<compile_context>
chip_gen: v5e
topology: v5e:2x2
jax: 0.10.0
libtpu: 0.0.40
codegen_flags: <defaults>
</compile_context>

<pallas_src>
import jax
import jax.numpy as jnp
from jax.experimental import pallas as pl
from jax.experimental.pallas import tpu as pltpu

NEG_SLOPE = 0.2   # leaky_relu negative slope
DROP_P = 0.4      # F.dropout(x, 0.4) -- functional default training=True, so it IS applied
FC_PAD = 128      # lane-dense padded FC output width (real out_features = 1)


# ---------------------------------------------------------------------------
# Conv layer = im2col (glue) + merged-M Pallas GEMM + bias + LeakyReLU
# ---------------------------------------------------------------------------
def _gemm_bias_lrelu_kernel(x_ref, w_ref, b_ref, o_ref):
    # x_ref: (TM, K) bf16 im2col rows, w_ref: (K, Cout) bf16, b_ref: (1, Cout) f32
    y = jnp.dot(x_ref[...], w_ref[...], preferred_element_type=jnp.float32)
    y = y + b_ref[...]
    # leaky_relu(0.2): single vmax instead of compare+select
    o_ref[...] = jnp.maximum(y, NEG_SLOPE * y).astype(o_ref.dtype)


def conv2d_leaky(x_nhwc, w2d, b2d, *, stride, tm=256):
    """3x3 conv, padding=1, given stride, followed by LeakyReLU(0.2).

    x_nhwc: (N,H,W,Cin) bf16; w2d: (9*Cin, Cout) bf16; b2d: (1, Cout) f32.
    """
    N, H, W, Cin = x_nhwc.shape
    K, Cout = w2d.shape
    KH = KW = 3
    Hout = (H + 2 - KH) // stride + 1
    Wout = (W + 2 - KW) // stride + 1
    P = Hout * Wout
    M = N * P

    # im2col patch extraction (data movement only, kept in plain JAX)
    xp = jnp.pad(x_nhwc, ((0, 0), (1, 1), (1, 1), (0, 0)))
    taps = []
    for ky in range(KH):
        for kx in range(KW):
            taps.append(jax.lax.slice(
                xp,
                (0, ky, kx, 0),
                (N, ky + stride * (Hout - 1) + 1, kx + stride * (Wout - 1) + 1, Cin),
                (1, stride, stride, 1)))                  # (N, Hout, Wout, Cin)
    cols = jnp.stack(taps, axis=3).reshape(M, K)          # (N*P, 9*Cin) bf16

    # merged row axis: one lane/sublane-dense GEMM over all samples' output pixels
    tm = min(tm, M)
    n_tiles = pl.cdiv(M, tm)
    Mp = n_tiles * tm
    if Mp != M:
        cols = jnp.pad(cols, ((0, Mp - M), (0, 0)))

    cost = pl.CostEstimate(
        flops=2 * Mp * K * Cout,
        transcendentals=0,
        bytes_accessed=Mp * K * 2 + K * Cout * 2 + Cout * 4 + Mp * Cout * 2,
    )

    out = pl.pallas_call(
        _gemm_bias_lrelu_kernel,
        out_shape=jax.ShapeDtypeStruct((Mp, Cout), jnp.bfloat16),
        grid=(n_tiles,),
        in_specs=[
            pl.BlockSpec((tm, K), lambda i: (i, 0)),
            pl.BlockSpec((K, Cout), lambda i: (0, 0)),   # weight resident (constant index)
            pl.BlockSpec((1, Cout), lambda i: (0, 0)),
        ],
        out_specs=pl.BlockSpec((tm, Cout), lambda i: (i, 0)),
        compiler_params=pltpu.CompilerParams(
            dimension_semantics=("parallel",),
            vmem_limit_bytes=64 * 1024 * 1024),
        cost_estimate=cost,
    )(cols, w2d, b2d)
    return out[:M].reshape(N, Hout, Wout, Cout)


# ---------------------------------------------------------------------------
# Dropout(0.4) + Linear(4096 -> 1) fused; output lane-padded to 128 columns
# ---------------------------------------------------------------------------
def _fc_dropout_kernel(x_ref, m_ref, w_ref, b_ref, o_ref):
    # x_ref: (N, 4096) bf16, m_ref: (N, 4096) f32 scaled keep-mask,
    # w_ref: (4096, 128) bf16 (only col 0 nonzero), b_ref: (1, 128) f32
    x = (x_ref[...].astype(jnp.float32) * m_ref[...]).astype(jnp.bfloat16)
    y = jnp.dot(x, w_ref[...], preferred_element_type=jnp.float32)
    o_ref[...] = (y + b_ref[...]).astype(o_ref.dtype)


def fc_dropout(x_bf16, mask_scaled, w_pad, b_pad):
    N, Kf = x_bf16.shape
    cost = pl.CostEstimate(
        flops=2 * N * Kf * FC_PAD + N * Kf,
        transcendentals=0,
        bytes_accessed=N * Kf * (2 + 4) + Kf * FC_PAD * 2 + N * FC_PAD * 4,
    )
    y = pl.pallas_call(
        _fc_dropout_kernel,
        out_shape=jax.ShapeDtypeStruct((N, FC_PAD), jnp.float32),
        in_specs=[pl.BlockSpec(memory_space=pltpu.MemorySpace.VMEM)] * 4,
        out_specs=pl.BlockSpec(memory_space=pltpu.MemorySpace.VMEM),
        cost_estimate=cost,
    )(x_bf16, mask_scaled, w_pad, b_pad)
    return y[:, :1]                                       # real out_features = 1


# ---------------------------------------------------------------------------
# Parameters (deterministic, PyTorch-default-like uniform init) + one-time prep
# ---------------------------------------------------------------------------
def init_params(key):
    def conv_init(k, cin, cout):
        kw, kb = jax.random.split(k)
        bound = 1.0 / float((cin * 9) ** 0.5)
        w = jax.random.uniform(kw, (3, 3, cin, cout), jnp.float32, -bound, bound)  # HWIO
        b = jax.random.uniform(kb, (cout,), jnp.float32, -bound, bound)
        return w, b

    ks = jax.random.split(key, 5)
    w1, b1 = conv_init(ks[0], 3, 64)
    w2, b2 = conv_init(ks[1], 64, 128)
    w3, b3 = conv_init(ks[2], 128, 128)
    w4, b4 = conv_init(ks[3], 128, 256)
    kfw, kfb = jax.random.split(ks[4])
    fan_in = 256 * 4 * 4
    bound = 1.0 / float(fan_in ** 0.5)
    wfc = jax.random.uniform(kfw, (fan_in, 1), jnp.float32, -bound, bound)  # NCHW-flatten order
    bfc = jax.random.uniform(kfb, (1, 1), jnp.float32, -bound, bound)
    return dict(w1=w1, b1=b1, w2=w2, b2=b2, w3=w3, b3=b3, w4=w4, b4=b4,
                wfc=wfc, bfc=bfc)


def prepare_params(raw):
    """One-time layout/dtype prep: bf16 GEMM weights, NHWC-order + lane-padded FC weight."""
    p = {}
    for i in (1, 2, 3, 4):
        w = raw[f"w{i}"]                                   # (3,3,Cin,Cout) HWIO
        cout = w.shape[-1]
        p[f"w{i}"] = w.reshape(-1, cout).astype(jnp.bfloat16)          # (9*Cin, Cout)
        p[f"b{i}"] = raw[f"b{i}"].reshape(1, cout).astype(jnp.float32)
    # FC weight is defined over torch's NCHW flatten (c,h,w); permute once to NHWC (h,w,c)
    wfc = raw["wfc"].reshape(256, 4, 4, 1).transpose(1, 2, 0, 3).reshape(256 * 16, 1)
    w_pad = jnp.zeros((wfc.shape[0], FC_PAD), jnp.float32).at[:, :1].set(wfc)
    p["wfc"] = w_pad.astype(jnp.bfloat16)
    p["bfc"] = jnp.zeros((1, FC_PAD), jnp.float32).at[:, :1].set(raw["bfc"].reshape(1, 1))
    return p


# ---------------------------------------------------------------------------
# Full forward pass (DeepCNN0)
# ---------------------------------------------------------------------------
def deep_cnn0_forward(params, x_nchw, dropout_seed=0):
    x = jnp.transpose(x_nchw, (0, 2, 3, 1)).astype(jnp.bfloat16)   # NCHW -> NHWC, bf16
    x = conv2d_leaky(x, params["w1"], params["b1"], stride=1)      # (N,32,32,64)
    x = conv2d_leaky(x, params["w2"], params["b2"], stride=2)      # (N,16,16,128)
    x = conv2d_leaky(x, params["w3"], params["b3"], stride=2)      # (N, 8, 8,128)
    x = conv2d_leaky(x, params["w4"], params["b4"], stride=2)      # (N, 4, 4,256)
    N = x.shape[0]
    feat = x.reshape(N, -1)                                        # NHWC flatten (wfc permuted)
    # TODO(synk): dropout mask comes from jax.random (deterministic given seed), not
    # PyTorch's RNG stream; disable for inference by replacing mask with ones.
    key = jax.random.PRNGKey(dropout_seed)
    keep = jax.random.bernoulli(key, 1.0 - DROP_P, feat.shape)
    mask = keep.astype(jnp.float32) * (1.0 / (1.0 - DROP_P))
    return fc_dropout(feat, mask, params["wfc"], params["bfc"])


if __name__ == "__main__":
    key = jax.random.PRNGKey(0)
    pkey, xkey = jax.random.split(key)
    params = prepare_params(init_params(pkey))
    # CIFAR-sized input required by the architecture (fc1 expects 256*4*4 features)
    x = jax.random.normal(xkey, (2, 3, 32, 32), jnp.float32)
    fwd = jax.jit(deep_cnn0_forward)
    y = fwd(params, x, 0)
    y = jax.block_until_ready(y)
    assert y.shape == (2, 1) and y.dtype == jnp.float32
    assert bool(jnp.all(jnp.isfinite(y)))
    print("KERNEL_OK")
</pallas_src>

<mosaic_0001>
module attributes {stable_mosaic.version = 11 : i64} {
  func.func @_gemm_bias_lrelu_kernel(%arg0: i32, %arg1: memref<256x27xbf16, #tpu.memory_space<vmem>>, %arg2: memref<27x64xbf16, #tpu.memory_space<vmem>>, %arg3: memref<1x64xf32, #tpu.memory_space<vmem>>, %arg4: memref<256x64xbf16, #tpu.memory_space<vmem>>) attributes {dimension_semantics = [#tpu.dimension_semantics<parallel>], iteration_bounds = array<i64: 8>, scalar_prefetch = 0 : i64, scratch_operands = 0 : i64, tpu.core_type = #tpu.core_type<tc>, window_params = [{transform_indices = @transform_0, window_bounds = array<i64: 256, 27>}, {pipeline_mode = #tpu.pipeline_mode<synchronous>, transform_indices = @transform_1, window_bounds = array<i64: 27, 64>}, {pipeline_mode = #tpu.pipeline_mode<synchronous>, transform_indices = @transform_2, window_bounds = array<i64: 1, 64>}, {transform_indices = @transform_3, window_bounds = array<i64: 256, 64>}]} {
    %c0 = arith.constant 0 : index
    %c0_0 = arith.constant 0 : index
    %0 = vector.load %arg1[%c0, %c0_0] : memref<256x27xbf16, #tpu.memory_space<vmem>>, vector<256x27xbf16>
    %c0_1 = arith.constant 0 : index
    %c0_2 = arith.constant 0 : index
    %1 = vector.load %arg2[%c0_1, %c0_2] : memref<27x64xbf16, #tpu.memory_space<vmem>>, vector<27x64xbf16>
    %cst = arith.constant dense<0.000000e+00> : vector<256x64xf32>
    %2 = tpu.matmul %0, %1, %cst {dimension_numbers = #tpu.dot_dimension_numbers<[1], [0], [0], [1], [0, 0, 1, 1], [], []>} : vector<256x27xbf16>, vector<27x64xbf16>, vector<256x64xf32> -> vector<256x64xf32>
    %c0_3 = arith.constant 0 : index
    %c0_4 = arith.constant 0 : index
    %3 = vector.load %arg3[%c0_3, %c0_4] : memref<1x64xf32, #tpu.memory_space<vmem>>, vector<1x64xf32>
    %4 = vector.broadcast %3 : vector<1x64xf32> to vector<256x64xf32>
    %5 = arith.addf %2, %4 : vector<256x64xf32>
    %cst_5 = arith.constant 2.000000e-01 : f32
    %6 = vector.broadcast %cst_5 : f32 to vector<256x64xf32>
    %7 = arith.mulf %6, %5 : vector<256x64xf32>
    %8 = arith.maximumf %5, %7 : vector<256x64xf32>
    %9 = arith.truncf %8 : vector<256x64xf32> to vector<256x64xbf16>
    %c0_6 = arith.constant 0 : index
    %c0_7 = arith.constant 0 : index
    %10 = vector.load %arg4[%c0_6, %c0_7] : memref<256x64xbf16, #tpu.memory_space<vmem>>, vector<256x64xbf16>
    tpu.vector_store %arg4[%c0_6, %c0_7], %9 {strides = array<i32>} : memref<256x64xbf16, #tpu.memory_space<vmem>>, vector<256x64xbf16>,
    return
  }
  func.func @transform_0(%arg0: i32) -> (i32, i32) {
    %c0_i32 = arith.constant 0 : i32
    %c0_i32_0 = arith.constant 0 : i32
    return %arg0, %c0_i32 : i32, i32
  }
  func.func @transform_1(%arg0: i32) -> (i32, i32) {
    %c0_i32 = arith.constant 0 : i32
    %c0_i32_0 = arith.constant 0 : i32
    %c0_i32_1 = arith.constant 0 : i32
    return %c0_i32, %c0_i32_0 : i32, i32
  }
  func.func @transform_2(%arg0: i32) -> (i32, i32) {
    %c0_i32 = arith.constant 0 : i32
    %c0_i32_0 = arith.constant 0 : i32
    %c0_i32_1 = arith.constant 0 : i32
    return %c0_i32, %c0_i32_0 : i32, i32
  }
  func.func @transform_3(%arg0: i32) -> (i32, i32) {
    %c0_i32 = arith.constant 0 : i32
    %c0_i32_0 = arith.constant 0 : i32
    return %arg0, %c0_i32 : i32, i32
  }
}

module attributes {stable_mosaic.version = 11 : i64} {
  func.func @_gemm_bias_lrelu_kernel(%arg0: i32, %arg1: memref<256x576xbf16, #tpu.memory_space<vmem>>, %arg2: memref<576x128xbf16, #tpu.memory_space<vmem>>, %arg3: memref<1x128xf32, #tpu.memory_space<vmem>>, %arg4: memref<256x128xbf16, #tpu.memory_space<vmem>>) attributes {dimension_semantics = [#tpu.dimension_semantics<parallel>], iteration_bounds = array<i64: 2>, scalar_prefetch = 0 : i64, scratch_operands = 0 : i64, tpu.core_type = #tpu.core_type<tc>, window_params = [{transform_indices = @transform_0, window_bounds = array<i64: 256, 576>}, {pipeline_mode = #tpu.pipeline_mode<synchronous>, transform_indices = @transform_1, window_bounds = array<i64: 576, 128>}, {pipeline_mode = #tpu.pipeline_mode<synchronous>, transform_indices = @transform_2, window_bounds = array<i64: 1, 128>}, {transform_indices = @transform_3, window_bounds = array<i64: 256, 128>}]} {
    %c0 = arith.constant 0 : index
    %c0_0 = arith.constant 0 : index
    %0 = vector.load %arg1[%c0, %c0_0] : memref<256x576xbf16, #tpu.memory_space<vmem>>, vector<256x576xbf16>
    %c0_1 = arith.constant 0 : index
    %c0_2 = arith.constant 0 : index
    %1 = vector.load %arg2[%c0_1, %c0_2] : memref<576x128xbf16, #tpu.memory_space<vmem>>, vector<576x128xbf16>
    %cst = arith.constant dense<0.000000e+00> : vector<256x128xf32>
    %2 = tpu.matmul %0, %1, %cst {dimension_numbers = #tpu.dot_dimension_numbers<[1], [0], [0], [1], [0, 0, 1, 1], [], []>} : vector<256x576xbf16>, vector<576x128xbf16>, vector<256x128xf32> -> vector<256x128xf32>
    %c0_3 = arith.constant 0 : index
    %c0_4 = arith.constant 0 : index
    %3 = vector.load %arg3[%c0_3, %c0_4] : memref<1x128xf32, #tpu.memory_space<vmem>>, vector<1x128xf32>
    %4 = vector.broadcast %3 : vector<1x128xf32> to vector<256x128xf32>
    %5 = arith.addf %2, %4 : vector<256x128xf32>
    %cst_5 = arith.constant 2.000000e-01 : f32
    %6 = vector.broadcast %cst_5 : f32 to vector<256x128xf32>
    %7 = arith.mulf %6, %5 : vector<256x128xf32>
    %8 = arith.maximumf %5, %7 : vector<256x128xf32>
    %9 = arith.truncf %8 : vector<256x128xf32> to vector<256x128xbf16>
    %c0_6 = arith.constant 0 : index
    %c0_7 = arith.constant 0 : index
    %10 = vector.load %arg4[%c0_6, %c0_7] : memref<256x128xbf16, #tpu.memory_space<vmem>>, vector<256x128xbf16>
    tpu.vector_store %arg4[%c0_6, %c0_7], %9 {strides = array<i32>} : memref<256x128xbf16, #tpu.memory_space<vmem>>, vector<256x128xbf16>,
    return
  }
  func.func @transform_0(%arg0: i32) -> (i32, i32) {
    %c0_i32 = arith.constant 0 : i32
    %c0_i32_0 = arith.constant 0 : i32
    return %arg0, %c0_i32 : i32, i32
  }
  func.func @transform_1(%arg0: i32) -> (i32, i32) {
    %c0_i32 = arith.constant 0 : i32
    %c0_i32_0 = arith.constant 0 : i32
    %c0_i32_1 = arith.constant 0 : i32
    return %c0_i32, %c0_i32_0 : i32, i32
  }
  func.func @transform_2(%arg0: i32) -> (i32, i32) {
    %c0_i32 = arith.constant 0 : i32
    %c0_i32_0 = arith.constant 0 : i32
    %c0_i32_1 = arith.constant 0 : i32
    return %c0_i32, %c0_i32_0 : i32, i32
  }
  func.func @transform_3(%arg0: i32) -> (i32, i32) {
    %c0_i32 = arith.constant 0 : i32
    %c0_i32_0 = arith.constant 0 : i32
    return %arg0, %c0_i32 : i32, i32
  }
}

module attributes {stable_mosaic.version = 11 : i64} {
  func.func @_gemm_bias_lrelu_kernel(%arg0: i32, %arg1: memref<128x1152xbf16, #tpu.memory_space<vmem>>, %arg2: memref<1152x128xbf16, #tpu.memory_space<vmem>>, %arg3: memref<1x128xf32, #tpu.memory_space<vmem>>, %arg4: memref<128x128xbf16, #tpu.memory_space<vmem>>) attributes {dimension_semantics = [#tpu.dimension_semantics<parallel>], iteration_bounds = array<i64: 1>, scalar_prefetch = 0 : i64, scratch_operands = 0 : i64, tpu.core_type = #tpu.core_type<tc>, window_params = [{transform_indices = @transform_0, window_bounds = array<i64: 128, 1152>}, {pipeline_mode = #tpu.pipeline_mode<synchronous>, transform_indices = @transform_1, window_bounds = array<i64: 1152, 128>}, {pipeline_mode = #tpu.pipeline_mode<synchronous>, transform_indices = @transform_2, window_bounds = array<i64: 1, 128>}, {transform_indices = @transform_3, window_bounds = array<i64: 128, 128>}]} {
    %c0 = arith.constant 0 : index
    %c0_0 = arith.constant 0 : index
    %0 = vector.load %arg1[%c0, %c0_0] : memref<128x1152xbf16, #tpu.memory_space<vmem>>, vector<128x1152xbf16>
    %c0_1 = arith.constant 0 : index
    %c0_2 = arith.constant 0 : index
    %1 = vector.load %arg2[%c0_1, %c0_2] : memref<1152x128xbf16, #tpu.memory_space<vmem>>, vector<1152x128xbf16>
    %cst = arith.constant dense<0.000000e+00> : vector<128x128xf32>
    %2 = tpu.matmul %0, %1, %cst {dimension_numbers = #tpu.dot_dimension_numbers<[1], [0], [0], [1], [0, 0, 1, 1], [], []>} : vector<128x1152xbf16>, vector<1152x128xbf16>, vector<128x128xf32> -> vector<128x128xf32>
    %c0_3 = arith.constant 0 : index
    %c0_4 = arith.constant 0 : index
    %3 = vector.load %arg3[%c0_3, %c0_4] : memref<1x128xf32, #tpu.memory_space<vmem>>, vector<1x128xf32>
    %4 = vector.broadcast %3 : vector<1x128xf32> to vector<128x128xf32>
    %5 = arith.addf %2, %4 : vector<128x128xf32>
    %cst_5 = arith.constant 2.000000e-01 : f32
    %6 = vector.broadcast %cst_5 : f32 to vector<128x128xf32>
    %7 = arith.mulf %6, %5 : vector<128x128xf32>
    %8 = arith.maximumf %5, %7 : vector<128x128xf32>
    %9 = arith.truncf %8 : vector<128x128xf32> to vector<128x128xbf16>
    %c0_6 = arith.constant 0 : index
    %c0_7 = arith.constant 0 : index
    %10 = vector.load %arg4[%c0_6, %c0_7] : memref<128x128xbf16, #tpu.memory_space<vmem>>, vector<128x128xbf16>
    tpu.vector_store %arg4[%c0_6, %c0_7], %9 {strides = array<i32>} : memref<128x128xbf16, #tpu.memory_space<vmem>>, vector<128x128xbf16>,
    return
  }
  func.func @transform_0(%arg0: i32) -> (i32, i32) {
    %c0_i32 = arith.constant 0 : i32
    %c0_i32_0 = arith.constant 0 : i32
    return %arg0, %c0_i32 : i32, i32
  }
  func.func @transform_1(%arg0: i32) -> (i32, i32) {
    %c0_i32 = arith.constant 0 : i32
    %c0_i32_0 = arith.constant 0 : i32
    %c0_i32_1 = arith.constant 0 : i32
    return %c0_i32, %c0_i32_0 : i32, i32
  }
  func.func @transform_2(%arg0: i32) -> (i32, i32) {
    %c0_i32 = arith.constant 0 : i32
    %c0_i32_0 = arith.constant 0 : i32
    %c0_i32_1 = arith.constant 0 : i32
    return %c0_i32, %c0_i32_0 : i32, i32
  }
  func.func @transform_3(%arg0: i32) -> (i32, i32) {
    %c0_i32 = arith.constant 0 : i32
    %c0_i32_0 = arith.constant 0 : i32
    return %arg0, %c0_i32 : i32, i32
  }
}

module attributes {stable_mosaic.version = 11 : i64} {
  func.func @_gemm_bias_lrelu_kernel(%arg0: i32, %arg1: memref<32x1152xbf16, #tpu.memory_space<vmem>>, %arg2: memref<1152x256xbf16, #tpu.memory_space<vmem>>, %arg3: memref<1x256xf32, #tpu.memory_space<vmem>>, %arg4: memref<32x256xbf16, #tpu.memory_space<vmem>>) attributes {dimension_semantics = [#tpu.dimension_semantics<parallel>], iteration_bounds = array<i64: 1>, scalar_prefetch = 0 : i64, scratch_operands = 0 : i64, tpu.core_type = #tpu.core_type<tc>, window_params = [{transform_indices = @transform_0, window_bounds = array<i64: 32, 1152>}, {pipeline_mode = #tpu.pipeline_mode<synchronous>, transform_indices = @transform_1, window_bounds = array<i64: 1152, 256>}, {pipeline_mode = #tpu.pipeline_mode<synchronous>, transform_indices = @transform_2, window_bounds = array<i64: 1, 256>}, {transform_indices = @transform_3, window_bounds = array<i64: 32, 256>}]} {
    %c0 = arith.constant 0 : index
    %c0_0 = arith.constant 0 : index
    %0 = vector.load %arg1[%c0, %c0_0] : memref<32x1152xbf16, #tpu.memory_space<vmem>>, vector<32x1152xbf16>
    %c0_1 = arith.constant 0 : index
    %c0_2 = arith.constant 0 : index
    %1 = vector.load %arg2[%c0_1, %c0_2] : memref<1152x256xbf16, #tpu.memory_space<vmem>>, vector<1152x256xbf16>
    %cst = arith.constant dense<0.000000e+00> : vector<32x256xf32>
    %2 = tpu.matmul %0, %1, %cst {dimension_numbers = #tpu.dot_dimension_numbers<[1], [0], [0], [1], [0, 0, 1, 1], [], []>} : vector<32x1152xbf16>, vector<1152x256xbf16>, vector<32x256xf32> -> vector<32x256xf32>
    %c0_3 = arith.constant 0 : index
    %c0_4 = arith.constant 0 : index
    %3 = vector.load %arg3[%c0_3, %c0_4] : memref<1x256xf32, #tpu.memory_space<vmem>>, vector<1x256xf32>
    %4 = vector.broadcast %3 : vector<1x256xf32> to vector<32x256xf32>
    %5 = arith.addf %2, %4 : vector<32x256xf32>
    %cst_5 = arith.constant 2.000000e-01 : f32
    %6 = vector.broadcast %cst_5 : f32 to vector<32x256xf32>
    %7 = arith.mulf %6, %5 : vector<32x256xf32>
    %8 = arith.maximumf %5, %7 : vector<32x256xf32>
    %9 = arith.truncf %8 : vector<32x256xf32> to vector<32x256xbf16>
    %c0_6 = arith.constant 0 : index
    %c0_7 = arith.constant 0 : index
    %10 = vector.load %arg4[%c0_6, %c0_7] : memref<32x256xbf16, #tpu.memory_space<vmem>>, vector<32x256xbf16>
    tpu.vector_store %arg4[%c0_6, %c0_7], %9 {strides = array<i32>} : memref<32x256xbf16, #tpu.memory_space<vmem>>, vector<32x256xbf16>,
    return
  }
  func.func @transform_0(%arg0: i32) -> (i32, i32) {
    %c0_i32 = arith.constant 0 : i32
    %c0_i32_0 = arith.constant 0 : i32
    return %arg0, %c0_i32 : i32, i32
  }
  func.func @transform_1(%arg0: i32) -> (i32, i32) {
    %c0_i32 = arith.constant 0 : i32
    %c0_i32_0 = arith.constant 0 : i32
    %c0_i32_1 = arith.constant 0 : i32
    return %c0_i32, %c0_i32_0 : i32, i32
  }
  func.func @transform_2(%arg0: i32) -> (i32, i32) {
    %c0_i32 = arith.constant 0 : i32
    %c0_i32_0 = arith.constant 0 : i32
    %c0_i32_1 = arith.constant 0 : i32
    return %c0_i32, %c0_i32_0 : i32, i32
  }
  func.func @transform_3(%arg0: i32) -> (i32, i32) {
    %c0_i32 = arith.constant 0 : i32
    %c0_i32_0 = arith.constant 0 : i32
    return %arg0, %c0_i32 : i32, i32
  }
}

module attributes {stable_mosaic.version = 11 : i64} {
  func.func @_fc_dropout_kernel(%arg0: memref<2x4096xbf16, #tpu.memory_space<vmem>>, %arg1: memref<2x4096xf32, #tpu.memory_space<vmem>>, %arg2: memref<4096x128xbf16, #tpu.memory_space<vmem>>, %arg3: memref<1x128xf32, #tpu.memory_space<vmem>>, %arg4: memref<2x128xf32, #tpu.memory_space<vmem>>) attributes {dimension_semantics = [], scalar_prefetch = 0 : i64, scratch_operands = 0 : i64, tpu.core_type = #tpu.core_type<tc>} {
    %c0 = arith.constant 0 : index
    %c0_0 = arith.constant 0 : index
    %0 = vector.load %arg0[%c0, %c0_0] : memref<2x4096xbf16, #tpu.memory_space<vmem>>, vector<2x4096xbf16>
    %1 = arith.extf %0 : vector<2x4096xbf16> to vector<2x4096xf32>
    %c0_1 = arith.constant 0 : index
    %c0_2 = arith.constant 0 : index
    %2 = vector.load %arg1[%c0_1, %c0_2] : memref<2x4096xf32, #tpu.memory_space<vmem>>, vector<2x4096xf32>
    %3 = arith.mulf %1, %2 : vector<2x4096xf32>
    %4 = arith.truncf %3 : vector<2x4096xf32> to vector<2x4096xbf16>
    %c0_3 = arith.constant 0 : index
    %c0_4 = arith.constant 0 : index
    %5 = vector.load %arg2[%c0_3, %c0_4] : memref<4096x128xbf16, #tpu.memory_space<vmem>>, vector<4096x128xbf16>
    %cst = arith.constant dense<0.000000e+00> : vector<2x128xf32>
    %6 = tpu.matmul %4, %5, %cst {dimension_numbers = #tpu.dot_dimension_numbers<[1], [0], [0], [1], [0, 0, 1, 1], [], []>} : vector<2x4096xbf16>, vector<4096x128xbf16>, vector<2x128xf32> -> vector<2x128xf32>
    %c0_5 = arith.constant 0 : index
    %c0_6 = arith.constant 0 : index
    %7 = vector.load %arg3[%c0_5, %c0_6] : memref<1x128xf32, #tpu.memory_space<vmem>>, vector<1x128xf32>
    %8 = vector.broadcast %7 : vector<1x128xf32> to vector<2x128xf32>
    %9 = arith.addf %6, %8 : vector<2x128xf32>
    %c0_7 = arith.constant 0 : index
    %c0_8 = arith.constant 0 : index
    %10 = vector.load %arg4[%c0_7, %c0_8] : memref<2x128xf32, #tpu.memory_space<vmem>>, vector<2x128xf32>
    tpu.vector_store %arg4[%c0_7, %c0_8], %9 {strides = array<i32>} : memref<2x128xf32, #tpu.memory_space<vmem>>, vector<2x128xf32>,
    return
  }
}

</mosaic_0001>

<llo_original>
// kernel: deep_cnn0_forward.5
$region0: #{deep_cnn0_forward.5}
  #allocation0 [shape = 'u32[]', space=smem, size = 0x4, offset = 0x4, fixed_abs, tag = 'smem constant byte address 0x4 - core index']
  #allocation1 [shape = 'u32[72,128]{1,0:T(1,128)}', space=vmem, size = 0x9000, scoped, tag = 'internal scratch']
  %s0 = inlined_call_operand.vmem [shape: bf16[2048,27], index: 0, kind: input, shape index: {}]
  %s1 = inlined_call_operand.vmem [shape: bf16[27,64], index: 1, kind: input, shape index: {}]
  %s2 = inlined_call_operand.vmem [shape: f32[1,64], index: 2, kind: input, shape index: {}]
  %s3 = inlined_call_operand.vmem [shape: bf16[2048,64], index: 3, kind: output, shape index: {}]
  %s4 = sld [smem:[#allocation0]]
  $region45: #{deep_cnn0_forward.5} parent=0
    _
  %s6 = ssub.s32 1, %s4
  %s7 = scalar_select 0, %s6, %s4
  loop: start=0, step=1, limit=10
  $region2: #{deep_cnn0_forward.5} parent=0 // loop_pre_header
    _
  $region3: #{deep_cnn0_forward.5} parent=0 // loop_header
    %s9 = sphi 0, %s13
    %p10 = scmp.ge.s32.totalorder %s9, 10
    %s19 = sphi 0, %s21
    %s22 = sphi 0, %s19
    %s23 = sphi 0, %s22
    %s39 = sphi 0, %s23
    %s43 = sphi 0, %s43
    %s45 = sphi 0, %s43
    %s46 = sphi 0, %s45
    %s60 = sphi 0, %s46
    %s64 = sphi 0, %s64
    %s66 = sphi 0, %s64
    %s67 = sphi 0, %s66
    %s81 = sphi 0, %s67
    %s87 = sphi 0, %s89
    %s90 = sphi 0, %s87
    %s91 = sphi 0, %s90
    %s107 = sphi 0, %s91
  $region4: #{deep_cnn0_forward.5} parent=0 // loop_header_branch
    %12 = sbr.rel (%p10) target = $region8
  $region5: #{deep_cnn0_forward.5} parent=0 // loop_body
    %s14 = ssub.s32 %s9, 1
    %s15 = ssub.s32 %s9, 2
    %s16 = sadd.s32 %s9, 1
    %s17 = ssub.s32 %s9, %s16
    %p18 = scmp.eq.s32.totalorder %s17, 0
    %s20 = sadd.s32 %s19, 1
    %s21 = scalar_select %p18, %s19, %s20
    %p24 = pneg %p18
    %p25 = scmp.eq.s32.totalorder %s9, 7
    %p26 = por %p24, %p25
    %p27 = scmp.ne.s32.totalorder %s19, %s22
    %p28 = scmp.eq.s32.totalorder %s9, 0
    %p29 = por %p27, %p28
    %p30 = scmp.ne.s32.totalorder %s19, %s22
    %p31 = scmp.eq.s32.totalorder %s14, 7
    %p32 = por %p30, %p31
    %p33 = scmp.ne.s32.totalorder %s22, %s23
    %p34 = scmp.eq.s32.totalorder %s14, 0
    %p35 = por %p33, %p34
    %p36 = scmp.ne.s32.totalorder %s22, %s23
    %p37 = scmp.eq.s32.totalorder %s15, 7
    %p38 = por %p36, %p37
    %p40 = scmp.ne.s32.totalorder %s23, %s39
    %p41 = scmp.eq.s32.totalorder %s15, 0
    %p42 = por %p40, %p41
    %s44 = sadd.s32 %s43, 1
    %p47 = scmp.eq.s32.totalorder %s9, 7
    %p48 = scmp.ne.s32.totalorder %s43, %s45
    %p49 = scmp.eq.s32.totalorder %s9, 0
    %p50 = por %p48, %p49
    %p51 = scmp.ne.s32.totalorder %s43, %s45
    %p52 = scmp.eq.s32.totalorder %s14, 7
    %p53 = por %p51, %p52
    %p54 = scmp.ne.s32.totalorder %s45, %s46
    %p55 = scmp.eq.s32.totalorder %s14, 0
    %p56 = por %p54, %p55
    %p57 = scmp.ne.s32.totalorder %s45, %s46
    %p58 = scmp.eq.s32.totalorder %s15, 7
    %p59 = por %p57, %p58
    %p61 = scmp.ne.s32.totalorder %s46, %s60
    %p62 = scmp.eq.s32.totalorder %s15, 0
    %p63 = por %p61, %p62
    %s65 = sadd.s32 %s64, 1
    %p68 = scmp.eq.s32.totalorder %s9, 7
    %p69 = scmp.ne.s32.totalorder %s64, %s66
    %p70 = scmp.eq.s32.totalorder %s9, 0
    %p71 = por %p69, %p70
    %p72 = scmp.ne.s32.totalorder %s64, %s66
    %p73 = scmp.eq.s32.totalorder %s14, 7
    %p74 = por %p72, %p73
    %p75 = scmp.ne.s32.totalorder %s66, %s67
    %p76 = scmp.eq.s32.totalorder %s14, 0
    %p77 = por %p75, %p76
    %p78 = scmp.ne.s32.totalorder %s66, %s67
    %p79 = scmp.eq.s32.totalorder %s15, 7
    %p80 = por %p78, %p79
    %p82 = scmp.ne.s32.totalorder %s67, %s81
    %p83 = scmp.eq.s32.totalorder %s15, 0
    %p84 = por %p82, %p83
    %s85 = ssub.s32 %s9, %s16
    %p86 = scmp.eq.s32.totalorder %s85, 0
    %s88 = sadd.s32 %s87, 1
    %s89 = scalar_select %p86, %s87, %s88
    %p92 = pneg %p86
    %p93 = scmp.eq.s32.totalorder %s9, 7
    %p94 = por %p92, %p93
    %p95 = scmp.ne.s32.totalorder %s87, %s90
    %p96 = scmp.eq.s32.totalorder %s9, 0
    %p97 = por %p95, %p96
    %p98 = scmp.ne.s32.totalorder %s87, %s90
    %p99 = scmp.eq.s32.totalorder %s14, 7
    %p100 = por %p98, %p99
    %p101 = scmp.ne.s32.totalorder %s90, %s91
    %p102 = scmp.eq.s32.totalorder %s14, 0
    %p103 = por %p101, %p102
    %p104 = scmp.ne.s32.totalorder %s90, %s91
    %p105 = scmp.eq.s32.totalorder %s15, 7
    %p106 = por %p104, %p105
    %p108 = scmp.ne.s32.totalorder %s91, %s107
    %p109 = scmp.eq.s32.totalorder %s15, 0
    %p110 = por %p108, %p109
    %p111 = scmp.le.s32.totalorder 1, %s9
    %p112 = scmp.lt.s32.totalorder %s9, 9
    %p113 = pnand %p111, %p112
    %p114 = pneg %p113
    // Predicated region
    $region9: #{deep_cnn0_forward.5} parent=5 // pred_check
      _
    $region10: #{deep_cnn0_forward.5} parent=5 // pred_check_branch
      %116 = sbr.rel (%p113) target = $region12
    $region11: #{deep_cnn0_forward.5} parent=5 // pred_region
      %s117 = ssub.s32 %s9, 1
      // Predicated region
      $region13: #{deep_cnn0_forward.5} parent=11 // pred_check
        %p118 = pneg %p56
      $region14: #{deep_cnn0_forward.5} parent=11 // pred_check_branch
        %120 = sbr.rel (%p118) target = $region16
      $region15: #{deep_cnn0_forward.5} parent=11 // pred_region
        _
      $region16: #{deep_cnn0_forward.5} parent=11 // pred_fallthru
        _
      // Predicated region
      $region17: #{deep_cnn0_forward.5} parent=11 // pred_check
        %p121 = pneg %p77
      $region18: #{deep_cnn0_forward.5} parent=11 // pred_check_branch
        %123 = sbr.rel (%p121) target = $region20
      $region19: #{deep_cnn0_forward.5} parent=11 // pred_region
        _
      $region20: #{deep_cnn0_forward.5} parent=11 // pred_fallthru
        _
    $region12: #{deep_cnn0_forward.5} parent=5 // pred_fallthru
      _
    %p124 = scmp.lt.s32.totalorder %s9, 8
    // Predicated region
    $region21: #{deep_cnn0_forward.5} parent=5 // pred_check
      %p125 = pneg %p124
    $region22: #{deep_cnn0_forward.5} parent=5 // pred_check_branch
      %127 = sbr.rel (%p125) target = $region24
    $region23: #{deep_cnn0_forward.5} parent=5 // pred_region
      // Predicated region
      $region25: #{deep_cnn0_forward.5} parent=23 // pred_check
        %p128 = pneg %p29
      $region26: #{deep_cnn0_forward.5} parent=23 // pred_check_branch
        %130 = sbr.rel (%p128) target = $region28
      $region27: #{deep_cnn0_forward.5} parent=23 // pred_region
        %s131 = smul.u32 32, %s9
        %p132 = scmp.lt.s32.totalorder %s131, 255
        %s133 = scalar_select %p132, %s131, 255
        %s134 = smul.addr %s133, 4
        %s135 = scalar_lea.vmem %s0, %s134
        %s136 = smul.u32 32, %s9
      $region28: #{deep_cnn0_forward.5} parent=23 // pred_fallthru
        _
    $region24: #{deep_cnn0_forward.5} parent=5 // pred_fallthru
      _
    %p137 = scmp.le.s32.totalorder 1, %s9
    %p138 = scmp.lt.s32.totalorder %s9, 9
    %p139 = pnand %p137, %p138
    %p140 = pneg %p139
    // Predicated region
    $region29: #{deep_cnn0_forward.5} parent=5 // pred_check
      _
    $region30: #{deep_cnn0_forward.5} parent=5 // pred_check_branch
      %142 = sbr.rel (%p139) target = $region32
    $region31: #{deep_cnn0_forward.5} parent=5 // pred_region
      %s143 = ssub.s32 %s9, 1
      %s144 = smul.u32 32, %s14
      %p145 = scmp.lt.s32.totalorder %s144, 255
      %s146 = scalar_select %p145, %s144, 255
      %s147 = smul.addr %s146, 4
      %s148 = scalar_lea.vmem %s0, %s147
      %p149 = pneg %p35
      %p150 = pneg %p32
      %p151 = pneg %p56
      %p152 = pneg %p53
      %p153 = pneg %p77
      %p154 = pneg %p74
      %p155 = pneg %p103
      %p156 = pneg %p100
      %s157 = smul.u32 32, %s14
      %p158 = scmp.lt.s32.totalorder %s157, 255
      %s159 = scalar_select %p158, %s157, 255
      %s160 = smul.addr %s159, 4
      %s161 = scalar_lea.vmem %s3, %s160
      %s162 = smul.u32 32, %s14
      %p163 = scmp.lt.s32.totalorder %s162, 255
      %s164 = scalar_select %p163, %s162, 255
      %s165 = smul.addr %s164, 4
      %s166 = scalar_lea.vmem %s0, %s165
      %s167 = smul.u32 32, %s14
      %s168 = smul.u32 32, %s14
      %p169 = scmp.lt.s32.totalorder %s168, 255
      %s170 = scalar_select %p169, %s168, 255
      %s171 = smul.addr %s170, 4
      %s172 = scalar_lea.vmem %s3, %s171
      %s173 = smul.u32 32, %s14
      %v175 = vld [vmem:[%s166] sm:$0xf]
      %v176 = vld [vmem:[%s166 + $0x4] sm:$0xf]
      %v177 = vld [vmem:[%s166 + $0x8] sm:$0xf]
      %v178 = vld [vmem:[%s166 + $0xc] sm:$0xf]
      %v179 = vld [vmem:[%s166 + $0x10] sm:$0xf]
      %v180 = vld [vmem:[%s166 + $0x14] sm:$0xf]
      %v181 = vld [vmem:[%s166 + $0x18] sm:$0xf]
      %v182 = vld [vmem:[%s166 + $0x1c] sm:$0xf]
      %v183 = vld [vmem:[%s166 + $0x20] sm:$0xf]
      %v184 = vld [vmem:[%s166 + $0x24] sm:$0xf]
      %v185 = vld [vmem:[%s166 + $0x28] sm:$0xf]
      %v186 = vld [vmem:[%s166 + $0x2c] sm:$0xf]
      %v187 = vld [vmem:[%s166 + $0x30] sm:$0xf]
      %v188 = vld [vmem:[%s166 + $0x34] sm:$0xf]
      %v189 = vld [vmem:[%s166 + $0x38] sm:$0xf]
      %v190 = vld [vmem:[%s166 + $0x3c] sm:$0xf]
      %v191 = vld [vmem:[%s166 + $0x40] sm:$0xf]
      %v192 = vld [vmem:[%s166 + $0x44] sm:$0xf]
      %v193 = vld [vmem:[%s166 + $0x48] sm:$0xf]
      %v194 = vld [vmem:[%s166 + $0x4c] sm:$0xf]
      %v195 = vld [vmem:[%s166 + $0x50] sm:$0xf]
      %v196 = vld [vmem:[%s166 + $0x54] sm:$0xf]
      %v197 = vld [vmem:[%s166 + $0x58] sm:$0xf]
      %v198 = vld [vmem:[%s166 + $0x5c] sm:$0xf]
      %v199 = vld [vmem:[%s166 + $0x60] sm:$0xf]
      %v200 = vld [vmem:[%s166 + $0x64] sm:$0xf]
      %v201 = vld [vmem:[%s166 + $0x68] sm:$0xf]
      %v202 = vld [vmem:[%s166 + $0x6c] sm:$0xf]
      %v203 = vld [vmem:[%s166 + $0x70] sm:$0xf]
      %v204 = vld [vmem:[%s166 + $0x74] sm:$0xf]
      %v205 = vld [vmem:[%s166 + $0x78] sm:$0xf]
      %v206 = vld [vmem:[%s166 + $0x7c] sm:$0xf]
      %v207 = vld [vmem:[%s1] sm:$0xf]
      %v208 = vld [vmem:[%s1 + $0x4] sm:$0xf]
      %v209 = vld [vmem:[%s1 + $0x8] sm:$0xf]
      %v210 = vld [vmem:[%s1 + $0xc] sm:$0x3]
      %v211 = vld [vmem:[%s2] sm:$0x1]
      %v213 = vperm.slane %v211, 0
      %v247 = vunpack.c.l.b16 %v175
      %v248 = vunpack.c.l.b16 %v176
      %v249 = vunpack.c.l.b16 %v177
      %v250 = vunpack.c.l.b16 %v178
      %v251 = vunpack.c.l.b16 %v179
      %v252 = vunpack.c.l.b16 %v180
      %v253 = vunpack.c.l.b16 %v181
      %v254 = vunpack.c.l.b16 %v182
      %v255 = vunpack.c.l.b16 %v183
      %v256 = vunpack.c.l.b16 %v184
      %v257 = vunpack.c.l.b16 %v185
      %v258 = vunpack.c.l.b16 %v186
      %v259 = vunpack.c.l.b16 %v187
      %v260 = vunpack.c.l.b16 %v188
      %v261 = vunpack.c.l.b16 %v189
      %v262 = vunpack.c.l.b16 %v190
      %v263 = vunpack.c.l.b16 %v191
      %v264 = vunpack.c.l.b16 %v192
      %v265 = vunpack.c.l.b16 %v193
      %v266 = vunpack.c.l.b16 %v194
      %v267 = vunpack.c.l.b16 %v195
      %v268 = vunpack.c.l.b16 %v196
      %v269 = vunpack.c.l.b16 %v197
      %v270 = vunpack.c.l.b16 %v198
      %v271 = vunpack.c.l.b16 %v199
      %v272 = vunpack.c.l.b16 %v200
      %v273 = vunpack.c.l.b16 %v201
      %v274 = vunpack.c.l.b16 %v202
      %v275 = vunpack.c.l.b16 %v203
      %v276 = vunpack.c.l.b16 %v204
      %v277 = vunpack.c.l.b16 %v205
      %v278 = vunpack.c.l.b16 %v206
      %v279 = vpack.c.b16 %v248, %v247
      %v280 = vpack.c.b16 %v250, %v249
      %v281 = vpack.c.b16 %v252, %v251
      %v282 = vpack.c.b16 %v254, %v253
      %v283 = vpack.c.b16 %v256, %v255
      %v284 = vpack.c.b16 %v258, %v257
      %v285 = vpack.c.b16 %v260, %v259
      %v286 = vpack.c.b16 %v262, %v261
      %v287 = vpack.c.b16 %v264, %v263
      %v288 = vpack.c.b16 %v266, %v265
      %v289 = vpack.c.b16 %v268, %v267
      %v290 = vpack.c.b16 %v270, %v269
      %v291 = vpack.c.b16 %v272, %v271
      %v292 = vpack.c.b16 %v274, %v273
      %v293 = vpack.c.b16 %v276, %v275
      %v294 = vpack.c.b16 %v278, %v277
      %v299 = vunpack.c.l.b16 %v207
      %v300 = vunpack.c.l.b16 %v208
      %v301 = vunpack.c.l.b16 %v209
      %v302 = vunpack.c.l.b16 %v210
      %v303 = vpack.c.b16 %v300, %v299
      %v304 = vpack.c.b16 %v302, %v301
      %vm306 = vcmask 220160
      %v308 = vsel %vm306, %v279, 0
      %v311 = vsel %vm306, %v280, 0
      %v314 = vsel %vm306, %v281, 0
      %v317 = vsel %vm306, %v282, 0
      %v320 = vsel %vm306, %v283, 0
      %v323 = vsel %vm306, %v284, 0
      %v326 = vsel %vm306, %v285, 0
      %v329 = vsel %vm306, %v286, 0
      %v332 = vsel %vm306, %v287, 0
      %v335 = vsel %vm306, %v288, 0
      %v338 = vsel %vm306, %v289, 0
      %v341 = vsel %vm306, %v290, 0
      %v344 = vsel %vm306, %v291, 0
      %v347 = vsel %vm306, %v292, 0
      %v350 = vsel %vm306, %v293, 0
      %v353 = vsel %vm306, %v294, 0
      %vm355 = vcmask 1044480
      %vm356 = vcmask 1045504
      %v357 = vsel %vm355, 4294967295, 65535
      %v358 = vsel %vm356, %v357, 0
      %v360 = vand.u32 %v304, %v358
      %362 = vmatpush.bf16.msra.mxu0 0
      %363 = vmatpush.bf16.msra.mxu0 0
      %364 = vmatpush.bf16.msra.mxu0 0
      %365 = vmatpush.bf16.msra.mxu0 0
      %366 = vmatpush.bf16.msra.mxu0 0
      %367 = vmatpush.bf16.msra.mxu0 0
      %368 = vmatpush.bf16.msra.mxu0 %v360
      %369 = vmatpush.bf16.msra.mxu0 %v303
      %370 = vmatmul.bf16.gmra.mxu0 %v308
      %v371 = vpop.f32.mrf.mxu0
      %v372 = vadd.f32 %v213, %v371
      %v373 = vpop.f32.mrf.mxu0
      %v374 = vadd.f32 %v213, %v373
      %375 = vmatmul.bf16.gmra.mxu0 %v311
      %v376 = vpop.f32.mrf.mxu0
      %v377 = vadd.f32 %v213, %v376
      %v378 = vpop.f32.mrf.mxu0
      %v379 = vadd.f32 %v213, %v378
      %380 = vmatmul.bf16.gmra.mxu0 %v314
      %v381 = vpop.f32.mrf.mxu0
      %v382 = vadd.f32 %v213, %v381
      %v383 = vpop.f32.mrf.mxu0
      %v384 = vadd.f32 %v213, %v383
      %385 = vmatmul.bf16.gmra.mxu0 %v317
      %v386 = vpop.f32.mrf.mxu0
      %v387 = vadd.f32 %v213, %v386
      %v388 = vpop.f32.mrf.mxu0
      %v389 = vadd.f32 %v213, %v388
      %390 = vmatmul.bf16.gmra.mxu0 %v320
      %v391 = vpop.f32.mrf.mxu0
      %v392 = vadd.f32 %v213, %v391
      %v393 = vpop.f32.mrf.mxu0
      %v394 = vadd.f32 %v213, %v393
      %395 = vmatmul.bf16.gmra.mxu0 %v323
      %v396 = vpop.f32.mrf.mxu0
      %v397 = vadd.f32 %v213, %v396
      %v398 = vpop.f32.mrf.mxu0
      %v399 = vadd.f32 %v213, %v398
      %400 = vmatmul.bf16.gmra.mxu0 %v326
      %v401 = vpop.f32.mrf.mxu0
      %v402 = vadd.f32 %v213, %v401
      %v403 = vpop.f32.mrf.mxu0
      %v404 = vadd.f32 %v213, %v403
      %405 = vmatmul.bf16.gmra.mxu0 %v329
      %v406 = vpop.f32.mrf.mxu0
      %v407 = vadd.f32 %v213, %v406
      %v408 = vpop.f32.mrf.mxu0
      %v409 = vadd.f32 %v213, %v408
      %410 = vmatmul.bf16.gmra.mxu0 %v332
      %v411 = vpop.f32.mrf.mxu0
      %v412 = vadd.f32 %v213, %v411
      %v413 = vpop.f32.mrf.mxu0
      %v414 = vadd.f32 %v213, %v413
      %415 = vmatmul.bf16.gmra.mxu0 %v335
      %v416 = vpop.f32.mrf.mxu0
      %v417 = vadd.f32 %v213, %v416
      %v418 = vpop.f32.mrf.mxu0
      %v419 = vadd.f32 %v213, %v418
      %420 = vmatmul.bf16.gmra.mxu0 %v338
      %v421 = vpop.f32.mrf.mxu0
      %v422 = vadd.f32 %v213, %v421
      %v423 = vpop.f32.mrf.mxu0
      %v424 = vadd.f32 %v213, %v423
      %425 = vmatmul.bf16.gmra.mxu0 %v341
      %v426 = vpop.f32.mrf.mxu0
      %v427 = vadd.f32 %v213, %v426
      %v428 = vpop.f32.mrf.mxu0
      %v429 = vadd.f32 %v213, %v428
      %430 = vmatmul.bf16.gmra.mxu0 %v344
      %v431 = vpop.f32.mrf.mxu0
      %v432 = vadd.f32 %v213, %v431
      %v433 = vpop.f32.mrf.mxu0
      %v434 = vadd.f32 %v213, %v433
      %435 = vmatmul.bf16.gmra.mxu0 %v347
      %v436 = vpop.f32.mrf.mxu0
      %v437 = vadd.f32 %v213, %v436
      %v438 = vpop.f32.mrf.mxu0
      %v439 = vadd.f32 %v213, %v438
      %440 = vmatmul.bf16.gmra.mxu0 %v350
      %v441 = vpop.f32.mrf.mxu0
      %v442 = vadd.f32 %v213, %v441
      %v443 = vpop.f32.mrf.mxu0
      %v444 = vadd.f32 %v213, %v443
      %445 = vmatmul.bf16.gmra.mxu0 %v353
      %v446 = vpop.f32.mrf.mxu0
      %v447 = vadd.f32 %v213, %v446
      %v448 = vpop.f32.mrf.mxu0
      %v449 = vadd.f32 %v213, %v448
      %450 = vdwg.mxu0
      %v451 = vmul.f32 %v372, 0.2
      %v452 = vmul.f32 %v374, 0.2
      %v453 = vmul.f32 %v377, 0.2
      %v454 = vmul.f32 %v379, 0.2
      %v455 = vmul.f32 %v382, 0.2
      %v456 = vmul.f32 %v384, 0.2
      %v457 = vmul.f32 %v387, 0.2
      %v458 = vmul.f32 %v389, 0.2
      %v459 = vmul.f32 %v392, 0.2
      %v460 = vmul.f32 %v394, 0.2
      %v461 = vmul.f32 %v397, 0.2
      %v462 = vmul.f32 %v399, 0.2
      %v463 = vmul.f32 %v402, 0.2
      %v464 = vmul.f32 %v404, 0.2
      %v465 = vmul.f32 %v407, 0.2
      %v466 = vmul.f32 %v409, 0.2
      %v467 = vmul.f32 %v412, 0.2
      %v468 = vmul.f32 %v414, 0.2
      %v469 = vmul.f32 %v417, 0.2
      %v470 = vmul.f32 %v419, 0.2
      %v471 = vmul.f32 %v422, 0.2
      %v472 = vmul.f32 %v424, 0.2
      %v473 = vmul.f32 %v427, 0.2
      %v474 = vmul.f32 %v429, 0.2
      %v475 = vmul.f32 %v432, 0.2
      %v476 = vmul.f32 %v434, 0.2
      %v477 = vmul.f32 %v437, 0.2
      %v478 = vmul.f32 %v439, 0.2
      %v479 = vmul.f32 %v442, 0.2
      %v480 = vmul.f32 %v444, 0.2
      %v481 = vmul.f32 %v447, 0.2
      %v482 = vmul.f32 %v449, 0.2
      %v483 = vmax.f32 %v372, %v451
      %v484 = vmax.f32 %v374, %v452
      %v485 = vmax.f32 %v377, %v453
      %v486 = vmax.f32 %v379, %v454
      %v487 = vmax.f32 %v382, %v455
      %v488 = vmax.f32 %v384, %v456
      %v489 = vmax.f32 %v387, %v457
      %v490 = vmax.f32 %v389, %v458
      %v491 = vmax.f32 %v392, %v459
      %v492 = vmax.f32 %v394, %v460
      %v493 = vmax.f32 %v397, %v461
      %v494 = vmax.f32 %v399, %v462
      %v495 = vmax.f32 %v402, %v463
      %v496 = vmax.f32 %v404, %v464
      %v497 = vmax.f32 %v407, %v465
      %v498 = vmax.f32 %v409, %v466
      %v499 = vmax.f32 %v412, %v467
      %v500 = vmax.f32 %v414, %v468
      %v501 = vmax.f32 %v417, %v469
      %v502 = vmax.f32 %v419, %v470
      %v503 = vmax.f32 %v422, %v471
      %v504 = vmax.f32 %v424, %v472
      %v505 = vmax.f32 %v427, %v473
      %v506 = vmax.f32 %v429, %v474
      %v507 = vmax.f32 %v432, %v475
      %v508 = vmax.f32 %v434, %v476
      %v509 = vmax.f32 %v437, %v477
      %v510 = vmax.f32 %v439, %v478
      %v511 = vmax.f32 %v442, %v479
      %v512 = vmax.f32 %v444, %v480
      %v513 = vmax.f32 %v447, %v481
      %v514 = vmax.f32 %v449, %v482
      %v515 = vpack.c.bf16 %v483, %v483
      %v516 = vpack.c.bf16 %v484, %v484
      %v517 = vpack.c.bf16 %v485, %v485
      %v518 = vpack.c.bf16 %v486, %v486
      %v519 = vpack.c.bf16 %v487, %v487
      %v520 = vpack.c.bf16 %v488, %v488
      %v521 = vpack.c.bf16 %v489, %v489
      %v522 = vpack.c.bf16 %v490, %v490
      %v523 = vpack.c.bf16 %v491, %v491
      %v524 = vpack.c.bf16 %v492, %v492
      %v525 = vpack.c.bf16 %v493, %v493
      %v526 = vpack.c.bf16 %v494, %v494
      %v527 = vpack.c.bf16 %v495, %v495
      %v528 = vpack.c.bf16 %v496, %v496
      %v529 = vpack.c.bf16 %v497, %v497
      %v530 = vpack.c.bf16 %v498, %v498
      %v531 = vpack.c.bf16 %v499, %v499
      %v532 = vpack.c.bf16 %v500, %v500
      %v533 = vpack.c.bf16 %v501, %v501
      %v534 = vpack.c.bf16 %v502, %v502
      %v535 = vpack.c.bf16 %v503, %v503
      %v536 = vpack.c.bf16 %v504, %v504
      %v537 = vpack.c.bf16 %v505, %v505
      %v538 = vpack.c.bf16 %v506, %v506
      %v539 = vpack.c.bf16 %v507, %v507
      %v540 = vpack.c.bf16 %v508, %v508
      %v541 = vpack.c.bf16 %v509, %v509
      %v542 = vpack.c.bf16 %v510, %v510
      %v543 = vpack.c.bf16 %v511, %v511
      %v544 = vpack.c.bf16 %v512, %v512
      %v545 = vpack.c.bf16 %v513, %v513
      %v546 = vpack.c.bf16 %v514, %v514
      %vm547 = vcmask 519168
      %548 = vst.msk [vmem:[%s172] sm:$0xf] %vm547, %v515
      %549 = vst.msk [vmem:[%s172 + $0x4] sm:$0xf] %vm547, %v516
      %550 = vst.msk [vmem:[%s172 + $0x8] sm:$0xf] %vm547, %v517
      %551 = vst.msk [vmem:[%s172 + $0xc] sm:$0xf] %vm547, %v518
      %552 = vst.msk [vmem:[%s172 + $0x10] sm:$0xf] %vm547, %v519
      %553 = vst.msk [vmem:[%s172 + $0x14] sm:$0xf] %vm547, %v520
      %554 = vst.msk [vmem:[%s172 + $0x18] sm:$0xf] %vm547, %v521
      %555 = vst.msk [vmem:[%s172 + $0x1c] sm:$0xf] %vm547, %v522
      %556 = vst.msk [vmem:[%s172 + $0x20] sm:$0xf] %vm547, %v523
      %557 = vst.msk [vmem:[%s172 + $0x24] sm:$0xf] %vm547, %v524
      %558 = vst.msk [vmem:[%s172 + $0x28] sm:$0xf] %vm547, %v525
      %559 = vst.msk [vmem:[%s172 + $0x2c] sm:$0xf] %vm547, %v526
      %560 = vst.msk [vmem:[%s172 + $0x30] sm:$0xf] %vm547, %v527
      %561 = vst.msk [vmem:[%s172 + $0x34] sm:$0xf] %vm547, %v528
      %562 = vst.msk [vmem:[%s172 + $0x38] sm:$0xf] %vm547, %v529
      %563 = vst.msk [vmem:[%s172 + $0x3c] sm:$0xf] %vm547, %v530
      %564 = vst.msk [vmem:[%s172 + $0x40] sm:$0xf] %vm547, %v531
      %565 = vst.msk [vmem:[%s172 + $0x44] sm:$0xf] %vm547, %v532
      %566 = vst.msk [vmem:[%s172 + $0x48] sm:$0xf] %vm547, %v533
      %567 = vst.msk [vmem:[%s172 + $0x4c] sm:$0xf] %vm547, %v534
      %568 = vst.msk [vmem:[%s172 + $0x50] sm:$0xf] %vm547, %v535
      %569 = vst.msk [vmem:[%s172 + $0x54] sm:$0xf] %vm547, %v536
      %570 = vst.msk [vmem:[%s172 + $0x58] sm:$0xf] %vm547, %v537
      %571 = vst.msk [vmem:[%s172 + $0x5c] sm:$0xf] %vm547, %v538
      %572 = vst.msk [vmem:[%s172 + $0x60] sm:$0xf] %vm547, %v539
      %573 = vst.msk [vmem:[%s172 + $0x64] sm:$0xf] %vm547, %v540
      %574 = vst.msk [vmem:[%s172 + $0x68] sm:$0xf] %vm547, %v541
      %575 = vst.msk [vmem:[%s172 + $0x6c] sm:$0xf] %vm547, %v542
      %576 = vst.msk [vmem:[%s172 + $0x70] sm:$0xf] %vm547, %v543
      %577 = vst.msk [vmem:[%s172 + $0x74] sm:$0xf] %vm547, %v544
      %578 = vst.msk [vmem:[%s172 + $0x78] sm:$0xf] %vm547, %v545
      %579 = vst.msk [vmem:[%s172 + $0x7c] sm:$0xf] %vm547, %v546
      %s580 = smul.u32 32, %s14
      %p581 = scmp.lt.s32.totalorder %s580, 255
      %s582 = scalar_select %p581, %s580, 255
      %s583 = smul.addr %s582, 4
      %s584 = scalar_lea.vmem %s3, %s583
      // Predicated region
      $region33: #{deep_cnn0_forward.5} parent=31 // pred_check
        %p585 = pneg %p100
      $region34: #{deep_cnn0_forward.5} parent=31 // pred_check_branch
        %587 = sbr.rel (%p585) target = $region36
      $region35: #{deep_cnn0_forward.5} parent=31 // pred_region
        %s588 = smul.u32 32, %s14
      $region36: #{deep_cnn0_forward.5} parent=31 // pred_fallthru
        _
    $region32: #{deep_cnn0_forward.5} parent=5 // pred_fallthru
      _
    %p589 = scmp.le.s32.totalorder 2, %s9
    // Predicated region
    $region37: #{deep_cnn0_forward.5} parent=5 // pred_check
      %p590 = pneg %p589
    $region38: #{deep_cnn0_forward.5} parent=5 // pred_check_branch
      %592 = sbr.rel (%p590) target = $region40
    $region39: #{deep_cnn0_forward.5} parent=5 // pred_region
      %s593 = ssub.s32 %s9, 2
      // Predicated region
      $region41: #{deep_cnn0_forward.5} parent=39 // pred_check
        %p594 = pneg %p106
      $region42: #{deep_cnn0_forward.5} parent=39 // pred_check_branch
        %596 = sbr.rel (%p594) target = $region44
      $region43: #{deep_cnn0_forward.5} parent=39 // pred_region
        %s597 = smul.u32 32, %s15
        %p598 = scmp.lt.s32.totalorder %s597, 255
        %s599 = scalar_select %p598, %s597, 255
        %s600 = smul.addr %s599, 4
        %s601 = scalar_lea.vmem %s3, %s600
      $region44: #{deep_cnn0_forward.5} parent=39 // pred_fallthru
        _
    $region40: #{deep_cnn0_forward.5} parent=5 // pred_fallthru
      _
  $region6: #{deep_cnn0_forward.5} parent=0 // loop_footer
    %s13 = sadd.s32 1, %s9
  $region7: #{deep_cnn0_forward.5} parent=0 // loop_footer_branch
    %8 = sbr.rel target = $region3
  $region8: #{deep_cnn0_forward.5} parent=0 // loop_exit
    _

// kernel: deep_cnn0_forward.6
$region0: #{deep_cnn0_forward.6}
  #allocation0 [shape = 'u32[]', space=smem, size = 0x4, offset = 0x4, fixed_abs, tag = 'smem constant byte address 0x4 - core index']
  #allocation1 [shape = 'u32[72,128]{1,0:T(1,128)}', space=vmem, size = 0x9000, scoped, tag = 'internal scratch']
  %s0 = inlined_call_operand.vmem [shape: bf16[512,576], index: 0, kind: input, shape index: {}]
  %s1 = inlined_call_operand.vmem [shape: bf16[576,128], index: 1, kind: input, shape index: {}]
  %s2 = inlined_call_operand.vmem [shape: f32[1,128], index: 2, kind: input, shape index: {}]
  %s3 = inlined_call_operand.vmem [shape: bf16[512,128], index: 3, kind: output, shape index: {}]
  %s4 = sld [smem:[#allocation0]]
  $region45: #{deep_cnn0_forward.6} parent=0
    _
  %s6 = ssub.s32 1, %s4
  %s7 = scalar_select 0, %s6, %s4
  loop: start=0, step=1, limit=4
  $region2: #{deep_cnn0_forward.6} parent=0 // loop_pre_header
    _
  $region3: #{deep_cnn0_forward.6} parent=0 // loop_header
    %s9 = sphi 0, %s13
    %p10 = scmp.ge.s32.totalorder %s9, 4
    %s19 = sphi 0, %s21
    %s22 = sphi 0, %s19
    %s23 = sphi 0, %s22
    %s39 = sphi 0, %s23
    %s43 = sphi 0, %s43
    %s45 = sphi 0, %s43
    %s46 = sphi 0, %s45
    %s60 = sphi 0, %s46
    %s64 = sphi 0, %s64
    %s66 = sphi 0, %s64
    %s67 = sphi 0, %s66
    %s81 = sphi 0, %s67
    %s87 = sphi 0, %s89
    %s90 = sphi 0, %s87
    %s91 = sphi 0, %s90
    %s107 = sphi 0, %s91
  $region4: #{deep_cnn0_forward.6} parent=0 // loop_header_branch
    %12 = sbr.rel (%p10) target = $region8
  $region5: #{deep_cnn0_forward.6} parent=0 // loop_body
    %s14 = ssub.s32 %s9, 1
    %s15 = ssub.s32 %s9, 2
    %s16 = sadd.s32 %s9, 1
    %s17 = ssub.s32 %s9, %s16
    %p18 = scmp.eq.s32.totalorder %s17, 0
    %s20 = sadd.s32 %s19, 1
    %s21 = scalar_select %p18, %s19, %s20
    %p24 = pneg %p18
    %p25 = scmp.eq.s32.totalorder %s9, 1
    %p26 = por %p24, %p25
    %p27 = scmp.ne.s32.totalorder %s19, %s22
    %p28 = scmp.eq.s32.totalorder %s9, 0
    %p29 = por %p27, %p28
    %p30 = scmp.ne.s32.totalorder %s19, %s22
    %p31 = scmp.eq.s32.totalorder %s14, 1
    %p32 = por %p30, %p31
    %p33 = scmp.ne.s32.totalorder %s22, %s23
    %p34 = scmp.eq.s32.totalorder %s14, 0
    %p35 = por %p33, %p34
    %p36 = scmp.ne.s32.totalorder %s22, %s23
    %p37 = scmp.eq.s32.totalorder %s15, 1
    %p38 = por %p36, %p37
    %p40 = scmp.ne.s32.totalorder %s23, %s39
    %p41 = scmp.eq.s32.totalorder %s15, 0
    %p42 = por %p40, %p41
    %s44 = sadd.s32 %s43, 1
    %p47 = scmp.eq.s32.totalorder %s9, 1
    %p48 = scmp.ne.s32.totalorder %s43, %s45
    %p49 = scmp.eq.s32.totalorder %s9, 0
    %p50 = por %p48, %p49
    %p51 = scmp.ne.s32.totalorder %s43, %s45
    %p52 = scmp.eq.s32.totalorder %s14, 1
    %p53 = por %p51, %p52
    %p54 = scmp.ne.s32.totalorder %s45, %s46
    %p55 = scmp.eq.s32.totalorder %s14, 0
    %p56 = por %p54, %p55
    %p57 = scmp.ne.s32.totalorder %s45, %s46
    %p58 = scmp.eq.s32.totalorder %s15, 1
    %p59 = por %p57, %p58
    %p61 = scmp.ne.s32.totalorder %s46, %s60
    %p62 = scmp.eq.s32.totalorder %s15, 0
    %p63 = por %p61, %p62
    %s65 = sadd.s32 %s64, 1
    %p68 = scmp.eq.s32.totalorder %s9, 1
    %p69 = scmp.ne.s32.totalorder %s64, %s66
    %p70 = scmp.eq.s32.totalorder %s9, 0
    %p71 = por %p69, %p70
    %p72 = scmp.ne.s32.totalorder %s64, %s66
    %p73 = scmp.eq.s32.totalorder %s14, 1
    %p74 = por %p72, %p73
    %p75 = scmp.ne.s32.totalorder %s66, %s67
    %p76 = scmp.eq.s32.totalorder %s14, 0
    %p77 = por %p75, %p76
    %p78 = scmp.ne.s32.totalorder %s66, %s67
    %p79 = scmp.eq.s32.totalorder %s15, 1
    %p80 = por %p78, %p79
    %p82 = scmp.ne.s32.totalorder %s67, %s81
    %p83 = scmp.eq.s32.totalorder %s15, 0
    %p84 = por %p82, %p83
    %s85 = ssub.s32 %s9, %s16
    %p86 = scmp.eq.s32.totalorder %s85, 0
    %s88 = sadd.s32 %s87, 1
    %s89 = scalar_select %p86, %s87, %s88
    %p92 = pneg %p86
    %p93 = scmp.eq.s32.totalorder %s9, 1
    %p94 = por %p92, %p93
    %p95 = scmp.ne.s32.totalorder %s87, %s90
    %p96 = scmp.eq.s32.totalorder %s9, 0
    %p97 = por %p95, %p96
    %p98 = scmp.ne.s32.totalorder %s87, %s90
    %p99 = scmp.eq.s32.totalorder %s14, 1
    %p100 = por %p98, %p99
    %p101 = scmp.ne.s32.totalorder %s90, %s91
    %p102 = scmp.eq.s32.totalorder %s14, 0
    %p103 = por %p101, %p102
    %p104 = scmp.ne.s32.totalorder %s90, %s91
    %p105 = scmp.eq.s32.totalorder %s15, 1
    %p106 = por %p104, %p105
    %p108 = scmp.ne.s32.totalorder %s91, %s107
    %p109 = scmp.eq.s32.totalorder %s15, 0
    %p110 = por %p108, %p109
    %p111 = scmp.le.s32.totalorder 1, %s9
    %p112 = scmp.lt.s32.totalorder %s9, 3
    %p113 = pnand %p111, %p112
    %p114 = pneg %p113
    // Predicated region
    $region9: #{deep_cnn0_forward.6} parent=5 // pred_check
      _
    $region10: #{deep_cnn0_forward.6} parent=5 // pred_check_branch
      %116 = sbr.rel (%p113) target = $region12
    $region11: #{deep_cnn0_forward.6} parent=5 // pred_region
      %s117 = ssub.s32 %s9, 1
      // Predicated region
      $region13: #{deep_cnn0_forward.6} parent=11 // pred_check
        %p118 = pneg %p56
      $region14: #{deep_cnn0_forward.6} parent=11 // pred_check_branch
        %120 = sbr.rel (%p118) target = $region16
      $region15: #{deep_cnn0_forward.6} parent=11 // pred_region
        _
      $region16: #{deep_cnn0_forward.6} parent=11 // pred_fallthru
        _
      // Predicated region
      $region17: #{deep_cnn0_forward.6} parent=11 // pred_check
        %p121 = pneg %p77
      $region18: #{deep_cnn0_forward.6} parent=11 // pred_check_branch
        %123 = sbr.rel (%p121) target = $region20
      $region19: #{deep_cnn0_forward.6} parent=11 // pred_region
        _
      $region20: #{deep_cnn0_forward.6} parent=11 // pred_fallthru
        _
    $region12: #{deep_cnn0_forward.6} parent=5 // pred_fallthru
      _
    %p124 = scmp.lt.s32.totalorder %s9, 2
    // Predicated region
    $region21: #{deep_cnn0_forward.6} parent=5 // pred_check
      %p125 = pneg %p124
    $region22: #{deep_cnn0_forward.6} parent=5 // pred_check_branch
      %127 = sbr.rel (%p125) target = $region24
    $region23: #{deep_cnn0_forward.6} parent=5 // pred_region
      // Predicated region
      $region25: #{deep_cnn0_forward.6} parent=23 // pred_check
        %p128 = pneg %p29
      $region26: #{deep_cnn0_forward.6} parent=23 // pred_check_branch
        %130 = sbr.rel (%p128) target = $region28
      $region27: #{deep_cnn0_forward.6} parent=23 // pred_region
        %s131 = smul.u32 32, %s9
        %p132 = scmp.lt.s32.totalorder %s131, 63
        %s133 = scalar_select %p132, %s131, 63
        %s134 = smul.addr %s133, 5
        %s135 = smul.addr %s134, 4
        %s136 = scalar_lea.vmem %s0, %s135
        %s137 = smul.u32 32, %s9
      $region28: #{deep_cnn0_forward.6} parent=23 // pred_fallthru
        _
    $region24: #{deep_cnn0_forward.6} parent=5 // pred_fallthru
      _
    %p138 = scmp.le.s32.totalorder 1, %s9
    %p139 = scmp.lt.s32.totalorder %s9, 3
    %p140 = pnand %p138, %p139
    %p141 = pneg %p140
    // Predicated region
    $region29: #{deep_cnn0_forward.6} parent=5 // pred_check
      _
    $region30: #{deep_cnn0_forward.6} parent=5 // pred_check_branch
      %143 = sbr.rel (%p140) target = $region32
    $region31: #{deep_cnn0_forward.6} parent=5 // pred_region
      %s144 = ssub.s32 %s9, 1
      %s145 = smul.u32 32, %s14
      %p146 = scmp.lt.s32.totalorder %s145, 63
      %s147 = scalar_select %p146, %s145, 63
      %s148 = smul.addr %s147, 5
      %s149 = smul.addr %s148, 4
      %s150 = scalar_lea.vmem %s0, %s149
      %p151 = pneg %p35
      %p152 = pneg %p32
      %p153 = pneg %p56
      %p154 = pneg %p53
      %p155 = pneg %p77
      %p156 = pneg %p74
      %p157 = pneg %p103
      %p158 = pneg %p100
      %s159 = smul.u32 32, %s14
      %p160 = scmp.lt.s32.totalorder %s159, 63
      %s161 = scalar_select %p160, %s159, 63
      %s162 = smul.addr %s161, 4
      %s163 = scalar_lea.vmem %s3, %s162
      %s164 = smul.u32 32, %s14
      %p165 = scmp.lt.s32.totalorder %s164, 63
      %s166 = scalar_select %p165, %s164, 63
      %s167 = smul.addr %s166, 5
      %s168 = smul.addr %s167, 4
      %s169 = scalar_lea.vmem %s0, %s168
      %s170 = smul.u32 32, %s14
      %s171 = smul.u32 32, %s14
      %p172 = scmp.lt.s32.totalorder %s171, 63
      %s173 = scalar_select %p172, %s171, 63
      %s174 = smul.addr %s173, 4
      %s175 = scalar_lea.vmem %s3, %s174
      %s176 = smul.u32 32, %s14
      %v178 = vld [vmem:[%s169] sm:$0xff]
      %v179 = vld [vmem:[%s169 + $0x8] sm:$0xff]
      %v180 = vld [vmem:[%s169 + $0x10] sm:$0xf]
      %v181 = vld [vmem:[%s169 + $0x14] sm:$0xff]
      %v182 = vld [vmem:[%s169 + $0x1c] sm:$0xff]
      %v183 = vld [vmem:[%s169 + $0x24] sm:$0xf]
      %v184 = vld [vmem:[%s169 + $0x28] sm:$0xff]
      %v185 = vld [vmem:[%s169 + $0x30] sm:$0xff]
      %v186 = vld [vmem:[%s169 + $0x38] sm:$0xf]
      %v187 = vld [vmem:[%s169 + $0x3c] sm:$0xff]
      %v188 = vld [vmem:[%s169 + $0x44] sm:$0xff]
      %v189 = vld [vmem:[%s169 + $0x4c] sm:$0xf]
      %v190 = vld [vmem:[%s169 + $0x50] sm:$0xff]
      %v191 = vld [vmem:[%s169 + $0x58] sm:$0xff]
      %v192 = vld [vmem:[%s169 + $0x60] sm:$0xf]
      %v193 = vld [vmem:[%s169 + $0x64] sm:$0xff]
      %v194 = vld [vmem:[%s169 + $0x6c] sm:$0xff]
      %v195 = vld [vmem:[%s169 + $0x74] sm:$0xf]
      %v196 = vld [vmem:[%s169 + $0x78] sm:$0xff]
      %v197 = vld [vmem:[%s169 + $0x80] sm:$0xff]
      %v198 = vld [vmem:[%s169 + $0x88] sm:$0xf]
      %v199 = vld [vmem:[%s169 + $0x8c] sm:$0xff]
      %v200 = vld [vmem:[%s169 + $0x94] sm:$0xff]
      %v201 = vld [vmem:[%s169 + $0x9c] sm:$0xf]
      %v202 = vld [vmem:[%s169 + $0xa0] sm:$0xff]
      %v203 = vld [vmem:[%s169 + $0xa8] sm:$0xff]
      %v204 = vld [vmem:[%s169 + $0xb0] sm:$0xf]
      %v205 = vld [vmem:[%s169 + $0xb4] sm:$0xff]
      %v206 = vld [vmem:[%s169 + $0xbc] sm:$0xff]
      %v207 = vld [vmem:[%s169 + $0xc4] sm:$0xf]
      %v208 = vld [vmem:[%s169 + $0xc8] sm:$0xff]
      %v209 = vld [vmem:[%s169 + $0xd0] sm:$0xff]
      %v210 = vld [vmem:[%s169 + $0xd8] sm:$0xf]
      %v211 = vld [vmem:[%s169 + $0xdc] sm:$0xff]
      %v212 = vld [vmem:[%s169 + $0xe4] sm:$0xff]
      %v213 = vld [vmem:[%s169 + $0xec] sm:$0xf]
      %v214 = vld [vmem:[%s169 + $0xf0] sm:$0xff]
      %v215 = vld [vmem:[%s169 + $0xf8] sm:$0xff]
      %v216 = vld [vmem:[%s169 + $0x100] sm:$0xf]
      %v217 = vld [vmem:[%s169 + $0x104] sm:$0xff]
      %v218 = vld [vmem:[%s169 + $0x10c] sm:$0xff]
      %v219 = vld [vmem:[%s169 + $0x114] sm:$0xf]
      %v220 = vld [vmem:[%s169 + $0x118] sm:$0xff]
      %v221 = vld [vmem:[%s169 + $0x120] sm:$0xff]
      %v222 = vld [vmem:[%s169 + $0x128] sm:$0xf]
      %v223 = vld [vmem:[%s169 + $0x12c] sm:$0xff]
      %v224 = vld [vmem:[%s169 + $0x134] sm:$0xff]
      %v225 = vld [vmem:[%s169 + $0x13c] sm:$0xf]
      %v226 = vld [vmem:[%s169 + $0x140] sm:$0xff]
      %v227 = vld [vmem:[%s169 + $0x148] sm:$0xff]
      %v228 = vld [vmem:[%s169 + $0x150] sm:$0xf]
      %v229 = vld [vmem:[%s169 + $0x154] sm:$0xff]
      %v230 = vld [vmem:[%s169 + $0x15c] sm:$0xff]
      %v231 = vld [vmem:[%s169 + $0x164] sm:$0xf]
      %v232 = vld [vmem:[%s169 + $0x168] sm:$0xff]
      %v233 = vld [vmem:[%s169 + $0x170] sm:$0xff]
      %v234 = vld [vmem:[%s169 + $0x178] sm:$0xf]
      %v235 = vld [vmem:[%s169 + $0x17c] sm:$0xff]
      %v236 = vld [vmem:[%s169 + $0x184] sm:$0xff]
      %v237 = vld [vmem:[%s169 + $0x18c] sm:$0xf]
      %v238 = vld [vmem:[%s169 + $0x190] sm:$0xff]
      %v239 = vld [vmem:[%s169 + $0x198] sm:$0xff]
      %v240 = vld [vmem:[%s169 + $0x1a0] sm:$0xf]
      %v241 = vld [vmem:[%s169 + $0x1a4] sm:$0xff]
      %v242 = vld [vmem:[%s169 + $0x1ac] sm:$0xff]
      %v243 = vld [vmem:[%s169 + $0x1b4] sm:$0xf]
      %v244 = vld [vmem:[%s169 + $0x1b8] sm:$0xff]
      %v245 = vld [vmem:[%s169 + $0x1c0] sm:$0xff]
      %v246 = vld [vmem:[%s169 + $0x1c8] sm:$0xf]
      %v247 = vld [vmem:[%s169 + $0x1cc] sm:$0xff]
      %v248 = vld [vmem:[%s169 + $0x1d4] sm:$0xff]
      %v249 = vld [vmem:[%s169 + $0x1dc] sm:$0xf]
      %v250 = vld [vmem:[%s169 + $0x1e0] sm:$0xff]
      %v251 = vld [vmem:[%s169 + $0x1e8] sm:$0xff]
      %v252 = vld [vmem:[%s169 + $0x1f0] sm:$0xf]
      %v253 = vld [vmem:[%s169 + $0x1f4] sm:$0xff]
      %v254 = vld [vmem:[%s169 + $0x1fc] sm:$0xff]
      %v255 = vld [vmem:[%s169 + $0x204] sm:$0xf]
      %v256 = vld [vmem:[%s169 + $0x208] sm:$0xff]
      %v257 = vld [vmem:[%s169 + $0x210] sm:$0xff]
      %v258 = vld [vmem:[%s169 + $0x218] sm:$0xf]
      %v259 = vld [vmem:[%s169 + $0x21c] sm:$0xff]
      %v260 = vld [vmem:[%s169 + $0x224] sm:$0xff]
      %v261 = vld [vmem:[%s169 + $0x22c] sm:$0xf]
      %v262 = vld [vmem:[%s169 + $0x230] sm:$0xff]
      %v263 = vld [vmem:[%s169 + $0x238] sm:$0xff]
      %v264 = vld [vmem:[%s169 + $0x240] sm:$0xf]
      %v265 = vld [vmem:[%s169 + $0x244] sm:$0xff]
      %v266 = vld [vmem:[%s169 + $0x24c] sm:$0xff]
      %v267 = vld [vmem:[%s169 + $0x254] sm:$0xf]
      %v268 = vld [vmem:[%s169 + $0x258] sm:$0xff]
      %v269 = vld [vmem:[%s169 + $0x260] sm:$0xff]
      %v270 = vld [vmem:[%s169 + $0x268] sm:$0xf]
      %v271 = vld [vmem:[%s169 + $0x26c] sm:$0xff]
      %v272 = vld [vmem:[%s169 + $0x274] sm:$0xff]
      %v273 = vld [vmem:[%s169 + $0x27c] sm:$0xf]
      %v274 = vld [vmem:[%s1] sm:$0xf]
      %v275 = vld [vmem:[%s1 + $0x4] sm:$0xf]
      %v276 = vld [vmem:[%s1 + $0x8] sm:$0xf]
      %v277 = vld [vmem:[%s1 + $0xc] sm:$0xf]
      %v278 = vld [vmem:[%s1 + $0x10] sm:$0xf]
      %v279 = vld [vmem:[%s1 + $0x14] sm:$0xf]
      %v280 = vld [vmem:[%s1 + $0x18] sm:$0xf]
      %v281 = vld [vmem:[%s1 + $0x1c] sm:$0xf]
      %v282 = vld [vmem:[%s1 + $0x20] sm:$0xf]
      %v283 = vld [vmem:[%s1 + $0x24] sm:$0xf]
      %v284 = vld [vmem:[%s1 + $0x28] sm:$0xf]
      %v285 = vld [vmem:[%s1 + $0x2c] sm:$0xf]
      %v286 = vld [vmem:[%s1 + $0x30] sm:$0xf]
      %v287 = vld [vmem:[%s1 + $0x34] sm:$0xf]
      %v288 = vld [vmem:[%s1 + $0x38] sm:$0xf]
      %v289 = vld [vmem:[%s1 + $0x3c] sm:$0xf]
      %v290 = vld [vmem:[%s1 + $0x40] sm:$0xf]
      %v291 = vld [vmem:[%s1 + $0x44] sm:$0xf]
      %v292 = vld [vmem:[%s1 + $0x48] sm:$0xf]
      %v293 = vld [vmem:[%s1 + $0x4c] sm:$0xf]
      %v294 = vld [vmem:[%s1 + $0x50] sm:$0xf]
      %v295 = vld [vmem:[%s1 + $0x54] sm:$0xf]
      %v296 = vld [vmem:[%s1 + $0x58] sm:$0xf]
      %v297 = vld [vmem:[%s1 + $0x5c] sm:$0xf]
      %v298 = vld [vmem:[%s1 + $0x60] sm:$0xf]
      %v299 = vld [vmem:[%s1 + $0x64] sm:$0xf]
      %v300 = vld [vmem:[%s1 + $0x68] sm:$0xf]
      %v301 = vld [vmem:[%s1 + $0x6c] sm:$0xf]
      %v302 = vld [vmem:[%s1 + $0x70] sm:$0xf]
      %v303 = vld [vmem:[%s1 + $0x74] sm:$0xf]
      %v304 = vld [vmem:[%s1 + $0x78] sm:$0xf]
      %v305 = vld [vmem:[%s1 + $0x7c] sm:$0xf]
      %v306 = vld [vmem:[%s1 + $0x80] sm:$0xf]
      %v307 = vld [vmem:[%s1 + $0x84] sm:$0xf]
      %v308 = vld [vmem:[%s1 + $0x88] sm:$0xf]
      %v309 = vld [vmem:[%s1 + $0x8c] sm:$0xf]
      %v310 = vld [vmem:[%s1 + $0x90] sm:$0xf]
      %v311 = vld [vmem:[%s1 + $0x94] sm:$0xf]
      %v312 = vld [vmem:[%s1 + $0x98] sm:$0xf]
      %v313 = vld [vmem:[%s1 + $0x9c] sm:$0xf]
      %v314 = vld [vmem:[%s1 + $0xa0] sm:$0xf]
      %v315 = vld [vmem:[%s1 + $0xa4] sm:$0xf]
      %v316 = vld [vmem:[%s1 + $0xa8] sm:$0xf]
      %v317 = vld [vmem:[%s1 + $0xac] sm:$0xf]
      %v318 = vld [vmem:[%s1 + $0xb0] sm:$0xf]
      %v319 = vld [vmem:[%s1 + $0xb4] sm:$0xf]
      %v320 = vld [vmem:[%s1 + $0xb8] sm:$0xf]
      %v321 = vld [vmem:[%s1 + $0xbc] sm:$0xf]
      %v322 = vld [vmem:[%s1 + $0xc0] sm:$0xf]
      %v323 = vld [vmem:[%s1 + $0xc4] sm:$0xf]
      %v324 = vld [vmem:[%s1 + $0xc8] sm:$0xf]
      %v325 = vld [vmem:[%s1 + $0xcc] sm:$0xf]
      %v326 = vld [vmem:[%s1 + $0xd0] sm:$0xf]
      %v327 = vld [vmem:[%s1 + $0xd4] sm:$0xf]
      %v328 = vld [vmem:[%s1 + $0xd8] sm:$0xf]
      %v329 = vld [vmem:[%s1 + $0xdc] sm:$0xf]
      %v330 = vld [vmem:[%s1 + $0xe0] sm:$0xf]
      %v331 = vld [vmem:[%s1 + $0xe4] sm:$0xf]
      %v332 = vld [vmem:[%s1 + $0xe8] sm:$0xf]
      %v333 = vld [vmem:[%s1 + $0xec] sm:$0xf]
      %v334 = vld [vmem:[%s1 + $0xf0] sm:$0xf]
      %v335 = vld [vmem:[%s1 + $0xf4] sm:$0xf]
      %v336 = vld [vmem:[%s1 + $0xf8] sm:$0xf]
      %v337 = vld [vmem:[%s1 + $0xfc] sm:$0xf]
      %v338 = vld [vmem:[%s1 + $0x100] sm:$0xf]
      %v339 = vld [vmem:[%s1 + $0x104] sm:$0xf]
      %v340 = vld [vmem:[%s1 + $0x108] sm:$0xf]
      %v341 = vld [vmem:[%s1 + $0x10c] sm:$0xf]
      %v342 = vld [vmem:[%s1 + $0x110] sm:$0xf]
      %v343 = vld [vmem:[%s1 + $0x114] sm:$0xf]
      %v344 = vld [vmem:[%s1 + $0x118] sm:$0xf]
      %v345 = vld [vmem:[%s1 + $0x11c] sm:$0xf]
      %v346 = vld [vmem:[%s2] sm:$0x1]
      %v348 = vperm.slane %v346, 0
      %v446 = vunpack.c.l.b16 %v178
      %v447 = vunpack.c.h.b16 %v178
      %v448 = vunpack.c.l.b16 %v179
      %v449 = vunpack.c.h.b16 %v179
      %v450 = vunpack.c.l.b16 %v180
      %v451 = vunpack.c.l.b16 %v181
      %v452 = vunpack.c.h.b16 %v181
      %v453 = vunpack.c.l.b16 %v182
      %v454 = vunpack.c.h.b16 %v182
      %v455 = vunpack.c.l.b16 %v183
      %v456 = vunpack.c.l.b16 %v184
      %v457 = vunpack.c.h.b16 %v184
      %v458 = vunpack.c.l.b16 %v185
      %v459 = vunpack.c.h.b16 %v185
      %v460 = vunpack.c.l.b16 %v186
      %v461 = vunpack.c.l.b16 %v187
      %v462 = vunpack.c.h.b16 %v187
      %v463 = vunpack.c.l.b16 %v188
      %v464 = vunpack.c.h.b16 %v188
      %v465 = vunpack.c.l.b16 %v189
      %v466 = vunpack.c.l.b16 %v190
      %v467 = vunpack.c.h.b16 %v190
      %v468 = vunpack.c.l.b16 %v191
      %v469 = vunpack.c.h.b16 %v191
      %v470 = vunpack.c.l.b16 %v192
      %v471 = vunpack.c.l.b16 %v193
      %v472 = vunpack.c.h.b16 %v193
      %v473 = vunpack.c.l.b16 %v194
      %v474 = vunpack.c.h.b16 %v194
      %v475 = vunpack.c.l.b16 %v195
      %v476 = vunpack.c.l.b16 %v196
      %v477 = vunpack.c.h.b16 %v196
      %v478 = vunpack.c.l.b16 %v197
      %v479 = vunpack.c.h.b16 %v197
      %v480 = vunpack.c.l.b16 %v198
      %v481 = vunpack.c.l.b16 %v199
      %v482 = vunpack.c.h.b16 %v199
      %v483 = vunpack.c.l.b16 %v200
      %v484 = vunpack.c.h.b16 %v200
      %v485 = vunpack.c.l.b16 %v201
      %v486 = vunpack.c.l.b16 %v202
      %v487 = vunpack.c.h.b16 %v202
      %v488 = vunpack.c.l.b16 %v203
      %v489 = vunpack.c.h.b16 %v203
      %v490 = vunpack.c.l.b16 %v204
      %v491 = vunpack.c.l.b16 %v205
      %v492 = vunpack.c.h.b16 %v205
      %v493 = vunpack.c.l.b16 %v206
      %v494 = vunpack.c.h.b16 %v206
      %v495 = vunpack.c.l.b16 %v207
      %v496 = vunpack.c.l.b16 %v208
      %v497 = vunpack.c.h.b16 %v208
      %v498 = vunpack.c.l.b16 %v209
      %v499 = vunpack.c.h.b16 %v209
      %v500 = vunpack.c.l.b16 %v210
      %v501 = vunpack.c.l.b16 %v211
      %v502 = vunpack.c.h.b16 %v211
      %v503 = vunpack.c.l.b16 %v212
      %v504 = vunpack.c.h.b16 %v212
      %v505 = vunpack.c.l.b16 %v213
      %v506 = vunpack.c.l.b16 %v214
      %v507 = vunpack.c.h.b16 %v214
      %v508 = vunpack.c.l.b16 %v215
      %v509 = vunpack.c.h.b16 %v215
      %v510 = vunpack.c.l.b16 %v216
      %v511 = vunpack.c.l.b16 %v217
      %v512 = vunpack.c.h.b16 %v217
      %v513 = vunpack.c.l.b16 %v218
      %v514 = vunpack.c.h.b16 %v218
      %v515 = vunpack.c.l.b16 %v219
      %v516 = vunpack.c.l.b16 %v220
      %v517 = vunpack.c.h.b16 %v220
      %v518 = vunpack.c.l.b16 %v221
      %v519 = vunpack.c.h.b16 %v221
      %v520 = vunpack.c.l.b16 %v222
      %v521 = vunpack.c.l.b16 %v223
      %v522 = vunpack.c.h.b16 %v223
      %v523 = vunpack.c.l.b16 %v224
      %v524 = vunpack.c.h.b16 %v224
      %v525 = vunpack.c.l.b16 %v225
      %v526 = vunpack.c.l.b16 %v226
      %v527 = vunpack.c.h.b16 %v226
      %v528 = vunpack.c.l.b16 %v227
      %v529 = vunpack.c.h.b16 %v227
      %v530 = vunpack.c.l.b16 %v228
      %v531 = vunpack.c.l.b16 %v229
      %v532 = vunpack.c.h.b16 %v229
      %v533 = vunpack.c.l.b16 %v230
      %v534 = vunpack.c.h.b16 %v230
      %v535 = vunpack.c.l.b16 %v231
      %v536 = vunpack.c.l.b16 %v232
      %v537 = vunpack.c.h.b16 %v232
      %v538 = vunpack.c.l.b16 %v233
      %v539 = vunpack.c.h.b16 %v233
      %v540 = vunpack.c.l.b16 %v234
      %v541 = vunpack.c.l.b16 %v235
      %v542 = vunpack.c.h.b16 %v235
      %v543 = vunpack.c.l.b16 %v236
      %v544 = vunpack.c.h.b16 %v236
      %v545 = vunpack.c.l.b16 %v237
      %v546 = vunpack.c.l.b16 %v238
      %v547 = vunpack.c.h.b16 %v238
      %v548 = vunpack.c.l.b16 %v239
      %v549 = vunpack.c.h.b16 %v239
      %v550 = vunpack.c.l.b16 %v240
      %v551 = vunpack.c.l.b16 %v241
      %v552 = vunpack.c.h.b16 %v241
      %v553 = vunpack.c.l.b16 %v242
      %v554 = vunpack.c.h.b16 %v242
      %v555 = vunpack.c.l.b16 %v243
      %v556 = vunpack.c.l.b16 %v244
      %v557 = vunpack.c.h.b16 %v244
      %v558 = vunpack.c.l.b16 %v245
      %v559 = vunpack.c.h.b16 %v245
      %v560 = vunpack.c.l.b16 %v246
      %v561 = vunpack.c.l.b16 %v247
      %v562 = vunpack.c.h.b16 %v247
      %v563 = vunpack.c.l.b16 %v248
      %v564 = vunpack.c.h.b16 %v248
      %v565 = vunpack.c.l.b16 %v249
      %v566 = vunpack.c.l.b16 %v250
      %v567 = vunpack.c.h.b16 %v250
      %v568 = vunpack.c.l.b16 %v251
      %v569 = vunpack.c.h.b16 %v251
      %v570 = vunpack.c.l.b16 %v252
      %v571 = vunpack.c.l.b16 %v253
      %v572 = vunpack.c.h.b16 %v253
      %v573 = vunpack.c.l.b16 %v254
      %v574 = vunpack.c.h.b16 %v254
      %v575 = vunpack.c.l.b16 %v255
      %v576 = vunpack.c.l.b16 %v256
      %v577 = vunpack.c.h.b16 %v256
      %v578 = vunpack.c.l.b16 %v257
      %v579 = vunpack.c.h.b16 %v257
      %v580 = vunpack.c.l.b16 %v258
      %v581 = vunpack.c.l.b16 %v259
      %v582 = vunpack.c.h.b16 %v259
      %v583 = vunpack.c.l.b16 %v260
      %v584 = vunpack.c.h.b16 %v260
      %v585 = vunpack.c.l.b16 %v261
      %v586 = vunpack.c.l.b16 %v262
      %v587 = vunpack.c.h.b16 %v262
      %v588 = vunpack.c.l.b16 %v263
      %v589 = vunpack.c.h.b16 %v263
      %v590 = vunpack.c.l.b16 %v264
      %v591 = vunpack.c.l.b16 %v265
      %v592 = vunpack.c.h.b16 %v265
      %v593 = vunpack.c.l.b16 %v266
      %v594 = vunpack.c.h.b16 %v266
      %v595 = vunpack.c.l.b16 %v267
      %v596 = vunpack.c.l.b16 %v268
      %v597 = vunpack.c.h.b16 %v268
      %v598 = vunpack.c.l.b16 %v269
      %v599 = vunpack.c.h.b16 %v269
      %v600 = vunpack.c.l.b16 %v270
      %v601 = vunpack.c.l.b16 %v271
      %v602 = vunpack.c.h.b16 %v271
      %v603 = vunpack.c.l.b16 %v272
      %v604 = vunpack.c.h.b16 %v272
      %v605 = vunpack.c.l.b16 %v273
      %v606 = vpack.c.b16 %v451, %v446
      %v607 = vpack.c.b16 %v452, %v447
      %v608 = vpack.c.b16 %v453, %v448
      %v609 = vpack.c.b16 %v454, %v449
      %v610 = vpack.c.b16 %v455, %v450
      %v611 = vpack.c.b16 %v461, %v456
      %v612 = vpack.c.b16 %v462, %v457
      %v613 = vpack.c.b16 %v463, %v458
      %v614 = vpack.c.b16 %v464, %v459
      %v615 = vpack.c.b16 %v465, %v460
      %v616 = vpack.c.b16 %v471, %v466
      %v617 = vpack.c.b16 %v472, %v467
      %v618 = vpack.c.b16 %v473, %v468
      %v619 = vpack.c.b16 %v474, %v469
      %v620 = vpack.c.b16 %v475, %v470
      %v621 = vpack.c.b16 %v481, %v476
      %v622 = vpack.c.b16 %v482, %v477
      %v623 = vpack.c.b16 %v483, %v478
      %v624 = vpack.c.b16 %v484, %v479
      %v625 = vpack.c.b16 %v485, %v480
      %v626 = vpack.c.b16 %v491, %v486
      %v627 = vpack.c.b16 %v492, %v487
      %v628 = vpack.c.b16 %v493, %v488
      %v629 = vpack.c.b16 %v494, %v489
      %v630 = vpack.c.b16 %v495, %v490
      %v631 = vpack.c.b16 %v501, %v496
      %v632 = vpack.c.b16 %v502, %v497
      %v633 = vpack.c.b16 %v503, %v498
      %v634 = vpack.c.b16 %v504, %v499
      %v635 = vpack.c.b16 %v505, %v500
      %v636 = vpack.c.b16 %v511, %v506
      %v637 = vpack.c.b16 %v512, %v507
      %v638 = vpack.c.b16 %v513, %v508
      %v639 = vpack.c.b16 %v514, %v509
      %v640 = vpack.c.b16 %v515, %v510
      %v641 = vpack.c.b16 %v521, %v516
      %v642 = vpack.c.b16 %v522, %v517
      %v643 = vpack.c.b16 %v523, %v518
      %v644 = vpack.c.b16 %v524, %v519
      %v645 = vpack.c.b16 %v525, %v520
      %v646 = vpack.c.b16 %v531, %v526
      %v647 = vpack.c.b16 %v532, %v527
      %v648 = vpack.c.b16 %v533, %v528
      %v649 = vpack.c.b16 %v534, %v529
      %v650 = vpack.c.b16 %v535, %v530
      %v651 = vpack.c.b16 %v541, %v536
      %v652 = vpack.c.b16 %v542, %v537
      %v653 = vpack.c.b16 %v543, %v538
      %v654 = vpack.c.b16 %v544, %v539
      %v655 = vpack.c.b16 %v545, %v540
      %v656 = vpack.c.b16 %v551, %v546
      %v657 = vpack.c.b16 %v552, %v547
      %v658 = vpack.c.b16 %v553, %v548
      %v659 = vpack.c.b16 %v554, %v549
      %v660 = vpack.c.b16 %v555, %v550
      %v661 = vpack.c.b16 %v561, %v556
      %v662 = vpack.c.b16 %v562, %v557
      %v663 = vpack.c.b16 %v563, %v558
      %v664 = vpack.c.b16 %v564, %v559
      %v665 = vpack.c.b16 %v565, %v560
      %v666 = vpack.c.b16 %v571, %v566
      %v667 = vpack.c.b16 %v572, %v567
      %v668 = vpack.c.b16 %v573, %v568
      %v669 = vpack.c.b16 %v574, %v569
      %v670 = vpack.c.b16 %v575, %v570
      %v671 = vpack.c.b16 %v581, %v576
      %v672 = vpack.c.b16 %v582, %v577
      %v673 = vpack.c.b16 %v583, %v578
      %v674 = vpack.c.b16 %v584, %v579
      %v675 = vpack.c.b16 %v585, %v580
      %v676 = vpack.c.b16 %v591, %v586
      %v677 = vpack.c.b16 %v592, %v587
      %v678 = vpack.c.b16 %v593, %v588
      %v679 = vpack.c.b16 %v594, %v589
      %v680 = vpack.c.b16 %v595, %v590
      %v681 = vpack.c.b16 %v601, %v596
      %v682 = vpack.c.b16 %v602, %v597
      %v683 = vpack.c.b16 %v603, %v598
      %v684 = vpack.c.b16 %v604, %v599
      %v685 = vpack.c.b16 %v605, %v600
      %v822 = vunpack.c.l.b16 %v274
      %v823 = vunpack.c.l.b16 %v275
      %v824 = vunpack.c.l.b16 %v276
      %v825 = vunpack.c.l.b16 %v277
      %v826 = vunpack.c.l.b16 %v278
      %v827 = vunpack.c.l.b16 %v279
      %v828 = vunpack.c.l.b16 %v280
      %v829 = vunpack.c.l.b16 %v281
      %v830 = vunpack.c.l.b16 %v282
      %v831 = vunpack.c.l.b16 %v283
      %v832 = vunpack.c.l.b16 %v284
      %v833 = vunpack.c.l.b16 %v285
      %v834 = vunpack.c.l.b16 %v286
      %v835 = vunpack.c.l.b16 %v287
      %v836 = vunpack.c.l.b16 %v288
      %v837 = vunpack.c.l.b16 %v289
      %v838 = vunpack.c.l.b16 %v290
      %v839 = vunpack.c.l.b16 %v291
      %v840 = vunpack.c.l.b16 %v292
      %v841 = vunpack.c.l.b16 %v293
      %v842 = vunpack.c.l.b16 %v294
      %v843 = vunpack.c.l.b16 %v295
      %v844 = vunpack.c.l.b16 %v296
      %v845 = vunpack.c.l.b16 %v297
      %v846 = vunpack.c.l.b16 %v298
      %v847 = vunpack.c.l.b16 %v299
      %v848 = vunpack.c.l.b16 %v300
      %v849 = vunpack.c.l.b16 %v301
      %v850 = vunpack.c.l.b16 %v302
      %v851 = vunpack.c.l.b16 %v303
      %v852 = vunpack.c.l.b16 %v304
      %v853 = vunpack.c.l.b16 %v305
      %v854 = vunpack.c.l.b16 %v306
      %v855 = vunpack.c.l.b16 %v307
      %v856 = vunpack.c.l.b16 %v308
      %v857 = vunpack.c.l.b16 %v309
      %v858 = vunpack.c.l.b16 %v310
      %v859 = vunpack.c.l.b16 %v311
      %v860 = vunpack.c.l.b16 %v312
      %v861 = vunpack.c.l.b16 %v313
      %v862 = vunpack.c.l.b16 %v314
      %v863 = vunpack.c.l.b16 %v315
      %v864 = vunpack.c.l.b16 %v316
      %v865 = vunpack.c.l.b16 %v317
      %v866 = vunpack.c.l.b16 %v318
      %v867 = vunpack.c.l.b16 %v319
      %v868 = vunpack.c.l.b16 %v320
      %v869 = vunpack.c.l.b16 %v321
      %v870 = vunpack.c.l.b16 %v322
      %v871 = vunpack.c.l.b16 %v323
      %v872 = vunpack.c.l.b16 %v324
      %v873 = vunpack.c.l.b16 %v325
      %v874 = vunpack.c.l.b16 %v326
      %v875 = vunpack.c.l.b16 %v327
      %v876 = vunpack.c.l.b16 %v328
      %v877 = vunpack.c.l.b16 %v329
      %v878 = vunpack.c.l.b16 %v330
      %v879 = vunpack.c.l.b16 %v331
      %v880 = vunpack.c.l.b16 %v332
      %v881 = vunpack.c.l.b16 %v333
      %v882 = vunpack.c.l.b16 %v334
      %v883 = vunpack.c.l.b16 %v335
      %v884 = vunpack.c.l.b16 %v336
      %v885 = vunpack.c.l.b16 %v337
      %v886 = vunpack.c.l.b16 %v338
      %v887 = vunpack.c.l.b16 %v339
      %v888 = vunpack.c.l.b16 %v340
      %v889 = vunpack.c.l.b16 %v341
      %v890 = vunpack.c.l.b16 %v342
      %v891 = vunpack.c.l.b16 %v343
      %v892 = vunpack.c.l.b16 %v344
      %v893 = vunpack.c.l.b16 %v345
      %v894 = vpack.c.b16 %v823, %v822
      %v895 = vpack.c.b16 %v825, %v824
      %v896 = vpack.c.b16 %v827, %v826
      %v897 = vpack.c.b16 %v829, %v828
      %v898 = vpack.c.b16 %v831, %v830
      %v899 = vpack.c.b16 %v833, %v832
      %v900 = vpack.c.b16 %v835, %v834
      %v901 = vpack.c.b16 %v837, %v836
      %v902 = vpack.c.b16 %v839, %v838
      %v903 = vpack.c.b16 %v841, %v840
      %v904 = vpack.c.b16 %v843, %v842
      %v905 = vpack.c.b16 %v845, %v844
      %v906 = vpack.c.b16 %v847, %v846
      %v907 = vpack.c.b16 %v849, %v848
      %v908 = vpack.c.b16 %v851, %v850
      %v909 = vpack.c.b16 %v853, %v852
      %v910 = vpack.c.b16 %v855, %v854
      %v911 = vpack.c.b16 %v857, %v856
      %v912 = vpack.c.b16 %v859, %v858
      %v913 = vpack.c.b16 %v861, %v860
      %v914 = vpack.c.b16 %v863, %v862
      %v915 = vpack.c.b16 %v865, %v864
      %v916 = vpack.c.b16 %v867, %v866
      %v917 = vpack.c.b16 %v869, %v868
      %v918 = vpack.c.b16 %v871, %v870
      %v919 = vpack.c.b16 %v873, %v872
      %v920 = vpack.c.b16 %v875, %v874
      %v921 = vpack.c.b16 %v877, %v876
      %v922 = vpack.c.b16 %v879, %v878
      %v923 = vpack.c.b16 %v881, %v880
      %v924 = vpack.c.b16 %v883, %v882
      %v925 = vpack.c.b16 %v885, %v884
      %v926 = vpack.c.b16 %v887, %v886
      %v927 = vpack.c.b16 %v889, %v888
      %v928 = vpack.c.b16 %v891, %v890
      %v929 = vpack.c.b16 %v893, %v892
      %vm966 = vcmask 523264
      %v968 = vsel %vm966, %v610, 0
      %v971 = vsel %vm966, %v615, 0
      %v974 = vsel %vm966, %v620, 0
      %v977 = vsel %vm966, %v625, 0
      %v980 = vsel %vm966, %v630, 0
      %v983 = vsel %vm966, %v635, 0
      %v986 = vsel %vm966, %v640, 0
      %v989 = vsel %vm966, %v645, 0
      %v992 = vsel %vm966, %v650, 0
      %v995 = vsel %vm966, %v655, 0
      %v998 = vsel %vm966, %v660, 0
      %v1001 = vsel %vm966, %v665, 0
      %v1004 = vsel %vm966, %v670, 0
      %v1007 = vsel %vm966, %v675, 0
      %v1010 = vsel %vm966, %v680, 0
      %v1013 = vsel %vm966, %v685, 0
      %1015 = vmatpush.bf16.msra.mxu0 %v901
      %1016 = vmatpush.bf16.msra.mxu0 %v900
      %1017 = vmatpush.bf16.msra.mxu0 %v899
      %1018 = vmatpush.bf16.msra.mxu0 %v898
      %1019 = vmatpush.bf16.msra.mxu0 %v897
      %1020 = vmatpush.bf16.msra.mxu0 %v896
      %1021 = vmatpush.bf16.msra.mxu0 %v895
      %1022 = vmatpush.bf16.msra.mxu0 %v894
      %1023 = vmatmul.bf16.gmra.mxu0 %v606
      %v1024 = vpop.f32.mrf.mxu0
      %v1025 = vadd.f32 %v348, %v1024
      %v1026 = vpop.f32.mrf.mxu0
      %v1027 = vadd.f32 %v348, %v1026
      %1028 = vmatmul.bf16.gmra.mxu0 %v611
      %v1029 = vpop.f32.mrf.mxu0
      %v1030 = vadd.f32 %v348, %v1029
      %v1031 = vpop.f32.mrf.mxu0
      %v1032 = vadd.f32 %v348, %v1031
      %1033 = vmatmul.bf16.gmra.mxu0 %v616
      %v1034 = vpop.f32.mrf.mxu0
      %v1035 = vadd.f32 %v348, %v1034
      %v1036 = vpop.f32.mrf.mxu0
      %v1037 = vadd.f32 %v348, %v1036
      %1038 = vmatmul.bf16.gmra.mxu0 %v621
      %v1039 = vpop.f32.mrf.mxu0
      %v1040 = vadd.f32 %v348, %v1039
      %v1041 = vpop.f32.mrf.mxu0
      %v1042 = vadd.f32 %v348, %v1041
      %1043 = vmatmul.bf16.gmra.mxu0 %v626
      %v1044 = vpop.f32.mrf.mxu0
      %v1045 = vadd.f32 %v348, %v1044
      %v1046 = vpop.f32.mrf.mxu0
      %v1047 = vadd.f32 %v348, %v1046
      %1048 = vmatmul.bf16.gmra.mxu0 %v631
      %v1049 = vpop.f32.mrf.mxu0
      %v1050 = vadd.f32 %v348, %v1049
      %v1051 = vpop.f32.mrf.mxu0
      %v1052 = vadd.f32 %v348, %v1051
      %1053 = vmatmul.bf16.gmra.mxu0 %v636
      %v1054 = vpop.f32.mrf.mxu0
      %v1055 = vadd.f32 %v348, %v1054
      %v1056 = vpop.f32.mrf.mxu0
      %v1057 = vadd.f32 %v348, %v1056
      %1058 = vmatmul.bf16.gmra.mxu0 %v641
      %v1059 = vpop.f32.mrf.mxu0
      %v1060 = vadd.f32 %v348, %v1059
      %v1061 = vpop.f32.mrf.mxu0
      %v1062 = vadd.f32 %v348, %v1061
      %1063 = vmatmul.bf16.gmra.mxu0 %v646
      %v1064 = vpop.f32.mrf.mxu0
      %v1065 = vadd.f32 %v348, %v1064
      %v1066 = vpop.f32.mrf.mxu0
      %v1067 = vadd.f32 %v348, %v1066
      %1068 = vmatmul.bf16.gmra.mxu0 %v651
      %v1069 = vpop.f32.mrf.mxu0
      %v1070 = vadd.f32 %v348, %v1069
      %v1071 = vpop.f32.mrf.mxu0
      %v1072 = vadd.f32 %v348, %v1071
      %1073 = vmatmul.bf16.gmra.mxu0 %v656
      %v1074 = vpop.f32.mrf.mxu0
      %v1075 = vadd.f32 %v348, %v1074
      %v1076 = vpop.f32.mrf.mxu0
      %v1077 = vadd.f32 %v348, %v1076
      %1078 = vmatmul.bf16.gmra.mxu0 %v661
      %v1079 = vpop.f32.mrf.mxu0
      %v1080 = vadd.f32 %v348, %v1079
      %v1081 = vpop.f32.mrf.mxu0
      %v1082 = vadd.f32 %v348, %v1081
      %1083 = vmatmul.bf16.gmra.mxu0 %v666
      %v1084 = vpop.f32.mrf.mxu0
      %v1085 = vadd.f32 %v348, %v1084
      %v1086 = vpop.f32.mrf.mxu0
      %v1087 = vadd.f32 %v348, %v1086
      %1088 = vmatmul.bf16.gmra.mxu0 %v671
      %v1089 = vpop.f32.mrf.mxu0
      %v1090 = vadd.f32 %v348, %v1089
      %v1091 = vpop.f32.mrf.mxu0
      %v1092 = vadd.f32 %v348, %v1091
      %1093 = vmatmul.bf16.gmra.mxu0 %v676
      %v1094 = vpop.f32.mrf.mxu0
      %v1095 = vadd.f32 %v348, %v1094
      %v1096 = vpop.f32.mrf.mxu0
      %v1097 = vadd.f32 %v348, %v1096
      %1098 = vmatmul.bf16.gmra.mxu0 %v681
      %v1099 = vpop.f32.mrf.mxu0
      %v1100 = vadd.f32 %v348, %v1099
      %v1101 = vpop.f32.mrf.mxu0
      %v1102 = vadd.f32 %v348, %v1101
      %1103 = vdwg.mxu0
      %1104 = vmatpush.bf16.msra.mxu0 %v909
      %1105 = vmatpush.bf16.msra.mxu0 %v908
      %1106 = vmatpush.bf16.msra.mxu0 %v907
      %1107 = vmatpush.bf16.msra.mxu0 %v906
      %1108 = vmatpush.bf16.msra.mxu0 %v905
      %1109 = vmatpush.bf16.msra.mxu0 %v904
      %1110 = vmatpush.bf16.msra.mxu0 %v903
      %1111 = vmatpush.bf16.msra.mxu0 %v902
      %1112 = vmatmul.bf16.gmra.mxu0 %v607
      %v1113 = vpop.f32.mrf.mxu0
      %v1114 = vadd.f32 %v1025, %v1113
      %v1115 = vpop.f32.mrf.mxu0
      %v1116 = vadd.f32 %v1027, %v1115
      %1117 = vmatmul.bf16.gmra.mxu0 %v612
      %v1118 = vpop.f32.mrf.mxu0
      %v1119 = vadd.f32 %v1030, %v1118
      %v1120 = vpop.f32.mrf.mxu0
      %v1121 = vadd.f32 %v1032, %v1120
      %1122 = vmatmul.bf16.gmra.mxu0 %v617
      %v1123 = vpop.f32.mrf.mxu0
      %v1124 = vadd.f32 %v1035, %v1123
      %v1125 = vpop.f32.mrf.mxu0
      %v1126 = vadd.f32 %v1037, %v1125
      %1127 = vmatmul.bf16.gmra.mxu0 %v622
      %v1128 = vpop.f32.mrf.mxu0
      %v1129 = vadd.f32 %v1040, %v1128
      %v1130 = vpop.f32.mrf.mxu0
      %v1131 = vadd.f32 %v1042, %v1130
      %1132 = vmatmul.bf16.gmra.mxu0 %v627
      %v1133 = vpop.f32.mrf.mxu0
      %v1134 = vadd.f32 %v1045, %v1133
      %v1135 = vpop.f32.mrf.mxu0
      %v1136 = vadd.f32 %v1047, %v1135
      %1137 = vmatmul.bf16.gmra.mxu0 %v632
      %v1138 = vpop.f32.mrf.mxu0
      %v1139 = vadd.f32 %v1050, %v1138
      %v1140 = vpop.f32.mrf.mxu0
      %v1141 = vadd.f32 %v1052, %v1140
      %1142 = vmatmul.bf16.gmra.mxu0 %v637
      %v1143 = vpop.f32.mrf.mxu0
      %v1144 = vadd.f32 %v1055, %v1143
      %v1145 = vpop.f32.mrf.mxu0
      %v1146 = vadd.f32 %v1057, %v1145
      %1147 = vmatmul.bf16.gmra.mxu0 %v642
      %v1148 = vpop.f32.mrf.mxu0
      %v1149 = vadd.f32 %v1060, %v1148
      %v1150 = vpop.f32.mrf.mxu0
      %v1151 = vadd.f32 %v1062, %v1150
      %1152 = vmatmul.bf16.gmra.mxu0 %v647
      %v1153 = vpop.f32.mrf.mxu0
      %v1154 = vadd.f32 %v1065, %v1153
      %v1155 = vpop.f32.mrf.mxu0
      %v1156 = vadd.f32 %v1067, %v1155
      %1157 = vmatmul.bf16.gmra.mxu0 %v652
      %v1158 = vpop.f32.mrf.mxu0
      %v1159 = vadd.f32 %v1070, %v1158
      %v1160 = vpop.f32.mrf.mxu0
      %v1161 = vadd.f32 %v1072, %v1160
      %1162 = vmatmul.bf16.gmra.mxu0 %v657
      %v1163 = vpop.f32.mrf.mxu0
      %v1164 = vadd.f32 %v1075, %v1163
      %v1165 = vpop.f32.mrf.mxu0
      %v1166 = vadd.f32 %v1077, %v1165
      %1167 = vmatmul.bf16.gmra.mxu0 %v662
      %v1168 = vpop.f32.mrf.mxu0
      %v1169 = vadd.f32 %v1080, %v1168
      %v1170 = vpop.f32.mrf.mxu0
      %v1171 = vadd.f32 %v1082, %v1170
      %1172 = vmatmul.bf16.gmra.mxu0 %v667
      %v1173 = vpop.f32.mrf.mxu0
      %v1174 = vadd.f32 %v1085, %v1173
      %v1175 = vpop.f32.mrf.mxu0
      %v1176 = vadd.f32 %v1087, %v1175
      %1177 = vmatmul.bf16.gmra.mxu0 %v672
      %v1178 = vpop.f32.mrf.mxu0
      %v1179 = vadd.f32 %v1090, %v1178
      %v1180 = vpop.f32.mrf.mxu0
      %v1181 = vadd.f32 %v1092, %v1180
      %1182 = vmatmul.bf16.gmra.mxu0 %v677
      %v1183 = vpop.f32.mrf.mxu0
      %v1184 = vadd.f32 %v1095, %v1183
      %v1185 = vpop.f32.mrf.mxu0
      %v1186 = vadd.f32 %v1097, %v1185
      %1187 = vmatmul.bf16.gmra.mxu0 %v682
      %v1188 = vpop.f32.mrf.mxu0
      %v1189 = vadd.f32 %v1100, %v1188
      %v1190 = vpop.f32.mrf.mxu0
      %v1191 = vadd.f32 %v1102, %v1190
      %1192 = vdwg.mxu0
      %1193 = vmatpush.bf16.msra.mxu0 %v917
      %1194 = vmatpush.bf16.msra.mxu0 %v916
      %1195 = vmatpush.bf16.msra.mxu0 %v915
      %1196 = vmatpush.bf16.msra.mxu0 %v914
      %1197 = vmatpush.bf16.msra.mxu0 %v913
      %1198 = vmatpush.bf16.msra.mxu0 %v912
      %1199 = vmatpush.bf16.msra.mxu0 %v911
      %1200 = vmatpush.bf16.msra.mxu0 %v910
      %1201 = vmatmul.bf16.gmra.mxu0 %v608
      %v1202 = vpop.f32.mrf.mxu0
      %v1203 = vadd.f32 %v1114, %v1202
      %v1204 = vpop.f32.mrf.mxu0
      %v1205 = vadd.f32 %v1116, %v1204
      %1206 = vmatmul.bf16.gmra.mxu0 %v613
      %v1207 = vpop.f32.mrf.mxu0
      %v1208 = vadd.f32 %v1119, %v1207
      %v1209 = vpop.f32.mrf.mxu0
      %v1210 = vadd.f32 %v1121, %v1209
      %1211 = vmatmul.bf16.gmra.mxu0 %v618
      %v1212 = vpop.f32.mrf.mxu0
      %v1213 = vadd.f32 %v1124, %v1212
      %v1214 = vpop.f32.mrf.mxu0
      %v1215 = vadd.f32 %v1126, %v1214
      %1216 = vmatmul.bf16.gmra.mxu0 %v623
      %v1217 = vpop.f32.mrf.mxu0
      %v1218 = vadd.f32 %v1129, %v1217
      %v1219 = vpop.f32.mrf.mxu0
      %v1220 = vadd.f32 %v1131, %v1219
      %1221 = vmatmul.bf16.gmra.mxu0 %v628
      %v1222 = vpop.f32.mrf.mxu0
      %v1223 = vadd.f32 %v1134, %v1222
      %v1224 = vpop.f32.mrf.mxu0
      %v1225 = vadd.f32 %v1136, %v1224
      %1226 = vmatmul.bf16.gmra.mxu0 %v633
      %v1227 = vpop.f32.mrf.mxu0
      %v1228 = vadd.f32 %v1139, %v1227
      %v1229 = vpop.f32.mrf.mxu0
      %v1230 = vadd.f32 %v1141, %v1229
      %1231 = vmatmul.bf16.gmra.mxu0 %v638
      %v1232 = vpop.f32.mrf.mxu0
      %v1233 = vadd.f32 %v1144, %v1232
      %v1234 = vpop.f32.mrf.mxu0
      %v1235 = vadd.f32 %v1146, %v1234
      %1236 = vmatmul.bf16.gmra.mxu0 %v643
      %v1237 = vpop.f32.mrf.mxu0
      %v1238 = vadd.f32 %v1149, %v1237
      %v1239 = vpop.f32.mrf.mxu0
      %v1240 = vadd.f32 %v1151, %v1239
      %1241 = vmatmul.bf16.gmra.mxu0 %v648
      %v1242 = vpop.f32.mrf.mxu0
      %v1243 = vadd.f32 %v1154, %v1242
      %v1244 = vpop.f32.mrf.mxu0
      %v1245 = vadd.f32 %v1156, %v1244
      %1246 = vmatmul.bf16.gmra.mxu0 %v653
      %v1247 = vpop.f32.mrf.mxu0
      %v1248 = vadd.f32 %v1159, %v1247
      %v1249 = vpop.f32.mrf.mxu0
      %v1250 = vadd.f32 %v1161, %v1249
      %1251 = vmatmul.bf16.gmra.mxu0 %v658
      %v1252 = vpop.f32.mrf.mxu0
      %v1253 = vadd.f32 %v1164, %v1252
      %v1254 = vpop.f32.mrf.mxu0
      %v1255 = vadd.f32 %v1166, %v1254
      %1256 = vmatmul.bf16.gmra.mxu0 %v663
      %v1257 = vpop.f32.mrf.mxu0
      %v1258 = vadd.f32 %v1169, %v1257
      %v1259 = vpop.f32.mrf.mxu0
      %v1260 = vadd.f32 %v1171, %v1259
      %1261 = vmatmul.bf16.gmra.mxu0 %v668
      %v1262 = vpop.f32.mrf.mxu0
      %v1263 = vadd.f32 %v1174, %v1262
      %v1264 = vpop.f32.mrf.mxu0
      %v1265 = vadd.f32 %v1176, %v1264
      %1266 = vmatmul.bf16.gmra.mxu0 %v673
      %v1267 = vpop.f32.mrf.mxu0
      %v1268 = vadd.f32 %v1179, %v1267
      %v1269 = vpop.f32.mrf.mxu0
      %v1270 = vadd.f32 %v1181, %v1269
      %1271 = vmatmul.bf16.gmra.mxu0 %v678
      %v1272 = vpop.f32.mrf.mxu0
      %v1273 = vadd.f32 %v1184, %v1272
      %v1274 = vpop.f32.mrf.mxu0
      %v1275 = vadd.f32 %v1186, %v1274
      %1276 = vmatmul.bf16.gmra.mxu0 %v683
      %v1277 = vpop.f32.mrf.mxu0
      %v1278 = vadd.f32 %v1189, %v1277
      %v1279 = vpop.f32.mrf.mxu0
      %v1280 = vadd.f32 %v1191, %v1279
      %1281 = vdwg.mxu0
      %1282 = vmatpush.bf16.msra.mxu0 %v925
      %1283 = vmatpush.bf16.msra.mxu0 %v924
      %1284 = vmatpush.bf16.msra.mxu0 %v923
      %1285 = vmatpush.bf16.msra.mxu0 %v922
      %1286 = vmatpush.bf16.msra.mxu0 %v921
      %1287 = vmatpush.bf16.msra.mxu0 %v920
      %1288 = vmatpush.bf16.msra.mxu0 %v919
      %1289 = vmatpush.bf16.msra.mxu0 %v918
      %1290 = vmatmul.bf16.gmra.mxu0 %v609
      %v1291 = vpop.f32.mrf.mxu0
      %v1292 = vadd.f32 %v1203, %v1291
      %v1293 = vpop.f32.mrf.mxu0
      %v1294 = vadd.f32 %v1205, %v1293
      %1295 = vmatmul.bf16.gmra.mxu0 %v614
      %v1296 = vpop.f32.mrf.mxu0
      %v1297 = vadd.f32 %v1208, %v1296
      %v1298 = vpop.f32.mrf.mxu0
      %v1299 = vadd.f32 %v1210, %v1298
      %1300 = vmatmul.bf16.gmra.mxu0 %v619
      %v1301 = vpop.f32.mrf.mxu0
      %v1302 = vadd.f32 %v1213, %v1301
      %v1303 = vpop.f32.mrf.mxu0
      %v1304 = vadd.f32 %v1215, %v1303
      %1305 = vmatmul.bf16.gmra.mxu0 %v624
      %v1306 = vpop.f32.mrf.mxu0
      %v1307 = vadd.f32 %v1218, %v1306
      %v1308 = vpop.f32.mrf.mxu0
      %v1309 = vadd.f32 %v1220, %v1308
      %1310 = vmatmul.bf16.gmra.mxu0 %v629
      %v1311 = vpop.f32.mrf.mxu0
      %v1312 = vadd.f32 %v1223, %v1311
      %v1313 = vpop.f32.mrf.mxu0
      %v1314 = vadd.f32 %v1225, %v1313
      %1315 = vmatmul.bf16.gmra.mxu0 %v634
      %v1316 = vpop.f32.mrf.mxu0
      %v1317 = vadd.f32 %v1228, %v1316
      %v1318 = vpop.f32.mrf.mxu0
      %v1319 = vadd.f32 %v1230, %v1318
      %1320 = vmatmul.bf16.gmra.mxu0 %v639
      %v1321 = vpop.f32.mrf.mxu0
      %v1322 = vadd.f32 %v1233, %v1321
      %v1323 = vpop.f32.mrf.mxu0
      %v1324 = vadd.f32 %v1235, %v1323
      %1325 = vmatmul.bf16.gmra.mxu0 %v644
      %v1326 = vpop.f32.mrf.mxu0
      %v1327 = vadd.f32 %v1238, %v1326
      %v1328 = vpop.f32.mrf.mxu0
      %v1329 = vadd.f32 %v1240, %v1328
      %1330 = vmatmul.bf16.gmra.mxu0 %v649
      %v1331 = vpop.f32.mrf.mxu0
      %v1332 = vadd.f32 %v1243, %v1331
      %v1333 = vpop.f32.mrf.mxu0
      %v1334 = vadd.f32 %v1245, %v1333
      %1335 = vmatmul.bf16.gmra.mxu0 %v654
      %v1336 = vpop.f32.mrf.mxu0
      %v1337 = vadd.f32 %v1248, %v1336
      %v1338 = vpop.f32.mrf.mxu0
      %v1339 = vadd.f32 %v1250, %v1338
      %1340 = vmatmul.bf16.gmra.mxu0 %v659
      %v1341 = vpop.f32.mrf.mxu0
      %v1342 = vadd.f32 %v1253, %v1341
      %v1343 = vpop.f32.mrf.mxu0
      %v1344 = vadd.f32 %v1255, %v1343
      %1345 = vmatmul.bf16.gmra.mxu0 %v664
      %v1346 = vpop.f32.mrf.mxu0
      %v1347 = vadd.f32 %v1258, %v1346
      %v1348 = vpop.f32.mrf.mxu0
      %v1349 = vadd.f32 %v1260, %v1348
      %1350 = vmatmul.bf16.gmra.mxu0 %v669
      %v1351 = vpop.f32.mrf.mxu0
      %v1352 = vadd.f32 %v1263, %v1351
      %v1353 = vpop.f32.mrf.mxu0
      %v1354 = vadd.f32 %v1265, %v1353
      %1355 = vmatmul.bf16.gmra.mxu0 %v674
      %v1356 = vpop.f32.mrf.mxu0
      %v1357 = vadd.f32 %v1268, %v1356
      %v1358 = vpop.f32.mrf.mxu0
      %v1359 = vadd.f32 %v1270, %v1358
      %1360 = vmatmul.bf16.gmra.mxu0 %v679
      %v1361 = vpop.f32.mrf.mxu0
      %v1362 = vadd.f32 %v1273, %v1361
      %v1363 = vpop.f32.mrf.mxu0
      %v1364 = vadd.f32 %v1275, %v1363
      %1365 = vmatmul.bf16.gmra.mxu0 %v684
      %v1366 = vpop.f32.mrf.mxu0
      %v1367 = vadd.f32 %v1278, %v1366
      %v1368 = vpop.f32.mrf.mxu0
      %v1369 = vadd.f32 %v1280, %v1368
      %1370 = vdwg.mxu0
      %1371 = vmatpush.bf16.msra.mxu0 0
      %1372 = vmatpush.bf16.msra.mxu0 0
      %1373 = vmatpush.bf16.msra.mxu0 0
      %1374 = vmatpush.bf16.msra.mxu0 0
      %1375 = vmatpush.bf16.msra.mxu0 %v929
      %1376 = vmatpush.bf16.msra.mxu0 %v928
      %1377 = vmatpush.bf16.msra.mxu0 %v927
      %1378 = vmatpush.bf16.msra.mxu0 %v926
      %1379 = vmatmul.bf16.gmra.mxu0 %v968
      %v1380 = vpop.f32.mrf.mxu0
      %v1381 = vadd.f32 %v1292, %v1380
      %v1382 = vpop.f32.mrf.mxu0
      %v1383 = vadd.f32 %v1294, %v1382
      %1384 = vmatmul.bf16.gmra.mxu0 %v971
      %v1385 = vpop.f32.mrf.mxu0
      %v1386 = vadd.f32 %v1297, %v1385
      %v1387 = vpop.f32.mrf.mxu0
      %v1388 = vadd.f32 %v1299, %v1387
      %1389 = vmatmul.bf16.gmra.mxu0 %v974
      %v1390 = vpop.f32.mrf.mxu0
      %v1391 = vadd.f32 %v1302, %v1390
      %v1392 = vpop.f32.mrf.mxu0
      %v1393 = vadd.f32 %v1304, %v1392
      %1394 = vmatmul.bf16.gmra.mxu0 %v977
      %v1395 = vpop.f32.mrf.mxu0
      %v1396 = vadd.f32 %v1307, %v1395
      %v1397 = vpop.f32.mrf.mxu0
      %v1398 = vadd.f32 %v1309, %v1397
      %1399 = vmatmul.bf16.gmra.mxu0 %v980
      %v1400 = vpop.f32.mrf.mxu0
      %v1401 = vadd.f32 %v1312, %v1400
      %v1402 = vpop.f32.mrf.mxu0
      %v1403 = vadd.f32 %v1314, %v1402
      %1404 = vmatmul.bf16.gmra.mxu0 %v983
      %v1405 = vpop.f32.mrf.mxu0
      %v1406 = vadd.f32 %v1317, %v1405
      %v1407 = vpop.f32.mrf.mxu0
      %v1408 = vadd.f32 %v1319, %v1407
      %1409 = vmatmul.bf16.gmra.mxu0 %v986
      %v1410 = vpop.f32.mrf.mxu0
      %v1411 = vadd.f32 %v1322, %v1410
      %v1412 = vpop.f32.mrf.mxu0
      %v1413 = vadd.f32 %v1324, %v1412
      %1414 = vmatmul.bf16.gmra.mxu0 %v989
      %v1415 = vpop.f32.mrf.mxu0
      %v1416 = vadd.f32 %v1327, %v1415
      %v1417 = vpop.f32.mrf.mxu0
      %v1418 = vadd.f32 %v1329, %v1417
      %1419 = vmatmul.bf16.gmra.mxu0 %v992
      %v1420 = vpop.f32.mrf.mxu0
      %v1421 = vadd.f32 %v1332, %v1420
      %v1422 = vpop.f32.mrf.mxu0
      %v1423 = vadd.f32 %v1334, %v1422
      %1424 = vmatmul.bf16.gmra.mxu0 %v995
      %v1425 = vpop.f32.mrf.mxu0
      %v1426 = vadd.f32 %v1337, %v1425
      %v1427 = vpop.f32.mrf.mxu0
      %v1428 = vadd.f32 %v1339, %v1427
      %1429 = vmatmul.bf16.gmra.mxu0 %v998
      %v1430 = vpop.f32.mrf.mxu0
      %v1431 = vadd.f32 %v1342, %v1430
      %v1432 = vpop.f32.mrf.mxu0
      %v1433 = vadd.f32 %v1344, %v1432
      %1434 = vmatmul.bf16.gmra.mxu0 %v1001
      %v1435 = vpop.f32.mrf.mxu0
      %v1436 = vadd.f32 %v1347, %v1435
      %v1437 = vpop.f32.mrf.mxu0
      %v1438 = vadd.f32 %v1349, %v1437
      %1439 = vmatmul.bf16.gmra.mxu0 %v1004
      %v1440 = vpop.f32.mrf.mxu0
      %v1441 = vadd.f32 %v1352, %v1440
      %v1442 = vpop.f32.mrf.mxu0
      %v1443 = vadd.f32 %v1354, %v1442
      %1444 = vmatmul.bf16.gmra.mxu0 %v1007
      %v1445 = vpop.f32.mrf.mxu0
      %v1446 = vadd.f32 %v1357, %v1445
      %v1447 = vpop.f32.mrf.mxu0
      %v1448 = vadd.f32 %v1359, %v1447
      %1449 = vmatmul.bf16.gmra.mxu0 %v1010
      %v1450 = vpop.f32.mrf.mxu0
      %v1451 = vadd.f32 %v1362, %v1450
      %v1452 = vpop.f32.mrf.mxu0
      %v1453 = vadd.f32 %v1364, %v1452
      %1454 = vmatmul.bf16.gmra.mxu0 %v1013
      %v1455 = vpop.f32.mrf.mxu0
      %v1456 = vadd.f32 %v1367, %v1455
      %v1457 = vpop.f32.mrf.mxu0
      %v1458 = vadd.f32 %v1369, %v1457
      %1459 = vdwg.mxu0
      %v1460 = vmul.f32 %v1381, 0.2
      %v1461 = vmul.f32 %v1383, 0.2
      %v1462 = vmul.f32 %v1386, 0.2
      %v1463 = vmul.f32 %v1388, 0.2
      %v1464 = vmul.f32 %v1391, 0.2
      %v1465 = vmul.f32 %v1393, 0.2
      %v1466 = vmul.f32 %v1396, 0.2
      %v1467 = vmul.f32 %v1398, 0.2
      %v1468 = vmul.f32 %v1401, 0.2
      %v1469 = vmul.f32 %v1403, 0.2
      %v1470 = vmul.f32 %v1406, 0.2
      %v1471 = vmul.f32 %v1408, 0.2
      %v1472 = vmul.f32 %v1411, 0.2
      %v1473 = vmul.f32 %v1413, 0.2
      %v1474 = vmul.f32 %v1416, 0.2
      %v1475 = vmul.f32 %v1418, 0.2
      %v1476 = vmul.f32 %v1421, 0.2
      %v1477 = vmul.f32 %v1423, 0.2
      %v1478 = vmul.f32 %v1426, 0.2
      %v1479 = vmul.f32 %v1428, 0.2
      %v1480 = vmul.f32 %v1431, 0.2
      %v1481 = vmul.f32 %v1433, 0.2
      %v1482 = vmul.f32 %v1436, 0.2
      %v1483 = vmul.f32 %v1438, 0.2
      %v1484 = vmul.f32 %v1441, 0.2
      %v1485 = vmul.f32 %v1443, 0.2
      %v1486 = vmul.f32 %v1446, 0.2
      %v1487 = vmul.f32 %v1448, 0.2
      %v1488 = vmul.f32 %v1451, 0.2
      %v1489 = vmul.f32 %v1453, 0.2
      %v1490 = vmul.f32 %v1456, 0.2
      %v1491 = vmul.f32 %v1458, 0.2
      %v1492 = vmax.f32 %v1381, %v1460
      %v1493 = vmax.f32 %v1383, %v1461
      %v1494 = vmax.f32 %v1386, %v1462
      %v1495 = vmax.f32 %v1388, %v1463
      %v1496 = vmax.f32 %v1391, %v1464
      %v1497 = vmax.f32 %v1393, %v1465
      %v1498 = vmax.f32 %v1396, %v1466
      %v1499 = vmax.f32 %v1398, %v1467
      %v1500 = vmax.f32 %v1401, %v1468
      %v1501 = vmax.f32 %v1403, %v1469
      %v1502 = vmax.f32 %v1406, %v1470
      %v1503 = vmax.f32 %v1408, %v1471
      %v1504 = vmax.f32 %v1411, %v1472
      %v1505 = vmax.f32 %v1413, %v1473
      %v1506 = vmax.f32 %v1416, %v1474
      %v1507 = vmax.f32 %v1418, %v1475
      %v1508 = vmax.f32 %v1421, %v1476
      %v1509 = vmax.f32 %v1423, %v1477
      %v1510 = vmax.f32 %v1426, %v1478
      %v1511 = vmax.f32 %v1428, %v1479
      %v1512 = vmax.f32 %v1431, %v1480
      %v1513 = vmax.f32 %v1433, %v1481
      %v1514 = vmax.f32 %v1436, %v1482
      %v1515 = vmax.f32 %v1438, %v1483
      %v1516 = vmax.f32 %v1441, %v1484
      %v1517 = vmax.f32 %v1443, %v1485
      %v1518 = vmax.f32 %v1446, %v1486
      %v1519 = vmax.f32 %v1448, %v1487
      %v1520 = vmax.f32 %v1451, %v1488
      %v1521 = vmax.f32 %v1453, %v1489
      %v1522 = vmax.f32 %v1456, %v1490
      %v1523 = vmax.f32 %v1458, %v1491
      %v1524 = vpack.c.bf16 %v1492, %v1492
      %v1525 = vpack.c.bf16 %v1493, %v1493
      %v1526 = vpack.c.bf16 %v1494, %v1494
      %v1527 = vpack.c.bf16 %v1495, %v1495
      %v1528 = vpack.c.bf16 %v1496, %v1496
      %v1529 = vpack.c.bf16 %v1497, %v1497
      %v1530 = vpack.c.bf16 %v1498, %v1498
      %v1531 = vpack.c.bf16 %v1499, %v1499
      %v1532 = vpack.c.bf16 %v1500, %v1500
      %v1533 = vpack.c.bf16 %v1501, %v1501
      %v1534 = vpack.c.bf16 %v1502, %v1502
      %v1535 = vpack.c.bf16 %v1503, %v1503
      %v1536 = vpack.c.bf16 %v1504, %v1504
      %v1537 = vpack.c.bf16 %v1505, %v1505
      %v1538 = vpack.c.bf16 %v1506, %v1506
      %v1539 = vpack.c.bf16 %v1507, %v1507
      %v1540 = vpack.c.bf16 %v1508, %v1508
      %v1541 = vpack.c.bf16 %v1509, %v1509
      %v1542 = vpack.c.bf16 %v1510, %v1510
      %v1543 = vpack.c.bf16 %v1511, %v1511
      %v1544 = vpack.c.bf16 %v1512, %v1512
      %v1545 = vpack.c.bf16 %v1513, %v1513
      %v1546 = vpack.c.bf16 %v1514, %v1514
      %v1547 = vpack.c.bf16 %v1515, %v1515
      %v1548 = vpack.c.bf16 %v1516, %v1516
      %v1549 = vpack.c.bf16 %v1517, %v1517
      %v1550 = vpack.c.bf16 %v1518, %v1518
      %v1551 = vpack.c.bf16 %v1519, %v1519
      %v1552 = vpack.c.bf16 %v1520, %v1520
      %v1553 = vpack.c.bf16 %v1521, %v1521
      %v1554 = vpack.c.bf16 %v1522, %v1522
      %v1555 = vpack.c.bf16 %v1523, %v1523
      %1556 = vst [vmem:[%s175] sm:$0xf] %v1524
      %1557 = vst [vmem:[%s175 + $0x4] sm:$0xf] %v1525
      %1558 = vst [vmem:[%s175 + $0x8] sm:$0xf] %v1526
      %1559 = vst [vmem:[%s175 + $0xc] sm:$0xf] %v1527
      %1560 = vst [vmem:[%s175 + $0x10] sm:$0xf] %v1528
      %1561 = vst [vmem:[%s175 + $0x14] sm:$0xf] %v1529
      %1562 = vst [vmem:[%s175 + $0x18] sm:$0xf] %v1530
      %1563 = vst [vmem:[%s175 + $0x1c] sm:$0xf] %v1531
      %1564 = vst [vmem:[%s175 + $0x20] sm:$0xf] %v1532
      %1565 = vst [vmem:[%s175 + $0x24] sm:$0xf] %v1533
      %1566 = vst [vmem:[%s175 + $0x28] sm:$0xf] %v1534
      %1567 = vst [vmem:[%s175 + $0x2c] sm:$0xf] %v1535
      %1568 = vst [vmem:[%s175 + $0x30] sm:$0xf] %v1536
      %1569 = vst [vmem:[%s175 + $0x34] sm:$0xf] %v1537
      %1570 = vst [vmem:[%s175 + $0x38] sm:$0xf] %v1538
      %1571 = vst [vmem:[%s175 + $0x3c] sm:$0xf] %v1539
      %1572 = vst [vmem:[%s175 + $0x40] sm:$0xf] %v1540
      %1573 = vst [vmem:[%s175 + $0x44] sm:$0xf] %v1541
      %1574 = vst [vmem:[%s175 + $0x48] sm:$0xf] %v1542
      %1575 = vst [vmem:[%s175 + $0x4c] sm:$0xf] %v1543
      %1576 = vst [vmem:[%s175 + $0x50] sm:$0xf] %v1544
      %1577 = vst [vmem:[%s175 + $0x54] sm:$0xf] %v1545
      %1578 = vst [vmem:[%s175 + $0x58] sm:$0xf] %v1546
      %1579 = vst [vmem:[%s175 + $0x5c] sm:$0xf] %v1547
      %1580 = vst [vmem:[%s175 + $0x60] sm:$0xf] %v1548
      %1581 = vst [vmem:[%s175 + $0x64] sm:$0xf] %v1549
      %1582 = vst [vmem:[%s175 + $0x68] sm:$0xf] %v1550
      %1583 = vst [vmem:[%s175 + $0x6c] sm:$0xf] %v1551
      %1584 = vst [vmem:[%s175 + $0x70] sm:$0xf] %v1552
      %1585 = vst [vmem:[%s175 + $0x74] sm:$0xf] %v1553
      %1586 = vst [vmem:[%s175 + $0x78] sm:$0xf] %v1554
      %1587 = vst [vmem:[%s175 + $0x7c] sm:$0xf] %v1555
      %s1588 = smul.u32 32, %s14
      %p1589 = scmp.lt.s32.totalorder %s1588, 63
      %s1590 = scalar_select %p1589, %s1588, 63
      %s1591 = smul.addr %s1590, 4
      %s1592 = scalar_lea.vmem %s3, %s1591
      // Predicated region
      $region33: #{deep_cnn0_forward.6} parent=31 // pred_check
        %p1593 = pneg %p100
      $region34: #{deep_cnn0_forward.6} parent=31 // pred_check_branch
        %1595 = sbr.rel (%p1593) target = $region36
      $region35: #{deep_cnn0_forward.6} parent=31 // pred_region
        %s1596 = smul.u32 32, %s14
      $region36: #{deep_cnn0_forward.6} parent=31 // pred_fallthru
        _
    $region32: #{deep_cnn0_forward.6} parent=5 // pred_fallthru
      _
    %p1597 = scmp.le.s32.totalorder 2, %s9
    // Predicated region
    $region37: #{deep_cnn0_forward.6} parent=5 // pred_check
      %p1598 = pneg %p1597
    $region38: #{deep_cnn0_forward.6} parent=5 // pred_check_branch
      %1600 = sbr.rel (%p1598) target = $region40
    $region39: #{deep_cnn0_forward.6} parent=5 // pred_region
      %s1601 = ssub.s32 %s9, 2
      // Predicated region
      $region41: #{deep_cnn0_forward.6} parent=39 // pred_check
        %p1602 = pneg %p106
      $region42: #{deep_cnn0_forward.6} parent=39 // pred_check_branch
        %1604 = sbr.rel (%p1602) target = $region44
      $region43: #{deep_cnn0_forward.6} parent=39 // pred_region
        %s1605 = smul.u32 32, %s15
        %p1606 = scmp.lt.s32.totalorder %s1605, 63
        %s1607 = scalar_select %p1606, %s1605, 63
        %s1608 = smul.addr %s1607, 4
        %s1609 = scalar_lea.vmem %s3, %s1608
      $region44: #{deep_cnn0_forward.6} parent=39 // pred_fallthru
        _
    $region40: #{deep_cnn0_forward.6} parent=5 // pred_fallthru
      _
  $region6: #{deep_cnn0_forward.6} parent=0 // loop_footer
    %s13 = sadd.s32 1, %s9
  $region7: #{deep_cnn0_forward.6} parent=0 // loop_footer_branch
    %8 = sbr.rel target = $region3
  $region8: #{deep_cnn0_forward.6} parent=0 // loop_exit
    _

// kernel: deep_cnn0_forward.7
$region0: #{deep_cnn0_forward.7}
  #allocation0 [shape = 'u32[]', space=smem, size = 0x4, offset = 0x4, fixed_abs, tag = 'smem constant byte address 0x4 - core index']
  #allocation1 [shape = 'u32[72,128]{1,0:T(1,128)}', space=vmem, size = 0x9000, scoped, tag = 'internal scratch']
  %s0 = inlined_call_operand.vmem [shape: bf16[128,1152], index: 0, kind: input, shape index: {}]
  %s1 = inlined_call_operand.vmem [shape: bf16[1152,128], index: 1, kind: input, shape index: {}]
  %s2 = inlined_call_operand.vmem [shape: f32[1,128], index: 2, kind: input, shape index: {}]
  %s3 = inlined_call_operand.vmem [shape: bf16[128,128], index: 3, kind: output, shape index: {}]
  %s4 = sld [smem:[#allocation0]]
  $region22: #{deep_cnn0_forward.7} parent=0
    _
  %s6 = ssub.s32 1, %s4
  %s7 = scalar_select 0, %s6, %s4
  // Predicated region
  $region2: #{deep_cnn0_forward.7} parent=0 // pred_check
    _
  $region3: #{deep_cnn0_forward.7} parent=0 // pred_check_branch
    %9 = sbr.rel (0) target = $region5
  $region4: #{deep_cnn0_forward.7} parent=0 // pred_region
    _
  $region5: #{deep_cnn0_forward.7} parent=0 // pred_fallthru
    _
  // Predicated region
  $region6: #{deep_cnn0_forward.7} parent=0 // pred_check
    _
  $region7: #{deep_cnn0_forward.7} parent=0 // pred_check_branch
    %11 = sbr.rel (0) target = $region9
  $region8: #{deep_cnn0_forward.7} parent=0 // pred_region
    _
  $region9: #{deep_cnn0_forward.7} parent=0 // pred_fallthru
    _
  // Predicated region
  $region10: #{deep_cnn0_forward.7} parent=0 // pred_check
    _
  $region11: #{deep_cnn0_forward.7} parent=0 // pred_check_branch
    %13 = sbr.rel (0) target = $region13
  $region12: #{deep_cnn0_forward.7} parent=0 // pred_region
    _
  $region13: #{deep_cnn0_forward.7} parent=0 // pred_fallthru
    _
  %v14 = vld [vmem:[%s0] sm:$0xff]
  %v15 = vld [vmem:[%s0 + $0x8] sm:$0xff]
  %v16 = vld [vmem:[%s0 + $0x10] sm:$0xff]
  %v17 = vld [vmem:[%s0 + $0x18] sm:$0xff]
  %v18 = vld [vmem:[%s0 + $0x20] sm:$0xf]
  %v19 = vld [vmem:[%s0 + $0x24] sm:$0xff]
  %v20 = vld [vmem:[%s0 + $0x2c] sm:$0xff]
  %v21 = vld [vmem:[%s0 + $0x34] sm:$0xff]
  %v22 = vld [vmem:[%s0 + $0x3c] sm:$0xff]
  %v23 = vld [vmem:[%s0 + $0x44] sm:$0xf]
  %v24 = vld [vmem:[%s0 + $0x48] sm:$0xff]
  %v25 = vld [vmem:[%s0 + $0x50] sm:$0xff]
  %v26 = vld [vmem:[%s0 + $0x58] sm:$0xff]
  %v27 = vld [vmem:[%s0 + $0x60] sm:$0xff]
  %v28 = vld [vmem:[%s0 + $0x68] sm:$0xf]
  %v29 = vld [vmem:[%s0 + $0x6c] sm:$0xff]
  %v30 = vld [vmem:[%s0 + $0x74] sm:$0xff]
  %v31 = vld [vmem:[%s0 + $0x7c] sm:$0xff]
  %v32 = vld [vmem:[%s0 + $0x84] sm:$0xff]
  %v33 = vld [vmem:[%s0 + $0x8c] sm:$0xf]
  %v34 = vld [vmem:[%s0 + $0x90] sm:$0xff]
  %v35 = vld [vmem:[%s0 + $0x98] sm:$0xff]
  %v36 = vld [vmem:[%s0 + $0xa0] sm:$0xff]
  %v37 = vld [vmem:[%s0 + $0xa8] sm:$0xff]
  %v38 = vld [vmem:[%s0 + $0xb0] sm:$0xf]
  %v39 = vld [vmem:[%s0 + $0xb4] sm:$0xff]
  %v40 = vld [vmem:[%s0 + $0xbc] sm:$0xff]
  %v41 = vld [vmem:[%s0 + $0xc4] sm:$0xff]
  %v42 = vld [vmem:[%s0 + $0xcc] sm:$0xff]
  %v43 = vld [vmem:[%s0 + $0xd4] sm:$0xf]
  %v44 = vld [vmem:[%s0 + $0xd8] sm:$0xff]
  %v45 = vld [vmem:[%s0 + $0xe0] sm:$0xff]
  %v46 = vld [vmem:[%s0 + $0xe8] sm:$0xff]
  %v47 = vld [vmem:[%s0 + $0xf0] sm:$0xff]
  %v48 = vld [vmem:[%s0 + $0xf8] sm:$0xf]
  %v49 = vld [vmem:[%s0 + $0xfc] sm:$0xff]
  %v50 = vld [vmem:[%s0 + $0x104] sm:$0xff]
  %v51 = vld [vmem:[%s0 + $0x10c] sm:$0xff]
  %v52 = vld [vmem:[%s0 + $0x114] sm:$0xff]
  %v53 = vld [vmem:[%s0 + $0x11c] sm:$0xf]
  %v54 = vld [vmem:[%s0 + $0x120] sm:$0xff]
  %v55 = vld [vmem:[%s0 + $0x128] sm:$0xff]
  %v56 = vld [vmem:[%s0 + $0x130] sm:$0xff]
  %v57 = vld [vmem:[%s0 + $0x138] sm:$0xff]
  %v58 = vld [vmem:[%s0 + $0x140] sm:$0xf]
  %v59 = vld [vmem:[%s0 + $0x144] sm:$0xff]
  %v60 = vld [vmem:[%s0 + $0x14c] sm:$0xff]
  %v61 = vld [vmem:[%s0 + $0x154] sm:$0xff]
  %v62 = vld [vmem:[%s0 + $0x15c] sm:$0xff]
  %v63 = vld [vmem:[%s0 + $0x164] sm:$0xf]
  %v64 = vld [vmem:[%s0 + $0x168] sm:$0xff]
  %v65 = vld [vmem:[%s0 + $0x170] sm:$0xff]
  %v66 = vld [vmem:[%s0 + $0x178] sm:$0xff]
  %v67 = vld [vmem:[%s0 + $0x180] sm:$0xff]
  %v68 = vld [vmem:[%s0 + $0x188] sm:$0xf]
  %v69 = vld [vmem:[%s0 + $0x18c] sm:$0xff]
  %v70 = vld [vmem:[%s0 + $0x194] sm:$0xff]
  %v71 = vld [vmem:[%s0 + $0x19c] sm:$0xff]
  %v72 = vld [vmem:[%s0 + $0x1a4] sm:$0xff]
  %v73 = vld [vmem:[%s0 + $0x1ac] sm:$0xf]
  %v74 = vld [vmem:[%s0 + $0x1b0] sm:$0xff]
  %v75 = vld [vmem:[%s0 + $0x1b8] sm:$0xff]
  %v76 = vld [vmem:[%s0 + $0x1c0] sm:$0xff]
  %v77 = vld [vmem:[%s0 + $0x1c8] sm:$0xff]
  %v78 = vld [vmem:[%s0 + $0x1d0] sm:$0xf]
  %v79 = vld [vmem:[%s0 + $0x1d4] sm:$0xff]
  %v80 = vld [vmem:[%s0 + $0x1dc] sm:$0xff]
  %v81 = vld [vmem:[%s0 + $0x1e4] sm:$0xff]
  %v82 = vld [vmem:[%s0 + $0x1ec] sm:$0xff]
  %v83 = vld [vmem:[%s0 + $0x1f4] sm:$0xf]
  %v84 = vld [vmem:[%s0 + $0x1f8] sm:$0xff]
  %v85 = vld [vmem:[%s0 + $0x200] sm:$0xff]
  %v86 = vld [vmem:[%s0 + $0x208] sm:$0xff]
  %v87 = vld [vmem:[%s0 + $0x210] sm:$0xff]
  %v88 = vld [vmem:[%s0 + $0x218] sm:$0xf]
  %v89 = vld [vmem:[%s0 + $0x21c] sm:$0xff]
  %v90 = vld [vmem:[%s0 + $0x224] sm:$0xff]
  %v91 = vld [vmem:[%s0 + $0x22c] sm:$0xff]
  %v92 = vld [vmem:[%s0 + $0x234] sm:$0xff]
  %v93 = vld [vmem:[%s0 + $0x23c] sm:$0xf]
  %v94 = vld [vmem:[%s1] sm:$0xf]
  %v95 = vld [vmem:[%s1 + $0x4] sm:$0xf]
  %v96 = vld [vmem:[%s1 + $0x8] sm:$0xf]
  %v97 = vld [vmem:[%s1 + $0xc] sm:$0xf]
  %v98 = vld [vmem:[%s1 + $0x10] sm:$0xf]
  %v99 = vld [vmem:[%s1 + $0x14] sm:$0xf]
  %v100 = vld [vmem:[%s1 + $0x18] sm:$0xf]
  %v101 = vld [vmem:[%s1 + $0x1c] sm:$0xf]
  %v102 = vld [vmem:[%s1 + $0x20] sm:$0xf]
  %v103 = vld [vmem:[%s1 + $0x24] sm:$0xf]
  %v104 = vld [vmem:[%s1 + $0x28] sm:$0xf]
  %v105 = vld [vmem:[%s1 + $0x2c] sm:$0xf]
  %v106 = vld [vmem:[%s1 + $0x30] sm:$0xf]
  %v107 = vld [vmem:[%s1 + $0x34] sm:$0xf]
  %v108 = vld [vmem:[%s1 + $0x38] sm:$0xf]
  %v109 = vld [vmem:[%s1 + $0x3c] sm:$0xf]
  %v110 = vld [vmem:[%s1 + $0x40] sm:$0xf]
  %v111 = vld [vmem:[%s1 + $0x44] sm:$0xf]
  %v112 = vld [vmem:[%s1 + $0x48] sm:$0xf]
  %v113 = vld [vmem:[%s1 + $0x4c] sm:$0xf]
  %v114 = vld [vmem:[%s1 + $0x50] sm:$0xf]
  %v115 = vld [vmem:[%s1 + $0x54] sm:$0xf]
  %v116 = vld [vmem:[%s1 + $0x58] sm:$0xf]
  %v117 = vld [vmem:[%s1 + $0x5c] sm:$0xf]
  %v118 = vld [vmem:[%s1 + $0x60] sm:$0xf]
  %v119 = vld [vmem:[%s1 + $0x64] sm:$0xf]
  %v120 = vld [vmem:[%s1 + $0x68] sm:$0xf]
  %v121 = vld [vmem:[%s1 + $0x6c] sm:$0xf]
  %v122 = vld [vmem:[%s1 + $0x70] sm:$0xf]
  %v123 = vld [vmem:[%s1 + $0x74] sm:$0xf]
  %v124 = vld [vmem:[%s1 + $0x78] sm:$0xf]
  %v125 = vld [vmem:[%s1 + $0x7c] sm:$0xf]
  %v126 = vld [vmem:[%s1 + $0x80] sm:$0xf]
  %v127 = vld [vmem:[%s1 + $0x84] sm:$0xf]
  %v128 = vld [vmem:[%s1 + $0x88] sm:$0xf]
  %v129 = vld [vmem:[%s1 + $0x8c] sm:$0xf]
  %v130 = vld [vmem:[%s1 + $0x90] sm:$0xf]
  %v131 = vld [vmem:[%s1 + $0x94] sm:$0xf]
  %v132 = vld [vmem:[%s1 + $0x98] sm:$0xf]
  %v133 = vld [vmem:[%s1 + $0x9c] sm:$0xf]
  %v134 = vld [vmem:[%s1 + $0xa0] sm:$0xf]
  %v135 = vld [vmem:[%s1 + $0xa4] sm:$0xf]
  %v136 = vld [vmem:[%s1 + $0xa8] sm:$0xf]
  %v137 = vld [vmem:[%s1 + $0xac] sm:$0xf]
  %v138 = vld [vmem:[%s1 + $0xb0] sm:$0xf]
  %v139 = vld [vmem:[%s1 + $0xb4] sm:$0xf]
  %v140 = vld [vmem:[%s1 + $0xb8] sm:$0xf]
  %v141 = vld [vmem:[%s1 + $0xbc] sm:$0xf]
  %v142 = vld [vmem:[%s1 + $0xc0] sm:$0xf]
  %v143 = vld [vmem:[%s1 + $0xc4] sm:$0xf]
  %v144 = vld [vmem:[%s1 + $0xc8] sm:$0xf]
  %v145 = vld [vmem:[%s1 + $0xcc] sm:$0xf]
  %v146 = vld [vmem:[%s1 + $0xd0] sm:$0xf]
  %v147 = vld [vmem:[%s1 + $0xd4] sm:$0xf]
  %v148 = vld [vmem:[%s1 + $0xd8] sm:$0xf]
  %v149 = vld [vmem:[%s1 + $0xdc] sm:$0xf]
  %v150 = vld [vmem:[%s1 + $0xe0] sm:$0xf]
  %v151 = vld [vmem:[%s1 + $0xe4] sm:$0xf]
  %v152 = vld [vmem:[%s1 + $0xe8] sm:$0xf]
  %v153 = vld [vmem:[%s1 + $0xec] sm:$0xf]
  %v154 = vld [vmem:[%s1 + $0xf0] sm:$0xf]
  %v155 = vld [vmem:[%s1 + $0xf4] sm:$0xf]
  %v156 = vld [vmem:[%s1 + $0xf8] sm:$0xf]
  %v157 = vld [vmem:[%s1 + $0xfc] sm:$0xf]
  %v158 = vld [vmem:[%s1 + $0x100] sm:$0xf]
  %v159 = vld [vmem:[%s1 + $0x104] sm:$0xf]
  %v160 = vld [vmem:[%s1 + $0x108] sm:$0xf]
  %v161 = vld [vmem:[%s1 + $0x10c] sm:$0xf]
  %v162 = vld [vmem:[%s1 + $0x110] sm:$0xf]
  %v163 = vld [vmem:[%s1 + $0x114] sm:$0xf]
  %v164 = vld [vmem:[%s1 + $0x118] sm:$0xf]
  %v165 = vld [vmem:[%s1 + $0x11c] sm:$0xf]
  %v166 = vld [vmem:[%s1 + $0x120] sm:$0xf]
  %v167 = vld [vmem:[%s1 + $0x124] sm:$0xf]
  %v168 = vld [vmem:[%s1 + $0x128] sm:$0xf]
  %v169 = vld [vmem:[%s1 + $0x12c] sm:$0xf]
  %v170 = vld [vmem:[%s1 + $0x130] sm:$0xf]
  %v171 = vld [vmem:[%s1 + $0x134] sm:$0xf]
  %v172 = vld [vmem:[%s1 + $0x138] sm:$0xf]
  %v173 = vld [vmem:[%s1 + $0x13c] sm:$0xf]
  %v174 = vld [vmem:[%s1 + $0x140] sm:$0xf]
  %v175 = vld [vmem:[%s1 + $0x144] sm:$0xf]
  %v176 = vld [vmem:[%s1 + $0x148] sm:$0xf]
  %v177 = vld [vmem:[%s1 + $0x14c] sm:$0xf]
  %v178 = vld [vmem:[%s1 + $0x150] sm:$0xf]
  %v179 = vld [vmem:[%s1 + $0x154] sm:$0xf]
  %v180 = vld [vmem:[%s1 + $0x158] sm:$0xf]
  %v181 = vld [vmem:[%s1 + $0x15c] sm:$0xf]
  %v182 = vld [vmem:[%s1 + $0x160] sm:$0xf]
  %v183 = vld [vmem:[%s1 + $0x164] sm:$0xf]
  %v184 = vld [vmem:[%s1 + $0x168] sm:$0xf]
  %v185 = vld [vmem:[%s1 + $0x16c] sm:$0xf]
  %v186 = vld [vmem:[%s1 + $0x170] sm:$0xf]
  %v187 = vld [vmem:[%s1 + $0x174] sm:$0xf]
  %v188 = vld [vmem:[%s1 + $0x178] sm:$0xf]
  %v189 = vld [vmem:[%s1 + $0x17c] sm:$0xf]
  %v190 = vld [vmem:[%s1 + $0x180] sm:$0xf]
  %v191 = vld [vmem:[%s1 + $0x184] sm:$0xf]
  %v192 = vld [vmem:[%s1 + $0x188] sm:$0xf]
  %v193 = vld [vmem:[%s1 + $0x18c] sm:$0xf]
  %v194 = vld [vmem:[%s1 + $0x190] sm:$0xf]
  %v195 = vld [vmem:[%s1 + $0x194] sm:$0xf]
  %v196 = vld [vmem:[%s1 + $0x198] sm:$0xf]
  %v197 = vld [vmem:[%s1 + $0x19c] sm:$0xf]
  %v198 = vld [vmem:[%s1 + $0x1a0] sm:$0xf]
  %v199 = vld [vmem:[%s1 + $0x1a4] sm:$0xf]
  %v200 = vld [vmem:[%s1 + $0x1a8] sm:$0xf]
  %v201 = vld [vmem:[%s1 + $0x1ac] sm:$0xf]
  %v202 = vld [vmem:[%s1 + $0x1b0] sm:$0xf]
  %v203 = vld [vmem:[%s1 + $0x1b4] sm:$0xf]
  %v204 = vld [vmem:[%s1 + $0x1b8] sm:$0xf]
  %v205 = vld [vmem:[%s1 + $0x1bc] sm:$0xf]
  %v206 = vld [vmem:[%s1 + $0x1c0] sm:$0xf]
  %v207 = vld [vmem:[%s1 + $0x1c4] sm:$0xf]
  %v208 = vld [vmem:[%s1 + $0x1c8] sm:$0xf]
  %v209 = vld [vmem:[%s1 + $0x1cc] sm:$0xf]
  %v210 = vld [vmem:[%s1 + $0x1d0] sm:$0xf]
  %v211 = vld [vmem:[%s1 + $0x1d4] sm:$0xf]
  %v212 = vld [vmem:[%s1 + $0x1d8] sm:$0xf]
  %v213 = vld [vmem:[%s1 + $0x1dc] sm:$0xf]
  %v214 = vld [vmem:[%s1 + $0x1e0] sm:$0xf]
  %v215 = vld [vmem:[%s1 + $0x1e4] sm:$0xf]
  %v216 = vld [vmem:[%s1 + $0x1e8] sm:$0xf]
  %v217 = vld [vmem:[%s1 + $0x1ec] sm:$0xf]
  %v218 = vld [vmem:[%s1 + $0x1f0] sm:$0xf]
  %v219 = vld [vmem:[%s1 + $0x1f4] sm:$0xf]
  %v220 = vld [vmem:[%s1 + $0x1f8] sm:$0xf]
  %v221 = vld [vmem:[%s1 + $0x1fc] sm:$0xf]
  %v222 = vld [vmem:[%s1 + $0x200] sm:$0xf]
  %v223 = vld [vmem:[%s1 + $0x204] sm:$0xf]
  %v224 = vld [vmem:[%s1 + $0x208] sm:$0xf]
  %v225 = vld [vmem:[%s1 + $0x20c] sm:$0xf]
  %v226 = vld [vmem:[%s1 + $0x210] sm:$0xf]
  %v227 = vld [vmem:[%s1 + $0x214] sm:$0xf]
  %v228 = vld [vmem:[%s1 + $0x218] sm:$0xf]
  %v229 = vld [vmem:[%s1 + $0x21c] sm:$0xf]
  %v230 = vld [vmem:[%s1 + $0x220] sm:$0xf]
  %v231 = vld [vmem:[%s1 + $0x224] sm:$0xf]
  %v232 = vld [vmem:[%s1 + $0x228] sm:$0xf]
  %v233 = vld [vmem:[%s1 + $0x22c] sm:$0xf]
  %v234 = vld [vmem:[%s1 + $0x230] sm:$0xf]
  %v235 = vld [vmem:[%s1 + $0x234] sm:$0xf]
  %v236 = vld [vmem:[%s1 + $0x238] sm:$0xf]
  %v237 = vld [vmem:[%s1 + $0x23c] sm:$0xf]
  %v238 = vld [vmem:[%s2] sm:$0x1]
  %v240 = vperm.slane %v238, 0
  %v322 = vunpack.c.l.b16 %v14
  %v323 = vunpack.c.h.b16 %v14
  %v324 = vunpack.c.l.b16 %v15
  %v325 = vunpack.c.h.b16 %v15
  %v326 = vunpack.c.l.b16 %v16
  %v327 = vunpack.c.h.b16 %v16
  %v328 = vunpack.c.l.b16 %v17
  %v329 = vunpack.c.h.b16 %v17
  %v330 = vunpack.c.l.b16 %v18
  %v331 = vunpack.c.l.b16 %v19
  %v332 = vunpack.c.h.b16 %v19
  %v333 = vunpack.c.l.b16 %v20
  %v334 = vunpack.c.h.b16 %v20
  %v335 = vunpack.c.l.b16 %v21
  %v336 = vunpack.c.h.b16 %v21
  %v337 = vunpack.c.l.b16 %v22
  %v338 = vunpack.c.h.b16 %v22
  %v339 = vunpack.c.l.b16 %v23
  %v340 = vunpack.c.l.b16 %v24
  %v341 = vunpack.c.h.b16 %v24
  %v342 = vunpack.c.l.b16 %v25
  %v343 = vunpack.c.h.b16 %v25
  %v344 = vunpack.c.l.b16 %v26
  %v345 = vunpack.c.h.b16 %v26
  %v346 = vunpack.c.l.b16 %v27
  %v347 = vunpack.c.h.b16 %v27
  %v348 = vunpack.c.l.b16 %v28
  %v349 = vunpack.c.l.b16 %v29
  %v350 = vunpack.c.h.b16 %v29
  %v351 = vunpack.c.l.b16 %v30
  %v352 = vunpack.c.h.b16 %v30
  %v353 = vunpack.c.l.b16 %v31
  %v354 = vunpack.c.h.b16 %v31
  %v355 = vunpack.c.l.b16 %v32
  %v356 = vunpack.c.h.b16 %v32
  %v357 = vunpack.c.l.b16 %v33
  %v358 = vunpack.c.l.b16 %v34
  %v359 = vunpack.c.h.b16 %v34
  %v360 = vunpack.c.l.b16 %v35
  %v361 = vunpack.c.h.b16 %v35
  %v362 = vunpack.c.l.b16 %v36
  %v363 = vunpack.c.h.b16 %v36
  %v364 = vunpack.c.l.b16 %v37
  %v365 = vunpack.c.h.b16 %v37
  %v366 = vunpack.c.l.b16 %v38
  %v367 = vunpack.c.l.b16 %v39
  %v368 = vunpack.c.h.b16 %v39
  %v369 = vunpack.c.l.b16 %v40
  %v370 = vunpack.c.h.b16 %v40
  %v371 = vunpack.c.l.b16 %v41
  %v372 = vunpack.c.h.b16 %v41
  %v373 = vunpack.c.l.b16 %v42
  %v374 = vunpack.c.h.b16 %v42
  %v375 = vunpack.c.l.b16 %v43
  %v376 = vunpack.c.l.b16 %v44
  %v377 = vunpack.c.h.b16 %v44
  %v378 = vunpack.c.l.b16 %v45
  %v379 = vunpack.c.h.b16 %v45
  %v380 = vunpack.c.l.b16 %v46
  %v381 = vunpack.c.h.b16 %v46
  %v382 = vunpack.c.l.b16 %v47
  %v383 = vunpack.c.h.b16 %v47
  %v384 = vunpack.c.l.b16 %v48
  %v385 = vunpack.c.l.b16 %v49
  %v386 = vunpack.c.h.b16 %v49
  %v387 = vunpack.c.l.b16 %v50
  %v388 = vunpack.c.h.b16 %v50
  %v389 = vunpack.c.l.b16 %v51
  %v390 = vunpack.c.h.b16 %v51
  %v391 = vunpack.c.l.b16 %v52
  %v392 = vunpack.c.h.b16 %v52
  %v393 = vunpack.c.l.b16 %v53
  %v394 = vunpack.c.l.b16 %v54
  %v395 = vunpack.c.h.b16 %v54
  %v396 = vunpack.c.l.b16 %v55
  %v397 = vunpack.c.h.b16 %v55
  %v398 = vunpack.c.l.b16 %v56
  %v399 = vunpack.c.h.b16 %v56
  %v400 = vunpack.c.l.b16 %v57
  %v401 = vunpack.c.h.b16 %v57
  %v402 = vunpack.c.l.b16 %v58
  %v403 = vunpack.c.l.b16 %v59
  %v404 = vunpack.c.h.b16 %v59
  %v405 = vunpack.c.l.b16 %v60
  %v406 = vunpack.c.h.b16 %v60
  %v407 = vunpack.c.l.b16 %v61
  %v408 = vunpack.c.h.b16 %v61
  %v409 = vunpack.c.l.b16 %v62
  %v410 = vunpack.c.h.b16 %v62
  %v411 = vunpack.c.l.b16 %v63
  %v412 = vunpack.c.l.b16 %v64
  %v413 = vunpack.c.h.b16 %v64
  %v414 = vunpack.c.l.b16 %v65
  %v415 = vunpack.c.h.b16 %v65
  %v416 = vunpack.c.l.b16 %v66
  %v417 = vunpack.c.h.b16 %v66
  %v418 = vunpack.c.l.b16 %v67
  %v419 = vunpack.c.h.b16 %v67
  %v420 = vunpack.c.l.b16 %v68
  %v421 = vunpack.c.l.b16 %v69
  %v422 = vunpack.c.h.b16 %v69
  %v423 = vunpack.c.l.b16 %v70
  %v424 = vunpack.c.h.b16 %v70
  %v425 = vunpack.c.l.b16 %v71
  %v426 = vunpack.c.h.b16 %v71
  %v427 = vunpack.c.l.b16 %v72
  %v428 = vunpack.c.h.b16 %v72
  %v429 = vunpack.c.l.b16 %v73
  %v430 = vunpack.c.l.b16 %v74
  %v431 = vunpack.c.h.b16 %v74
  %v432 = vunpack.c.l.b16 %v75
  %v433 = vunpack.c.h.b16 %v75
  %v434 = vunpack.c.l.b16 %v76
  %v435 = vunpack.c.h.b16 %v76
  %v436 = vunpack.c.l.b16 %v77
  %v437 = vunpack.c.h.b16 %v77
  %v438 = vunpack.c.l.b16 %v78
  %v439 = vunpack.c.l.b16 %v79
  %v440 = vunpack.c.h.b16 %v79
  %v441 = vunpack.c.l.b16 %v80
  %v442 = vunpack.c.h.b16 %v80
  %v443 = vunpack.c.l.b16 %v81
  %v444 = vunpack.c.h.b16 %v81
  %v445 = vunpack.c.l.b16 %v82
  %v446 = vunpack.c.h.b16 %v82
  %v447 = vunpack.c.l.b16 %v83
  %v448 = vunpack.c.l.b16 %v84
  %v449 = vunpack.c.h.b16 %v84
  %v450 = vunpack.c.l.b16 %v85
  %v451 = vunpack.c.h.b16 %v85
  %v452 = vunpack.c.l.b16 %v86
  %v453 = vunpack.c.h.b16 %v86
  %v454 = vunpack.c.l.b16 %v87
  %v455 = vunpack.c.h.b16 %v87
  %v456 = vunpack.c.l.b16 %v88
  %v457 = vunpack.c.l.b16 %v89
  %v458 = vunpack.c.h.b16 %v89
  %v459 = vunpack.c.l.b16 %v90
  %v460 = vunpack.c.h.b16 %v90
  %v461 = vunpack.c.l.b16 %v91
  %v462 = vunpack.c.h.b16 %v91
  %v463 = vunpack.c.l.b16 %v92
  %v464 = vunpack.c.h.b16 %v92
  %v465 = vunpack.c.l.b16 %v93
  %v466 = vpack.c.b16 %v331, %v322
  %v467 = vpack.c.b16 %v332, %v323
  %v468 = vpack.c.b16 %v333, %v324
  %v469 = vpack.c.b16 %v334, %v325
  %v470 = vpack.c.b16 %v335, %v326
  %v471 = vpack.c.b16 %v336, %v327
  %v472 = vpack.c.b16 %v337, %v328
  %v473 = vpack.c.b16 %v338, %v329
  %v474 = vpack.c.b16 %v339, %v330
  %v475 = vpack.c.b16 %v349, %v340
  %v476 = vpack.c.b16 %v350, %v341
  %v477 = vpack.c.b16 %v351, %v342
  %v478 = vpack.c.b16 %v352, %v343
  %v479 = vpack.c.b16 %v353, %v344
  %v480 = vpack.c.b16 %v354, %v345
  %v481 = vpack.c.b16 %v355, %v346
  %v482 = vpack.c.b16 %v356, %v347
  %v483 = vpack.c.b16 %v357, %v348
  %v484 = vpack.c.b16 %v367, %v358
  %v485 = vpack.c.b16 %v368, %v359
  %v486 = vpack.c.b16 %v369, %v360
  %v487 = vpack.c.b16 %v370, %v361
  %v488 = vpack.c.b16 %v371, %v362
  %v489 = vpack.c.b16 %v372, %v363
  %v490 = vpack.c.b16 %v373, %v364
  %v491 = vpack.c.b16 %v374, %v365
  %v492 = vpack.c.b16 %v375, %v366
  %v493 = vpack.c.b16 %v385, %v376
  %v494 = vpack.c.b16 %v386, %v377
  %v495 = vpack.c.b16 %v387, %v378
  %v496 = vpack.c.b16 %v388, %v379
  %v497 = vpack.c.b16 %v389, %v380
  %v498 = vpack.c.b16 %v390, %v381
  %v499 = vpack.c.b16 %v391, %v382
  %v500 = vpack.c.b16 %v392, %v383
  %v501 = vpack.c.b16 %v393, %v384
  %v502 = vpack.c.b16 %v403, %v394
  %v503 = vpack.c.b16 %v404, %v395
  %v504 = vpack.c.b16 %v405, %v396
  %v505 = vpack.c.b16 %v406, %v397
  %v506 = vpack.c.b16 %v407, %v398
  %v507 = vpack.c.b16 %v408, %v399
  %v508 = vpack.c.b16 %v409, %v400
  %v509 = vpack.c.b16 %v410, %v401
  %v510 = vpack.c.b16 %v411, %v402
  %v511 = vpack.c.b16 %v421, %v412
  %v512 = vpack.c.b16 %v422, %v413
  %v513 = vpack.c.b16 %v423, %v414
  %v514 = vpack.c.b16 %v424, %v415
  %v515 = vpack.c.b16 %v425, %v416
  %v516 = vpack.c.b16 %v426, %v417
  %v517 = vpack.c.b16 %v427, %v418
  %v518 = vpack.c.b16 %v428, %v419
  %v519 = vpack.c.b16 %v429, %v420
  %v520 = vpack.c.b16 %v439, %v430
  %v521 = vpack.c.b16 %v440, %v431
  %v522 = vpack.c.b16 %v441, %v432
  %v523 = vpack.c.b16 %v442, %v433
  %v524 = vpack.c.b16 %v443, %v434
  %v525 = vpack.c.b16 %v444, %v435
  %v526 = vpack.c.b16 %v445, %v436
  %v527 = vpack.c.b16 %v446, %v437
  %v528 = vpack.c.b16 %v447, %v438
  %v529 = vpack.c.b16 %v457, %v448
  %v530 = vpack.c.b16 %v458, %v449
  %v531 = vpack.c.b16 %v459, %v450
  %v532 = vpack.c.b16 %v460, %v451
  %v533 = vpack.c.b16 %v461, %v452
  %v534 = vpack.c.b16 %v462, %v453
  %v535 = vpack.c.b16 %v463, %v454
  %v536 = vpack.c.b16 %v464, %v455
  %v537 = vpack.c.b16 %v465, %v456
  %v754 = vunpack.c.l.b16 %v94
  %v755 = vunpack.c.l.b16 %v95
  %v756 = vunpack.c.l.b16 %v96
  %v757 = vunpack.c.l.b16 %v97
  %v758 = vunpack.c.l.b16 %v98
  %v759 = vunpack.c.l.b16 %v99
  %v760 = vunpack.c.l.b16 %v100
  %v761 = vunpack.c.l.b16 %v101
  %v762 = vunpack.c.l.b16 %v102
  %v763 = vunpack.c.l.b16 %v103
  %v764 = vunpack.c.l.b16 %v104
  %v765 = vunpack.c.l.b16 %v105
  %v766 = vunpack.c.l.b16 %v106
  %v767 = vunpack.c.l.b16 %v107
  %v768 = vunpack.c.l.b16 %v108
  %v769 = vunpack.c.l.b16 %v109
  %v770 = vunpack.c.l.b16 %v110
  %v771 = vunpack.c.l.b16 %v111
  %v772 = vunpack.c.l.b16 %v112
  %v773 = vunpack.c.l.b16 %v113
  %v774 = vunpack.c.l.b16 %v114
  %v775 = vunpack.c.l.b16 %v115
  %v776 = vunpack.c.l.b16 %v116
  %v777 = vunpack.c.l.b16 %v117
  %v778 = vunpack.c.l.b16 %v118
  %v779 = vunpack.c.l.b16 %v119
  %v780 = vunpack.c.l.b16 %v120
  %v781 = vunpack.c.l.b16 %v121
  %v782 = vunpack.c.l.b16 %v122
  %v783 = vunpack.c.l.b16 %v123
  %v784 = vunpack.c.l.b16 %v124
  %v785 = vunpack.c.l.b16 %v125
  %v786 = vunpack.c.l.b16 %v126
  %v787 = vunpack.c.l.b16 %v127
  %v788 = vunpack.c.l.b16 %v128
  %v789 = vunpack.c.l.b16 %v129
  %v790 = vunpack.c.l.b16 %v130
  %v791 = vunpack.c.l.b16 %v131
  %v792 = vunpack.c.l.b16 %v132
  %v793 = vunpack.c.l.b16 %v133
  %v794 = vunpack.c.l.b16 %v134
  %v795 = vunpack.c.l.b16 %v135
  %v796 = vunpack.c.l.b16 %v136
  %v797 = vunpack.c.l.b16 %v137
  %v798 = vunpack.c.l.b16 %v138
  %v799 = vunpack.c.l.b16 %v139
  %v800 = vunpack.c.l.b16 %v140
  %v801 = vunpack.c.l.b16 %v141
  %v802 = vunpack.c.l.b16 %v142
  %v803 = vunpack.c.l.b16 %v143
  %v804 = vunpack.c.l.b16 %v144
  %v805 = vunpack.c.l.b16 %v145
  %v806 = vunpack.c.l.b16 %v146
  %v807 = vunpack.c.l.b16 %v147
  %v808 = vunpack.c.l.b16 %v148
  %v809 = vunpack.c.l.b16 %v149
  %v810 = vunpack.c.l.b16 %v150
  %v811 = vunpack.c.l.b16 %v151
  %v812 = vunpack.c.l.b16 %v152
  %v813 = vunpack.c.l.b16 %v153
  %v814 = vunpack.c.l.b16 %v154
  %v815 = vunpack.c.l.b16 %v155
  %v816 = vunpack.c.l.b16 %v156
  %v817 = vunpack.c.l.b16 %v157
  %v818 = vunpack.c.l.b16 %v158
  %v819 = vunpack.c.l.b16 %v159
  %v820 = vunpack.c.l.b16 %v160
  %v821 = vunpack.c.l.b16 %v161
  %v822 = vunpack.c.l.b16 %v162
  %v823 = vunpack.c.l.b16 %v163
  %v824 = vunpack.c.l.b16 %v164
  %v825 = vunpack.c.l.b16 %v165
  %v826 = vunpack.c.l.b16 %v166
  %v827 = vunpack.c.l.b16 %v167
  %v828 = vunpack.c.l.b16 %v168
  %v829 = vunpack.c.l.b16 %v169
  %v830 = vunpack.c.l.b16 %v170
  %v831 = vunpack.c.l.b16 %v171
  %v832 = vunpack.c.l.b16 %v172
  %v833 = vunpack.c.l.b16 %v173
  %v834 = vunpack.c.l.b16 %v174
  %v835 = vunpack.c.l.b16 %v175
  %v836 = vunpack.c.l.b16 %v176
  %v837 = vunpack.c.l.b16 %v177
  %v838 = vunpack.c.l.b16 %v178
  %v839 = vunpack.c.l.b16 %v179
  %v840 = vunpack.c.l.b16 %v180
  %v841 = vunpack.c.l.b16 %v181
  %v842 = vunpack.c.l.b16 %v182
  %v843 = vunpack.c.l.b16 %v183
  %v844 = vunpack.c.l.b16 %v184
  %v845 = vunpack.c.l.b16 %v185
  %v846 = vunpack.c.l.b16 %v186
  %v847 = vunpack.c.l.b16 %v187
  %v848 = vunpack.c.l.b16 %v188
  %v849 = vunpack.c.l.b16 %v189
  %v850 = vunpack.c.l.b16 %v190
  %v851 = vunpack.c.l.b16 %v191
  %v852 = vunpack.c.l.b16 %v192
  %v853 = vunpack.c.l.b16 %v193
  %v854 = vunpack.c.l.b16 %v194
  %v855 = vunpack.c.l.b16 %v195
  %v856 = vunpack.c.l.b16 %v196
  %v857 = vunpack.c.l.b16 %v197
  %v858 = vunpack.c.l.b16 %v198
  %v859 = vunpack.c.l.b16 %v199
  %v860 = vunpack.c.l.b16 %v200
  %v861 = vunpack.c.l.b16 %v201
  %v862 = vunpack.c.l.b16 %v202
  %v863 = vunpack.c.l.b16 %v203
  %v864 = vunpack.c.l.b16 %v204
  %v865 = vunpack.c.l.b16 %v205
  %v866 = vunpack.c.l.b16 %v206
  %v867 = vunpack.c.l.b16 %v207
  %v868 = vunpack.c.l.b16 %v208
  %v869 = vunpack.c.l.b16 %v209
  %v870 = vunpack.c.l.b16 %v210
  %v871 = vunpack.c.l.b16 %v211
  %v872 = vunpack.c.l.b16 %v212
  %v873 = vunpack.c.l.b16 %v213
  %v874 = vunpack.c.l.b16 %v214
  %v875 = vunpack.c.l.b16 %v215
  %v876 = vunpack.c.l.b16 %v216
  %v877 = vunpack.c.l.b16 %v217
  %v878 = vunpack.c.l.b16 %v218
  %v879 = vunpack.c.l.b16 %v219
  %v880 = vunpack.c.l.b16 %v220
  %v881 = vunpack.c.l.b16 %v221
  %v882 = vunpack.c.l.b16 %v222
  %v883 = vunpack.c.l.b16 %v223
  %v884 = vunpack.c.l.b16 %v224
  %v885 = vunpack.c.l.b16 %v225
  %v886 = vunpack.c.l.b16 %v226
  %v887 = vunpack.c.l.b16 %v227
  %v888 = vunpack.c.l.b16 %v228
  %v889 = vunpack.c.l.b16 %v229
  %v890 = vunpack.c.l.b16 %v230
  %v891 = vunpack.c.l.b16 %v231
  %v892 = vunpack.c.l.b16 %v232
  %v893 = vunpack.c.l.b16 %v233
  %v894 = vunpack.c.l.b16 %v234
  %v895 = vunpack.c.l.b16 %v235
  %v896 = vunpack.c.l.b16 %v236
  %v897 = vunpack.c.l.b16 %v237
  %v898 = vpack.c.b16 %v755, %v754
  %v899 = vpack.c.b16 %v757, %v756
  %v900 = vpack.c.b16 %v759, %v758
  %v901 = vpack.c.b16 %v761, %v760
  %v902 = vpack.c.b16 %v763, %v762
  %v903 = vpack.c.b16 %v765, %v764
  %v904 = vpack.c.b16 %v767, %v766
  %v905 = vpack.c.b16 %v769, %v768
  %v906 = vpack.c.b16 %v771, %v770
  %v907 = vpack.c.b16 %v773, %v772
  %v908 = vpack.c.b16 %v775, %v774
  %v909 = vpack.c.b16 %v777, %v776
  %v910 = vpack.c.b16 %v779, %v778
  %v911 = vpack.c.b16 %v781, %v780
  %v912 = vpack.c.b16 %v783, %v782
  %v913 = vpack.c.b16 %v785, %v784
  %v914 = vpack.c.b16 %v787, %v786
  %v915 = vpack.c.b16 %v789, %v788
  %v916 = vpack.c.b16 %v791, %v790
  %v917 = vpack.c.b16 %v793, %v792
  %v918 = vpack.c.b16 %v795, %v794
  %v919 = vpack.c.b16 %v797, %v796
  %v920 = vpack.c.b16 %v799, %v798
  %v921 = vpack.c.b16 %v801, %v800
  %v922 = vpack.c.b16 %v803, %v802
  %v923 = vpack.c.b16 %v805, %v804
  %v924 = vpack.c.b16 %v807, %v806
  %v925 = vpack.c.b16 %v809, %v808
  %v926 = vpack.c.b16 %v811, %v810
  %v927 = vpack.c.b16 %v813, %v812
  %v928 = vpack.c.b16 %v815, %v814
  %v929 = vpack.c.b16 %v817, %v816
  %v930 = vpack.c.b16 %v819, %v818
  %v931 = vpack.c.b16 %v821, %v820
  %v932 = vpack.c.b16 %v823, %v822
  %v933 = vpack.c.b16 %v825, %v824
  %v934 = vpack.c.b16 %v827, %v826
  %v935 = vpack.c.b16 %v829, %v828
  %v936 = vpack.c.b16 %v831, %v830
  %v937 = vpack.c.b16 %v833, %v832
  %v938 = vpack.c.b16 %v835, %v834
  %v939 = vpack.c.b16 %v837, %v836
  %v940 = vpack.c.b16 %v839, %v838
  %v941 = vpack.c.b16 %v841, %v840
  %v942 = vpack.c.b16 %v843, %v842
  %v943 = vpack.c.b16 %v845, %v844
  %v944 = vpack.c.b16 %v847, %v846
  %v945 = vpack.c.b16 %v849, %v848
  %v946 = vpack.c.b16 %v851, %v850
  %v947 = vpack.c.b16 %v853, %v852
  %v948 = vpack.c.b16 %v855, %v854
  %v949 = vpack.c.b16 %v857, %v856
  %v950 = vpack.c.b16 %v859, %v858
  %v951 = vpack.c.b16 %v861, %v860
  %v952 = vpack.c.b16 %v863, %v862
  %v953 = vpack.c.b16 %v865, %v864
  %v954 = vpack.c.b16 %v867, %v866
  %v955 = vpack.c.b16 %v869, %v868
  %v956 = vpack.c.b16 %v871, %v870
  %v957 = vpack.c.b16 %v873, %v872
  %v958 = vpack.c.b16 %v875, %v874
  %v959 = vpack.c.b16 %v877, %v876
  %v960 = vpack.c.b16 %v879, %v878
  %v961 = vpack.c.b16 %v881, %v880
  %v962 = vpack.c.b16 %v883, %v882
  %v963 = vpack.c.b16 %v885, %v884
  %v964 = vpack.c.b16 %v887, %v886
  %v965 = vpack.c.b16 %v889, %v888
  %v966 = vpack.c.b16 %v891, %v890
  %v967 = vpack.c.b16 %v893, %v892
  %v968 = vpack.c.b16 %v895, %v894
  %v969 = vpack.c.b16 %v897, %v896
  %1042 = vmatpush.bf16.msra.mxu0 %v905
  %1043 = vmatpush.bf16.msra.mxu0 %v904
  %1044 = vmatpush.bf16.msra.mxu0 %v903
  %1045 = vmatpush.bf16.msra.mxu0 %v902
  %1046 = vmatpush.bf16.msra.mxu0 %v901
  %1047 = vmatpush.bf16.msra.mxu0 %v900
  %1048 = vmatpush.bf16.msra.mxu0 %v899
  %1049 = vmatpush.bf16.msra.mxu0 %v898
  %1050 = vmatmul.bf16.gmra.mxu0 %v466
  %v1051 = vpop.f32.mrf.mxu0
  %v1052 = vadd.f32 %v240, %v1051
  %v1053 = vpop.f32.mrf.mxu0
  %v1054 = vadd.f32 %v240, %v1053
  %1055 = vmatmul.bf16.gmra.mxu0 %v475
  %v1056 = vpop.f32.mrf.mxu0
  %v1057 = vadd.f32 %v240, %v1056
  %v1058 = vpop.f32.mrf.mxu0
  %v1059 = vadd.f32 %v240, %v1058
  %1060 = vmatmul.bf16.gmra.mxu0 %v484
  %v1061 = vpop.f32.mrf.mxu0
  %v1062 = vadd.f32 %v240, %v1061
  %v1063 = vpop.f32.mrf.mxu0
  %v1064 = vadd.f32 %v240, %v1063
  %1065 = vmatmul.bf16.gmra.mxu0 %v493
  %v1066 = vpop.f32.mrf.mxu0
  %v1067 = vadd.f32 %v240, %v1066
  %v1068 = vpop.f32.mrf.mxu0
  %v1069 = vadd.f32 %v240, %v1068
  %1070 = vmatmul.bf16.gmra.mxu0 %v502
  %v1071 = vpop.f32.mrf.mxu0
  %v1072 = vadd.f32 %v240, %v1071
  %v1073 = vpop.f32.mrf.mxu0
  %v1074 = vadd.f32 %v240, %v1073
  %1075 = vmatmul.bf16.gmra.mxu0 %v511
  %v1076 = vpop.f32.mrf.mxu0
  %v1077 = vadd.f32 %v240, %v1076
  %v1078 = vpop.f32.mrf.mxu0
  %v1079 = vadd.f32 %v240, %v1078
  %1080 = vmatmul.bf16.gmra.mxu0 %v520
  %v1081 = vpop.f32.mrf.mxu0
  %v1082 = vadd.f32 %v240, %v1081
  %v1083 = vpop.f32.mrf.mxu0
  %v1084 = vadd.f32 %v240, %v1083
  %1085 = vmatmul.bf16.gmra.mxu0 %v529
  %v1086 = vpop.f32.mrf.mxu0
  %v1087 = vadd.f32 %v240, %v1086
  %v1088 = vpop.f32.mrf.mxu0
  %v1089 = vadd.f32 %v240, %v1088
  %1090 = vdwg.mxu0
  %1091 = vmatpush.bf16.msra.mxu0 %v913
  %1092 = vmatpush.bf16.msra.mxu0 %v912
  %1093 = vmatpush.bf16.msra.mxu0 %v911
  %1094 = vmatpush.bf16.msra.mxu0 %v910
  %1095 = vmatpush.bf16.msra.mxu0 %v909
  %1096 = vmatpush.bf16.msra.mxu0 %v908
  %1097 = vmatpush.bf16.msra.mxu0 %v907
  %1098 = vmatpush.bf16.msra.mxu0 %v906
  %1099 = vmatmul.bf16.gmra.mxu0 %v467
  %v1100 = vpop.f32.mrf.mxu0
  %v1101 = vadd.f32 %v1052, %v1100
  %v1102 = vpop.f32.mrf.mxu0
  %v1103 = vadd.f32 %v1054, %v1102
  %1104 = vmatmul.bf16.gmra.mxu0 %v476
  %v1105 = vpop.f32.mrf.mxu0
  %v1106 = vadd.f32 %v1057, %v1105
  %v1107 = vpop.f32.mrf.mxu0
  %v1108 = vadd.f32 %v1059, %v1107
  %1109 = vmatmul.bf16.gmra.mxu0 %v485
  %v1110 = vpop.f32.mrf.mxu0
  %v1111 = vadd.f32 %v1062, %v1110
  %v1112 = vpop.f32.mrf.mxu0
  %v1113 = vadd.f32 %v1064, %v1112
  %1114 = vmatmul.bf16.gmra.mxu0 %v494
  %v1115 = vpop.f32.mrf.mxu0
  %v1116 = vadd.f32 %v1067, %v1115
  %v1117 = vpop.f32.mrf.mxu0
  %v1118 = vadd.f32 %v1069, %v1117
  %1119 = vmatmul.bf16.gmra.mxu0 %v503
  %v1120 = vpop.f32.mrf.mxu0
  %v1121 = vadd.f32 %v1072, %v1120
  %v1122 = vpop.f32.mrf.mxu0
  %v1123 = vadd.f32 %v1074, %v1122
  %1124 = vmatmul.bf16.gmra.mxu0 %v512
  %v1125 = vpop.f32.mrf.mxu0
  %v1126 = vadd.f32 %v1077, %v1125
  %v1127 = vpop.f32.mrf.mxu0
  %v1128 = vadd.f32 %v1079, %v1127
  %1129 = vmatmul.bf16.gmra.mxu0 %v521
  %v1130 = vpop.f32.mrf.mxu0
  %v1131 = vadd.f32 %v1082, %v1130
  %v1132 = vpop.f32.mrf.mxu0
  %v1133 = vadd.f32 %v1084, %v1132
  %1134 = vmatmul.bf16.gmra.mxu0 %v530
  %v1135 = vpop.f32.mrf.mxu0
  %v1136 = vadd.f32 %v1087, %v1135
  %v1137 = vpop.f32.mrf.mxu0
  %v1138 = vadd.f32 %v1089, %v1137
  %1139 = vdwg.mxu0
  %1140 = vmatpush.bf16.msra.mxu0 %v921
  %1141 = vmatpush.bf16.msra.mxu0 %v920
  %1142 = vmatpush.bf16.msra.mxu0 %v919
  %1143 = vmatpush.bf16.msra.mxu0 %v918
  %1144 = vmatpush.bf16.msra.mxu0 %v917
  %1145 = vmatpush.bf16.msra.mxu0 %v916
  %1146 = vmatpush.bf16.msra.mxu0 %v915
  %1147 = vmatpush.bf16.msra.mxu0 %v914
  %1148 = vmatmul.bf16.gmra.mxu0 %v468
  %v1149 = vpop.f32.mrf.mxu0
  %v1150 = vadd.f32 %v1101, %v1149
  %v1151 = vpop.f32.mrf.mxu0
  %v1152 = vadd.f32 %v1103, %v1151
  %1153 = vmatmul.bf16.gmra.mxu0 %v477
  %v1154 = vpop.f32.mrf.mxu0
  %v1155 = vadd.f32 %v1106, %v1154
  %v1156 = vpop.f32.mrf.mxu0
  %v1157 = vadd.f32 %v1108, %v1156
  %1158 = vmatmul.bf16.gmra.mxu0 %v486
  %v1159 = vpop.f32.mrf.mxu0
  %v1160 = vadd.f32 %v1111, %v1159
  %v1161 = vpop.f32.mrf.mxu0
  %v1162 = vadd.f32 %v1113, %v1161
  %1163 = vmatmul.bf16.gmra.mxu0 %v495
  %v1164 = vpop.f32.mrf.mxu0
  %v1165 = vadd.f32 %v1116, %v1164
  %v1166 = vpop.f32.mrf.mxu0
  %v1167 = vadd.f32 %v1118, %v1166
  %1168 = vmatmul.bf16.gmra.mxu0 %v504
  %v1169 = vpop.f32.mrf.mxu0
  %v1170 = vadd.f32 %v1121, %v1169
  %v1171 = vpop.f32.mrf.mxu0
  %v1172 = vadd.f32 %v1123, %v1171
  %1173 = vmatmul.bf16.gmra.mxu0 %v513
  %v1174 = vpop.f32.mrf.mxu0
  %v1175 = vadd.f32 %v1126, %v1174
  %v1176 = vpop.f32.mrf.mxu0
  %v1177 = vadd.f32 %v1128, %v1176
  %1178 = vmatmul.bf16.gmra.mxu0 %v522
  %v1179 = vpop.f32.mrf.mxu0
  %v1180 = vadd.f32 %v1131, %v1179
  %v1181 = vpop.f32.mrf.mxu0
  %v1182 = vadd.f32 %v1133, %v1181
  %1183 = vmatmul.bf16.gmra.mxu0 %v531
  %v1184 = vpop.f32.mrf.mxu0
  %v1185 = vadd.f32 %v1136, %v1184
  %v1186 = vpop.f32.mrf.mxu0
  %v1187 = vadd.f32 %v1138, %v1186
  %1188 = vdwg.mxu0
  %1189 = vmatpush.bf16.msra.mxu0 %v929
  %1190 = vmatpush.bf16.msra.mxu0 %v928
  %1191 = vmatpush.bf16.msra.mxu0 %v927
  %1192 = vmatpush.bf16.msra.mxu0 %v926
  %1193 = vmatpush.bf16.msra.mxu0 %v925
  %1194 = vmatpush.bf16.msra.mxu0 %v924
  %1195 = vmatpush.bf16.msra.mxu0 %v923
  %1196 = vmatpush.bf16.msra.mxu0 %v922
  %1197 = vmatmul.bf16.gmra.mxu0 %v469
  %v1198 = vpop.f32.mrf.mxu0
  %v1199 = vadd.f32 %v1150, %v1198
  %v1200 = vpop.f32.mrf.mxu0
  %v1201 = vadd.f32 %v1152, %v1200
  %1202 = vmatmul.bf16.gmra.mxu0 %v478
  %v1203 = vpop.f32.mrf.mxu0
  %v1204 = vadd.f32 %v1155, %v1203
  %v1205 = vpop.f32.mrf.mxu0
  %v1206 = vadd.f32 %v1157, %v1205
  %1207 = vmatmul.bf16.gmra.mxu0 %v487
  %v1208 = vpop.f32.mrf.mxu0
  %v1209 = vadd.f32 %v1160, %v1208
  %v1210 = vpop.f32.mrf.mxu0
  %v1211 = vadd.f32 %v1162, %v1210
  %1212 = vmatmul.bf16.gmra.mxu0 %v496
  %v1213 = vpop.f32.mrf.mxu0
  %v1214 = vadd.f32 %v1165, %v1213
  %v1215 = vpop.f32.mrf.mxu0
  %v1216 = vadd.f32 %v1167, %v1215
  %1217 = vmatmul.bf16.gmra.mxu0 %v505
  %v1218 = vpop.f32.mrf.mxu0
  %v1219 = vadd.f32 %v1170, %v1218
  %v1220 = vpop.f32.mrf.mxu0
  %v1221 = vadd.f32 %v1172, %v1220
  %1222 = vmatmul.bf16.gmra.mxu0 %v514
  %v1223 = vpop.f32.mrf.mxu0
  %v1224 = vadd.f32 %v1175, %v1223
  %v1225 = vpop.f32.mrf.mxu0
  %v1226 = vadd.f32 %v1177, %v1225
  %1227 = vmatmul.bf16.gmra.mxu0 %v523
  %v1228 = vpop.f32.mrf.mxu0
  %v1229 = vadd.f32 %v1180, %v1228
  %v1230 = vpop.f32.mrf.mxu0
  %v1231 = vadd.f32 %v1182, %v1230
  %1232 = vmatmul.bf16.gmra.mxu0 %v532
  %v1233 = vpop.f32.mrf.mxu0
  %v1234 = vadd.f32 %v1185, %v1233
  %v1235 = vpop.f32.mrf.mxu0
  %v1236 = vadd.f32 %v1187, %v1235
  %1237 = vdwg.mxu0
  %1238 = vmatpush.bf16.msra.mxu0 %v937
  %1239 = vmatpush.bf16.msra.mxu0 %v936
  %1240 = vmatpush.bf16.msra.mxu0 %v935
  %1241 = vmatpush.bf16.msra.mxu0 %v934
  %1242 = vmatpush.bf16.msra.mxu0 %v933
  %1243 = vmatpush.bf16.msra.mxu0 %v932
  %1244 = vmatpush.bf16.msra.mxu0 %v931
  %1245 = vmatpush.bf16.msra.mxu0 %v930
  %1246 = vmatmul.bf16.gmra.mxu0 %v470
  %v1247 = vpop.f32.mrf.mxu0
  %v1248 = vadd.f32 %v1199, %v1247
  %v1249 = vpop.f32.mrf.mxu0
  %v1250 = vadd.f32 %v1201, %v1249
  %1251 = vmatmul.bf16.gmra.mxu0 %v479
  %v1252 = vpop.f32.mrf.mxu0
  %v1253 = vadd.f32 %v1204, %v1252
  %v1254 = vpop.f32.mrf.mxu0
  %v1255 = vadd.f32 %v1206, %v1254
  %1256 = vmatmul.bf16.gmra.mxu0 %v488
  %v1257 = vpop.f32.mrf.mxu0
  %v1258 = vadd.f32 %v1209, %v1257
  %v1259 = vpop.f32.mrf.mxu0
  %v1260 = vadd.f32 %v1211, %v1259
  %1261 = vmatmul.bf16.gmra.mxu0 %v497
  %v1262 = vpop.f32.mrf.mxu0
  %v1263 = vadd.f32 %v1214, %v1262
  %v1264 = vpop.f32.mrf.mxu0
  %v1265 = vadd.f32 %v1216, %v1264
  %1266 = vmatmul.bf16.gmra.mxu0 %v506
  %v1267 = vpop.f32.mrf.mxu0
  %v1268 = vadd.f32 %v1219, %v1267
  %v1269 = vpop.f32.mrf.mxu0
  %v1270 = vadd.f32 %v1221, %v1269
  %1271 = vmatmul.bf16.gmra.mxu0 %v515
  %v1272 = vpop.f32.mrf.mxu0
  %v1273 = vadd.f32 %v1224, %v1272
  %v1274 = vpop.f32.mrf.mxu0
  %v1275 = vadd.f32 %v1226, %v1274
  %1276 = vmatmul.bf16.gmra.mxu0 %v524
  %v1277 = vpop.f32.mrf.mxu0
  %v1278 = vadd.f32 %v1229, %v1277
  %v1279 = vpop.f32.mrf.mxu0
  %v1280 = vadd.f32 %v1231, %v1279
  %1281 = vmatmul.bf16.gmra.mxu0 %v533
  %v1282 = vpop.f32.mrf.mxu0
  %v1283 = vadd.f32 %v1234, %v1282
  %v1284 = vpop.f32.mrf.mxu0
  %v1285 = vadd.f32 %v1236, %v1284
  %1286 = vdwg.mxu0
  %1287 = vmatpush.bf16.msra.mxu0 %v945
  %1288 = vmatpush.bf16.msra.mxu0 %v944
  %1289 = vmatpush.bf16.msra.mxu0 %v943
  %1290 = vmatpush.bf16.msra.mxu0 %v942
  %1291 = vmatpush.bf16.msra.mxu0 %v941
  %1292 = vmatpush.bf16.msra.mxu0 %v940
  %1293 = vmatpush.bf16.msra.mxu0 %v939
  %1294 = vmatpush.bf16.msra.mxu0 %v938
  %1295 = vmatmul.bf16.gmra.mxu0 %v471
  %v1296 = vpop.f32.mrf.mxu0
  %v1297 = vadd.f32 %v1248, %v1296
  %v1298 = vpop.f32.mrf.mxu0
  %v1299 = vadd.f32 %v1250, %v1298
  %1300 = vmatmul.bf16.gmra.mxu0 %v480
  %v1301 = vpop.f32.mrf.mxu0
  %v1302 = vadd.f32 %v1253, %v1301
  %v1303 = vpop.f32.mrf.mxu0
  %v1304 = vadd.f32 %v1255, %v1303
  %1305 = vmatmul.bf16.gmra.mxu0 %v489
  %v1306 = vpop.f32.mrf.mxu0
  %v1307 = vadd.f32 %v1258, %v1306
  %v1308 = vpop.f32.mrf.mxu0
  %v1309 = vadd.f32 %v1260, %v1308
  %1310 = vmatmul.bf16.gmra.mxu0 %v498
  %v1311 = vpop.f32.mrf.mxu0
  %v1312 = vadd.f32 %v1263, %v1311
  %v1313 = vpop.f32.mrf.mxu0
  %v1314 = vadd.f32 %v1265, %v1313
  %1315 = vmatmul.bf16.gmra.mxu0 %v507
  %v1316 = vpop.f32.mrf.mxu0
  %v1317 = vadd.f32 %v1268, %v1316
  %v1318 = vpop.f32.mrf.mxu0
  %v1319 = vadd.f32 %v1270, %v1318
  %1320 = vmatmul.bf16.gmra.mxu0 %v516
  %v1321 = vpop.f32.mrf.mxu0
  %v1322 = vadd.f32 %v1273, %v1321
  %v1323 = vpop.f32.mrf.mxu0
  %v1324 = vadd.f32 %v1275, %v1323
  %1325 = vmatmul.bf16.gmra.mxu0 %v525
  %v1326 = vpop.f32.mrf.mxu0
  %v1327 = vadd.f32 %v1278, %v1326
  %v1328 = vpop.f32.mrf.mxu0
  %v1329 = vadd.f32 %v1280, %v1328
  %1330 = vmatmul.bf16.gmra.mxu0 %v534
  %v1331 = vpop.f32.mrf.mxu0
  %v1332 = vadd.f32 %v1283, %v1331
  %v1333 = vpop.f32.mrf.mxu0
  %v1334 = vadd.f32 %v1285, %v1333
  %1335 = vdwg.mxu0
  %1336 = vmatpush.bf16.msra.mxu0 %v953
  %1337 = vmatpush.bf16.msra.mxu0 %v952
  %1338 = vmatpush.bf16.msra.mxu0 %v951
  %1339 = vmatpush.bf16.msra.mxu0 %v950
  %1340 = vmatpush.bf16.msra.mxu0 %v949
  %1341 = vmatpush.bf16.msra.mxu0 %v948
  %1342 = vmatpush.bf16.msra.mxu0 %v947
  %1343 = vmatpush.bf16.msra.mxu0 %v946
  %1344 = vmatmul.bf16.gmra.mxu0 %v472
  %v1345 = vpop.f32.mrf.mxu0
  %v1346 = vadd.f32 %v1297, %v1345
  %v1347 = vpop.f32.mrf.mxu0
  %v1348 = vadd.f32 %v1299, %v1347
  %1349 = vmatmul.bf16.gmra.mxu0 %v481
  %v1350 = vpop.f32.mrf.mxu0
  %v1351 = vadd.f32 %v1302, %v1350
  %v1352 = vpop.f32.mrf.mxu0
  %v1353 = vadd.f32 %v1304, %v1352
  %1354 = vmatmul.bf16.gmra.mxu0 %v490
  %v1355 = vpop.f32.mrf.mxu0
  %v1356 = vadd.f32 %v1307, %v1355
  %v1357 = vpop.f32.mrf.mxu0
  %v1358 = vadd.f32 %v1309, %v1357
  %1359 = vmatmul.bf16.gmra.mxu0 %v499
  %v1360 = vpop.f32.mrf.mxu0
  %v1361 = vadd.f32 %v1312, %v1360
  %v1362 = vpop.f32.mrf.mxu0
  %v1363 = vadd.f32 %v1314, %v1362
  %1364 = vmatmul.bf16.gmra.mxu0 %v508
  %v1365 = vpop.f32.mrf.mxu0
  %v1366 = vadd.f32 %v1317, %v1365
  %v1367 = vpop.f32.mrf.mxu0
  %v1368 = vadd.f32 %v1319, %v1367
  %1369 = vmatmul.bf16.gmra.mxu0 %v517
  %v1370 = vpop.f32.mrf.mxu0
  %v1371 = vadd.f32 %v1322, %v1370
  %v1372 = vpop.f32.mrf.mxu0
  %v1373 = vadd.f32 %v1324, %v1372
  %1374 = vmatmul.bf16.gmra.mxu0 %v526
  %v1375 = vpop.f32.mrf.mxu0
  %v1376 = vadd.f32 %v1327, %v1375
  %v1377 = vpop.f32.mrf.mxu0
  %v1378 = vadd.f32 %v1329, %v1377
  %1379 = vmatmul.bf16.gmra.mxu0 %v535
  %v1380 = vpop.f32.mrf.mxu0
  %v1381 = vadd.f32 %v1332, %v1380
  %v1382 = vpop.f32.mrf.mxu0
  %v1383 = vadd.f32 %v1334, %v1382
  %1384 = vdwg.mxu0
  %1385 = vmatpush.bf16.msra.mxu0 %v961
  %1386 = vmatpush.bf16.msra.mxu0 %v960
  %1387 = vmatpush.bf16.msra.mxu0 %v959
  %1388 = vmatpush.bf16.msra.mxu0 %v958
  %1389 = vmatpush.bf16.msra.mxu0 %v957
  %1390 = vmatpush.bf16.msra.mxu0 %v956
  %1391 = vmatpush.bf16.msra.mxu0 %v955
  %1392 = vmatpush.bf16.msra.mxu0 %v954
  %1393 = vmatmul.bf16.gmra.mxu0 %v473
  %v1394 = vpop.f32.mrf.mxu0
  %v1395 = vadd.f32 %v1346, %v1394
  %v1396 = vpop.f32.mrf.mxu0
  %v1397 = vadd.f32 %v1348, %v1396
  %1398 = vmatmul.bf16.gmra.mxu0 %v482
  %v1399 = vpop.f32.mrf.mxu0
  %v1400 = vadd.f32 %v1351, %v1399
  %v1401 = vpop.f32.mrf.mxu0
  %v1402 = vadd.f32 %v1353, %v1401
  %1403 = vmatmul.bf16.gmra.mxu0 %v491
  %v1404 = vpop.f32.mrf.mxu0
  %v1405 = vadd.f32 %v1356, %v1404
  %v1406 = vpop.f32.mrf.mxu0
  %v1407 = vadd.f32 %v1358, %v1406
  %1408 = vmatmul.bf16.gmra.mxu0 %v500
  %v1409 = vpop.f32.mrf.mxu0
  %v1410 = vadd.f32 %v1361, %v1409
  %v1411 = vpop.f32.mrf.mxu0
  %v1412 = vadd.f32 %v1363, %v1411
  %1413 = vmatmul.bf16.gmra.mxu0 %v509
  %v1414 = vpop.f32.mrf.mxu0
  %v1415 = vadd.f32 %v1366, %v1414
  %v1416 = vpop.f32.mrf.mxu0
  %v1417 = vadd.f32 %v1368, %v1416
  %1418 = vmatmul.bf16.gmra.mxu0 %v518
  %v1419 = vpop.f32.mrf.mxu0
  %v1420 = vadd.f32 %v1371, %v1419
  %v1421 = vpop.f32.mrf.mxu0
  %v1422 = vadd.f32 %v1373, %v1421
  %1423 = vmatmul.bf16.gmra.mxu0 %v527
  %v1424 = vpop.f32.mrf.mxu0
  %v1425 = vadd.f32 %v1376, %v1424
  %v1426 = vpop.f32.mrf.mxu0
  %v1427 = vadd.f32 %v1378, %v1426
  %1428 = vmatmul.bf16.gmra.mxu0 %v536
  %v1429 = vpop.f32.mrf.mxu0
  %v1430 = vadd.f32 %v1381, %v1429
  %v1431 = vpop.f32.mrf.mxu0
  %v1432 = vadd.f32 %v1383, %v1431
  %1433 = vdwg.mxu0
  %1434 = vmatpush.bf16.msra.mxu0 %v969
  %1435 = vmatpush.bf16.msra.mxu0 %v968
  %1436 = vmatpush.bf16.msra.mxu0 %v967
  %1437 = vmatpush.bf16.msra.mxu0 %v966
  %1438 = vmatpush.bf16.msra.mxu0 %v965
  %1439 = vmatpush.bf16.msra.mxu0 %v964
  %1440 = vmatpush.bf16.msra.mxu0 %v963
  %1441 = vmatpush.bf16.msra.mxu0 %v962
  %1442 = vmatmul.bf16.gmra.mxu0 %v474
  %v1443 = vpop.f32.mrf.mxu0
  %v1444 = vadd.f32 %v1395, %v1443
  %v1445 = vpop.f32.mrf.mxu0
  %v1446 = vadd.f32 %v1397, %v1445
  %1447 = vmatmul.bf16.gmra.mxu0 %v483
  %v1448 = vpop.f32.mrf.mxu0
  %v1449 = vadd.f32 %v1400, %v1448
  %v1450 = vpop.f32.mrf.mxu0
  %v1451 = vadd.f32 %v1402, %v1450
  %1452 = vmatmul.bf16.gmra.mxu0 %v492
  %v1453 = vpop.f32.mrf.mxu0
  %v1454 = vadd.f32 %v1405, %v1453
  %v1455 = vpop.f32.mrf.mxu0
  %v1456 = vadd.f32 %v1407, %v1455
  %1457 = vmatmul.bf16.gmra.mxu0 %v501
  %v1458 = vpop.f32.mrf.mxu0
  %v1459 = vadd.f32 %v1410, %v1458
  %v1460 = vpop.f32.mrf.mxu0
  %v1461 = vadd.f32 %v1412, %v1460
  %1462 = vmatmul.bf16.gmra.mxu0 %v510
  %v1463 = vpop.f32.mrf.mxu0
  %v1464 = vadd.f32 %v1415, %v1463
  %v1465 = vpop.f32.mrf.mxu0
  %v1466 = vadd.f32 %v1417, %v1465
  %1467 = vmatmul.bf16.gmra.mxu0 %v519
  %v1468 = vpop.f32.mrf.mxu0
  %v1469 = vadd.f32 %v1420, %v1468
  %v1470 = vpop.f32.mrf.mxu0
  %v1471 = vadd.f32 %v1422, %v1470
  %1472 = vmatmul.bf16.gmra.mxu0 %v528
  %v1473 = vpop.f32.mrf.mxu0
  %v1474 = vadd.f32 %v1425, %v1473
  %v1475 = vpop.f32.mrf.mxu0
  %v1476 = vadd.f32 %v1427, %v1475
  %1477 = vmatmul.bf16.gmra.mxu0 %v537
  %v1478 = vpop.f32.mrf.mxu0
  %v1479 = vadd.f32 %v1430, %v1478
  %v1480 = vpop.f32.mrf.mxu0
  %v1481 = vadd.f32 %v1432, %v1480
  %1482 = vdwg.mxu0
  %v1483 = vmul.f32 %v1444, 0.2
  %v1484 = vmul.f32 %v1446, 0.2
  %v1485 = vmul.f32 %v1449, 0.2
  %v1486 = vmul.f32 %v1451, 0.2
  %v1487 = vmul.f32 %v1454, 0.2
  %v1488 = vmul.f32 %v1456, 0.2
  %v1489 = vmul.f32 %v1459, 0.2
  %v1490 = vmul.f32 %v1461, 0.2
  %v1491 = vmul.f32 %v1464, 0.2
  %v1492 = vmul.f32 %v1466, 0.2
  %v1493 = vmul.f32 %v1469, 0.2
  %v1494 = vmul.f32 %v1471, 0.2
  %v1495 = vmul.f32 %v1474, 0.2
  %v1496 = vmul.f32 %v1476, 0.2
  %v1497 = vmul.f32 %v1479, 0.2
  %v1498 = vmul.f32 %v1481, 0.2
  %v1499 = vmax.f32 %v1444, %v1483
  %v1500 = vmax.f32 %v1446, %v1484
  %v1501 = vmax.f32 %v1449, %v1485
  %v1502 = vmax.f32 %v1451, %v1486
  %v1503 = vmax.f32 %v1454, %v1487
  %v1504 = vmax.f32 %v1456, %v1488
  %v1505 = vmax.f32 %v1459, %v1489
  %v1506 = vmax.f32 %v1461, %v1490
  %v1507 = vmax.f32 %v1464, %v1491
  %v1508 = vmax.f32 %v1466, %v1492
  %v1509 = vmax.f32 %v1469, %v1493
  %v1510 = vmax.f32 %v1471, %v1494
  %v1511 = vmax.f32 %v1474, %v1495
  %v1512 = vmax.f32 %v1476, %v1496
  %v1513 = vmax.f32 %v1479, %v1497
  %v1514 = vmax.f32 %v1481, %v1498
  %v1515 = vpack.c.bf16 %v1499, %v1499
  %v1516 = vpack.c.bf16 %v1500, %v1500
  %v1517 = vpack.c.bf16 %v1501, %v1501
  %v1518 = vpack.c.bf16 %v1502, %v1502
  %v1519 = vpack.c.bf16 %v1503, %v1503
  %v1520 = vpack.c.bf16 %v1504, %v1504
  %v1521 = vpack.c.bf16 %v1505, %v1505
  %v1522 = vpack.c.bf16 %v1506, %v1506
  %v1523 = vpack.c.bf16 %v1507, %v1507
  %v1524 = vpack.c.bf16 %v1508, %v1508
  %v1525 = vpack.c.bf16 %v1509, %v1509
  %v1526 = vpack.c.bf16 %v1510, %v1510
  %v1527 = vpack.c.bf16 %v1511, %v1511
  %v1528 = vpack.c.bf16 %v1512, %v1512
  %v1529 = vpack.c.bf16 %v1513, %v1513
  %v1530 = vpack.c.bf16 %v1514, %v1514
  %1531 = vst [vmem:[%s3] sm:$0xf] %v1515
  %1532 = vst [vmem:[%s3 + $0x4] sm:$0xf] %v1516
  %1533 = vst [vmem:[%s3 + $0x8] sm:$0xf] %v1517
  %1534 = vst [vmem:[%s3 + $0xc] sm:$0xf] %v1518
  %1535 = vst [vmem:[%s3 + $0x10] sm:$0xf] %v1519
  %1536 = vst [vmem:[%s3 + $0x14] sm:$0xf] %v1520
  %1537 = vst [vmem:[%s3 + $0x18] sm:$0xf] %v1521
  %1538 = vst [vmem:[%s3 + $0x1c] sm:$0xf] %v1522
  %1539 = vst [vmem:[%s3 + $0x20] sm:$0xf] %v1523
  %1540 = vst [vmem:[%s3 + $0x24] sm:$0xf] %v1524
  %1541 = vst [vmem:[%s3 + $0x28] sm:$0xf] %v1525
  %1542 = vst [vmem:[%s3 + $0x2c] sm:$0xf] %v1526
  %1543 = vst [vmem:[%s3 + $0x30] sm:$0xf] %v1527
  %1544 = vst [vmem:[%s3 + $0x34] sm:$0xf] %v1528
  %1545 = vst [vmem:[%s3 + $0x38] sm:$0xf] %v1529
  %1546 = vst [vmem:[%s3 + $0x3c] sm:$0xf] %v1530
  // Predicated region
  $region14: #{deep_cnn0_forward.7} parent=0 // pred_check
    _
  $region15: #{deep_cnn0_forward.7} parent=0 // pred_check_branch
    %1548 = sbr.rel (0) target = $region17
  $region16: #{deep_cnn0_forward.7} parent=0 // pred_region
    _
  $region17: #{deep_cnn0_forward.7} parent=0 // pred_fallthru
    _
  // Predicated region
  $region18: #{deep_cnn0_forward.7} parent=0 // pred_check
    _
  $region19: #{deep_cnn0_forward.7} parent=0 // pred_check_branch
    %1550 = sbr.rel (0) target = $region21
  $region20: #{deep_cnn0_forward.7} parent=0 // pred_region
    _
  $region21: #{deep_cnn0_forward.7} parent=0 // pred_fallthru
    _

// kernel: deep_cnn0_forward.8
$region0: #{deep_cnn0_forward.8}
  #allocation0 [shape = 'u32[]', space=smem, size = 0x4, offset = 0x4, fixed_abs, tag = 'smem constant byte address 0x4 - core index']
  #allocation1 [shape = 'u32[72,128]{1,0:T(1,128)}', space=vmem, size = 0x9000, scoped, tag = 'internal scratch']
  %s0 = inlined_call_operand.vmem [shape: bf16[32,1152], index: 0, kind: input, shape index: {}]
  %s1 = inlined_call_operand.vmem [shape: bf16[1152,256], index: 1, kind: input, shape index: {}]
  %s2 = inlined_call_operand.vmem [shape: f32[1,256], index: 2, kind: input, shape index: {}]
  %s3 = inlined_call_operand.vmem [shape: bf16[32,256], index: 3, kind: output, shape index: {}]
  %s4 = sld [smem:[#allocation0]]
  $region22: #{deep_cnn0_forward.8} parent=0
    _
  %s6 = ssub.s32 1, %s4
  %s7 = scalar_select 0, %s6, %s4
  // Predicated region
  $region2: #{deep_cnn0_forward.8} parent=0 // pred_check
    _
  $region3: #{deep_cnn0_forward.8} parent=0 // pred_check_branch
    %9 = sbr.rel (0) target = $region5
  $region4: #{deep_cnn0_forward.8} parent=0 // pred_region
    _
  $region5: #{deep_cnn0_forward.8} parent=0 // pred_fallthru
    _
  // Predicated region
  $region6: #{deep_cnn0_forward.8} parent=0 // pred_check
    _
  $region7: #{deep_cnn0_forward.8} parent=0 // pred_check_branch
    %11 = sbr.rel (0) target = $region9
  $region8: #{deep_cnn0_forward.8} parent=0 // pred_region
    _
  $region9: #{deep_cnn0_forward.8} parent=0 // pred_fallthru
    _
  // Predicated region
  $region10: #{deep_cnn0_forward.8} parent=0 // pred_check
    _
  $region11: #{deep_cnn0_forward.8} parent=0 // pred_check_branch
    %13 = sbr.rel (0) target = $region13
  $region12: #{deep_cnn0_forward.8} parent=0 // pred_region
    _
  $region13: #{deep_cnn0_forward.8} parent=0 // pred_fallthru
    _
  %v14 = vld [vmem:[%s0] sm:$0xff]
  %v15 = vld [vmem:[%s0 + $0x8] sm:$0xff]
  %v16 = vld [vmem:[%s0 + $0x10] sm:$0xff]
  %v17 = vld [vmem:[%s0 + $0x18] sm:$0xff]
  %v18 = vld [vmem:[%s0 + $0x20] sm:$0xf]
  %v19 = vld [vmem:[%s0 + $0x24] sm:$0xff]
  %v20 = vld [vmem:[%s0 + $0x2c] sm:$0xff]
  %v21 = vld [vmem:[%s0 + $0x34] sm:$0xff]
  %v22 = vld [vmem:[%s0 + $0x3c] sm:$0xff]
  %v23 = vld [vmem:[%s0 + $0x44] sm:$0xf]
  %v24 = vld [vmem:[%s0 + $0x48] sm:$0xff]
  %v25 = vld [vmem:[%s0 + $0x50] sm:$0xff]
  %v26 = vld [vmem:[%s0 + $0x58] sm:$0xff]
  %v27 = vld [vmem:[%s0 + $0x60] sm:$0xff]
  %v28 = vld [vmem:[%s0 + $0x68] sm:$0xf]
  %v29 = vld [vmem:[%s0 + $0x6c] sm:$0xff]
  %v30 = vld [vmem:[%s0 + $0x74] sm:$0xff]
  %v31 = vld [vmem:[%s0 + $0x7c] sm:$0xff]
  %v32 = vld [vmem:[%s0 + $0x84] sm:$0xff]
  %v33 = vld [vmem:[%s0 + $0x8c] sm:$0xf]
  %v34 = vld [vmem:[%s1] sm:$0xff]
  %v35 = vld [vmem:[%s1 + $0x8] sm:$0xff]
  %v36 = vld [vmem:[%s1 + $0x10] sm:$0xff]
  %v37 = vld [vmem:[%s1 + $0x18] sm:$0xff]
  %v38 = vld [vmem:[%s1 + $0x20] sm:$0xff]
  %v39 = vld [vmem:[%s1 + $0x28] sm:$0xff]
  %v40 = vld [vmem:[%s1 + $0x30] sm:$0xff]
  %v41 = vld [vmem:[%s1 + $0x38] sm:$0xff]
  %v42 = vld [vmem:[%s1 + $0x40] sm:$0xff]
  %v43 = vld [vmem:[%s1 + $0x48] sm:$0xff]
  %v44 = vld [vmem:[%s1 + $0x50] sm:$0xff]
  %v45 = vld [vmem:[%s1 + $0x58] sm:$0xff]
  %v46 = vld [vmem:[%s1 + $0x60] sm:$0xff]
  %v47 = vld [vmem:[%s1 + $0x68] sm:$0xff]
  %v48 = vld [vmem:[%s1 + $0x70] sm:$0xff]
  %v49 = vld [vmem:[%s1 + $0x78] sm:$0xff]
  %v50 = vld [vmem:[%s1 + $0x80] sm:$0xff]
  %v51 = vld [vmem:[%s1 + $0x88] sm:$0xff]
  %v52 = vld [vmem:[%s1 + $0x90] sm:$0xff]
  %v53 = vld [vmem:[%s1 + $0x98] sm:$0xff]
  %v54 = vld [vmem:[%s1 + $0xa0] sm:$0xff]
  %v55 = vld [vmem:[%s1 + $0xa8] sm:$0xff]
  %v56 = vld [vmem:[%s1 + $0xb0] sm:$0xff]
  %v57 = vld [vmem:[%s1 + $0xb8] sm:$0xff]
  %v58 = vld [vmem:[%s1 + $0xc0] sm:$0xff]
  %v59 = vld [vmem:[%s1 + $0xc8] sm:$0xff]
  %v60 = vld [vmem:[%s1 + $0xd0] sm:$0xff]
  %v61 = vld [vmem:[%s1 + $0xd8] sm:$0xff]
  %v62 = vld [vmem:[%s1 + $0xe0] sm:$0xff]
  %v63 = vld [vmem:[%s1 + $0xe8] sm:$0xff]
  %v64 = vld [vmem:[%s1 + $0xf0] sm:$0xff]
  %v65 = vld [vmem:[%s1 + $0xf8] sm:$0xff]
  %v66 = vld [vmem:[%s1 + $0x100] sm:$0xff]
  %v67 = vld [vmem:[%s1 + $0x108] sm:$0xff]
  %v68 = vld [vmem:[%s1 + $0x110] sm:$0xff]
  %v69 = vld [vmem:[%s1 + $0x118] sm:$0xff]
  %v70 = vld [vmem:[%s1 + $0x120] sm:$0xff]
  %v71 = vld [vmem:[%s1 + $0x128] sm:$0xff]
  %v72 = vld [vmem:[%s1 + $0x130] sm:$0xff]
  %v73 = vld [vmem:[%s1 + $0x138] sm:$0xff]
  %v74 = vld [vmem:[%s1 + $0x140] sm:$0xff]
  %v75 = vld [vmem:[%s1 + $0x148] sm:$0xff]
  %v76 = vld [vmem:[%s1 + $0x150] sm:$0xff]
  %v77 = vld [vmem:[%s1 + $0x158] sm:$0xff]
  %v78 = vld [vmem:[%s1 + $0x160] sm:$0xff]
  %v79 = vld [vmem:[%s1 + $0x168] sm:$0xff]
  %v80 = vld [vmem:[%s1 + $0x170] sm:$0xff]
  %v81 = vld [vmem:[%s1 + $0x178] sm:$0xff]
  %v82 = vld [vmem:[%s1 + $0x180] sm:$0xff]
  %v83 = vld [vmem:[%s1 + $0x188] sm:$0xff]
  %v84 = vld [vmem:[%s1 + $0x190] sm:$0xff]
  %v85 = vld [vmem:[%s1 + $0x198] sm:$0xff]
  %v86 = vld [vmem:[%s1 + $0x1a0] sm:$0xff]
  %v87 = vld [vmem:[%s1 + $0x1a8] sm:$0xff]
  %v88 = vld [vmem:[%s1 + $0x1b0] sm:$0xff]
  %v89 = vld [vmem:[%s1 + $0x1b8] sm:$0xff]
  %v90 = vld [vmem:[%s1 + $0x1c0] sm:$0xff]
  %v91 = vld [vmem:[%s1 + $0x1c8] sm:$0xff]
  %v92 = vld [vmem:[%s1 + $0x1d0] sm:$0xff]
  %v93 = vld [vmem:[%s1 + $0x1d8] sm:$0xff]
  %v94 = vld [vmem:[%s1 + $0x1e0] sm:$0xff]
  %v95 = vld [vmem:[%s1 + $0x1e8] sm:$0xff]
  %v96 = vld [vmem:[%s1 + $0x1f0] sm:$0xff]
  %v97 = vld [vmem:[%s1 + $0x1f8] sm:$0xff]
  %v98 = vld [vmem:[%s1 + $0x200] sm:$0xff]
  %v99 = vld [vmem:[%s1 + $0x208] sm:$0xff]
  %v100 = vld [vmem:[%s1 + $0x210] sm:$0xff]
  %v101 = vld [vmem:[%s1 + $0x218] sm:$0xff]
  %v102 = vld [vmem:[%s1 + $0x220] sm:$0xff]
  %v103 = vld [vmem:[%s1 + $0x228] sm:$0xff]
  %v104 = vld [vmem:[%s1 + $0x230] sm:$0xff]
  %v105 = vld [vmem:[%s1 + $0x238] sm:$0xff]
  %v106 = vld [vmem:[%s1 + $0x240] sm:$0xff]
  %v107 = vld [vmem:[%s1 + $0x248] sm:$0xff]
  %v108 = vld [vmem:[%s1 + $0x250] sm:$0xff]
  %v109 = vld [vmem:[%s1 + $0x258] sm:$0xff]
  %v110 = vld [vmem:[%s1 + $0x260] sm:$0xff]
  %v111 = vld [vmem:[%s1 + $0x268] sm:$0xff]
  %v112 = vld [vmem:[%s1 + $0x270] sm:$0xff]
  %v113 = vld [vmem:[%s1 + $0x278] sm:$0xff]
  %v114 = vld [vmem:[%s1 + $0x280] sm:$0xff]
  %v115 = vld [vmem:[%s1 + $0x288] sm:$0xff]
  %v116 = vld [vmem:[%s1 + $0x290] sm:$0xff]
  %v117 = vld [vmem:[%s1 + $0x298] sm:$0xff]
  %v118 = vld [vmem:[%s1 + $0x2a0] sm:$0xff]
  %v119 = vld [vmem:[%s1 + $0x2a8] sm:$0xff]
  %v120 = vld [vmem:[%s1 + $0x2b0] sm:$0xff]
  %v121 = vld [vmem:[%s1 + $0x2b8] sm:$0xff]
  %v122 = vld [vmem:[%s1 + $0x2c0] sm:$0xff]
  %v123 = vld [vmem:[%s1 + $0x2c8] sm:$0xff]
  %v124 = vld [vmem:[%s1 + $0x2d0] sm:$0xff]
  %v125 = vld [vmem:[%s1 + $0x2d8] sm:$0xff]
  %v126 = vld [vmem:[%s1 + $0x2e0] sm:$0xff]
  %v127 = vld [vmem:[%s1 + $0x2e8] sm:$0xff]
  %v128 = vld [vmem:[%s1 + $0x2f0] sm:$0xff]
  %v129 = vld [vmem:[%s1 + $0x2f8] sm:$0xff]
  %v130 = vld [vmem:[%s1 + $0x300] sm:$0xff]
  %v131 = vld [vmem:[%s1 + $0x308] sm:$0xff]
  %v132 = vld [vmem:[%s1 + $0x310] sm:$0xff]
  %v133 = vld [vmem:[%s1 + $0x318] sm:$0xff]
  %v134 = vld [vmem:[%s1 + $0x320] sm:$0xff]
  %v135 = vld [vmem:[%s1 + $0x328] sm:$0xff]
  %v136 = vld [vmem:[%s1 + $0x330] sm:$0xff]
  %v137 = vld [vmem:[%s1 + $0x338] sm:$0xff]
  %v138 = vld [vmem:[%s1 + $0x340] sm:$0xff]
  %v139 = vld [vmem:[%s1 + $0x348] sm:$0xff]
  %v140 = vld [vmem:[%s1 + $0x350] sm:$0xff]
  %v141 = vld [vmem:[%s1 + $0x358] sm:$0xff]
  %v142 = vld [vmem:[%s1 + $0x360] sm:$0xff]
  %v143 = vld [vmem:[%s1 + $0x368] sm:$0xff]
  %v144 = vld [vmem:[%s1 + $0x370] sm:$0xff]
  %v145 = vld [vmem:[%s1 + $0x378] sm:$0xff]
  %v146 = vld [vmem:[%s1 + $0x380] sm:$0xff]
  %v147 = vld [vmem:[%s1 + $0x388] sm:$0xff]
  %v148 = vld [vmem:[%s1 + $0x390] sm:$0xff]
  %v149 = vld [vmem:[%s1 + $0x398] sm:$0xff]
  %v150 = vld [vmem:[%s1 + $0x3a0] sm:$0xff]
  %v151 = vld [vmem:[%s1 + $0x3a8] sm:$0xff]
  %v152 = vld [vmem:[%s1 + $0x3b0] sm:$0xff]
  %v153 = vld [vmem:[%s1 + $0x3b8] sm:$0xff]
  %v154 = vld [vmem:[%s1 + $0x3c0] sm:$0xff]
  %v155 = vld [vmem:[%s1 + $0x3c8] sm:$0xff]
  %v156 = vld [vmem:[%s1 + $0x3d0] sm:$0xff]
  %v157 = vld [vmem:[%s1 + $0x3d8] sm:$0xff]
  %v158 = vld [vmem:[%s1 + $0x3e0] sm:$0xff]
  %v159 = vld [vmem:[%s1 + $0x3e8] sm:$0xff]
  %v160 = vld [vmem:[%s1 + $0x3f0] sm:$0xff]
  %v161 = vld [vmem:[%s1 + $0x3f8] sm:$0xff]
  %v162 = vld [vmem:[%s1 + $0x400] sm:$0xff]
  %v163 = vld [vmem:[%s1 + $0x408] sm:$0xff]
  %v164 = vld [vmem:[%s1 + $0x410] sm:$0xff]
  %v165 = vld [vmem:[%s1 + $0x418] sm:$0xff]
  %v166 = vld [vmem:[%s1 + $0x420] sm:$0xff]
  %v167 = vld [vmem:[%s1 + $0x428] sm:$0xff]
  %v168 = vld [vmem:[%s1 + $0x430] sm:$0xff]
  %v169 = vld [vmem:[%s1 + $0x438] sm:$0xff]
  %v170 = vld [vmem:[%s1 + $0x440] sm:$0xff]
  %v171 = vld [vmem:[%s1 + $0x448] sm:$0xff]
  %v172 = vld [vmem:[%s1 + $0x450] sm:$0xff]
  %v173 = vld [vmem:[%s1 + $0x458] sm:$0xff]
  %v174 = vld [vmem:[%s1 + $0x460] sm:$0xff]
  %v175 = vld [vmem:[%s1 + $0x468] sm:$0xff]
  %v176 = vld [vmem:[%s1 + $0x470] sm:$0xff]
  %v177 = vld [vmem:[%s1 + $0x478] sm:$0xff]
  %v178 = vld [vmem:[%s2] sm:$0x3]
  %v180 = vperm.slane %v178, 0
  %v181 = vperm.slane %v178, 1
  %v204 = vunpack.c.l.b16 %v14
  %v205 = vunpack.c.h.b16 %v14
  %v206 = vunpack.c.l.b16 %v15
  %v207 = vunpack.c.h.b16 %v15
  %v208 = vunpack.c.l.b16 %v16
  %v209 = vunpack.c.h.b16 %v16
  %v210 = vunpack.c.l.b16 %v17
  %v211 = vunpack.c.h.b16 %v17
  %v212 = vunpack.c.l.b16 %v18
  %v213 = vunpack.c.l.b16 %v19
  %v214 = vunpack.c.h.b16 %v19
  %v215 = vunpack.c.l.b16 %v20
  %v216 = vunpack.c.h.b16 %v20
  %v217 = vunpack.c.l.b16 %v21
  %v218 = vunpack.c.h.b16 %v21
  %v219 = vunpack.c.l.b16 %v22
  %v220 = vunpack.c.h.b16 %v22
  %v221 = vunpack.c.l.b16 %v23
  %v222 = vunpack.c.l.b16 %v24
  %v223 = vunpack.c.h.b16 %v24
  %v224 = vunpack.c.l.b16 %v25
  %v225 = vunpack.c.h.b16 %v25
  %v226 = vunpack.c.l.b16 %v26
  %v227 = vunpack.c.h.b16 %v26
  %v228 = vunpack.c.l.b16 %v27
  %v229 = vunpack.c.h.b16 %v27
  %v230 = vunpack.c.l.b16 %v28
  %v231 = vunpack.c.l.b16 %v29
  %v232 = vunpack.c.h.b16 %v29
  %v233 = vunpack.c.l.b16 %v30
  %v234 = vunpack.c.h.b16 %v30
  %v235 = vunpack.c.l.b16 %v31
  %v236 = vunpack.c.h.b16 %v31
  %v237 = vunpack.c.l.b16 %v32
  %v238 = vunpack.c.h.b16 %v32
  %v239 = vunpack.c.l.b16 %v33
  %v240 = vpack.c.b16 %v213, %v204
  %v241 = vpack.c.b16 %v214, %v205
  %v242 = vpack.c.b16 %v215, %v206
  %v243 = vpack.c.b16 %v216, %v207
  %v244 = vpack.c.b16 %v217, %v208
  %v245 = vpack.c.b16 %v218, %v209
  %v246 = vpack.c.b16 %v219, %v210
  %v247 = vpack.c.b16 %v220, %v211
  %v248 = vpack.c.b16 %v221, %v212
  %v249 = vpack.c.b16 %v231, %v222
  %v250 = vpack.c.b16 %v232, %v223
  %v251 = vpack.c.b16 %v233, %v224
  %v252 = vpack.c.b16 %v234, %v225
  %v253 = vpack.c.b16 %v235, %v226
  %v254 = vpack.c.b16 %v236, %v227
  %v255 = vpack.c.b16 %v237, %v228
  %v256 = vpack.c.b16 %v238, %v229
  %v257 = vpack.c.b16 %v239, %v230
  %v420 = vunpack.c.l.b16 %v34
  %v421 = vunpack.c.h.b16 %v34
  %v422 = vunpack.c.l.b16 %v35
  %v423 = vunpack.c.h.b16 %v35
  %v424 = vunpack.c.l.b16 %v36
  %v425 = vunpack.c.h.b16 %v36
  %v426 = vunpack.c.l.b16 %v37
  %v427 = vunpack.c.h.b16 %v37
  %v428 = vunpack.c.l.b16 %v38
  %v429 = vunpack.c.h.b16 %v38
  %v430 = vunpack.c.l.b16 %v39
  %v431 = vunpack.c.h.b16 %v39
  %v432 = vunpack.c.l.b16 %v40
  %v433 = vunpack.c.h.b16 %v40
  %v434 = vunpack.c.l.b16 %v41
  %v435 = vunpack.c.h.b16 %v41
  %v436 = vunpack.c.l.b16 %v42
  %v437 = vunpack.c.h.b16 %v42
  %v438 = vunpack.c.l.b16 %v43
  %v439 = vunpack.c.h.b16 %v43
  %v440 = vunpack.c.l.b16 %v44
  %v441 = vunpack.c.h.b16 %v44
  %v442 = vunpack.c.l.b16 %v45
  %v443 = vunpack.c.h.b16 %v45
  %v444 = vunpack.c.l.b16 %v46
  %v445 = vunpack.c.h.b16 %v46
  %v446 = vunpack.c.l.b16 %v47
  %v447 = vunpack.c.h.b16 %v47
  %v448 = vunpack.c.l.b16 %v48
  %v449 = vunpack.c.h.b16 %v48
  %v450 = vunpack.c.l.b16 %v49
  %v451 = vunpack.c.h.b16 %v49
  %v452 = vunpack.c.l.b16 %v50
  %v453 = vunpack.c.h.b16 %v50
  %v454 = vunpack.c.l.b16 %v51
  %v455 = vunpack.c.h.b16 %v51
  %v456 = vunpack.c.l.b16 %v52
  %v457 = vunpack.c.h.b16 %v52
  %v458 = vunpack.c.l.b16 %v53
  %v459 = vunpack.c.h.b16 %v53
  %v460 = vunpack.c.l.b16 %v54
  %v461 = vunpack.c.h.b16 %v54
  %v462 = vunpack.c.l.b16 %v55
  %v463 = vunpack.c.h.b16 %v55
  %v464 = vunpack.c.l.b16 %v56
  %v465 = vunpack.c.h.b16 %v56
  %v466 = vunpack.c.l.b16 %v57
  %v467 = vunpack.c.h.b16 %v57
  %v468 = vunpack.c.l.b16 %v58
  %v469 = vunpack.c.h.b16 %v58
  %v470 = vunpack.c.l.b16 %v59
  %v471 = vunpack.c.h.b16 %v59
  %v472 = vunpack.c.l.b16 %v60
  %v473 = vunpack.c.h.b16 %v60
  %v474 = vunpack.c.l.b16 %v61
  %v475 = vunpack.c.h.b16 %v61
  %v476 = vunpack.c.l.b16 %v62
  %v477 = vunpack.c.h.b16 %v62
  %v478 = vunpack.c.l.b16 %v63
  %v479 = vunpack.c.h.b16 %v63
  %v480 = vunpack.c.l.b16 %v64
  %v481 = vunpack.c.h.b16 %v64
  %v482 = vunpack.c.l.b16 %v65
  %v483 = vunpack.c.h.b16 %v65
  %v484 = vunpack.c.l.b16 %v66
  %v485 = vunpack.c.h.b16 %v66
  %v486 = vunpack.c.l.b16 %v67
  %v487 = vunpack.c.h.b16 %v67
  %v488 = vunpack.c.l.b16 %v68
  %v489 = vunpack.c.h.b16 %v68
  %v490 = vunpack.c.l.b16 %v69
  %v491 = vunpack.c.h.b16 %v69
  %v492 = vunpack.c.l.b16 %v70
  %v493 = vunpack.c.h.b16 %v70
  %v494 = vunpack.c.l.b16 %v71
  %v495 = vunpack.c.h.b16 %v71
  %v496 = vunpack.c.l.b16 %v72
  %v497 = vunpack.c.h.b16 %v72
  %v498 = vunpack.c.l.b16 %v73
  %v499 = vunpack.c.h.b16 %v73
  %v500 = vunpack.c.l.b16 %v74
  %v501 = vunpack.c.h.b16 %v74
  %v502 = vunpack.c.l.b16 %v75
  %v503 = vunpack.c.h.b16 %v75
  %v504 = vunpack.c.l.b16 %v76
  %v505 = vunpack.c.h.b16 %v76
  %v506 = vunpack.c.l.b16 %v77
  %v507 = vunpack.c.h.b16 %v77
  %v508 = vunpack.c.l.b16 %v78
  %v509 = vunpack.c.h.b16 %v78
  %v510 = vunpack.c.l.b16 %v79
  %v511 = vunpack.c.h.b16 %v79
  %v512 = vunpack.c.l.b16 %v80
  %v513 = vunpack.c.h.b16 %v80
  %v514 = vunpack.c.l.b16 %v81
  %v515 = vunpack.c.h.b16 %v81
  %v516 = vunpack.c.l.b16 %v82
  %v517 = vunpack.c.h.b16 %v82
  %v518 = vunpack.c.l.b16 %v83
  %v519 = vunpack.c.h.b16 %v83
  %v520 = vunpack.c.l.b16 %v84
  %v521 = vunpack.c.h.b16 %v84
  %v522 = vunpack.c.l.b16 %v85
  %v523 = vunpack.c.h.b16 %v85
  %v524 = vunpack.c.l.b16 %v86
  %v525 = vunpack.c.h.b16 %v86
  %v526 = vunpack.c.l.b16 %v87
  %v527 = vunpack.c.h.b16 %v87
  %v528 = vunpack.c.l.b16 %v88
  %v529 = vunpack.c.h.b16 %v88
  %v530 = vunpack.c.l.b16 %v89
  %v531 = vunpack.c.h.b16 %v89
  %v532 = vunpack.c.l.b16 %v90
  %v533 = vunpack.c.h.b16 %v90
  %v534 = vunpack.c.l.b16 %v91
  %v535 = vunpack.c.h.b16 %v91
  %v536 = vunpack.c.l.b16 %v92
  %v537 = vunpack.c.h.b16 %v92
  %v538 = vunpack.c.l.b16 %v93
  %v539 = vunpack.c.h.b16 %v93
  %v540 = vunpack.c.l.b16 %v94
  %v541 = vunpack.c.h.b16 %v94
  %v542 = vunpack.c.l.b16 %v95
  %v543 = vunpack.c.h.b16 %v95
  %v544 = vunpack.c.l.b16 %v96
  %v545 = vunpack.c.h.b16 %v96
  %v546 = vunpack.c.l.b16 %v97
  %v547 = vunpack.c.h.b16 %v97
  %v548 = vunpack.c.l.b16 %v98
  %v549 = vunpack.c.h.b16 %v98
  %v550 = vunpack.c.l.b16 %v99
  %v551 = vunpack.c.h.b16 %v99
  %v552 = vunpack.c.l.b16 %v100
  %v553 = vunpack.c.h.b16 %v100
  %v554 = vunpack.c.l.b16 %v101
  %v555 = vunpack.c.h.b16 %v101
  %v556 = vunpack.c.l.b16 %v102
  %v557 = vunpack.c.h.b16 %v102
  %v558 = vunpack.c.l.b16 %v103
  %v559 = vunpack.c.h.b16 %v103
  %v560 = vunpack.c.l.b16 %v104
  %v561 = vunpack.c.h.b16 %v104
  %v562 = vunpack.c.l.b16 %v105
  %v563 = vunpack.c.h.b16 %v105
  %v564 = vunpack.c.l.b16 %v106
  %v565 = vunpack.c.h.b16 %v106
  %v566 = vunpack.c.l.b16 %v107
  %v567 = vunpack.c.h.b16 %v107
  %v568 = vunpack.c.l.b16 %v108
  %v569 = vunpack.c.h.b16 %v108
  %v570 = vunpack.c.l.b16 %v109
  %v571 = vunpack.c.h.b16 %v109
  %v572 = vunpack.c.l.b16 %v110
  %v573 = vunpack.c.h.b16 %v110
  %v574 = vunpack.c.l.b16 %v111
  %v575 = vunpack.c.h.b16 %v111
  %v576 = vunpack.c.l.b16 %v112
  %v577 = vunpack.c.h.b16 %v112
  %v578 = vunpack.c.l.b16 %v113
  %v579 = vunpack.c.h.b16 %v113
  %v580 = vunpack.c.l.b16 %v114
  %v581 = vunpack.c.h.b16 %v114
  %v582 = vunpack.c.l.b16 %v115
  %v583 = vunpack.c.h.b16 %v115
  %v584 = vunpack.c.l.b16 %v116
  %v585 = vunpack.c.h.b16 %v116
  %v586 = vunpack.c.l.b16 %v117
  %v587 = vunpack.c.h.b16 %v117
  %v588 = vunpack.c.l.b16 %v118
  %v589 = vunpack.c.h.b16 %v118
  %v590 = vunpack.c.l.b16 %v119
  %v591 = vunpack.c.h.b16 %v119
  %v592 = vunpack.c.l.b16 %v120
  %v593 = vunpack.c.h.b16 %v120
  %v594 = vunpack.c.l.b16 %v121
  %v595 = vunpack.c.h.b16 %v121
  %v596 = vunpack.c.l.b16 %v122
  %v597 = vunpack.c.h.b16 %v122
  %v598 = vunpack.c.l.b16 %v123
  %v599 = vunpack.c.h.b16 %v123
  %v600 = vunpack.c.l.b16 %v124
  %v601 = vunpack.c.h.b16 %v124
  %v602 = vunpack.c.l.b16 %v125
  %v603 = vunpack.c.h.b16 %v125
  %v604 = vunpack.c.l.b16 %v126
  %v605 = vunpack.c.h.b16 %v126
  %v606 = vunpack.c.l.b16 %v127
  %v607 = vunpack.c.h.b16 %v127
  %v608 = vunpack.c.l.b16 %v128
  %v609 = vunpack.c.h.b16 %v128
  %v610 = vunpack.c.l.b16 %v129
  %v611 = vunpack.c.h.b16 %v129
  %v612 = vunpack.c.l.b16 %v130
  %v613 = vunpack.c.h.b16 %v130
  %v614 = vunpack.c.l.b16 %v131
  %v615 = vunpack.c.h.b16 %v131
  %v616 = vunpack.c.l.b16 %v132
  %v617 = vunpack.c.h.b16 %v132
  %v618 = vunpack.c.l.b16 %v133
  %v619 = vunpack.c.h.b16 %v133
  %v620 = vunpack.c.l.b16 %v134
  %v621 = vunpack.c.h.b16 %v134
  %v622 = vunpack.c.l.b16 %v135
  %v623 = vunpack.c.h.b16 %v135
  %v624 = vunpack.c.l.b16 %v136
  %v625 = vunpack.c.h.b16 %v136
  %v626 = vunpack.c.l.b16 %v137
  %v627 = vunpack.c.h.b16 %v137
  %v628 = vunpack.c.l.b16 %v138
  %v629 = vunpack.c.h.b16 %v138
  %v630 = vunpack.c.l.b16 %v139
  %v631 = vunpack.c.h.b16 %v139
  %v632 = vunpack.c.l.b16 %v140
  %v633 = vunpack.c.h.b16 %v140
  %v634 = vunpack.c.l.b16 %v141
  %v635 = vunpack.c.h.b16 %v141
  %v636 = vunpack.c.l.b16 %v142
  %v637 = vunpack.c.h.b16 %v142
  %v638 = vunpack.c.l.b16 %v143
  %v639 = vunpack.c.h.b16 %v143
  %v640 = vunpack.c.l.b16 %v144
  %v641 = vunpack.c.h.b16 %v144
  %v642 = vunpack.c.l.b16 %v145
  %v643 = vunpack.c.h.b16 %v145
  %v644 = vunpack.c.l.b16 %v146
  %v645 = vunpack.c.h.b16 %v146
  %v646 = vunpack.c.l.b16 %v147
  %v647 = vunpack.c.h.b16 %v147
  %v648 = vunpack.c.l.b16 %v148
  %v649 = vunpack.c.h.b16 %v148
  %v650 = vunpack.c.l.b16 %v149
  %v651 = vunpack.c.h.b16 %v149
  %v652 = vunpack.c.l.b16 %v150
  %v653 = vunpack.c.h.b16 %v150
  %v654 = vunpack.c.l.b16 %v151
  %v655 = vunpack.c.h.b16 %v151
  %v656 = vunpack.c.l.b16 %v152
  %v657 = vunpack.c.h.b16 %v152
  %v658 = vunpack.c.l.b16 %v153
  %v659 = vunpack.c.h.b16 %v153
  %v660 = vunpack.c.l.b16 %v154
  %v661 = vunpack.c.h.b16 %v154
  %v662 = vunpack.c.l.b16 %v155
  %v663 = vunpack.c.h.b16 %v155
  %v664 = vunpack.c.l.b16 %v156
  %v665 = vunpack.c.h.b16 %v156
  %v666 = vunpack.c.l.b16 %v157
  %v667 = vunpack.c.h.b16 %v157
  %v668 = vunpack.c.l.b16 %v158
  %v669 = vunpack.c.h.b16 %v158
  %v670 = vunpack.c.l.b16 %v159
  %v671 = vunpack.c.h.b16 %v159
  %v672 = vunpack.c.l.b16 %v160
  %v673 = vunpack.c.h.b16 %v160
  %v674 = vunpack.c.l.b16 %v161
  %v675 = vunpack.c.h.b16 %v161
  %v676 = vunpack.c.l.b16 %v162
  %v677 = vunpack.c.h.b16 %v162
  %v678 = vunpack.c.l.b16 %v163
  %v679 = vunpack.c.h.b16 %v163
  %v680 = vunpack.c.l.b16 %v164
  %v681 = vunpack.c.h.b16 %v164
  %v682 = vunpack.c.l.b16 %v165
  %v683 = vunpack.c.h.b16 %v165
  %v684 = vunpack.c.l.b16 %v166
  %v685 = vunpack.c.h.b16 %v166
  %v686 = vunpack.c.l.b16 %v167
  %v687 = vunpack.c.h.b16 %v167
  %v688 = vunpack.c.l.b16 %v168
  %v689 = vunpack.c.h.b16 %v168
  %v690 = vunpack.c.l.b16 %v169
  %v691 = vunpack.c.h.b16 %v169
  %v692 = vunpack.c.l.b16 %v170
  %v693 = vunpack.c.h.b16 %v170
  %v694 = vunpack.c.l.b16 %v171
  %v695 = vunpack.c.h.b16 %v171
  %v696 = vunpack.c.l.b16 %v172
  %v697 = vunpack.c.h.b16 %v172
  %v698 = vunpack.c.l.b16 %v173
  %v699 = vunpack.c.h.b16 %v173
  %v700 = vunpack.c.l.b16 %v174
  %v701 = vunpack.c.h.b16 %v174
  %v702 = vunpack.c.l.b16 %v175
  %v703 = vunpack.c.h.b16 %v175
  %v704 = vunpack.c.l.b16 %v176
  %v705 = vunpack.c.h.b16 %v176
  %v706 = vunpack.c.l.b16 %v177
  %v707 = vunpack.c.h.b16 %v177
  %v708 = vpack.c.b16 %v422, %v420
  %v709 = vpack.c.b16 %v423, %v421
  %v710 = vpack.c.b16 %v426, %v424
  %v711 = vpack.c.b16 %v427, %v425
  %v712 = vpack.c.b16 %v430, %v428
  %v713 = vpack.c.b16 %v431, %v429
  %v714 = vpack.c.b16 %v434, %v432
  %v715 = vpack.c.b16 %v435, %v433
  %v716 = vpack.c.b16 %v438, %v436
  %v717 = vpack.c.b16 %v439, %v437
  %v718 = vpack.c.b16 %v442, %v440
  %v719 = vpack.c.b16 %v443, %v441
  %v720 = vpack.c.b16 %v446, %v444
  %v721 = vpack.c.b16 %v447, %v445
  %v722 = vpack.c.b16 %v450, %v448
  %v723 = vpack.c.b16 %v451, %v449
  %v724 = vpack.c.b16 %v454, %v452
  %v725 = vpack.c.b16 %v455, %v453
  %v726 = vpack.c.b16 %v458, %v456
  %v727 = vpack.c.b16 %v459, %v457
  %v728 = vpack.c.b16 %v462, %v460
  %v729 = vpack.c.b16 %v463, %v461
  %v730 = vpack.c.b16 %v466, %v464
  %v731 = vpack.c.b16 %v467, %v465
  %v732 = vpack.c.b16 %v470, %v468
  %v733 = vpack.c.b16 %v471, %v469
  %v734 = vpack.c.b16 %v474, %v472
  %v735 = vpack.c.b16 %v475, %v473
  %v736 = vpack.c.b16 %v478, %v476
  %v737 = vpack.c.b16 %v479, %v477
  %v738 = vpack.c.b16 %v482, %v480
  %v739 = vpack.c.b16 %v483, %v481
  %v740 = vpack.c.b16 %v486, %v484
  %v741 = vpack.c.b16 %v487, %v485
  %v742 = vpack.c.b16 %v490, %v488
  %v743 = vpack.c.b16 %v491, %v489
  %v744 = vpack.c.b16 %v494, %v492
  %v745 = vpack.c.b16 %v495, %v493
  %v746 = vpack.c.b16 %v498, %v496
  %v747 = vpack.c.b16 %v499, %v497
  %v748 = vpack.c.b16 %v502, %v500
  %v749 = vpack.c.b16 %v503, %v501
  %v750 = vpack.c.b16 %v506, %v504
  %v751 = vpack.c.b16 %v507, %v505
  %v752 = vpack.c.b16 %v510, %v508
  %v753 = vpack.c.b16 %v511, %v509
  %v754 = vpack.c.b16 %v514, %v512
  %v755 = vpack.c.b16 %v515, %v513
  %v756 = vpack.c.b16 %v518, %v516
  %v757 = vpack.c.b16 %v519, %v517
  %v758 = vpack.c.b16 %v522, %v520
  %v759 = vpack.c.b16 %v523, %v521
  %v760 = vpack.c.b16 %v526, %v524
  %v761 = vpack.c.b16 %v527, %v525
  %v762 = vpack.c.b16 %v530, %v528
  %v763 = vpack.c.b16 %v531, %v529
  %v764 = vpack.c.b16 %v534, %v532
  %v765 = vpack.c.b16 %v535, %v533
  %v766 = vpack.c.b16 %v538, %v536
  %v767 = vpack.c.b16 %v539, %v537
  %v768 = vpack.c.b16 %v542, %v540
  %v769 = vpack.c.b16 %v543, %v541
  %v770 = vpack.c.b16 %v546, %v544
  %v771 = vpack.c.b16 %v547, %v545
  %v772 = vpack.c.b16 %v550, %v548
  %v773 = vpack.c.b16 %v551, %v549
  %v774 = vpack.c.b16 %v554, %v552
  %v775 = vpack.c.b16 %v555, %v553
  %v776 = vpack.c.b16 %v558, %v556
  %v777 = vpack.c.b16 %v559, %v557
  %v778 = vpack.c.b16 %v562, %v560
  %v779 = vpack.c.b16 %v563, %v561
  %v780 = vpack.c.b16 %v566, %v564
  %v781 = vpack.c.b16 %v567, %v565
  %v782 = vpack.c.b16 %v570, %v568
  %v783 = vpack.c.b16 %v571, %v569
  %v784 = vpack.c.b16 %v574, %v572
  %v785 = vpack.c.b16 %v575, %v573
  %v786 = vpack.c.b16 %v578, %v576
  %v787 = vpack.c.b16 %v579, %v577
  %v788 = vpack.c.b16 %v582, %v580
  %v789 = vpack.c.b16 %v583, %v581
  %v790 = vpack.c.b16 %v586, %v584
  %v791 = vpack.c.b16 %v587, %v585
  %v792 = vpack.c.b16 %v590, %v588
  %v793 = vpack.c.b16 %v591, %v589
  %v794 = vpack.c.b16 %v594, %v592
  %v795 = vpack.c.b16 %v595, %v593
  %v796 = vpack.c.b16 %v598, %v596
  %v797 = vpack.c.b16 %v599, %v597
  %v798 = vpack.c.b16 %v602, %v600
  %v799 = vpack.c.b16 %v603, %v601
  %v800 = vpack.c.b16 %v606, %v604
  %v801 = vpack.c.b16 %v607, %v605
  %v802 = vpack.c.b16 %v610, %v608
  %v803 = vpack.c.b16 %v611, %v609
  %v804 = vpack.c.b16 %v614, %v612
  %v805 = vpack.c.b16 %v615, %v613
  %v806 = vpack.c.b16 %v618, %v616
  %v807 = vpack.c.b16 %v619, %v617
  %v808 = vpack.c.b16 %v622, %v620
  %v809 = vpack.c.b16 %v623, %v621
  %v810 = vpack.c.b16 %v626, %v624
  %v811 = vpack.c.b16 %v627, %v625
  %v812 = vpack.c.b16 %v630, %v628
  %v813 = vpack.c.b16 %v631, %v629
  %v814 = vpack.c.b16 %v634, %v632
  %v815 = vpack.c.b16 %v635, %v633
  %v816 = vpack.c.b16 %v638, %v636
  %v817 = vpack.c.b16 %v639, %v637
  %v818 = vpack.c.b16 %v642, %v640
  %v819 = vpack.c.b16 %v643, %v641
  %v820 = vpack.c.b16 %v646, %v644
  %v821 = vpack.c.b16 %v647, %v645
  %v822 = vpack.c.b16 %v650, %v648
  %v823 = vpack.c.b16 %v651, %v649
  %v824 = vpack.c.b16 %v654, %v652
  %v825 = vpack.c.b16 %v655, %v653
  %v826 = vpack.c.b16 %v658, %v656
  %v827 = vpack.c.b16 %v659, %v657
  %v828 = vpack.c.b16 %v662, %v660
  %v829 = vpack.c.b16 %v663, %v661
  %v830 = vpack.c.b16 %v666, %v664
  %v831 = vpack.c.b16 %v667, %v665
  %v832 = vpack.c.b16 %v670, %v668
  %v833 = vpack.c.b16 %v671, %v669
  %v834 = vpack.c.b16 %v674, %v672
  %v835 = vpack.c.b16 %v675, %v673
  %v836 = vpack.c.b16 %v678, %v676
  %v837 = vpack.c.b16 %v679, %v677
  %v838 = vpack.c.b16 %v682, %v680
  %v839 = vpack.c.b16 %v683, %v681
  %v840 = vpack.c.b16 %v686, %v684
  %v841 = vpack.c.b16 %v687, %v685
  %v842 = vpack.c.b16 %v690, %v688
  %v843 = vpack.c.b16 %v691, %v689
  %v844 = vpack.c.b16 %v694, %v692
  %v845 = vpack.c.b16 %v695, %v693
  %v846 = vpack.c.b16 %v698, %v696
  %v847 = vpack.c.b16 %v699, %v697
  %v848 = vpack.c.b16 %v702, %v700
  %v849 = vpack.c.b16 %v703, %v701
  %v850 = vpack.c.b16 %v706, %v704
  %v851 = vpack.c.b16 %v707, %v705
  %996 = vmatpush.bf16.msra.mxu0 %v722
  %997 = vmatpush.bf16.msra.mxu0 %v720
  %998 = vmatpush.bf16.msra.mxu0 %v718
  %999 = vmatpush.bf16.msra.mxu0 %v716
  %1000 = vmatpush.bf16.msra.mxu0 %v714
  %1001 = vmatpush.bf16.msra.mxu0 %v712
  %1002 = vmatpush.bf16.msra.mxu0 %v710
  %1003 = vmatpush.bf16.msra.mxu0 %v708
  %1004 = vmatmul.bf16.gmra.mxu0 %v240
  %v1005 = vpop.f32.mrf.mxu0
  %v1006 = vadd.f32 %v180, %v1005
  %v1007 = vpop.f32.mrf.mxu0
  %v1008 = vadd.f32 %v180, %v1007
  %1009 = vmatmul.bf16.gmra.mxu0 %v249
  %v1010 = vpop.f32.mrf.mxu0
  %v1011 = vadd.f32 %v180, %v1010
  %v1012 = vpop.f32.mrf.mxu0
  %v1013 = vadd.f32 %v180, %v1012
  %1014 = vdwg.mxu0
  %1015 = vmatpush.bf16.msra.mxu0 %v738
  %1016 = vmatpush.bf16.msra.mxu0 %v736
  %1017 = vmatpush.bf16.msra.mxu0 %v734
  %1018 = vmatpush.bf16.msra.mxu0 %v732
  %1019 = vmatpush.bf16.msra.mxu0 %v730
  %1020 = vmatpush.bf16.msra.mxu0 %v728
  %1021 = vmatpush.bf16.msra.mxu0 %v726
  %1022 = vmatpush.bf16.msra.mxu0 %v724
  %1023 = vmatmul.bf16.gmra.mxu0 %v241
  %v1024 = vpop.f32.mrf.mxu0
  %v1025 = vadd.f32 %v1006, %v1024
  %v1026 = vpop.f32.mrf.mxu0
  %v1027 = vadd.f32 %v1008, %v1026
  %1028 = vmatmul.bf16.gmra.mxu0 %v250
  %v1029 = vpop.f32.mrf.mxu0
  %v1030 = vadd.f32 %v1011, %v1029
  %v1031 = vpop.f32.mrf.mxu0
  %v1032 = vadd.f32 %v1013, %v1031
  %1033 = vdwg.mxu0
  %1034 = vmatpush.bf16.msra.mxu0 %v754
  %1035 = vmatpush.bf16.msra.mxu0 %v752
  %1036 = vmatpush.bf16.msra.mxu0 %v750
  %1037 = vmatpush.bf16.msra.mxu0 %v748
  %1038 = vmatpush.bf16.msra.mxu0 %v746
  %1039 = vmatpush.bf16.msra.mxu0 %v744
  %1040 = vmatpush.bf16.msra.mxu0 %v742
  %1041 = vmatpush.bf16.msra.mxu0 %v740
  %1042 = vmatmul.bf16.gmra.mxu0 %v242
  %v1043 = vpop.f32.mrf.mxu0
  %v1044 = vadd.f32 %v1025, %v1043
  %v1045 = vpop.f32.mrf.mxu0
  %v1046 = vadd.f32 %v1027, %v1045
  %1047 = vmatmul.bf16.gmra.mxu0 %v251
  %v1048 = vpop.f32.mrf.mxu0
  %v1049 = vadd.f32 %v1030, %v1048
  %v1050 = vpop.f32.mrf.mxu0
  %v1051 = vadd.f32 %v1032, %v1050
  %1052 = vdwg.mxu0
  %1053 = vmatpush.bf16.msra.mxu0 %v770
  %1054 = vmatpush.bf16.msra.mxu0 %v768
  %1055 = vmatpush.bf16.msra.mxu0 %v766
  %1056 = vmatpush.bf16.msra.mxu0 %v764
  %1057 = vmatpush.bf16.msra.mxu0 %v762
  %1058 = vmatpush.bf16.msra.mxu0 %v760
  %1059 = vmatpush.bf16.msra.mxu0 %v758
  %1060 = vmatpush.bf16.msra.mxu0 %v756
  %1061 = vmatmul.bf16.gmra.mxu0 %v243
  %v1062 = vpop.f32.mrf.mxu0
  %v1063 = vadd.f32 %v1044, %v1062
  %v1064 = vpop.f32.mrf.mxu0
  %v1065 = vadd.f32 %v1046, %v1064
  %1066 = vmatmul.bf16.gmra.mxu0 %v252
  %v1067 = vpop.f32.mrf.mxu0
  %v1068 = vadd.f32 %v1049, %v1067
  %v1069 = vpop.f32.mrf.mxu0
  %v1070 = vadd.f32 %v1051, %v1069
  %1071 = vdwg.mxu0
  %1072 = vmatpush.bf16.msra.mxu0 %v786
  %1073 = vmatpush.bf16.msra.mxu0 %v784
  %1074 = vmatpush.bf16.msra.mxu0 %v782
  %1075 = vmatpush.bf16.msra.mxu0 %v780
  %1076 = vmatpush.bf16.msra.mxu0 %v778
  %1077 = vmatpush.bf16.msra.mxu0 %v776
  %1078 = vmatpush.bf16.msra.mxu0 %v774
  %1079 = vmatpush.bf16.msra.mxu0 %v772
  %1080 = vmatmul.bf16.gmra.mxu0 %v244
  %v1081 = vpop.f32.mrf.mxu0
  %v1082 = vadd.f32 %v1063, %v1081
  %v1083 = vpop.f32.mrf.mxu0
  %v1084 = vadd.f32 %v1065, %v1083
  %1085 = vmatmul.bf16.gmra.mxu0 %v253
  %v1086 = vpop.f32.mrf.mxu0
  %v1087 = vadd.f32 %v1068, %v1086
  %v1088 = vpop.f32.mrf.mxu0
  %v1089 = vadd.f32 %v1070, %v1088
  %1090 = vdwg.mxu0
  %1091 = vmatpush.bf16.msra.mxu0 %v802
  %1092 = vmatpush.bf16.msra.mxu0 %v800
  %1093 = vmatpush.bf16.msra.mxu0 %v798
  %1094 = vmatpush.bf16.msra.mxu0 %v796
  %1095 = vmatpush.bf16.msra.mxu0 %v794
  %1096 = vmatpush.bf16.msra.mxu0 %v792
  %1097 = vmatpush.bf16.msra.mxu0 %v790
  %1098 = vmatpush.bf16.msra.mxu0 %v788
  %1099 = vmatmul.bf16.gmra.mxu0 %v245
  %v1100 = vpop.f32.mrf.mxu0
  %v1101 = vadd.f32 %v1082, %v1100
  %v1102 = vpop.f32.mrf.mxu0
  %v1103 = vadd.f32 %v1084, %v1102
  %1104 = vmatmul.bf16.gmra.mxu0 %v254
  %v1105 = vpop.f32.mrf.mxu0
  %v1106 = vadd.f32 %v1087, %v1105
  %v1107 = vpop.f32.mrf.mxu0
  %v1108 = vadd.f32 %v1089, %v1107
  %1109 = vdwg.mxu0
  %1110 = vmatpush.bf16.msra.mxu0 %v818
  %1111 = vmatpush.bf16.msra.mxu0 %v816
  %1112 = vmatpush.bf16.msra.mxu0 %v814
  %1113 = vmatpush.bf16.msra.mxu0 %v812
  %1114 = vmatpush.bf16.msra.mxu0 %v810
  %1115 = vmatpush.bf16.msra.mxu0 %v808
  %1116 = vmatpush.bf16.msra.mxu0 %v806
  %1117 = vmatpush.bf16.msra.mxu0 %v804
  %1118 = vmatmul.bf16.gmra.mxu0 %v246
  %v1119 = vpop.f32.mrf.mxu0
  %v1120 = vadd.f32 %v1101, %v1119
  %v1121 = vpop.f32.mrf.mxu0
  %v1122 = vadd.f32 %v1103, %v1121
  %1123 = vmatmul.bf16.gmra.mxu0 %v255
  %v1124 = vpop.f32.mrf.mxu0
  %v1125 = vadd.f32 %v1106, %v1124
  %v1126 = vpop.f32.mrf.mxu0
  %v1127 = vadd.f32 %v1108, %v1126
  %1128 = vdwg.mxu0
  %1129 = vmatpush.bf16.msra.mxu0 %v834
  %1130 = vmatpush.bf16.msra.mxu0 %v832
  %1131 = vmatpush.bf16.msra.mxu0 %v830
  %1132 = vmatpush.bf16.msra.mxu0 %v828
  %1133 = vmatpush.bf16.msra.mxu0 %v826
  %1134 = vmatpush.bf16.msra.mxu0 %v824
  %1135 = vmatpush.bf16.msra.mxu0 %v822
  %1136 = vmatpush.bf16.msra.mxu0 %v820
  %1137 = vmatmul.bf16.gmra.mxu0 %v247
  %v1138 = vpop.f32.mrf.mxu0
  %v1139 = vadd.f32 %v1120, %v1138
  %v1140 = vpop.f32.mrf.mxu0
  %v1141 = vadd.f32 %v1122, %v1140
  %1142 = vmatmul.bf16.gmra.mxu0 %v256
  %v1143 = vpop.f32.mrf.mxu0
  %v1144 = vadd.f32 %v1125, %v1143
  %v1145 = vpop.f32.mrf.mxu0
  %v1146 = vadd.f32 %v1127, %v1145
  %1147 = vdwg.mxu0
  %1148 = vmatpush.bf16.msra.mxu0 %v850
  %1149 = vmatpush.bf16.msra.mxu0 %v848
  %1150 = vmatpush.bf16.msra.mxu0 %v846
  %1151 = vmatpush.bf16.msra.mxu0 %v844
  %1152 = vmatpush.bf16.msra.mxu0 %v842
  %1153 = vmatpush.bf16.msra.mxu0 %v840
  %1154 = vmatpush.bf16.msra.mxu0 %v838
  %1155 = vmatpush.bf16.msra.mxu0 %v836
  %1156 = vmatmul.bf16.gmra.mxu0 %v248
  %v1157 = vpop.f32.mrf.mxu0
  %v1158 = vadd.f32 %v1139, %v1157
  %v1159 = vpop.f32.mrf.mxu0
  %v1160 = vadd.f32 %v1141, %v1159
  %1161 = vmatmul.bf16.gmra.mxu0 %v257
  %v1162 = vpop.f32.mrf.mxu0
  %v1163 = vadd.f32 %v1144, %v1162
  %v1164 = vpop.f32.mrf.mxu0
  %v1165 = vadd.f32 %v1146, %v1164
  %1166 = vdwg.mxu0
  %1167 = vmatpush.bf16.msra.mxu0 %v723
  %1168 = vmatpush.bf16.msra.mxu0 %v721
  %1169 = vmatpush.bf16.msra.mxu0 %v719
  %1170 = vmatpush.bf16.msra.mxu0 %v717
  %1171 = vmatpush.bf16.msra.mxu0 %v715
  %1172 = vmatpush.bf16.msra.mxu0 %v713
  %1173 = vmatpush.bf16.msra.mxu0 %v711
  %1174 = vmatpush.bf16.msra.mxu0 %v709
  %1175 = vmatmul.bf16.gmra.mxu0 %v240
  %v1176 = vpop.f32.mrf.mxu0
  %v1177 = vadd.f32 %v181, %v1176
  %v1178 = vpop.f32.mrf.mxu0
  %v1179 = vadd.f32 %v181, %v1178
  %1180 = vmatmul.bf16.gmra.mxu0 %v249
  %v1181 = vpop.f32.mrf.mxu0
  %v1182 = vadd.f32 %v181, %v1181
  %v1183 = vpop.f32.mrf.mxu0
  %v1184 = vadd.f32 %v181, %v1183
  %1185 = vdwg.mxu0
  %1186 = vmatpush.bf16.msra.mxu0 %v739
  %1187 = vmatpush.bf16.msra.mxu0 %v737
  %1188 = vmatpush.bf16.msra.mxu0 %v735
  %1189 = vmatpush.bf16.msra.mxu0 %v733
  %1190 = vmatpush.bf16.msra.mxu0 %v731
  %1191 = vmatpush.bf16.msra.mxu0 %v729
  %1192 = vmatpush.bf16.msra.mxu0 %v727
  %1193 = vmatpush.bf16.msra.mxu0 %v725
  %1194 = vmatmul.bf16.gmra.mxu0 %v241
  %v1195 = vpop.f32.mrf.mxu0
  %v1196 = vadd.f32 %v1177, %v1195
  %v1197 = vpop.f32.mrf.mxu0
  %v1198 = vadd.f32 %v1179, %v1197
  %1199 = vmatmul.bf16.gmra.mxu0 %v250
  %v1200 = vpop.f32.mrf.mxu0
  %v1201 = vadd.f32 %v1182, %v1200
  %v1202 = vpop.f32.mrf.mxu0
  %v1203 = vadd.f32 %v1184, %v1202
  %1204 = vdwg.mxu0
  %1205 = vmatpush.bf16.msra.mxu0 %v755
  %1206 = vmatpush.bf16.msra.mxu0 %v753
  %1207 = vmatpush.bf16.msra.mxu0 %v751
  %1208 = vmatpush.bf16.msra.mxu0 %v749
  %1209 = vmatpush.bf16.msra.mxu0 %v747
  %1210 = vmatpush.bf16.msra.mxu0 %v745
  %1211 = vmatpush.bf16.msra.mxu0 %v743
  %1212 = vmatpush.bf16.msra.mxu0 %v741
  %1213 = vmatmul.bf16.gmra.mxu0 %v242
  %v1214 = vpop.f32.mrf.mxu0
  %v1215 = vadd.f32 %v1196, %v1214
  %v1216 = vpop.f32.mrf.mxu0
  %v1217 = vadd.f32 %v1198, %v1216
  %1218 = vmatmul.bf16.gmra.mxu0 %v251
  %v1219 = vpop.f32.mrf.mxu0
  %v1220 = vadd.f32 %v1201, %v1219
  %v1221 = vpop.f32.mrf.mxu0
  %v1222 = vadd.f32 %v1203, %v1221
  %1223 = vdwg.mxu0
  %1224 = vmatpush.bf16.msra.mxu0 %v771
  %1225 = vmatpush.bf16.msra.mxu0 %v769
  %1226 = vmatpush.bf16.msra.mxu0 %v767
  %1227 = vmatpush.bf16.msra.mxu0 %v765
  %1228 = vmatpush.bf16.msra.mxu0 %v763
  %1229 = vmatpush.bf16.msra.mxu0 %v761
  %1230 = vmatpush.bf16.msra.mxu0 %v759
  %1231 = vmatpush.bf16.msra.mxu0 %v757
  %1232 = vmatmul.bf16.gmra.mxu0 %v243
  %v1233 = vpop.f32.mrf.mxu0
  %v1234 = vadd.f32 %v1215, %v1233
  %v1235 = vpop.f32.mrf.mxu0
  %v1236 = vadd.f32 %v1217, %v1235
  %1237 = vmatmul.bf16.gmra.mxu0 %v252
  %v1238 = vpop.f32.mrf.mxu0
  %v1239 = vadd.f32 %v1220, %v1238
  %v1240 = vpop.f32.mrf.mxu0
  %v1241 = vadd.f32 %v1222, %v1240
  %1242 = vdwg.mxu0
  %1243 = vmatpush.bf16.msra.mxu0 %v787
  %1244 = vmatpush.bf16.msra.mxu0 %v785
  %1245 = vmatpush.bf16.msra.mxu0 %v783
  %1246 = vmatpush.bf16.msra.mxu0 %v781
  %1247 = vmatpush.bf16.msra.mxu0 %v779
  %1248 = vmatpush.bf16.msra.mxu0 %v777
  %1249 = vmatpush.bf16.msra.mxu0 %v775
  %1250 = vmatpush.bf16.msra.mxu0 %v773
  %1251 = vmatmul.bf16.gmra.mxu0 %v244
  %v1252 = vpop.f32.mrf.mxu0
  %v1253 = vadd.f32 %v1234, %v1252
  %v1254 = vpop.f32.mrf.mxu0
  %v1255 = vadd.f32 %v1236, %v1254
  %1256 = vmatmul.bf16.gmra.mxu0 %v253
  %v1257 = vpop.f32.mrf.mxu0
  %v1258 = vadd.f32 %v1239, %v1257
  %v1259 = vpop.f32.mrf.mxu0
  %v1260 = vadd.f32 %v1241, %v1259
  %1261 = vdwg.mxu0
  %1262 = vmatpush.bf16.msra.mxu0 %v803
  %1263 = vmatpush.bf16.msra.mxu0 %v801
  %1264 = vmatpush.bf16.msra.mxu0 %v799
  %1265 = vmatpush.bf16.msra.mxu0 %v797
  %1266 = vmatpush.bf16.msra.mxu0 %v795
  %1267 = vmatpush.bf16.msra.mxu0 %v793
  %1268 = vmatpush.bf16.msra.mxu0 %v791
  %1269 = vmatpush.bf16.msra.mxu0 %v789
  %1270 = vmatmul.bf16.gmra.mxu0 %v245
  %v1271 = vpop.f32.mrf.mxu0
  %v1272 = vadd.f32 %v1253, %v1271
  %v1273 = vpop.f32.mrf.mxu0
  %v1274 = vadd.f32 %v1255, %v1273
  %1275 = vmatmul.bf16.gmra.mxu0 %v254
  %v1276 = vpop.f32.mrf.mxu0
  %v1277 = vadd.f32 %v1258, %v1276
  %v1278 = vpop.f32.mrf.mxu0
  %v1279 = vadd.f32 %v1260, %v1278
  %1280 = vdwg.mxu0
  %1281 = vmatpush.bf16.msra.mxu0 %v819
  %1282 = vmatpush.bf16.msra.mxu0 %v817
  %1283 = vmatpush.bf16.msra.mxu0 %v815
  %1284 = vmatpush.bf16.msra.mxu0 %v813
  %1285 = vmatpush.bf16.msra.mxu0 %v811
  %1286 = vmatpush.bf16.msra.mxu0 %v809
  %1287 = vmatpush.bf16.msra.mxu0 %v807
  %1288 = vmatpush.bf16.msra.mxu0 %v805
  %1289 = vmatmul.bf16.gmra.mxu0 %v246
  %v1290 = vpop.f32.mrf.mxu0
  %v1291 = vadd.f32 %v1272, %v1290
  %v1292 = vpop.f32.mrf.mxu0
  %v1293 = vadd.f32 %v1274, %v1292
  %1294 = vmatmul.bf16.gmra.mxu0 %v255
  %v1295 = vpop.f32.mrf.mxu0
  %v1296 = vadd.f32 %v1277, %v1295
  %v1297 = vpop.f32.mrf.mxu0
  %v1298 = vadd.f32 %v1279, %v1297
  %1299 = vdwg.mxu0
  %1300 = vmatpush.bf16.msra.mxu0 %v835
  %1301 = vmatpush.bf16.msra.mxu0 %v833
  %1302 = vmatpush.bf16.msra.mxu0 %v831
  %1303 = vmatpush.bf16.msra.mxu0 %v829
  %1304 = vmatpush.bf16.msra.mxu0 %v827
  %1305 = vmatpush.bf16.msra.mxu0 %v825
  %1306 = vmatpush.bf16.msra.mxu0 %v823
  %1307 = vmatpush.bf16.msra.mxu0 %v821
  %1308 = vmatmul.bf16.gmra.mxu0 %v247
  %v1309 = vpop.f32.mrf.mxu0
  %v1310 = vadd.f32 %v1291, %v1309
  %v1311 = vpop.f32.mrf.mxu0
  %v1312 = vadd.f32 %v1293, %v1311
  %1313 = vmatmul.bf16.gmra.mxu0 %v256
  %v1314 = vpop.f32.mrf.mxu0
  %v1315 = vadd.f32 %v1296, %v1314
  %v1316 = vpop.f32.mrf.mxu0
  %v1317 = vadd.f32 %v1298, %v1316
  %1318 = vdwg.mxu0
  %1319 = vmatpush.bf16.msra.mxu0 %v851
  %1320 = vmatpush.bf16.msra.mxu0 %v849
  %1321 = vmatpush.bf16.msra.mxu0 %v847
  %1322 = vmatpush.bf16.msra.mxu0 %v845
  %1323 = vmatpush.bf16.msra.mxu0 %v843
  %1324 = vmatpush.bf16.msra.mxu0 %v841
  %1325 = vmatpush.bf16.msra.mxu0 %v839
  %1326 = vmatpush.bf16.msra.mxu0 %v837
  %1327 = vmatmul.bf16.gmra.mxu0 %v248
  %v1328 = vpop.f32.mrf.mxu0
  %v1329 = vadd.f32 %v1310, %v1328
  %v1330 = vpop.f32.mrf.mxu0
  %v1331 = vadd.f32 %v1312, %v1330
  %1332 = vmatmul.bf16.gmra.mxu0 %v257
  %v1333 = vpop.f32.mrf.mxu0
  %v1334 = vadd.f32 %v1315, %v1333
  %v1335 = vpop.f32.mrf.mxu0
  %v1336 = vadd.f32 %v1317, %v1335
  %1337 = vdwg.mxu0
  %v1338 = vmul.f32 %v1158, 0.2
  %v1339 = vmul.f32 %v1329, 0.2
  %v1340 = vmul.f32 %v1160, 0.2
  %v1341 = vmul.f32 %v1331, 0.2
  %v1342 = vmul.f32 %v1163, 0.2
  %v1343 = vmul.f32 %v1334, 0.2
  %v1344 = vmul.f32 %v1165, 0.2
  %v1345 = vmul.f32 %v1336, 0.2
  %v1346 = vmax.f32 %v1158, %v1338
  %v1347 = vmax.f32 %v1329, %v1339
  %v1348 = vmax.f32 %v1160, %v1340
  %v1349 = vmax.f32 %v1331, %v1341
  %v1350 = vmax.f32 %v1163, %v1342
  %v1351 = vmax.f32 %v1334, %v1343
  %v1352 = vmax.f32 %v1165, %v1344
  %v1353 = vmax.f32 %v1336, %v1345
  %v1354 = vpack.c.bf16 %v1347, %v1346
  %v1355 = vpack.c.bf16 %v1349, %v1348
  %v1356 = vpack.c.bf16 %v1351, %v1350
  %v1357 = vpack.c.bf16 %v1353, %v1352
  %1358 = vst [vmem:[%s3] sm:$0xff] %v1354
  %1359 = vst [vmem:[%s3 + $0x8] sm:$0xff] %v1355
  %1360 = vst [vmem:[%s3 + $0x10] sm:$0xff] %v1356
  %1361 = vst [vmem:[%s3 + $0x18] sm:$0xff] %v1357
  // Predicated region
  $region14: #{deep_cnn0_forward.8} parent=0 // pred_check
    _
  $region15: #{deep_cnn0_forward.8} parent=0 // pred_check_branch
    %1363 = sbr.rel (0) target = $region17
  $region16: #{deep_cnn0_forward.8} parent=0 // pred_region
    _
  $region17: #{deep_cnn0_forward.8} parent=0 // pred_fallthru
    _
  // Predicated region
  $region18: #{deep_cnn0_forward.8} parent=0 // pred_check
    _
  $region19: #{deep_cnn0_forward.8} parent=0 // pred_check_branch
    %1365 = sbr.rel (0) target = $region21
  $region20: #{deep_cnn0_forward.8} parent=0 // pred_region
    _
  $region21: #{deep_cnn0_forward.8} parent=0 // pred_fallthru
    _

// kernel: deep_cnn0_forward.9
$region0: #{deep_cnn0_forward.9}
  #allocation0 [shape = 'u32[]', space=smem, size = 0x4, offset = 0x4, fixed_abs, tag = 'smem constant byte address 0x4 - core index']
  #allocation1 [shape = 'u32[72,128]{1,0:T(1,128)}', space=vmem, size = 0x9000, scoped, tag = 'internal scratch']
  %s0 = inlined_call_operand.vmem [shape: bf16[2,4096], index: 0, kind: input, shape index: {}]
  %s1 = inlined_call_operand.vmem [shape: f32[2,4096], index: 1, kind: input, shape index: {}]
  %s2 = inlined_call_operand.vmem [shape: bf16[4096,128], index: 2, kind: input, shape index: {}]
  %s3 = inlined_call_operand.vmem [shape: f32[1,128], index: 3, kind: input, shape index: {}]
  %s4 = inlined_call_operand.vmem [shape: f32[2,128], index: 4, kind: output, shape index: {}]
  %s5 = sld [smem:[#allocation0]]
  $region26: #{deep_cnn0_forward.9} parent=0
    _
  %s7 = ssub.s32 1, %s5
  %s8 = scalar_select 0, %s7, %s5
  // Predicated region
  $region2: #{deep_cnn0_forward.9} parent=0 // pred_check
    _
  $region3: #{deep_cnn0_forward.9} parent=0 // pred_check_branch
    %10 = sbr.rel (0) target = $region5
  $region4: #{deep_cnn0_forward.9} parent=0 // pred_region
    _
  $region5: #{deep_cnn0_forward.9} parent=0 // pred_fallthru
    _
  // Predicated region
  $region6: #{deep_cnn0_forward.9} parent=0 // pred_check
    _
  $region7: #{deep_cnn0_forward.9} parent=0 // pred_check_branch
    %12 = sbr.rel (0) target = $region9
  $region8: #{deep_cnn0_forward.9} parent=0 // pred_region
    _
  $region9: #{deep_cnn0_forward.9} parent=0 // pred_fallthru
    _
  // Predicated region
  $region10: #{deep_cnn0_forward.9} parent=0 // pred_check
    _
  $region11: #{deep_cnn0_forward.9} parent=0 // pred_check_branch
    %14 = sbr.rel (0) target = $region13
  $region12: #{deep_cnn0_forward.9} parent=0 // pred_region
    _
  $region13: #{deep_cnn0_forward.9} parent=0 // pred_fallthru
    _
  // Predicated region
  $region14: #{deep_cnn0_forward.9} parent=0 // pred_check
    _
  $region15: #{deep_cnn0_forward.9} parent=0 // pred_check_branch
    %16 = sbr.rel (0) target = $region17
  $region16: #{deep_cnn0_forward.9} parent=0 // pred_region
    _
  $region17: #{deep_cnn0_forward.9} parent=0 // pred_fallthru
    _
  %v17 = vld [vmem:[%s0] sm:$0xff]
  %v18 = vld [vmem:[%s0 + $0x8] sm:$0xff]
  %v19 = vld [vmem:[%s0 + $0x10] sm:$0xff]
  %v20 = vld [vmem:[%s0 + $0x18] sm:$0xff]
  %v21 = vunpack.c.l.bf16 %v17
  %v22 = vunpack.c.h.bf16 %v17
  %v23 = vunpack.c.l.bf16 %v18
  %v24 = vunpack.c.h.bf16 %v18
  %v25 = vunpack.c.l.bf16 %v19
  %v26 = vunpack.c.h.bf16 %v19
  %v27 = vunpack.c.l.bf16 %v20
  %v28 = vunpack.c.h.bf16 %v20
  %v29 = vld [vmem:[%s1] sm:$0xff]
  %v30 = vld [vmem:[%s1 + $0x8] sm:$0xff]
  %v31 = vld [vmem:[%s1 + $0x10] sm:$0xff]
  %v32 = vld [vmem:[%s1 + $0x18] sm:$0xff]
  %v33 = vld [vmem:[%s1 + $0x20] sm:$0xff]
  %v34 = vld [vmem:[%s1 + $0x28] sm:$0xff]
  %v35 = vld [vmem:[%s1 + $0x30] sm:$0xff]
  %v36 = vld [vmem:[%s1 + $0x38] sm:$0xff]
  %v37 = vmul.f32 %v21, %v29
  %v38 = vmul.f32 %v22, %v30
  %v39 = vmul.f32 %v23, %v31
  %v40 = vmul.f32 %v24, %v32
  %v41 = vmul.f32 %v25, %v33
  %v42 = vmul.f32 %v26, %v34
  %v43 = vmul.f32 %v27, %v35
  %v44 = vmul.f32 %v28, %v36
  %53 = vst [vmem:[#allocation1] ss:$4 sm:$0xff] %v37
  %s54 = scalar_lea.vmem [#allocation1], 32
  %55 = vst [vmem:[%s54] ss:$4 sm:$0xff] %v38
  %v56 = vld.sshfl [vmem:[#allocation1] sm:$0xff pattern:$0x73625140]
  %v57 = vld.sshfl [vmem:[#allocation1 + $0x8] sm:$0xff pattern:$0x73625140]
  %v58 = vld.sshfl [vmem:[#allocation1 + $0x10] sm:$0xff pattern:$0x73625140]
  %v59 = vld.sshfl [vmem:[#allocation1 + $0x18] sm:$0xff pattern:$0x73625140]
  %v60 = vld.sshfl [vmem:[#allocation1 + $0x20] sm:$0xff pattern:$0x73625140]
  %v61 = vld.sshfl [vmem:[#allocation1 + $0x28] sm:$0xff pattern:$0x73625140]
  %v62 = vld.sshfl [vmem:[#allocation1 + $0x30] sm:$0xff pattern:$0x73625140]
  %v63 = vld.sshfl [vmem:[#allocation1 + $0x38] sm:$0xff pattern:$0x73625140]
  %64 = vst [vmem:[#allocation1] ss:$4 sm:$0xff] %v39
  %65 = vst [vmem:[%s54] ss:$4 sm:$0xff] %v40
  %v66 = vld.sshfl [vmem:[#allocation1] sm:$0xff pattern:$0x73625140]
  %v67 = vld.sshfl [vmem:[#allocation1 + $0x8] sm:$0xff pattern:$0x73625140]
  %v68 = vld.sshfl [vmem:[#allocation1 + $0x10] sm:$0xff pattern:$0x73625140]
  %v69 = vld.sshfl [vmem:[#allocation1 + $0x18] sm:$0xff pattern:$0x73625140]
  %v70 = vld.sshfl [vmem:[#allocation1 + $0x20] sm:$0xff pattern:$0x73625140]
  %v71 = vld.sshfl [vmem:[#allocation1 + $0x28] sm:$0xff pattern:$0x73625140]
  %v72 = vld.sshfl [vmem:[#allocation1 + $0x30] sm:$0xff pattern:$0x73625140]
  %v73 = vld.sshfl [vmem:[#allocation1 + $0x38] sm:$0xff pattern:$0x73625140]
  %74 = vst [vmem:[#allocation1] ss:$4 sm:$0xff] %v41
  %75 = vst [vmem:[%s54] ss:$4 sm:$0xff] %v42
  %v76 = vld.sshfl [vmem:[#allocation1] sm:$0xff pattern:$0x73625140]
  %v77 = vld.sshfl [vmem:[#allocation1 + $0x8] sm:$0xff pattern:$0x73625140]
  %v78 = vld.sshfl [vmem:[#allocation1 + $0x10] sm:$0xff pattern:$0x73625140]
  %v79 = vld.sshfl [vmem:[#allocation1 + $0x18] sm:$0xff pattern:$0x73625140]
  %v80 = vld.sshfl [vmem:[#allocation1 + $0x20] sm:$0xff pattern:$0x73625140]
  %v81 = vld.sshfl [vmem:[#allocation1 + $0x28] sm:$0xff pattern:$0x73625140]
  %v82 = vld.sshfl [vmem:[#allocation1 + $0x30] sm:$0xff pattern:$0x73625140]
  %v83 = vld.sshfl [vmem:[#allocation1 + $0x38] sm:$0xff pattern:$0x73625140]
  %84 = vst [vmem:[#allocation1] ss:$4 sm:$0xff] %v43
  %85 = vst [vmem:[%s54] ss:$4 sm:$0xff] %v44
  %v86 = vld.sshfl [vmem:[#allocation1] sm:$0xff pattern:$0x73625140]
  %v87 = vld.sshfl [vmem:[#allocation1 + $0x8] sm:$0xff pattern:$0x73625140]
  %v88 = vld.sshfl [vmem:[#allocation1 + $0x10] sm:$0xff pattern:$0x73625140]
  %v89 = vld.sshfl [vmem:[#allocation1 + $0x18] sm:$0xff pattern:$0x73625140]
  %v90 = vld.sshfl [vmem:[#allocation1 + $0x20] sm:$0xff pattern:$0x73625140]
  %v91 = vld.sshfl [vmem:[#allocation1 + $0x28] sm:$0xff pattern:$0x73625140]
  %v92 = vld.sshfl [vmem:[#allocation1 + $0x30] sm:$0xff pattern:$0x73625140]
  %v93 = vld.sshfl [vmem:[#allocation1 + $0x38] sm:$0xff pattern:$0x73625140]
  %v126 = vpack.c.bf16 %v56, %v56
  %v127 = vpack.c.bf16 %v57, %v57
  %v128 = vpack.c.bf16 %v58, %v58
  %v129 = vpack.c.bf16 %v59, %v59
  %v130 = vpack.c.bf16 %v60, %v60
  %v131 = vpack.c.bf16 %v61, %v61
  %v132 = vpack.c.bf16 %v62, %v62
  %v133 = vpack.c.bf16 %v63, %v63
  %v134 = vpack.c.bf16 %v66, %v66
  %v135 = vpack.c.bf16 %v67, %v67
  %v136 = vpack.c.bf16 %v68, %v68
  %v137 = vpack.c.bf16 %v69, %v69
  %v138 = vpack.c.bf16 %v70, %v70
  %v139 = vpack.c.bf16 %v71, %v71
  %v140 = vpack.c.bf16 %v72, %v72
  %v141 = vpack.c.bf16 %v73, %v73
  %v142 = vpack.c.bf16 %v76, %v76
  %v143 = vpack.c.bf16 %v77, %v77
  %v144 = vpack.c.bf16 %v78, %v78
  %v145 = vpack.c.bf16 %v79, %v79
  %v146 = vpack.c.bf16 %v80, %v80
  %v147 = vpack.c.bf16 %v81, %v81
  %v148 = vpack.c.bf16 %v82, %v82
  %v149 = vpack.c.bf16 %v83, %v83
  %v150 = vpack.c.bf16 %v86, %v86
  %v151 = vpack.c.bf16 %v87, %v87
  %v152 = vpack.c.bf16 %v88, %v88
  %v153 = vpack.c.bf16 %v89, %v89
  %v154 = vpack.c.bf16 %v90, %v90
  %v155 = vpack.c.bf16 %v91, %v91
  %v156 = vpack.c.bf16 %v92, %v92
  %v157 = vpack.c.bf16 %v93, %v93
  %v158 = vld [vmem:[%s2] sm:$0xf]
  %v159 = vld [vmem:[%s2 + $0x4] sm:$0xf]
  %v160 = vld [vmem:[%s2 + $0x8] sm:$0xf]
  %v161 = vld [vmem:[%s2 + $0xc] sm:$0xf]
  %v162 = vld [vmem:[%s2 + $0x10] sm:$0xf]
  %v163 = vld [vmem:[%s2 + $0x14] sm:$0xf]
  %v164 = vld [vmem:[%s2 + $0x18] sm:$0xf]
  %v165 = vld [vmem:[%s2 + $0x1c] sm:$0xf]
  %v166 = vld [vmem:[%s2 + $0x20] sm:$0xf]
  %v167 = vld [vmem:[%s2 + $0x24] sm:$0xf]
  %v168 = vld [vmem:[%s2 + $0x28] sm:$0xf]
  %v169 = vld [vmem:[%s2 + $0x2c] sm:$0xf]
  %v170 = vld [vmem:[%s2 + $0x30] sm:$0xf]
  %v171 = vld [vmem:[%s2 + $0x34] sm:$0xf]
  %v172 = vld [vmem:[%s2 + $0x38] sm:$0xf]
  %v173 = vld [vmem:[%s2 + $0x3c] sm:$0xf]
  %v174 = vld [vmem:[%s2 + $0x40] sm:$0xf]
  %v175 = vld [vmem:[%s2 + $0x44] sm:$0xf]
  %v176 = vld [vmem:[%s2 + $0x48] sm:$0xf]
  %v177 = vld [vmem:[%s2 + $0x4c] sm:$0xf]
  %v178 = vld [vmem:[%s2 + $0x50] sm:$0xf]
  %v179 = vld [vmem:[%s2 + $0x54] sm:$0xf]
  %v180 = vld [vmem:[%s2 + $0x58] sm:$0xf]
  %v181 = vld [vmem:[%s2 + $0x5c] sm:$0xf]
  %v182 = vld [vmem:[%s2 + $0x60] sm:$0xf]
  %v183 = vld [vmem:[%s2 + $0x64] sm:$0xf]
  %v184 = vld [vmem:[%s2 + $0x68] sm:$0xf]
  %v185 = vld [vmem:[%s2 + $0x6c] sm:$0xf]
  %v186 = vld [vmem:[%s2 + $0x70] sm:$0xf]
  %v187 = vld [vmem:[%s2 + $0x74] sm:$0xf]
  %v188 = vld [vmem:[%s2 + $0x78] sm:$0xf]
  %v189 = vld [vmem:[%s2 + $0x7c] sm:$0xf]
  %v190 = vld [vmem:[%s2 + $0x80] sm:$0xf]
  %v191 = vld [vmem:[%s2 + $0x84] sm:$0xf]
  %v192 = vld [vmem:[%s2 + $0x88] sm:$0xf]
  %v193 = vld [vmem:[%s2 + $0x8c] sm:$0xf]
  %v194 = vld [vmem:[%s2 + $0x90] sm:$0xf]
  %v195 = vld [vmem:[%s2 + $0x94] sm:$0xf]
  %v196 = vld [vmem:[%s2 + $0x98] sm:$0xf]
  %v197 = vld [vmem:[%s2 + $0x9c] sm:$0xf]
  %v198 = vld [vmem:[%s2 + $0xa0] sm:$0xf]
  %v199 = vld [vmem:[%s2 + $0xa4] sm:$0xf]
  %v200 = vld [vmem:[%s2 + $0xa8] sm:$0xf]
  %v201 = vld [vmem:[%s2 + $0xac] sm:$0xf]
  %v202 = vld [vmem:[%s2 + $0xb0] sm:$0xf]
  %v203 = vld [vmem:[%s2 + $0xb4] sm:$0xf]
  %v204 = vld [vmem:[%s2 + $0xb8] sm:$0xf]
  %v205 = vld [vmem:[%s2 + $0xbc] sm:$0xf]
  %v206 = vld [vmem:[%s2 + $0xc0] sm:$0xf]
  %v207 = vld [vmem:[%s2 + $0xc4] sm:$0xf]
  %v208 = vld [vmem:[%s2 + $0xc8] sm:$0xf]
  %v209 = vld [vmem:[%s2 + $0xcc] sm:$0xf]
  %v210 = vld [vmem:[%s2 + $0xd0] sm:$0xf]
  %v211 = vld [vmem:[%s2 + $0xd4] sm:$0xf]
  %v212 = vld [vmem:[%s2 + $0xd8] sm:$0xf]
  %v213 = vld [vmem:[%s2 + $0xdc] sm:$0xf]
  %v214 = vld [vmem:[%s2 + $0xe0] sm:$0xf]
  %v215 = vld [vmem:[%s2 + $0xe4] sm:$0xf]
  %v216 = vld [vmem:[%s2 + $0xe8] sm:$0xf]
  %v217 = vld [vmem:[%s2 + $0xec] sm:$0xf]
  %v218 = vld [vmem:[%s2 + $0xf0] sm:$0xf]
  %v219 = vld [vmem:[%s2 + $0xf4] sm:$0xf]
  %v220 = vld [vmem:[%s2 + $0xf8] sm:$0xf]
  %v221 = vld [vmem:[%s2 + $0xfc] sm:$0xf]
  %v222 = vld [vmem:[%s2 + $0x100] sm:$0xf]
  %v223 = vld [vmem:[%s2 + $0x104] sm:$0xf]
  %v224 = vld [vmem:[%s2 + $0x108] sm:$0xf]
  %v225 = vld [vmem:[%s2 + $0x10c] sm:$0xf]
  %v226 = vld [vmem:[%s2 + $0x110] sm:$0xf]
  %v227 = vld [vmem:[%s2 + $0x114] sm:$0xf]
  %v228 = vld [vmem:[%s2 + $0x118] sm:$0xf]
  %v229 = vld [vmem:[%s2 + $0x11c] sm:$0xf]
  %v230 = vld [vmem:[%s2 + $0x120] sm:$0xf]
  %v231 = vld [vmem:[%s2 + $0x124] sm:$0xf]
  %v232 = vld [vmem:[%s2 + $0x128] sm:$0xf]
  %v233 = vld [vmem:[%s2 + $0x12c] sm:$0xf]
  %v234 = vld [vmem:[%s2 + $0x130] sm:$0xf]
  %v235 = vld [vmem:[%s2 + $0x134] sm:$0xf]
  %v236 = vld [vmem:[%s2 + $0x138] sm:$0xf]
  %v237 = vld [vmem:[%s2 + $0x13c] sm:$0xf]
  %v238 = vld [vmem:[%s2 + $0x140] sm:$0xf]
  %v239 = vld [vmem:[%s2 + $0x144] sm:$0xf]
  %v240 = vld [vmem:[%s2 + $0x148] sm:$0xf]
  %v241 = vld [vmem:[%s2 + $0x14c] sm:$0xf]
  %v242 = vld [vmem:[%s2 + $0x150] sm:$0xf]
  %v243 = vld [vmem:[%s2 + $0x154] sm:$0xf]
  %v244 = vld [vmem:[%s2 + $0x158] sm:$0xf]
  %v245 = vld [vmem:[%s2 + $0x15c] sm:$0xf]
  %v246 = vld [vmem:[%s2 + $0x160] sm:$0xf]
  %v247 = vld [vmem:[%s2 + $0x164] sm:$0xf]
  %v248 = vld [vmem:[%s2 + $0x168] sm:$0xf]
  %v249 = vld [vmem:[%s2 + $0x16c] sm:$0xf]
  %v250 = vld [vmem:[%s2 + $0x170] sm:$0xf]
  %v251 = vld [vmem:[%s2 + $0x174] sm:$0xf]
  %v252 = vld [vmem:[%s2 + $0x178] sm:$0xf]
  %v253 = vld [vmem:[%s2 + $0x17c] sm:$0xf]
  %v254 = vld [vmem:[%s2 + $0x180] sm:$0xf]
  %v255 = vld [vmem:[%s2 + $0x184] sm:$0xf]
  %v256 = vld [vmem:[%s2 + $0x188] sm:$0xf]
  %v257 = vld [vmem:[%s2 + $0x18c] sm:$0xf]
  %v258 = vld [vmem:[%s2 + $0x190] sm:$0xf]
  %v259 = vld [vmem:[%s2 + $0x194] sm:$0xf]
  %v260 = vld [vmem:[%s2 + $0x198] sm:$0xf]
  %v261 = vld [vmem:[%s2 + $0x19c] sm:$0xf]
  %v262 = vld [vmem:[%s2 + $0x1a0] sm:$0xf]
  %v263 = vld [vmem:[%s2 + $0x1a4] sm:$0xf]
  %v264 = vld [vmem:[%s2 + $0x1a8] sm:$0xf]
  %v265 = vld [vmem:[%s2 + $0x1ac] sm:$0xf]
  %v266 = vld [vmem:[%s2 + $0x1b0] sm:$0xf]
  %v267 = vld [vmem:[%s2 + $0x1b4] sm:$0xf]
  %v268 = vld [vmem:[%s2 + $0x1b8] sm:$0xf]
  %v269 = vld [vmem:[%s2 + $0x1bc] sm:$0xf]
  %v270 = vld [vmem:[%s2 + $0x1c0] sm:$0xf]
  %v271 = vld [vmem:[%s2 + $0x1c4] sm:$0xf]
  %v272 = vld [vmem:[%s2 + $0x1c8] sm:$0xf]
  %v273 = vld [vmem:[%s2 + $0x1cc] sm:$0xf]
  %v274 = vld [vmem:[%s2 + $0x1d0] sm:$0xf]
  %v275 = vld [vmem:[%s2 + $0x1d4] sm:$0xf]
  %v276 = vld [vmem:[%s2 + $0x1d8] sm:$0xf]
  %v277 = vld [vmem:[%s2 + $0x1dc] sm:$0xf]
  %v278 = vld [vmem:[%s2 + $0x1e0] sm:$0xf]
  %v279 = vld [vmem:[%s2 + $0x1e4] sm:$0xf]
  %v280 = vld [vmem:[%s2 + $0x1e8] sm:$0xf]
  %v281 = vld [vmem:[%s2 + $0x1ec] sm:$0xf]
  %v282 = vld [vmem:[%s2 + $0x1f0] sm:$0xf]
  %v283 = vld [vmem:[%s2 + $0x1f4] sm:$0xf]
  %v284 = vld [vmem:[%s2 + $0x1f8] sm:$0xf]
  %v285 = vld [vmem:[%s2 + $0x1fc] sm:$0xf]
  %v286 = vld [vmem:[%s2 + $0x200] sm:$0xf]
  %v287 = vld [vmem:[%s2 + $0x204] sm:$0xf]
  %v288 = vld [vmem:[%s2 + $0x208] sm:$0xf]
  %v289 = vld [vmem:[%s2 + $0x20c] sm:$0xf]
  %v290 = vld [vmem:[%s2 + $0x210] sm:$0xf]
  %v291 = vld [vmem:[%s2 + $0x214] sm:$0xf]
  %v292 = vld [vmem:[%s2 + $0x218] sm:$0xf]
  %v293 = vld [vmem:[%s2 + $0x21c] sm:$0xf]
  %v294 = vld [vmem:[%s2 + $0x220] sm:$0xf]
  %v295 = vld [vmem:[%s2 + $0x224] sm:$0xf]
  %v296 = vld [vmem:[%s2 + $0x228] sm:$0xf]
  %v297 = vld [vmem:[%s2 + $0x22c] sm:$0xf]
  %v298 = vld [vmem:[%s2 + $0x230] sm:$0xf]
  %v299 = vld [vmem:[%s2 + $0x234] sm:$0xf]
  %v300 = vld [vmem:[%s2 + $0x238] sm:$0xf]
  %v301 = vld [vmem:[%s2 + $0x23c] sm:$0xf]
  %v302 = vld [vmem:[%s2 + $0x240] sm:$0xf]
  %v303 = vld [vmem:[%s2 + $0x244] sm:$0xf]
  %v304 = vld [vmem:[%s2 + $0x248] sm:$0xf]
  %v305 = vld [vmem:[%s2 + $0x24c] sm:$0xf]
  %v306 = vld [vmem:[%s2 + $0x250] sm:$0xf]
  %v307 = vld [vmem:[%s2 + $0x254] sm:$0xf]
  %v308 = vld [vmem:[%s2 + $0x258] sm:$0xf]
  %v309 = vld [vmem:[%s2 + $0x25c] sm:$0xf]
  %v310 = vld [vmem:[%s2 + $0x260] sm:$0xf]
  %v311 = vld [vmem:[%s2 + $0x264] sm:$0xf]
  %v312 = vld [vmem:[%s2 + $0x268] sm:$0xf]
  %v313 = vld [vmem:[%s2 + $0x26c] sm:$0xf]
  %v314 = vld [vmem:[%s2 + $0x270] sm:$0xf]
  %v315 = vld [vmem:[%s2 + $0x274] sm:$0xf]
  %v316 = vld [vmem:[%s2 + $0x278] sm:$0xf]
  %v317 = vld [vmem:[%s2 + $0x27c] sm:$0xf]
  %v318 = vld [vmem:[%s2 + $0x280] sm:$0xf]
  %v319 = vld [vmem:[%s2 + $0x284] sm:$0xf]
  %v320 = vld [vmem:[%s2 + $0x288] sm:$0xf]
  %v321 = vld [vmem:[%s2 + $0x28c] sm:$0xf]
  %v322 = vld [vmem:[%s2 + $0x290] sm:$0xf]
  %v323 = vld [vmem:[%s2 + $0x294] sm:$0xf]
  %v324 = vld [vmem:[%s2 + $0x298] sm:$0xf]
  %v325 = vld [vmem:[%s2 + $0x29c] sm:$0xf]
  %v326 = vld [vmem:[%s2 + $0x2a0] sm:$0xf]
  %v327 = vld [vmem:[%s2 + $0x2a4] sm:$0xf]
  %v328 = vld [vmem:[%s2 + $0x2a8] sm:$0xf]
  %v329 = vld [vmem:[%s2 + $0x2ac] sm:$0xf]
  %v330 = vld [vmem:[%s2 + $0x2b0] sm:$0xf]
  %v331 = vld [vmem:[%s2 + $0x2b4] sm:$0xf]
  %v332 = vld [vmem:[%s2 + $0x2b8] sm:$0xf]
  %v333 = vld [vmem:[%s2 + $0x2bc] sm:$0xf]
  %v334 = vld [vmem:[%s2 + $0x2c0] sm:$0xf]
  %v335 = vld [vmem:[%s2 + $0x2c4] sm:$0xf]
  %v336 = vld [vmem:[%s2 + $0x2c8] sm:$0xf]
  %v337 = vld [vmem:[%s2 + $0x2cc] sm:$0xf]
  %v338 = vld [vmem:[%s2 + $0x2d0] sm:$0xf]
  %v339 = vld [vmem:[%s2 + $0x2d4] sm:$0xf]
  %v340 = vld [vmem:[%s2 + $0x2d8] sm:$0xf]
  %v341 = vld [vmem:[%s2 + $0x2dc] sm:$0xf]
  %v342 = vld [vmem:[%s2 + $0x2e0] sm:$0xf]
  %v343 = vld [vmem:[%s2 + $0x2e4] sm:$0xf]
  %v344 = vld [vmem:[%s2 + $0x2e8] sm:$0xf]
  %v345 = vld [vmem:[%s2 + $0x2ec] sm:$0xf]
  %v346 = vld [vmem:[%s2 + $0x2f0] sm:$0xf]
  %v347 = vld [vmem:[%s2 + $0x2f4] sm:$0xf]
  %v348 = vld [vmem:[%s2 + $0x2f8] sm:$0xf]
  %v349 = vld [vmem:[%s2 + $0x2fc] sm:$0xf]
  %v350 = vld [vmem:[%s2 + $0x300] sm:$0xf]
  %v351 = vld [vmem:[%s2 + $0x304] sm:$0xf]
  %v352 = vld [vmem:[%s2 + $0x308] sm:$0xf]
  %v353 = vld [vmem:[%s2 + $0x30c] sm:$0xf]
  %v354 = vld [vmem:[%s2 + $0x310] sm:$0xf]
  %v355 = vld [vmem:[%s2 + $0x314] sm:$0xf]
  %v356 = vld [vmem:[%s2 + $0x318] sm:$0xf]
  %v357 = vld [vmem:[%s2 + $0x31c] sm:$0xf]
  %v358 = vld [vmem:[%s2 + $0x320] sm:$0xf]
  %v359 = vld [vmem:[%s2 + $0x324] sm:$0xf]
  %v360 = vld [vmem:[%s2 + $0x328] sm:$0xf]
  %v361 = vld [vmem:[%s2 + $0x32c] sm:$0xf]
  %v362 = vld [vmem:[%s2 + $0x330] sm:$0xf]
  %v363 = vld [vmem:[%s2 + $0x334] sm:$0xf]
  %v364 = vld [vmem:[%s2 + $0x338] sm:$0xf]
  %v365 = vld [vmem:[%s2 + $0x33c] sm:$0xf]
  %v366 = vld [vmem:[%s2 + $0x340] sm:$0xf]
  %v367 = vld [vmem:[%s2 + $0x344] sm:$0xf]
  %v368 = vld [vmem:[%s2 + $0x348] sm:$0xf]
  %v369 = vld [vmem:[%s2 + $0x34c] sm:$0xf]
  %v370 = vld [vmem:[%s2 + $0x350] sm:$0xf]
  %v371 = vld [vmem:[%s2 + $0x354] sm:$0xf]
  %v372 = vld [vmem:[%s2 + $0x358] sm:$0xf]
  %v373 = vld [vmem:[%s2 + $0x35c] sm:$0xf]
  %v374 = vld [vmem:[%s2 + $0x360] sm:$0xf]
  %v375 = vld [vmem:[%s2 + $0x364] sm:$0xf]
  %v376 = vld [vmem:[%s2 + $0x368] sm:$0xf]
  %v377 = vld [vmem:[%s2 + $0x36c] sm:$0xf]
  %v378 = vld [vmem:[%s2 + $0x370] sm:$0xf]
  %v379 = vld [vmem:[%s2 + $0x374] sm:$0xf]
  %v380 = vld [vmem:[%s2 + $0x378] sm:$0xf]
  %v381 = vld [vmem:[%s2 + $0x37c] sm:$0xf]
  %v382 = vld [vmem:[%s2 + $0x380] sm:$0xf]
  %v383 = vld [vmem:[%s2 + $0x384] sm:$0xf]
  %v384 = vld [vmem:[%s2 + $0x388] sm:$0xf]
  %v385 = vld [vmem:[%s2 + $0x38c] sm:$0xf]
  %v386 = vld [vmem:[%s2 + $0x390] sm:$0xf]
  %v387 = vld [vmem:[%s2 + $0x394] sm:$0xf]
  %v388 = vld [vmem:[%s2 + $0x398] sm:$0xf]
  %v389 = vld [vmem:[%s2 + $0x39c] sm:$0xf]
  %v390 = vld [vmem:[%s2 + $0x3a0] sm:$0xf]
  %v391 = vld [vmem:[%s2 + $0x3a4] sm:$0xf]
  %v392 = vld [vmem:[%s2 + $0x3a8] sm:$0xf]
  %v393 = vld [vmem:[%s2 + $0x3ac] sm:$0xf]
  %v394 = vld [vmem:[%s2 + $0x3b0] sm:$0xf]
  %v395 = vld [vmem:[%s2 + $0x3b4] sm:$0xf]
  %v396 = vld [vmem:[%s2 + $0x3b8] sm:$0xf]
  %v397 = vld [vmem:[%s2 + $0x3bc] sm:$0xf]
  %v398 = vld [vmem:[%s2 + $0x3c0] sm:$0xf]
  %v399 = vld [vmem:[%s2 + $0x3c4] sm:$0xf]
  %v400 = vld [vmem:[%s2 + $0x3c8] sm:$0xf]
  %v401 = vld [vmem:[%s2 + $0x3cc] sm:$0xf]
  %v402 = vld [vmem:[%s2 + $0x3d0] sm:$0xf]
  %v403 = vld [vmem:[%s2 + $0x3d4] sm:$0xf]
  %v404 = vld [vmem:[%s2 + $0x3d8] sm:$0xf]
  %v405 = vld [vmem:[%s2 + $0x3dc] sm:$0xf]
  %v406 = vld [vmem:[%s2 + $0x3e0] sm:$0xf]
  %v407 = vld [vmem:[%s2 + $0x3e4] sm:$0xf]
  %v408 = vld [vmem:[%s2 + $0x3e8] sm:$0xf]
  %v409 = vld [vmem:[%s2 + $0x3ec] sm:$0xf]
  %v410 = vld [vmem:[%s2 + $0x3f0] sm:$0xf]
  %v411 = vld [vmem:[%s2 + $0x3f4] sm:$0xf]
  %v412 = vld [vmem:[%s2 + $0x3f8] sm:$0xf]
  %v413 = vld [vmem:[%s2 + $0x3fc] sm:$0xf]
  %v414 = vld [vmem:[%s2 + $0x400] sm:$0xf]
  %v415 = vld [vmem:[%s2 + $0x404] sm:$0xf]
  %v416 = vld [vmem:[%s2 + $0x408] sm:$0xf]
  %v417 = vld [vmem:[%s2 + $0x40c] sm:$0xf]
  %v418 = vld [vmem:[%s2 + $0x410] sm:$0xf]
  %v419 = vld [vmem:[%s2 + $0x414] sm:$0xf]
  %v420 = vld [vmem:[%s2 + $0x418] sm:$0xf]
  %v421 = vld [vmem:[%s2 + $0x41c] sm:$0xf]
  %v422 = vld [vmem:[%s2 + $0x420] sm:$0xf]
  %v423 = vld [vmem:[%s2 + $0x424] sm:$0xf]
  %v424 = vld [vmem:[%s2 + $0x428] sm:$0xf]
  %v425 = vld [vmem:[%s2 + $0x42c] sm:$0xf]
  %v426 = vld [vmem:[%s2 + $0x430] sm:$0xf]
  %v427 = vld [vmem:[%s2 + $0x434] sm:$0xf]
  %v428 = vld [vmem:[%s2 + $0x438] sm:$0xf]
  %v429 = vld [vmem:[%s2 + $0x43c] sm:$0xf]
  %v430 = vld [vmem:[%s2 + $0x440] sm:$0xf]
  %v431 = vld [vmem:[%s2 + $0x444] sm:$0xf]
  %v432 = vld [vmem:[%s2 + $0x448] sm:$0xf]
  %v433 = vld [vmem:[%s2 + $0x44c] sm:$0xf]
  %v434 = vld [vmem:[%s2 + $0x450] sm:$0xf]
  %v435 = vld [vmem:[%s2 + $0x454] sm:$0xf]
  %v436 = vld [vmem:[%s2 + $0x458] sm:$0xf]
  %v437 = vld [vmem:[%s2 + $0x45c] sm:$0xf]
  %v438 = vld [vmem:[%s2 + $0x460] sm:$0xf]
  %v439 = vld [vmem:[%s2 + $0x464] sm:$0xf]
  %v440 = vld [vmem:[%s2 + $0x468] sm:$0xf]
  %v441 = vld [vmem:[%s2 + $0x46c] sm:$0xf]
  %v442 = vld [vmem:[%s2 + $0x470] sm:$0xf]
  %v443 = vld [vmem:[%s2 + $0x474] sm:$0xf]
  %v444 = vld [vmem:[%s2 + $0x478] sm:$0xf]
  %v445 = vld [vmem:[%s2 + $0x47c] sm:$0xf]
  %v446 = vld [vmem:[%s2 + $0x480] sm:$0xf]
  %v447 = vld [vmem:[%s2 + $0x484] sm:$0xf]
  %v448 = vld [vmem:[%s2 + $0x488] sm:$0xf]
  %v449 = vld [vmem:[%s2 + $0x48c] sm:$0xf]
  %v450 = vld [vmem:[%s2 + $0x490] sm:$0xf]
  %v451 = vld [vmem:[%s2 + $0x494] sm:$0xf]
  %v452 = vld [vmem:[%s2 + $0x498] sm:$0xf]
  %v453 = vld [vmem:[%s2 + $0x49c] sm:$0xf]
  %v454 = vld [vmem:[%s2 + $0x4a0] sm:$0xf]
  %v455 = vld [vmem:[%s2 + $0x4a4] sm:$0xf]
  %v456 = vld [vmem:[%s2 + $0x4a8] sm:$0xf]
  %v457 = vld [vmem:[%s2 + $0x4ac] sm:$0xf]
  %v458 = vld [vmem:[%s2 + $0x4b0] sm:$0xf]
  %v459 = vld [vmem:[%s2 + $0x4b4] sm:$0xf]
  %v460 = vld [vmem:[%s2 + $0x4b8] sm:$0xf]
  %v461 = vld [vmem:[%s2 + $0x4bc] sm:$0xf]
  %v462 = vld [vmem:[%s2 + $0x4c0] sm:$0xf]
  %v463 = vld [vmem:[%s2 + $0x4c4] sm:$0xf]
  %v464 = vld [vmem:[%s2 + $0x4c8] sm:$0xf]
  %v465 = vld [vmem:[%s2 + $0x4cc] sm:$0xf]
  %v466 = vld [vmem:[%s2 + $0x4d0] sm:$0xf]
  %v467 = vld [vmem:[%s2 + $0x4d4] sm:$0xf]
  %v468 = vld [vmem:[%s2 + $0x4d8] sm:$0xf]
  %v469 = vld [vmem:[%s2 + $0x4dc] sm:$0xf]
  %v470 = vld [vmem:[%s2 + $0x4e0] sm:$0xf]
  %v471 = vld [vmem:[%s2 + $0x4e4] sm:$0xf]
  %v472 = vld [vmem:[%s2 + $0x4e8] sm:$0xf]
  %v473 = vld [vmem:[%s2 + $0x4ec] sm:$0xf]
  %v474 = vld [vmem:[%s2 + $0x4f0] sm:$0xf]
  %v475 = vld [vmem:[%s2 + $0x4f4] sm:$0xf]
  %v476 = vld [vmem:[%s2 + $0x4f8] sm:$0xf]
  %v477 = vld [vmem:[%s2 + $0x4fc] sm:$0xf]
  %v478 = vld [vmem:[%s2 + $0x500] sm:$0xf]
  %v479 = vld [vmem:[%s2 + $0x504] sm:$0xf]
  %v480 = vld [vmem:[%s2 + $0x508] sm:$0xf]
  %v481 = vld [vmem:[%s2 + $0x50c] sm:$0xf]
  %v482 = vld [vmem:[%s2 + $0x510] sm:$0xf]
  %v483 = vld [vmem:[%s2 + $0x514] sm:$0xf]
  %v484 = vld [vmem:[%s2 + $0x518] sm:$0xf]
  %v485 = vld [vmem:[%s2 + $0x51c] sm:$0xf]
  %v486 = vld [vmem:[%s2 + $0x520] sm:$0xf]
  %v487 = vld [vmem:[%s2 + $0x524] sm:$0xf]
  %v488 = vld [vmem:[%s2 + $0x528] sm:$0xf]
  %v489 = vld [vmem:[%s2 + $0x52c] sm:$0xf]
  %v490 = vld [vmem:[%s2 + $0x530] sm:$0xf]
  %v491 = vld [vmem:[%s2 + $0x534] sm:$0xf]
  %v492 = vld [vmem:[%s2 + $0x538] sm:$0xf]
  %v493 = vld [vmem:[%s2 + $0x53c] sm:$0xf]
  %v494 = vld [vmem:[%s2 + $0x540] sm:$0xf]
  %v495 = vld [vmem:[%s2 + $0x544] sm:$0xf]
  %v496 = vld [vmem:[%s2 + $0x548] sm:$0xf]
  %v497 = vld [vmem:[%s2 + $0x54c] sm:$0xf]
  %v498 = vld [vmem:[%s2 + $0x550] sm:$0xf]
  %v499 = vld [vmem:[%s2 + $0x554] sm:$0xf]
  %v500 = vld [vmem:[%s2 + $0x558] sm:$0xf]
  %v501 = vld [vmem:[%s2 + $0x55c] sm:$0xf]
  %v502 = vld [vmem:[%s2 + $0x560] sm:$0xf]
  %v503 = vld [vmem:[%s2 + $0x564] sm:$0xf]
  %v504 = vld [vmem:[%s2 + $0x568] sm:$0xf]
  %v505 = vld [vmem:[%s2 + $0x56c] sm:$0xf]
  %v506 = vld [vmem:[%s2 + $0x570] sm:$0xf]
  %v507 = vld [vmem:[%s2 + $0x574] sm:$0xf]
  %v508 = vld [vmem:[%s2 + $0x578] sm:$0xf]
  %v509 = vld [vmem:[%s2 + $0x57c] sm:$0xf]
  %v510 = vld [vmem:[%s2 + $0x580] sm:$0xf]
  %v511 = vld [vmem:[%s2 + $0x584] sm:$0xf]
  %v512 = vld [vmem:[%s2 + $0x588] sm:$0xf]
  %v513 = vld [vmem:[%s2 + $0x58c] sm:$0xf]
  %v514 = vld [vmem:[%s2 + $0x590] sm:$0xf]
  %v515 = vld [vmem:[%s2 + $0x594] sm:$0xf]
  %v516 = vld [vmem:[%s2 + $0x598] sm:$0xf]
  %v517 = vld [vmem:[%s2 + $0x59c] sm:$0xf]
  %v518 = vld [vmem:[%s2 + $0x5a0] sm:$0xf]
  %v519 = vld [vmem:[%s2 + $0x5a4] sm:$0xf]
  %v520 = vld [vmem:[%s2 + $0x5a8] sm:$0xf]
  %v521 = vld [vmem:[%s2 + $0x5ac] sm:$0xf]
  %v522 = vld [vmem:[%s2 + $0x5b0] sm:$0xf]
  %v523 = vld [vmem:[%s2 + $0x5b4] sm:$0xf]
  %v524 = vld [vmem:[%s2 + $0x5b8] sm:$0xf]
  %v525 = vld [vmem:[%s2 + $0x5bc] sm:$0xf]
  %v526 = vld [vmem:[%s2 + $0x5c0] sm:$0xf]
  %v527 = vld [vmem:[%s2 + $0x5c4] sm:$0xf]
  %v528 = vld [vmem:[%s2 + $0x5c8] sm:$0xf]
  %v529 = vld [vmem:[%s2 + $0x5cc] sm:$0xf]
  %v530 = vld [vmem:[%s2 + $0x5d0] sm:$0xf]
  %v531 = vld [vmem:[%s2 + $0x5d4] sm:$0xf]
  %v532 = vld [vmem:[%s2 + $0x5d8] sm:$0xf]
  %v533 = vld [vmem:[%s2 + $0x5dc] sm:$0xf]
  %v534 = vld [vmem:[%s2 + $0x5e0] sm:$0xf]
  %v535 = vld [vmem:[%s2 + $0x5e4] sm:$0xf]
  %v536 = vld [vmem:[%s2 + $0x5e8] sm:$0xf]
  %v537 = vld [vmem:[%s2 + $0x5ec] sm:$0xf]
  %v538 = vld [vmem:[%s2 + $0x5f0] sm:$0xf]
  %v539 = vld [vmem:[%s2 + $0x5f4] sm:$0xf]
  %v540 = vld [vmem:[%s2 + $0x5f8] sm:$0xf]
  %v541 = vld [vmem:[%s2 + $0x5fc] sm:$0xf]
  %v542 = vld [vmem:[%s2 + $0x600] sm:$0xf]
  %v543 = vld [vmem:[%s2 + $0x604] sm:$0xf]
  %v544 = vld [vmem:[%s2 + $0x608] sm:$0xf]
  %v545 = vld [vmem:[%s2 + $0x60c] sm:$0xf]
  %v546 = vld [vmem:[%s2 + $0x610] sm:$0xf]
  %v547 = vld [vmem:[%s2 + $0x614] sm:$0xf]
  %v548 = vld [vmem:[%s2 + $0x618] sm:$0xf]
  %v549 = vld [vmem:[%s2 + $0x61c] sm:$0xf]
  %v550 = vld [vmem:[%s2 + $0x620] sm:$0xf]
  %v551 = vld [vmem:[%s2 + $0x624] sm:$0xf]
  %v552 = vld [vmem:[%s2 + $0x628] sm:$0xf]
  %v553 = vld [vmem:[%s2 + $0x62c] sm:$0xf]
  %v554 = vld [vmem:[%s2 + $0x630] sm:$0xf]
  %v555 = vld [vmem:[%s2 + $0x634] sm:$0xf]
  %v556 = vld [vmem:[%s2 + $0x638] sm:$0xf]
  %v557 = vld [vmem:[%s2 + $0x63c] sm:$0xf]
  %v558 = vld [vmem:[%s2 + $0x640] sm:$0xf]
  %v559 = vld [vmem:[%s2 + $0x644] sm:$0xf]
  %v560 = vld [vmem:[%s2 + $0x648] sm:$0xf]
  %v561 = vld [vmem:[%s2 + $0x64c] sm:$0xf]
  %v562 = vld [vmem:[%s2 + $0x650] sm:$0xf]
  %v563 = vld [vmem:[%s2 + $0x654] sm:$0xf]
  %v564 = vld [vmem:[%s2 + $0x658] sm:$0xf]
  %v565 = vld [vmem:[%s2 + $0x65c] sm:$0xf]
  %v566 = vld [vmem:[%s2 + $0x660] sm:$0xf]
  %v567 = vld [vmem:[%s2 + $0x664] sm:$0xf]
  %v568 = vld [vmem:[%s2 + $0x668] sm:$0xf]
  %v569 = vld [vmem:[%s2 + $0x66c] sm:$0xf]
  %v570 = vld [vmem:[%s2 + $0x670] sm:$0xf]
  %v571 = vld [vmem:[%s2 + $0x674] sm:$0xf]
  %v572 = vld [vmem:[%s2 + $0x678] sm:$0xf]
  %v573 = vld [vmem:[%s2 + $0x67c] sm:$0xf]
  %v574 = vld [vmem:[%s2 + $0x680] sm:$0xf]
  %v575 = vld [vmem:[%s2 + $0x684] sm:$0xf]
  %v576 = vld [vmem:[%s2 + $0x688] sm:$0xf]
  %v577 = vld [vmem:[%s2 + $0x68c] sm:$0xf]
  %v578 = vld [vmem:[%s2 + $0x690] sm:$0xf]
  %v579 = vld [vmem:[%s2 + $0x694] sm:$0xf]
  %v580 = vld [vmem:[%s2 + $0x698] sm:$0xf]
  %v581 = vld [vmem:[%s2 + $0x69c] sm:$0xf]
  %v582 = vld [vmem:[%s2 + $0x6a0] sm:$0xf]
  %v583 = vld [vmem:[%s2 + $0x6a4] sm:$0xf]
  %v584 = vld [vmem:[%s2 + $0x6a8] sm:$0xf]
  %v585 = vld [vmem:[%s2 + $0x6ac] sm:$0xf]
  %v586 = vld [vmem:[%s2 + $0x6b0] sm:$0xf]
  %v587 = vld [vmem:[%s2 + $0x6b4] sm:$0xf]
  %v588 = vld [vmem:[%s2 + $0x6b8] sm:$0xf]
  %v589 = vld [vmem:[%s2 + $0x6bc] sm:$0xf]
  %v590 = vld [vmem:[%s2 + $0x6c0] sm:$0xf]
  %v591 = vld [vmem:[%s2 + $0x6c4] sm:$0xf]
  %v592 = vld [vmem:[%s2 + $0x6c8] sm:$0xf]
  %v593 = vld [vmem:[%s2 + $0x6cc] sm:$0xf]
  %v594 = vld [vmem:[%s2 + $0x6d0] sm:$0xf]
  %v595 = vld [vmem:[%s2 + $0x6d4] sm:$0xf]
  %v596 = vld [vmem:[%s2 + $0x6d8] sm:$0xf]
  %v597 = vld [vmem:[%s2 + $0x6dc] sm:$0xf]
  %v598 = vld [vmem:[%s2 + $0x6e0] sm:$0xf]
  %v599 = vld [vmem:[%s2 + $0x6e4] sm:$0xf]
  %v600 = vld [vmem:[%s2 + $0x6e8] sm:$0xf]
  %v601 = vld [vmem:[%s2 + $0x6ec] sm:$0xf]
  %v602 = vld [vmem:[%s2 + $0x6f0] sm:$0xf]
  %v603 = vld [vmem:[%s2 + $0x6f4] sm:$0xf]
  %v604 = vld [vmem:[%s2 + $0x6f8] sm:$0xf]
  %v605 = vld [vmem:[%s2 + $0x6fc] sm:$0xf]
  %v606 = vld [vmem:[%s2 + $0x700] sm:$0xf]
  %v607 = vld [vmem:[%s2 + $0x704] sm:$0xf]
  %v608 = vld [vmem:[%s2 + $0x708] sm:$0xf]
  %v609 = vld [vmem:[%s2 + $0x70c] sm:$0xf]
  %v610 = vld [vmem:[%s2 + $0x710] sm:$0xf]
  %v611 = vld [vmem:[%s2 + $0x714] sm:$0xf]
  %v612 = vld [vmem:[%s2 + $0x718] sm:$0xf]
  %v613 = vld [vmem:[%s2 + $0x71c] sm:$0xf]
  %v614 = vld [vmem:[%s2 + $0x720] sm:$0xf]
  %v615 = vld [vmem:[%s2 + $0x724] sm:$0xf]
  %v616 = vld [vmem:[%s2 + $0x728] sm:$0xf]
  %v617 = vld [vmem:[%s2 + $0x72c] sm:$0xf]
  %v618 = vld [vmem:[%s2 + $0x730] sm:$0xf]
  %v619 = vld [vmem:[%s2 + $0x734] sm:$0xf]
  %v620 = vld [vmem:[%s2 + $0x738] sm:$0xf]
  %v621 = vld [vmem:[%s2 + $0x73c] sm:$0xf]
  %v622 = vld [vmem:[%s2 + $0x740] sm:$0xf]
  %v623 = vld [vmem:[%s2 + $0x744] sm:$0xf]
  %v624 = vld [vmem:[%s2 + $0x748] sm:$0xf]
  %v625 = vld [vmem:[%s2 + $0x74c] sm:$0xf]
  %v626 = vld [vmem:[%s2 + $0x750] sm:$0xf]
  %v627 = vld [vmem:[%s2 + $0x754] sm:$0xf]
  %v628 = vld [vmem:[%s2 + $0x758] sm:$0xf]
  %v629 = vld [vmem:[%s2 + $0x75c] sm:$0xf]
  %v630 = vld [vmem:[%s2 + $0x760] sm:$0xf]
  %v631 = vld [vmem:[%s2 + $0x764] sm:$0xf]
  %v632 = vld [vmem:[%s2 + $0x768] sm:$0xf]
  %v633 = vld [vmem:[%s2 + $0x76c] sm:$0xf]
  %v634 = vld [vmem:[%s2 + $0x770] sm:$0xf]
  %v635 = vld [vmem:[%s2 + $0x774] sm:$0xf]
  %v636 = vld [vmem:[%s2 + $0x778] sm:$0xf]
  %v637 = vld [vmem:[%s2 + $0x77c] sm:$0xf]
  %v638 = vld [vmem:[%s2 + $0x780] sm:$0xf]
  %v639 = vld [vmem:[%s2 + $0x784] sm:$0xf]
  %v640 = vld [vmem:[%s2 + $0x788] sm:$0xf]
  %v641 = vld [vmem:[%s2 + $0x78c] sm:$0xf]
  %v642 = vld [vmem:[%s2 + $0x790] sm:$0xf]
  %v643 = vld [vmem:[%s2 + $0x794] sm:$0xf]
  %v644 = vld [vmem:[%s2 + $0x798] sm:$0xf]
  %v645 = vld [vmem:[%s2 + $0x79c] sm:$0xf]
  %v646 = vld [vmem:[%s2 + $0x7a0] sm:$0xf]
  %v647 = vld [vmem:[%s2 + $0x7a4] sm:$0xf]
  %v648 = vld [vmem:[%s2 + $0x7a8] sm:$0xf]
  %v649 = vld [vmem:[%s2 + $0x7ac] sm:$0xf]
  %v650 = vld [vmem:[%s2 + $0x7b0] sm:$0xf]
  %v651 = vld [vmem:[%s2 + $0x7b4] sm:$0xf]
  %v652 = vld [vmem:[%s2 + $0x7b8] sm:$0xf]
  %v653 = vld [vmem:[%s2 + $0x7bc] sm:$0xf]
  %v654 = vld [vmem:[%s2 + $0x7c0] sm:$0xf]
  %v655 = vld [vmem:[%s2 + $0x7c4] sm:$0xf]
  %v656 = vld [vmem:[%s2 + $0x7c8] sm:$0xf]
  %v657 = vld [vmem:[%s2 + $0x7cc] sm:$0xf]
  %v658 = vld [vmem:[%s2 + $0x7d0] sm:$0xf]
  %v659 = vld [vmem:[%s2 + $0x7d4] sm:$0xf]
  %v660 = vld [vmem:[%s2 + $0x7d8] sm:$0xf]
  %v661 = vld [vmem:[%s2 + $0x7dc] sm:$0xf]
  %v662 = vld [vmem:[%s2 + $0x7e0] sm:$0xf]
  %v663 = vld [vmem:[%s2 + $0x7e4] sm:$0xf]
  %v664 = vld [vmem:[%s2 + $0x7e8] sm:$0xf]
  %v665 = vld [vmem:[%s2 + $0x7ec] sm:$0xf]
  %v666 = vld [vmem:[%s2 + $0x7f0] sm:$0xf]
  %v667 = vld [vmem:[%s2 + $0x7f4] sm:$0xf]
  %v668 = vld [vmem:[%s2 + $0x7f8] sm:$0xf]
  %v669 = vld [vmem:[%s2 + $0x7fc] sm:$0xf]
  %v670 = vld [vmem:[%s3] sm:$0x1]
  %v672 = vperm.slane %v670, 0
  %v1186 = vunpack.c.l.b16 %v158
  %v1187 = vunpack.c.l.b16 %v159
  %v1188 = vunpack.c.l.b16 %v160
  %v1189 = vunpack.c.l.b16 %v161
  %v1190 = vunpack.c.l.b16 %v162
  %v1191 = vunpack.c.l.b16 %v163
  %v1192 = vunpack.c.l.b16 %v164
  %v1193 = vunpack.c.l.b16 %v165
  %v1194 = vunpack.c.l.b16 %v166
  %v1195 = vunpack.c.l.b16 %v167
  %v1196 = vunpack.c.l.b16 %v168
  %v1197 = vunpack.c.l.b16 %v169
  %v1198 = vunpack.c.l.b16 %v170
  %v1199 = vunpack.c.l.b16 %v171
  %v1200 = vunpack.c.l.b16 %v172
  %v1201 = vunpack.c.l.b16 %v173
  %v1202 = vunpack.c.l.b16 %v174
  %v1203 = vunpack.c.l.b16 %v175
  %v1204 = vunpack.c.l.b16 %v176
  %v1205 = vunpack.c.l.b16 %v177
  %v1206 = vunpack.c.l.b16 %v178
  %v1207 = vunpack.c.l.b16 %v179
  %v1208 = vunpack.c.l.b16 %v180
  %v1209 = vunpack.c.l.b16 %v181
  %v1210 = vunpack.c.l.b16 %v182
  %v1211 = vunpack.c.l.b16 %v183
  %v1212 = vunpack.c.l.b16 %v184
  %v1213 = vunpack.c.l.b16 %v185
  %v1214 = vunpack.c.l.b16 %v186
  %v1215 = vunpack.c.l.b16 %v187
  %v1216 = vunpack.c.l.b16 %v188
  %v1217 = vunpack.c.l.b16 %v189
  %v1218 = vunpack.c.l.b16 %v190
  %v1219 = vunpack.c.l.b16 %v191
  %v1220 = vunpack.c.l.b16 %v192
  %v1221 = vunpack.c.l.b16 %v193
  %v1222 = vunpack.c.l.b16 %v194
  %v1223 = vunpack.c.l.b16 %v195
  %v1224 = vunpack.c.l.b16 %v196
  %v1225 = vunpack.c.l.b16 %v197
  %v1226 = vunpack.c.l.b16 %v198
  %v1227 = vunpack.c.l.b16 %v199
  %v1228 = vunpack.c.l.b16 %v200
  %v1229 = vunpack.c.l.b16 %v201
  %v1230 = vunpack.c.l.b16 %v202
  %v1231 = vunpack.c.l.b16 %v203
  %v1232 = vunpack.c.l.b16 %v204
  %v1233 = vunpack.c.l.b16 %v205
  %v1234 = vunpack.c.l.b16 %v206
  %v1235 = vunpack.c.l.b16 %v207
  %v1236 = vunpack.c.l.b16 %v208
  %v1237 = vunpack.c.l.b16 %v209
  %v1238 = vunpack.c.l.b16 %v210
  %v1239 = vunpack.c.l.b16 %v211
  %v1240 = vunpack.c.l.b16 %v212
  %v1241 = vunpack.c.l.b16 %v213
  %v1242 = vunpack.c.l.b16 %v214
  %v1243 = vunpack.c.l.b16 %v215
  %v1244 = vunpack.c.l.b16 %v216
  %v1245 = vunpack.c.l.b16 %v217
  %v1246 = vunpack.c.l.b16 %v218
  %v1247 = vunpack.c.l.b16 %v219
  %v1248 = vunpack.c.l.b16 %v220
  %v1249 = vunpack.c.l.b16 %v221
  %v1250 = vunpack.c.l.b16 %v222
  %v1251 = vunpack.c.l.b16 %v223
  %v1252 = vunpack.c.l.b16 %v224
  %v1253 = vunpack.c.l.b16 %v225
  %v1254 = vunpack.c.l.b16 %v226
  %v1255 = vunpack.c.l.b16 %v227
  %v1256 = vunpack.c.l.b16 %v228
  %v1257 = vunpack.c.l.b16 %v229
  %v1258 = vunpack.c.l.b16 %v230
  %v1259 = vunpack.c.l.b16 %v231
  %v1260 = vunpack.c.l.b16 %v232
  %v1261 = vunpack.c.l.b16 %v233
  %v1262 = vunpack.c.l.b16 %v234
  %v1263 = vunpack.c.l.b16 %v235
  %v1264 = vunpack.c.l.b16 %v236
  %v1265 = vunpack.c.l.b16 %v237
  %v1266 = vunpack.c.l.b16 %v238
  %v1267 = vunpack.c.l.b16 %v239
  %v1268 = vunpack.c.l.b16 %v240
  %v1269 = vunpack.c.l.b16 %v241
  %v1270 = vunpack.c.l.b16 %v242
  %v1271 = vunpack.c.l.b16 %v243
  %v1272 = vunpack.c.l.b16 %v244
  %v1273 = vunpack.c.l.b16 %v245
  %v1274 = vunpack.c.l.b16 %v246
  %v1275 = vunpack.c.l.b16 %v247
  %v1276 = vunpack.c.l.b16 %v248
  %v1277 = vunpack.c.l.b16 %v249
  %v1278 = vunpack.c.l.b16 %v250
  %v1279 = vunpack.c.l.b16 %v251
  %v1280 = vunpack.c.l.b16 %v252
  %v1281 = vunpack.c.l.b16 %v253
  %v1282 = vunpack.c.l.b16 %v254
  %v1283 = vunpack.c.l.b16 %v255
  %v1284 = vunpack.c.l.b16 %v256
  %v1285 = vunpack.c.l.b16 %v257
  %v1286 = vunpack.c.l.b16 %v258
  %v1287 = vunpack.c.l.b16 %v259
  %v1288 = vunpack.c.l.b16 %v260
  %v1289 = vunpack.c.l.b16 %v261
  %v1290 = vunpack.c.l.b16 %v262
  %v1291 = vunpack.c.l.b16 %v263
  %v1292 = vunpack.c.l.b16 %v264
  %v1293 = vunpack.c.l.b16 %v265
  %v1294 = vunpack.c.l.b16 %v266
  %v1295 = vunpack.c.l.b16 %v267
  %v1296 = vunpack.c.l.b16 %v268
  %v1297 = vunpack.c.l.b16 %v269
  %v1298 = vunpack.c.l.b16 %v270
  %v1299 = vunpack.c.l.b16 %v271
  %v1300 = vunpack.c.l.b16 %v272
  %v1301 = vunpack.c.l.b16 %v273
  %v1302 = vunpack.c.l.b16 %v274
  %v1303 = vunpack.c.l.b16 %v275
  %v1304 = vunpack.c.l.b16 %v276
  %v1305 = vunpack.c.l.b16 %v277
  %v1306 = vunpack.c.l.b16 %v278
  %v1307 = vunpack.c.l.b16 %v279
  %v1308 = vunpack.c.l.b16 %v280
  %v1309 = vunpack.c.l.b16 %v281
  %v1310 = vunpack.c.l.b16 %v282
  %v1311 = vunpack.c.l.b16 %v283
  %v1312 = vunpack.c.l.b16 %v284
  %v1313 = vunpack.c.l.b16 %v285
  %v1314 = vunpack.c.l.b16 %v286
  %v1315 = vunpack.c.l.b16 %v287
  %v1316 = vunpack.c.l.b16 %v288
  %v1317 = vunpack.c.l.b16 %v289
  %v1318 = vunpack.c.l.b16 %v290
  %v1319 = vunpack.c.l.b16 %v291
  %v1320 = vunpack.c.l.b16 %v292
  %v1321 = vunpack.c.l.b16 %v293
  %v1322 = vunpack.c.l.b16 %v294
  %v1323 = vunpack.c.l.b16 %v295
  %v1324 = vunpack.c.l.b16 %v296
  %v1325 = vunpack.c.l.b16 %v297
  %v1326 = vunpack.c.l.b16 %v298
  %v1327 = vunpack.c.l.b16 %v299
  %v1328 = vunpack.c.l.b16 %v300
  %v1329 = vunpack.c.l.b16 %v301
  %v1330 = vunpack.c.l.b16 %v302
  %v1331 = vunpack.c.l.b16 %v303
  %v1332 = vunpack.c.l.b16 %v304
  %v1333 = vunpack.c.l.b16 %v305
  %v1334 = vunpack.c.l.b16 %v306
  %v1335 = vunpack.c.l.b16 %v307
  %v1336 = vunpack.c.l.b16 %v308
  %v1337 = vunpack.c.l.b16 %v309
  %v1338 = vunpack.c.l.b16 %v310
  %v1339 = vunpack.c.l.b16 %v311
  %v1340 = vunpack.c.l.b16 %v312
  %v1341 = vunpack.c.l.b16 %v313
  %v1342 = vunpack.c.l.b16 %v314
  %v1343 = vunpack.c.l.b16 %v315
  %v1344 = vunpack.c.l.b16 %v316
  %v1345 = vunpack.c.l.b16 %v317
  %v1346 = vunpack.c.l.b16 %v318
  %v1347 = vunpack.c.l.b16 %v319
  %v1348 = vunpack.c.l.b16 %v320
  %v1349 = vunpack.c.l.b16 %v321
  %v1350 = vunpack.c.l.b16 %v322
  %v1351 = vunpack.c.l.b16 %v323
  %v1352 = vunpack.c.l.b16 %v324
  %v1353 = vunpack.c.l.b16 %v325
  %v1354 = vunpack.c.l.b16 %v326
  %v1355 = vunpack.c.l.b16 %v327
  %v1356 = vunpack.c.l.b16 %v328
  %v1357 = vunpack.c.l.b16 %v329
  %v1358 = vunpack.c.l.b16 %v330
  %v1359 = vunpack.c.l.b16 %v331
  %v1360 = vunpack.c.l.b16 %v332
  %v1361 = vunpack.c.l.b16 %v333
  %v1362 = vunpack.c.l.b16 %v334
  %v1363 = vunpack.c.l.b16 %v335
  %v1364 = vunpack.c.l.b16 %v336
  %v1365 = vunpack.c.l.b16 %v337
  %v1366 = vunpack.c.l.b16 %v338
  %v1367 = vunpack.c.l.b16 %v339
  %v1368 = vunpack.c.l.b16 %v340
  %v1369 = vunpack.c.l.b16 %v341
  %v1370 = vunpack.c.l.b16 %v342
  %v1371 = vunpack.c.l.b16 %v343
  %v1372 = vunpack.c.l.b16 %v344
  %v1373 = vunpack.c.l.b16 %v345
  %v1374 = vunpack.c.l.b16 %v346
  %v1375 = vunpack.c.l.b16 %v347
  %v1376 = vunpack.c.l.b16 %v348
  %v1377 = vunpack.c.l.b16 %v349
  %v1378 = vunpack.c.l.b16 %v350
  %v1379 = vunpack.c.l.b16 %v351
  %v1380 = vunpack.c.l.b16 %v352
  %v1381 = vunpack.c.l.b16 %v353
  %v1382 = vunpack.c.l.b16 %v354
  %v1383 = vunpack.c.l.b16 %v355
  %v1384 = vunpack.c.l.b16 %v356
  %v1385 = vunpack.c.l.b16 %v357
  %v1386 = vunpack.c.l.b16 %v358
  %v1387 = vunpack.c.l.b16 %v359
  %v1388 = vunpack.c.l.b16 %v360
  %v1389 = vunpack.c.l.b16 %v361
  %v1390 = vunpack.c.l.b16 %v362
  %v1391 = vunpack.c.l.b16 %v363
  %v1392 = vunpack.c.l.b16 %v364
  %v1393 = vunpack.c.l.b16 %v365
  %v1394 = vunpack.c.l.b16 %v366
  %v1395 = vunpack.c.l.b16 %v367
  %v1396 = vunpack.c.l.b16 %v368
  %v1397 = vunpack.c.l.b16 %v369
  %v1398 = vunpack.c.l.b16 %v370
  %v1399 = vunpack.c.l.b16 %v371
  %v1400 = vunpack.c.l.b16 %v372
  %v1401 = vunpack.c.l.b16 %v373
  %v1402 = vunpack.c.l.b16 %v374
  %v1403 = vunpack.c.l.b16 %v375
  %v1404 = vunpack.c.l.b16 %v376
  %v1405 = vunpack.c.l.b16 %v377
  %v1406 = vunpack.c.l.b16 %v378
  %v1407 = vunpack.c.l.b16 %v379
  %v1408 = vunpack.c.l.b16 %v380
  %v1409 = vunpack.c.l.b16 %v381
  %v1410 = vunpack.c.l.b16 %v382
  %v1411 = vunpack.c.l.b16 %v383
  %v1412 = vunpack.c.l.b16 %v384
  %v1413 = vunpack.c.l.b16 %v385
  %v1414 = vunpack.c.l.b16 %v386
  %v1415 = vunpack.c.l.b16 %v387
  %v1416 = vunpack.c.l.b16 %v388
  %v1417 = vunpack.c.l.b16 %v389
  %v1418 = vunpack.c.l.b16 %v390
  %v1419 = vunpack.c.l.b16 %v391
  %v1420 = vunpack.c.l.b16 %v392
  %v1421 = vunpack.c.l.b16 %v393
  %v1422 = vunpack.c.l.b16 %v394
  %v1423 = vunpack.c.l.b16 %v395
  %v1424 = vunpack.c.l.b16 %v396
  %v1425 = vunpack.c.l.b16 %v397
  %v1426 = vunpack.c.l.b16 %v398
  %v1427 = vunpack.c.l.b16 %v399
  %v1428 = vunpack.c.l.b16 %v400
  %v1429 = vunpack.c.l.b16 %v401
  %v1430 = vunpack.c.l.b16 %v402
  %v1431 = vunpack.c.l.b16 %v403
  %v1432 = vunpack.c.l.b16 %v404
  %v1433 = vunpack.c.l.b16 %v405
  %v1434 = vunpack.c.l.b16 %v406
  %v1435 = vunpack.c.l.b16 %v407
  %v1436 = vunpack.c.l.b16 %v408
  %v1437 = vunpack.c.l.b16 %v409
  %v1438 = vunpack.c.l.b16 %v410
  %v1439 = vunpack.c.l.b16 %v411
  %v1440 = vunpack.c.l.b16 %v412
  %v1441 = vunpack.c.l.b16 %v413
  %v1442 = vunpack.c.l.b16 %v414
  %v1443 = vunpack.c.l.b16 %v415
  %v1444 = vunpack.c.l.b16 %v416
  %v1445 = vunpack.c.l.b16 %v417
  %v1446 = vunpack.c.l.b16 %v418
  %v1447 = vunpack.c.l.b16 %v419
  %v1448 = vunpack.c.l.b16 %v420
  %v1449 = vunpack.c.l.b16 %v421
  %v1450 = vunpack.c.l.b16 %v422
  %v1451 = vunpack.c.l.b16 %v423
  %v1452 = vunpack.c.l.b16 %v424
  %v1453 = vunpack.c.l.b16 %v425
  %v1454 = vunpack.c.l.b16 %v426
  %v1455 = vunpack.c.l.b16 %v427
  %v1456 = vunpack.c.l.b16 %v428
  %v1457 = vunpack.c.l.b16 %v429
  %v1458 = vunpack.c.l.b16 %v430
  %v1459 = vunpack.c.l.b16 %v431
  %v1460 = vunpack.c.l.b16 %v432
  %v1461 = vunpack.c.l.b16 %v433
  %v1462 = vunpack.c.l.b16 %v434
  %v1463 = vunpack.c.l.b16 %v435
  %v1464 = vunpack.c.l.b16 %v436
  %v1465 = vunpack.c.l.b16 %v437
  %v1466 = vunpack.c.l.b16 %v438
  %v1467 = vunpack.c.l.b16 %v439
  %v1468 = vunpack.c.l.b16 %v440
  %v1469 = vunpack.c.l.b16 %v441
  %v1470 = vunpack.c.l.b16 %v442
  %v1471 = vunpack.c.l.b16 %v443
  %v1472 = vunpack.c.l.b16 %v444
  %v1473 = vunpack.c.l.b16 %v445
  %v1474 = vunpack.c.l.b16 %v446
  %v1475 = vunpack.c.l.b16 %v447
  %v1476 = vunpack.c.l.b16 %v448
  %v1477 = vunpack.c.l.b16 %v449
  %v1478 = vunpack.c.l.b16 %v450
  %v1479 = vunpack.c.l.b16 %v451
  %v1480 = vunpack.c.l.b16 %v452
  %v1481 = vunpack.c.l.b16 %v453
  %v1482 = vunpack.c.l.b16 %v454
  %v1483 = vunpack.c.l.b16 %v455
  %v1484 = vunpack.c.l.b16 %v456
  %v1485 = vunpack.c.l.b16 %v457
  %v1486 = vunpack.c.l.b16 %v458
  %v1487 = vunpack.c.l.b16 %v459
  %v1488 = vunpack.c.l.b16 %v460
  %v1489 = vunpack.c.l.b16 %v461
  %v1490 = vunpack.c.l.b16 %v462
  %v1491 = vunpack.c.l.b16 %v463
  %v1492 = vunpack.c.l.b16 %v464
  %v1493 = vunpack.c.l.b16 %v465
  %v1494 = vunpack.c.l.b16 %v466
  %v1495 = vunpack.c.l.b16 %v467
  %v1496 = vunpack.c.l.b16 %v468
  %v1497 = vunpack.c.l.b16 %v469
  %v1498 = vunpack.c.l.b16 %v470
  %v1499 = vunpack.c.l.b16 %v471
  %v1500 = vunpack.c.l.b16 %v472
  %v1501 = vunpack.c.l.b16 %v473
  %v1502 = vunpack.c.l.b16 %v474
  %v1503 = vunpack.c.l.b16 %v475
  %v1504 = vunpack.c.l.b16 %v476
  %v1505 = vunpack.c.l.b16 %v477
  %v1506 = vunpack.c.l.b16 %v478
  %v1507 = vunpack.c.l.b16 %v479
  %v1508 = vunpack.c.l.b16 %v480
  %v1509 = vunpack.c.l.b16 %v481
  %v1510 = vunpack.c.l.b16 %v482
  %v1511 = vunpack.c.l.b16 %v483
  %v1512 = vunpack.c.l.b16 %v484
  %v1513 = vunpack.c.l.b16 %v485
  %v1514 = vunpack.c.l.b16 %v486
  %v1515 = vunpack.c.l.b16 %v487
  %v1516 = vunpack.c.l.b16 %v488
  %v1517 = vunpack.c.l.b16 %v489
  %v1518 = vunpack.c.l.b16 %v490
  %v1519 = vunpack.c.l.b16 %v491
  %v1520 = vunpack.c.l.b16 %v492
  %v1521 = vunpack.c.l.b16 %v493
  %v1522 = vunpack.c.l.b16 %v494
  %v1523 = vunpack.c.l.b16 %v495
  %v1524 = vunpack.c.l.b16 %v496
  %v1525 = vunpack.c.l.b16 %v497
  %v1526 = vunpack.c.l.b16 %v498
  %v1527 = vunpack.c.l.b16 %v499
  %v1528 = vunpack.c.l.b16 %v500
  %v1529 = vunpack.c.l.b16 %v501
  %v1530 = vunpack.c.l.b16 %v502
  %v1531 = vunpack.c.l.b16 %v503
  %v1532 = vunpack.c.l.b16 %v504
  %v1533 = vunpack.c.l.b16 %v505
  %v1534 = vunpack.c.l.b16 %v506
  %v1535 = vunpack.c.l.b16 %v507
  %v1536 = vunpack.c.l.b16 %v508
  %v1537 = vunpack.c.l.b16 %v509
  %v1538 = vunpack.c.l.b16 %v510
  %v1539 = vunpack.c.l.b16 %v511
  %v1540 = vunpack.c.l.b16 %v512
  %v1541 = vunpack.c.l.b16 %v513
  %v1542 = vunpack.c.l.b16 %v514
  %v1543 = vunpack.c.l.b16 %v515
  %v1544 = vunpack.c.l.b16 %v516
  %v1545 = vunpack.c.l.b16 %v517
  %v1546 = vunpack.c.l.b16 %v518
  %v1547 = vunpack.c.l.b16 %v519
  %v1548 = vunpack.c.l.b16 %v520
  %v1549 = vunpack.c.l.b16 %v521
  %v1550 = vunpack.c.l.b16 %v522
  %v1551 = vunpack.c.l.b16 %v523
  %v1552 = vunpack.c.l.b16 %v524
  %v1553 = vunpack.c.l.b16 %v525
  %v1554 = vunpack.c.l.b16 %v526
  %v1555 = vunpack.c.l.b16 %v527
  %v1556 = vunpack.c.l.b16 %v528
  %v1557 = vunpack.c.l.b16 %v529
  %v1558 = vunpack.c.l.b16 %v530
  %v1559 = vunpack.c.l.b16 %v531
  %v1560 = vunpack.c.l.b16 %v532
  %v1561 = vunpack.c.l.b16 %v533
  %v1562 = vunpack.c.l.b16 %v534
  %v1563 = vunpack.c.l.b16 %v535
  %v1564 = vunpack.c.l.b16 %v536
  %v1565 = vunpack.c.l.b16 %v537
  %v1566 = vunpack.c.l.b16 %v538
  %v1567 = vunpack.c.l.b16 %v539
  %v1568 = vunpack.c.l.b16 %v540
  %v1569 = vunpack.c.l.b16 %v541
  %v1570 = vunpack.c.l.b16 %v542
  %v1571 = vunpack.c.l.b16 %v543
  %v1572 = vunpack.c.l.b16 %v544
  %v1573 = vunpack.c.l.b16 %v545
  %v1574 = vunpack.c.l.b16 %v546
  %v1575 = vunpack.c.l.b16 %v547
  %v1576 = vunpack.c.l.b16 %v548
  %v1577 = vunpack.c.l.b16 %v549
  %v1578 = vunpack.c.l.b16 %v550
  %v1579 = vunpack.c.l.b16 %v551
  %v1580 = vunpack.c.l.b16 %v552
  %v1581 = vunpack.c.l.b16 %v553
  %v1582 = vunpack.c.l.b16 %v554
  %v1583 = vunpack.c.l.b16 %v555
  %v1584 = vunpack.c.l.b16 %v556
  %v1585 = vunpack.c.l.b16 %v557
  %v1586 = vunpack.c.l.b16 %v558
  %v1587 = vunpack.c.l.b16 %v559
  %v1588 = vunpack.c.l.b16 %v560
  %v1589 = vunpack.c.l.b16 %v561
  %v1590 = vunpack.c.l.b16 %v562
  %v1591 = vunpack.c.l.b16 %v563
  %v1592 = vunpack.c.l.b16 %v564
  %v1593 = vunpack.c.l.b16 %v565
  %v1594 = vunpack.c.l.b16 %v566
  %v1595 = vunpack.c.l.b16 %v567
  %v1596 = vunpack.c.l.b16 %v568
  %v1597 = vunpack.c.l.b16 %v569
  %v1598 = vunpack.c.l.b16 %v570
  %v1599 = vunpack.c.l.b16 %v571
  %v1600 = vunpack.c.l.b16 %v572
  %v1601 = vunpack.c.l.b16 %v573
  %v1602 = vunpack.c.l.b16 %v574
  %v1603 = vunpack.c.l.b16 %v575
  %v1604 = vunpack.c.l.b16 %v576
  %v1605 = vunpack.c.l.b16 %v577
  %v1606 = vunpack.c.l.b16 %v578
  %v1607 = vunpack.c.l.b16 %v579
  %v1608 = vunpack.c.l.b16 %v580
  %v1609 = vunpack.c.l.b16 %v581
  %v1610 = vunpack.c.l.b16 %v582
  %v1611 = vunpack.c.l.b16 %v583
  %v1612 = vunpack.c.l.b16 %v584
  %v1613 = vunpack.c.l.b16 %v585
  %v1614 = vunpack.c.l.b16 %v586
  %v1615 = vunpack.c.l.b16 %v587
  %v1616 = vunpack.c.l.b16 %v588
  %v1617 = vunpack.c.l.b16 %v589
  %v1618 = vunpack.c.l.b16 %v590
  %v1619 = vunpack.c.l.b16 %v591
  %v1620 = vunpack.c.l.b16 %v592
  %v1621 = vunpack.c.l.b16 %v593
  %v1622 = vunpack.c.l.b16 %v594
  %v1623 = vunpack.c.l.b16 %v595
  %v1624 = vunpack.c.l.b16 %v596
  %v1625 = vunpack.c.l.b16 %v597
  %v1626 = vunpack.c.l.b16 %v598
  %v1627 = vunpack.c.l.b16 %v599
  %v1628 = vunpack.c.l.b16 %v600
  %v1629 = vunpack.c.l.b16 %v601
  %v1630 = vunpack.c.l.b16 %v602
  %v1631 = vunpack.c.l.b16 %v603
  %v1632 = vunpack.c.l.b16 %v604
  %v1633 = vunpack.c.l.b16 %v605
  %v1634 = vunpack.c.l.b16 %v606
  %v1635 = vunpack.c.l.b16 %v607
  %v1636 = vunpack.c.l.b16 %v608
  %v1637 = vunpack.c.l.b16 %v609
  %v1638 = vunpack.c.l.b16 %v610
  %v1639 = vunpack.c.l.b16 %v611
  %v1640 = vunpack.c.l.b16 %v612
  %v1641 = vunpack.c.l.b16 %v613
  %v1642 = vunpack.c.l.b16 %v614
  %v1643 = vunpack.c.l.b16 %v615
  %v1644 = vunpack.c.l.b16 %v616
  %v1645 = vunpack.c.l.b16 %v617
  %v1646 = vunpack.c.l.b16 %v618
  %v1647 = vunpack.c.l.b16 %v619
  %v1648 = vunpack.c.l.b16 %v620
  %v1649 = vunpack.c.l.b16 %v621
  %v1650 = vunpack.c.l.b16 %v622
  %v1651 = vunpack.c.l.b16 %v623
  %v1652 = vunpack.c.l.b16 %v624
  %v1653 = vunpack.c.l.b16 %v625
  %v1654 = vunpack.c.l.b16 %v626
  %v1655 = vunpack.c.l.b16 %v627
  %v1656 = vunpack.c.l.b16 %v628
  %v1657 = vunpack.c.l.b16 %v629
  %v1658 = vunpack.c.l.b16 %v630
  %v1659 = vunpack.c.l.b16 %v631
  %v1660 = vunpack.c.l.b16 %v632
  %v1661 = vunpack.c.l.b16 %v633
  %v1662 = vunpack.c.l.b16 %v634
  %v1663 = vunpack.c.l.b16 %v635
  %v1664 = vunpack.c.l.b16 %v636
  %v1665 = vunpack.c.l.b16 %v637
  %v1666 = vunpack.c.l.b16 %v638
  %v1667 = vunpack.c.l.b16 %v639
  %v1668 = vunpack.c.l.b16 %v640
  %v1669 = vunpack.c.l.b16 %v641
  %v1670 = vunpack.c.l.b16 %v642
  %v1671 = vunpack.c.l.b16 %v643
  %v1672 = vunpack.c.l.b16 %v644
  %v1673 = vunpack.c.l.b16 %v645
  %v1674 = vunpack.c.l.b16 %v646
  %v1675 = vunpack.c.l.b16 %v647
  %v1676 = vunpack.c.l.b16 %v648
  %v1677 = vunpack.c.l.b16 %v649
  %v1678 = vunpack.c.l.b16 %v650
  %v1679 = vunpack.c.l.b16 %v651
  %v1680 = vunpack.c.l.b16 %v652
  %v1681 = vunpack.c.l.b16 %v653
  %v1682 = vunpack.c.l.b16 %v654
  %v1683 = vunpack.c.l.b16 %v655
  %v1684 = vunpack.c.l.b16 %v656
  %v1685 = vunpack.c.l.b16 %v657
  %v1686 = vunpack.c.l.b16 %v658
  %v1687 = vunpack.c.l.b16 %v659
  %v1688 = vunpack.c.l.b16 %v660
  %v1689 = vunpack.c.l.b16 %v661
  %v1690 = vunpack.c.l.b16 %v662
  %v1691 = vunpack.c.l.b16 %v663
  %v1692 = vunpack.c.l.b16 %v664
  %v1693 = vunpack.c.l.b16 %v665
  %v1694 = vunpack.c.l.b16 %v666
  %v1695 = vunpack.c.l.b16 %v667
  %v1696 = vunpack.c.l.b16 %v668
  %v1697 = vunpack.c.l.b16 %v669
  %v1698 = vpack.c.b16 %v1187, %v1186
  %v1699 = vpack.c.b16 %v1189, %v1188
  %v1700 = vpack.c.b16 %v1191, %v1190
  %v1701 = vpack.c.b16 %v1193, %v1192
  %v1702 = vpack.c.b16 %v1195, %v1194
  %v1703 = vpack.c.b16 %v1197, %v1196
  %v1704 = vpack.c.b16 %v1199, %v1198
  %v1705 = vpack.c.b16 %v1201, %v1200
  %v1706 = vpack.c.b16 %v1203, %v1202
  %v1707 = vpack.c.b16 %v1205, %v1204
  %v1708 = vpack.c.b16 %v1207, %v1206
  %v1709 = vpack.c.b16 %v1209, %v1208
  %v1710 = vpack.c.b16 %v1211, %v1210
  %v1711 = vpack.c.b16 %v1213, %v1212
  %v1712 = vpack.c.b16 %v1215, %v1214
  %v1713 = vpack.c.b16 %v1217, %v1216
  %v1714 = vpack.c.b16 %v1219, %v1218
  %v1715 = vpack.c.b16 %v1221, %v1220
  %v1716 = vpack.c.b16 %v1223, %v1222
  %v1717 = vpack.c.b16 %v1225, %v1224
  %v1718 = vpack.c.b16 %v1227, %v1226
  %v1719 = vpack.c.b16 %v1229, %v1228
  %v1720 = vpack.c.b16 %v1231, %v1230
  %v1721 = vpack.c.b16 %v1233, %v1232
  %v1722 = vpack.c.b16 %v1235, %v1234
  %v1723 = vpack.c.b16 %v1237, %v1236
  %v1724 = vpack.c.b16 %v1239, %v1238
  %v1725 = vpack.c.b16 %v1241, %v1240
  %v1726 = vpack.c.b16 %v1243, %v1242
  %v1727 = vpack.c.b16 %v1245, %v1244
  %v1728 = vpack.c.b16 %v1247, %v1246
  %v1729 = vpack.c.b16 %v1249, %v1248
  %v1730 = vpack.c.b16 %v1251, %v1250
  %v1731 = vpack.c.b16 %v1253, %v1252
  %v1732 = vpack.c.b16 %v1255, %v1254
  %v1733 = vpack.c.b16 %v1257, %v1256
  %v1734 = vpack.c.b16 %v1259, %v1258
  %v1735 = vpack.c.b16 %v1261, %v1260
  %v1736 = vpack.c.b16 %v1263, %v1262
  %v1737 = vpack.c.b16 %v1265, %v1264
  %v1738 = vpack.c.b16 %v1267, %v1266
  %v1739 = vpack.c.b16 %v1269, %v1268
  %v1740 = vpack.c.b16 %v1271, %v1270
  %v1741 = vpack.c.b16 %v1273, %v1272
  %v1742 = vpack.c.b16 %v1275, %v1274
  %v1743 = vpack.c.b16 %v1277, %v1276
  %v1744 = vpack.c.b16 %v1279, %v1278
  %v1745 = vpack.c.b16 %v1281, %v1280
  %v1746 = vpack.c.b16 %v1283, %v1282
  %v1747 = vpack.c.b16 %v1285, %v1284
  %v1748 = vpack.c.b16 %v1287, %v1286
  %v1749 = vpack.c.b16 %v1289, %v1288
  %v1750 = vpack.c.b16 %v1291, %v1290
  %v1751 = vpack.c.b16 %v1293, %v1292
  %v1752 = vpack.c.b16 %v1295, %v1294
  %v1753 = vpack.c.b16 %v1297, %v1296
  %v1754 = vpack.c.b16 %v1299, %v1298
  %v1755 = vpack.c.b16 %v1301, %v1300
  %v1756 = vpack.c.b16 %v1303, %v1302
  %v1757 = vpack.c.b16 %v1305, %v1304
  %v1758 = vpack.c.b16 %v1307, %v1306
  %v1759 = vpack.c.b16 %v1309, %v1308
  %v1760 = vpack.c.b16 %v1311, %v1310
  %v1761 = vpack.c.b16 %v1313, %v1312
  %v1762 = vpack.c.b16 %v1315, %v1314
  %v1763 = vpack.c.b16 %v1317, %v1316
  %v1764 = vpack.c.b16 %v1319, %v1318
  %v1765 = vpack.c.b16 %v1321, %v1320
  %v1766 = vpack.c.b16 %v1323, %v1322
  %v1767 = vpack.c.b16 %v1325, %v1324
  %v1768 = vpack.c.b16 %v1327, %v1326
  %v1769 = vpack.c.b16 %v1329, %v1328
  %v1770 = vpack.c.b16 %v1331, %v1330
  %v1771 = vpack.c.b16 %v1333, %v1332
  %v1772 = vpack.c.b16 %v1335, %v1334
  %v1773 = vpack.c.b16 %v1337, %v1336
  %v1774 = vpack.c.b16 %v1339, %v1338
  %v1775 = vpack.c.b16 %v1341, %v1340
  %v1776 = vpack.c.b16 %v1343, %v1342
  %v1777 = vpack.c.b16 %v1345, %v1344
  %v1778 = vpack.c.b16 %v1347, %v1346
  %v1779 = vpack.c.b16 %v1349, %v1348
  %v1780 = vpack.c.b16 %v1351, %v1350
  %v1781 = vpack.c.b16 %v1353, %v1352
  %v1782 = vpack.c.b16 %v1355, %v1354
  %v1783 = vpack.c.b16 %v1357, %v1356
  %v1784 = vpack.c.b16 %v1359, %v1358
  %v1785 = vpack.c.b16 %v1361, %v1360
  %v1786 = vpack.c.b16 %v1363, %v1362
  %v1787 = vpack.c.b16 %v1365, %v1364
  %v1788 = vpack.c.b16 %v1367, %v1366
  %v1789 = vpack.c.b16 %v1369, %v1368
  %v1790 = vpack.c.b16 %v1371, %v1370
  %v1791 = vpack.c.b16 %v1373, %v1372
  %v1792 = vpack.c.b16 %v1375, %v1374
  %v1793 = vpack.c.b16 %v1377, %v1376
  %v1794 = vpack.c.b16 %v1379, %v1378
  %v1795 = vpack.c.b16 %v1381, %v1380
  %v1796 = vpack.c.b16 %v1383, %v1382
  %v1797 = vpack.c.b16 %v1385, %v1384
  %v1798 = vpack.c.b16 %v1387, %v1386
  %v1799 = vpack.c.b16 %v1389, %v1388
  %v1800 = vpack.c.b16 %v1391, %v1390
  %v1801 = vpack.c.b16 %v1393, %v1392
  %v1802 = vpack.c.b16 %v1395, %v1394
  %v1803 = vpack.c.b16 %v1397, %v1396
  %v1804 = vpack.c.b16 %v1399, %v1398
  %v1805 = vpack.c.b16 %v1401, %v1400
  %v1806 = vpack.c.b16 %v1403, %v1402
  %v1807 = vpack.c.b16 %v1405, %v1404
  %v1808 = vpack.c.b16 %v1407, %v1406
  %v1809 = vpack.c.b16 %v1409, %v1408
  %v1810 = vpack.c.b16 %v1411, %v1410
  %v1811 = vpack.c.b16 %v1413, %v1412
  %v1812 = vpack.c.b16 %v1415, %v1414
  %v1813 = vpack.c.b16 %v1417, %v1416
  %v1814 = vpack.c.b16 %v1419, %v1418
  %v1815 = vpack.c.b16 %v1421, %v1420
  %v1816 = vpack.c.b16 %v1423, %v1422
  %v1817 = vpack.c.b16 %v1425, %v1424
  %v1818 = vpack.c.b16 %v1427, %v1426
  %v1819 = vpack.c.b16 %v1429, %v1428
  %v1820 = vpack.c.b16 %v1431, %v1430
  %v1821 = vpack.c.b16 %v1433, %v1432
  %v1822 = vpack.c.b16 %v1435, %v1434
  %v1823 = vpack.c.b16 %v1437, %v1436
  %v1824 = vpack.c.b16 %v1439, %v1438
  %v1825 = vpack.c.b16 %v1441, %v1440
  %v1826 = vpack.c.b16 %v1443, %v1442
  %v1827 = vpack.c.b16 %v1445, %v1444
  %v1828 = vpack.c.b16 %v1447, %v1446
  %v1829 = vpack.c.b16 %v1449, %v1448
  %v1830 = vpack.c.b16 %v1451, %v1450
  %v1831 = vpack.c.b16 %v1453, %v1452
  %v1832 = vpack.c.b16 %v1455, %v1454
  %v1833 = vpack.c.b16 %v1457, %v1456
  %v1834 = vpack.c.b16 %v1459, %v1458
  %v1835 = vpack.c.b16 %v1461, %v1460
  %v1836 = vpack.c.b16 %v1463, %v1462
  %v1837 = vpack.c.b16 %v1465, %v1464
  %v1838 = vpack.c.b16 %v1467, %v1466
  %v1839 = vpack.c.b16 %v1469, %v1468
  %v1840 = vpack.c.b16 %v1471, %v1470
  %v1841 = vpack.c.b16 %v1473, %v1472
  %v1842 = vpack.c.b16 %v1475, %v1474
  %v1843 = vpack.c.b16 %v1477, %v1476
  %v1844 = vpack.c.b16 %v1479, %v1478
  %v1845 = vpack.c.b16 %v1481, %v1480
  %v1846 = vpack.c.b16 %v1483, %v1482
  %v1847 = vpack.c.b16 %v1485, %v1484
  %v1848 = vpack.c.b16 %v1487, %v1486
  %v1849 = vpack.c.b16 %v1489, %v1488
  %v1850 = vpack.c.b16 %v1491, %v1490
  %v1851 = vpack.c.b16 %v1493, %v1492
  %v1852 = vpack.c.b16 %v1495, %v1494
  %v1853 = vpack.c.b16 %v1497, %v1496
  %v1854 = vpack.c.b16 %v1499, %v1498
  %v1855 = vpack.c.b16 %v1501, %v1500
  %v1856 = vpack.c.b16 %v1503, %v1502
  %v1857 = vpack.c.b16 %v1505, %v1504
  %v1858 = vpack.c.b16 %v1507, %v1506
  %v1859 = vpack.c.b16 %v1509, %v1508
  %v1860 = vpack.c.b16 %v1511, %v1510
  %v1861 = vpack.c.b16 %v1513, %v1512
  %v1862 = vpack.c.b16 %v1515, %v1514
  %v1863 = vpack.c.b16 %v1517, %v1516
  %v1864 = vpack.c.b16 %v1519, %v1518
  %v1865 = vpack.c.b16 %v1521, %v1520
  %v1866 = vpack.c.b16 %v1523, %v1522
  %v1867 = vpack.c.b16 %v1525, %v1524
  %v1868 = vpack.c.b16 %v1527, %v1526
  %v1869 = vpack.c.b16 %v1529, %v1528
  %v1870 = vpack.c.b16 %v1531, %v1530
  %v1871 = vpack.c.b16 %v1533, %v1532
  %v1872 = vpack.c.b16 %v1535, %v1534
  %v1873 = vpack.c.b16 %v1537, %v1536
  %v1874 = vpack.c.b16 %v1539, %v1538
  %v1875 = vpack.c.b16 %v1541, %v1540
  %v1876 = vpack.c.b16 %v1543, %v1542
  %v1877 = vpack.c.b16 %v1545, %v1544
  %v1878 = vpack.c.b16 %v1547, %v1546
  %v1879 = vpack.c.b16 %v1549, %v1548
  %v1880 = vpack.c.b16 %v1551, %v1550
  %v1881 = vpack.c.b16 %v1553, %v1552
  %v1882 = vpack.c.b16 %v1555, %v1554
  %v1883 = vpack.c.b16 %v1557, %v1556
  %v1884 = vpack.c.b16 %v1559, %v1558
  %v1885 = vpack.c.b16 %v1561, %v1560
  %v1886 = vpack.c.b16 %v1563, %v1562
  %v1887 = vpack.c.b16 %v1565, %v1564
  %v1888 = vpack.c.b16 %v1567, %v1566
  %v1889 = vpack.c.b16 %v1569, %v1568
  %v1890 = vpack.c.b16 %v1571, %v1570
  %v1891 = vpack.c.b16 %v1573, %v1572
  %v1892 = vpack.c.b16 %v1575, %v1574
  %v1893 = vpack.c.b16 %v1577, %v1576
  %v1894 = vpack.c.b16 %v1579, %v1578
  %v1895 = vpack.c.b16 %v1581, %v1580
  %v1896 = vpack.c.b16 %v1583, %v1582
  %v1897 = vpack.c.b16 %v1585, %v1584
  %v1898 = vpack.c.b16 %v1587, %v1586
  %v1899 = vpack.c.b16 %v1589, %v1588
  %v1900 = vpack.c.b16 %v1591, %v1590
  %v1901 = vpack.c.b16 %v1593, %v1592
  %v1902 = vpack.c.b16 %v1595, %v1594
  %v1903 = vpack.c.b16 %v1597, %v1596
  %v1904 = vpack.c.b16 %v1599, %v1598
  %v1905 = vpack.c.b16 %v1601, %v1600
  %v1906 = vpack.c.b16 %v1603, %v1602
  %v1907 = vpack.c.b16 %v1605, %v1604
  %v1908 = vpack.c.b16 %v1607, %v1606
  %v1909 = vpack.c.b16 %v1609, %v1608
  %v1910 = vpack.c.b16 %v1611, %v1610
  %v1911 = vpack.c.b16 %v1613, %v1612
  %v1912 = vpack.c.b16 %v1615, %v1614
  %v1913 = vpack.c.b16 %v1617, %v1616
  %v1914 = vpack.c.b16 %v1619, %v1618
  %v1915 = vpack.c.b16 %v1621, %v1620
  %v1916 = vpack.c.b16 %v1623, %v1622
  %v1917 = vpack.c.b16 %v1625, %v1624
  %v1918 = vpack.c.b16 %v1627, %v1626
  %v1919 = vpack.c.b16 %v1629, %v1628
  %v1920 = vpack.c.b16 %v1631, %v1630
  %v1921 = vpack.c.b16 %v1633, %v1632
  %v1922 = vpack.c.b16 %v1635, %v1634
  %v1923 = vpack.c.b16 %v1637, %v1636
  %v1924 = vpack.c.b16 %v1639, %v1638
  %v1925 = vpack.c.b16 %v1641, %v1640
  %v1926 = vpack.c.b16 %v1643, %v1642
  %v1927 = vpack.c.b16 %v1645, %v1644
  %v1928 = vpack.c.b16 %v1647, %v1646
  %v1929 = vpack.c.b16 %v1649, %v1648
  %v1930 = vpack.c.b16 %v1651, %v1650
  %v1931 = vpack.c.b16 %v1653, %v1652
  %v1932 = vpack.c.b16 %v1655, %v1654
  %v1933 = vpack.c.b16 %v1657, %v1656
  %v1934 = vpack.c.b16 %v1659, %v1658
  %v1935 = vpack.c.b16 %v1661, %v1660
  %v1936 = vpack.c.b16 %v1663, %v1662
  %v1937 = vpack.c.b16 %v1665, %v1664
  %v1938 = vpack.c.b16 %v1667, %v1666
  %v1939 = vpack.c.b16 %v1669, %v1668
  %v1940 = vpack.c.b16 %v1671, %v1670
  %v1941 = vpack.c.b16 %v1673, %v1672
  %v1942 = vpack.c.b16 %v1675, %v1674
  %v1943 = vpack.c.b16 %v1677, %v1676
  %v1944 = vpack.c.b16 %v1679, %v1678
  %v1945 = vpack.c.b16 %v1681, %v1680
  %v1946 = vpack.c.b16 %v1683, %v1682
  %v1947 = vpack.c.b16 %v1685, %v1684
  %v1948 = vpack.c.b16 %v1687, %v1686
  %v1949 = vpack.c.b16 %v1689, %v1688
  %v1950 = vpack.c.b16 %v1691, %v1690
  %v1951 = vpack.c.b16 %v1693, %v1692
  %v1952 = vpack.c.b16 %v1695, %v1694
  %v1953 = vpack.c.b16 %v1697, %v1696
  %2210 = vmatpush.bf16.msra.mxu0 %v1705
  %2211 = vmatpush.bf16.msra.mxu0 %v1704
  %2212 = vmatpush.bf16.msra.mxu0 %v1703
  %2213 = vmatpush.bf16.msra.mxu0 %v1702
  %2214 = vmatpush.bf16.msra.mxu0 %v1701
  %2215 = vmatpush.bf16.msra.mxu0 %v1700
  %2216 = vmatpush.bf16.msra.mxu0 %v1699
  %2217 = vmatpush.bf16.msra.mxu0 %v1698
  %2218 = vmatmul.bf16.gmra.mxu0 %v126
  %v2219 = vpop.f32.mrf.mxu0
  %v2220 = vadd.f32 %v672, %v2219
  %v2221 = vpop.f32.mrf.mxu0
  %2222 = vdwg.mxu0
  %2223 = vmatpush.bf16.msra.mxu0 %v1713
  %2224 = vmatpush.bf16.msra.mxu0 %v1712
  %2225 = vmatpush.bf16.msra.mxu0 %v1711
  %2226 = vmatpush.bf16.msra.mxu0 %v1710
  %2227 = vmatpush.bf16.msra.mxu0 %v1709
  %2228 = vmatpush.bf16.msra.mxu0 %v1708
  %2229 = vmatpush.bf16.msra.mxu0 %v1707
  %2230 = vmatpush.bf16.msra.mxu0 %v1706
  %2231 = vmatmul.bf16.gmra.mxu0 %v127
  %v2232 = vpop.f32.mrf.mxu0
  %v2233 = vadd.f32 %v2220, %v2232
  %v2234 = vpop.f32.mrf.mxu0
  %2235 = vdwg.mxu0
  %2236 = vmatpush.bf16.msra.mxu0 %v1721
  %2237 = vmatpush.bf16.msra.mxu0 %v1720
  %2238 = vmatpush.bf16.msra.mxu0 %v1719
  %2239 = vmatpush.bf16.msra.mxu0 %v1718
  %2240 = vmatpush.bf16.msra.mxu0 %v1717
  %2241 = vmatpush.bf16.msra.mxu0 %v1716
  %2242 = vmatpush.bf16.msra.mxu0 %v1715
  %2243 = vmatpush.bf16.msra.mxu0 %v1714
  %2244 = vmatmul.bf16.gmra.mxu0 %v128
  %v2245 = vpop.f32.mrf.mxu0
  %v2246 = vadd.f32 %v2233, %v2245
  %v2247 = vpop.f32.mrf.mxu0
  %2248 = vdwg.mxu0
  %2249 = vmatpush.bf16.msra.mxu0 %v1729
  %2250 = vmatpush.bf16.msra.mxu0 %v1728
  %2251 = vmatpush.bf16.msra.mxu0 %v1727
  %2252 = vmatpush.bf16.msra.mxu0 %v1726
  %2253 = vmatpush.bf16.msra.mxu0 %v1725
  %2254 = vmatpush.bf16.msra.mxu0 %v1724
  %2255 = vmatpush.bf16.msra.mxu0 %v1723
  %2256 = vmatpush.bf16.msra.mxu0 %v1722
  %2257 = vmatmul.bf16.gmra.mxu0 %v129
  %v2258 = vpop.f32.mrf.mxu0
  %v2259 = vadd.f32 %v2246, %v2258
  %v2260 = vpop.f32.mrf.mxu0
  %2261 = vdwg.mxu0
  %2262 = vmatpush.bf16.msra.mxu0 %v1737
  %2263 = vmatpush.bf16.msra.mxu0 %v1736
  %2264 = vmatpush.bf16.msra.mxu0 %v1735
  %2265 = vmatpush.bf16.msra.mxu0 %v1734
  %2266 = vmatpush.bf16.msra.mxu0 %v1733
  %2267 = vmatpush.bf16.msra.mxu0 %v1732
  %2268 = vmatpush.bf16.msra.mxu0 %v1731
  %2269 = vmatpush.bf16.msra.mxu0 %v1730
  %2270 = vmatmul.bf16.gmra.mxu0 %v130
  %v2271 = vpop.f32.mrf.mxu0
  %v2272 = vadd.f32 %v2259, %v2271
  %v2273 = vpop.f32.mrf.mxu0
  %2274 = vdwg.mxu0
  %2275 = vmatpush.bf16.msra.mxu0 %v1745
  %2276 = vmatpush.bf16.msra.mxu0 %v1744
  %2277 = vmatpush.bf16.msra.mxu0 %v1743
  %2278 = vmatpush.bf16.msra.mxu0 %v1742
  %2279 = vmatpush.bf16.msra.mxu0 %v1741
  %2280 = vmatpush.bf16.msra.mxu0 %v1740
  %2281 = vmatpush.bf16.msra.mxu0 %v1739
  %2282 = vmatpush.bf16.msra.mxu0 %v1738
  %2283 = vmatmul.bf16.gmra.mxu0 %v131
  %v2284 = vpop.f32.mrf.mxu0
  %v2285 = vadd.f32 %v2272, %v2284
  %v2286 = vpop.f32.mrf.mxu0
  %2287 = vdwg.mxu0
  %2288 = vmatpush.bf16.msra.mxu0 %v1753
  %2289 = vmatpush.bf16.msra.mxu0 %v1752
  %2290 = vmatpush.bf16.msra.mxu0 %v1751
  %2291 = vmatpush.bf16.msra.mxu0 %v1750
  %2292 = vmatpush.bf16.msra.mxu0 %v1749
  %2293 = vmatpush.bf16.msra.mxu0 %v1748
  %2294 = vmatpush.bf16.msra.mxu0 %v1747
  %2295 = vmatpush.bf16.msra.mxu0 %v1746
  %2296 = vmatmul.bf16.gmra.mxu0 %v132
  %v2297 = vpop.f32.mrf.mxu0
  %v2298 = vadd.f32 %v2285, %v2297
  %v2299 = vpop.f32.mrf.mxu0
  %2300 = vdwg.mxu0
  %2301 = vmatpush.bf16.msra.mxu0 %v1761
  %2302 = vmatpush.bf16.msra.mxu0 %v1760
  %2303 = vmatpush.bf16.msra.mxu0 %v1759
  %2304 = vmatpush.bf16.msra.mxu0 %v1758
  %2305 = vmatpush.bf16.msra.mxu0 %v1757
  %2306 = vmatpush.bf16.msra.mxu0 %v1756
  %2307 = vmatpush.bf16.msra.mxu0 %v1755
  %2308 = vmatpush.bf16.msra.mxu0 %v1754
  %2309 = vmatmul.bf16.gmra.mxu0 %v133
  %v2310 = vpop.f32.mrf.mxu0
  %v2311 = vadd.f32 %v2298, %v2310
  %v2312 = vpop.f32.mrf.mxu0
  %2313 = vdwg.mxu0
  %2314 = vmatpush.bf16.msra.mxu0 %v1769
  %2315 = vmatpush.bf16.msra.mxu0 %v1768
  %2316 = vmatpush.bf16.msra.mxu0 %v1767
  %2317 = vmatpush.bf16.msra.mxu0 %v1766
  %2318 = vmatpush.bf16.msra.mxu0 %v1765
  %2319 = vmatpush.bf16.msra.mxu0 %v1764
  %2320 = vmatpush.bf16.msra.mxu0 %v1763
  %2321 = vmatpush.bf16.msra.mxu0 %v1762
  %2322 = vmatmul.bf16.gmra.mxu0 %v134
  %v2323 = vpop.f32.mrf.mxu0
  %v2324 = vadd.f32 %v2311, %v2323
  %v2325 = vpop.f32.mrf.mxu0
  %2326 = vdwg.mxu0
  %2327 = vmatpush.bf16.msra.mxu0 %v1777
  %2328 = vmatpush.bf16.msra.mxu0 %v1776
  %2329 = vmatpush.bf16.msra.mxu0 %v1775
  %2330 = vmatpush.bf16.msra.mxu0 %v1774
  %2331 = vmatpush.bf16.msra.mxu0 %v1773
  %2332 = vmatpush.bf16.msra.mxu0 %v1772
  %2333 = vmatpush.bf16.msra.mxu0 %v1771
  %2334 = vmatpush.bf16.msra.mxu0 %v1770
  %2335 = vmatmul.bf16.gmra.mxu0 %v135
  %v2336 = vpop.f32.mrf.mxu0
  %v2337 = vadd.f32 %v2324, %v2336
  %v2338 = vpop.f32.mrf.mxu0
  %2339 = vdwg.mxu0
  %2340 = vmatpush.bf16.msra.mxu0 %v1785
  %2341 = vmatpush.bf16.msra.mxu0 %v1784
  %2342 = vmatpush.bf16.msra.mxu0 %v1783
  %2343 = vmatpush.bf16.msra.mxu0 %v1782
  %2344 = vmatpush.bf16.msra.mxu0 %v1781
  %2345 = vmatpush.bf16.msra.mxu0 %v1780
  %2346 = vmatpush.bf16.msra.mxu0 %v1779
  %2347 = vmatpush.bf16.msra.mxu0 %v1778
  %2348 = vmatmul.bf16.gmra.mxu0 %v136
  %v2349 = vpop.f32.mrf.mxu0
  %v2350 = vadd.f32 %v2337, %v2349
  %v2351 = vpop.f32.mrf.mxu0
  %2352 = vdwg.mxu0
  %2353 = vmatpush.bf16.msra.mxu0 %v1793
  %2354 = vmatpush.bf16.msra.mxu0 %v1792
  %2355 = vmatpush.bf16.msra.mxu0 %v1791
  %2356 = vmatpush.bf16.msra.mxu0 %v1790
  %2357 = vmatpush.bf16.msra.mxu0 %v1789
  %2358 = vmatpush.bf16.msra.mxu0 %v1788
  %2359 = vmatpush.bf16.msra.mxu0 %v1787
  %2360 = vmatpush.bf16.msra.mxu0 %v1786
  %2361 = vmatmul.bf16.gmra.mxu0 %v137
  %v2362 = vpop.f32.mrf.mxu0
  %v2363 = vadd.f32 %v2350, %v2362
  %v2364 = vpop.f32.mrf.mxu0
  %2365 = vdwg.mxu0
  %2366 = vmatpush.bf16.msra.mxu0 %v1801
  %2367 = vmatpush.bf16.msra.mxu0 %v1800
  %2368 = vmatpush.bf16.msra.mxu0 %v1799
  %2369 = vmatpush.bf16.msra.mxu0 %v1798
  %2370 = vmatpush.bf16.msra.mxu0 %v1797
  %2371 = vmatpush.bf16.msra.mxu0 %v1796
  %2372 = vmatpush.bf16.msra.mxu0 %v1795
  %2373 = vmatpush.bf16.msra.mxu0 %v1794
  %2374 = vmatmul.bf16.gmra.mxu0 %v138
  %v2375 = vpop.f32.mrf.mxu0
  %v2376 = vadd.f32 %v2363, %v2375
  %v2377 = vpop.f32.mrf.mxu0
  %2378 = vdwg.mxu0
  %2379 = vmatpush.bf16.msra.mxu0 %v1809
  %2380 = vmatpush.bf16.msra.mxu0 %v1808
  %2381 = vmatpush.bf16.msra.mxu0 %v1807
  %2382 = vmatpush.bf16.msra.mxu0 %v1806
  %2383 = vmatpush.bf16.msra.mxu0 %v1805
  %2384 = vmatpush.bf16.msra.mxu0 %v1804
  %2385 = vmatpush.bf16.msra.mxu0 %v1803
  %2386 = vmatpush.bf16.msra.mxu0 %v1802
  %2387 = vmatmul.bf16.gmra.mxu0 %v139
  %v2388 = vpop.f32.mrf.mxu0
  %v2389 = vadd.f32 %v2376, %v2388
  %v2390 = vpop.f32.mrf.mxu0
  %2391 = vdwg.mxu0
  %2392 = vmatpush.bf16.msra.mxu0 %v1817
  %2393 = vmatpush.bf16.msra.mxu0 %v1816
  %2394 = vmatpush.bf16.msra.mxu0 %v1815
  %2395 = vmatpush.bf16.msra.mxu0 %v1814
  %2396 = vmatpush.bf16.msra.mxu0 %v1813
  %2397 = vmatpush.bf16.msra.mxu0 %v1812
  %2398 = vmatpush.bf16.msra.mxu0 %v1811
  %2399 = vmatpush.bf16.msra.mxu0 %v1810
  %2400 = vmatmul.bf16.gmra.mxu0 %v140
  %v2401 = vpop.f32.mrf.mxu0
  %v2402 = vadd.f32 %v2389, %v2401
  %v2403 = vpop.f32.mrf.mxu0
  %2404 = vdwg.mxu0
  %2405 = vmatpush.bf16.msra.mxu0 %v1825
  %2406 = vmatpush.bf16.msra.mxu0 %v1824
  %2407 = vmatpush.bf16.msra.mxu0 %v1823
  %2408 = vmatpush.bf16.msra.mxu0 %v1822
  %2409 = vmatpush.bf16.msra.mxu0 %v1821
  %2410 = vmatpush.bf16.msra.mxu0 %v1820
  %2411 = vmatpush.bf16.msra.mxu0 %v1819
  %2412 = vmatpush.bf16.msra.mxu0 %v1818
  %2413 = vmatmul.bf16.gmra.mxu0 %v141
  %v2414 = vpop.f32.mrf.mxu0
  %v2415 = vadd.f32 %v2402, %v2414
  %v2416 = vpop.f32.mrf.mxu0
  %2417 = vdwg.mxu0
  %2418 = vmatpush.bf16.msra.mxu0 %v1833
  %2419 = vmatpush.bf16.msra.mxu0 %v1832
  %2420 = vmatpush.bf16.msra.mxu0 %v1831
  %2421 = vmatpush.bf16.msra.mxu0 %v1830
  %2422 = vmatpush.bf16.msra.mxu0 %v1829
  %2423 = vmatpush.bf16.msra.mxu0 %v1828
  %2424 = vmatpush.bf16.msra.mxu0 %v1827
  %2425 = vmatpush.bf16.msra.mxu0 %v1826
  %2426 = vmatmul.bf16.gmra.mxu0 %v142
  %v2427 = vpop.f32.mrf.mxu0
  %v2428 = vadd.f32 %v2415, %v2427
  %v2429 = vpop.f32.mrf.mxu0
  %2430 = vdwg.mxu0
  %2431 = vmatpush.bf16.msra.mxu0 %v1841
  %2432 = vmatpush.bf16.msra.mxu0 %v1840
  %2433 = vmatpush.bf16.msra.mxu0 %v1839
  %2434 = vmatpush.bf16.msra.mxu0 %v1838
  %2435 = vmatpush.bf16.msra.mxu0 %v1837
  %2436 = vmatpush.bf16.msra.mxu0 %v1836
  %2437 = vmatpush.bf16.msra.mxu0 %v1835
  %2438 = vmatpush.bf16.msra.mxu0 %v1834
  %2439 = vmatmul.bf16.gmra.mxu0 %v143
  %v2440 = vpop.f32.mrf.mxu0
  %v2441 = vadd.f32 %v2428, %v2440
  %v2442 = vpop.f32.mrf.mxu0
  %2443 = vdwg.mxu0
  %2444 = vmatpush.bf16.msra.mxu0 %v1849
  %2445 = vmatpush.bf16.msra.mxu0 %v1848
  %2446 = vmatpush.bf16.msra.mxu0 %v1847
  %2447 = vmatpush.bf16.msra.mxu0 %v1846
  %2448 = vmatpush.bf16.msra.mxu0 %v1845
  %2449 = vmatpush.bf16.msra.mxu0 %v1844
  %2450 = vmatpush.bf16.msra.mxu0 %v1843
  %2451 = vmatpush.bf16.msra.mxu0 %v1842
  %2452 = vmatmul.bf16.gmra.mxu0 %v144
  %v2453 = vpop.f32.mrf.mxu0
  %v2454 = vadd.f32 %v2441, %v2453
  %v2455 = vpop.f32.mrf.mxu0
  %2456 = vdwg.mxu0
  %2457 = vmatpush.bf16.msra.mxu0 %v1857
  %2458 = vmatpush.bf16.msra.mxu0 %v1856
  %2459 = vmatpush.bf16.msra.mxu0 %v1855
  %2460 = vmatpush.bf16.msra.mxu0 %v1854
  %2461 = vmatpush.bf16.msra.mxu0 %v1853
  %2462 = vmatpush.bf16.msra.mxu0 %v1852
  %2463 = vmatpush.bf16.msra.mxu0 %v1851
  %2464 = vmatpush.bf16.msra.mxu0 %v1850
  %2465 = vmatmul.bf16.gmra.mxu0 %v145
  %v2466 = vpop.f32.mrf.mxu0
  %v2467 = vadd.f32 %v2454, %v2466
  %v2468 = vpop.f32.mrf.mxu0
  %2469 = vdwg.mxu0
  %2470 = vmatpush.bf16.msra.mxu0 %v1865
  %2471 = vmatpush.bf16.msra.mxu0 %v1864
  %2472 = vmatpush.bf16.msra.mxu0 %v1863
  %2473 = vmatpush.bf16.msra.mxu0 %v1862
  %2474 = vmatpush.bf16.msra.mxu0 %v1861
  %2475 = vmatpush.bf16.msra.mxu0 %v1860
  %2476 = vmatpush.bf16.msra.mxu0 %v1859
  %2477 = vmatpush.bf16.msra.mxu0 %v1858
  %2478 = vmatmul.bf16.gmra.mxu0 %v146
  %v2479 = vpop.f32.mrf.mxu0
  %v2480 = vadd.f32 %v2467, %v2479
  %v2481 = vpop.f32.mrf.mxu0
  %2482 = vdwg.mxu0
  %2483 = vmatpush.bf16.msra.mxu0 %v1873
  %2484 = vmatpush.bf16.msra.mxu0 %v1872
  %2485 = vmatpush.bf16.msra.mxu0 %v1871
  %2486 = vmatpush.bf16.msra.mxu0 %v1870
  %2487 = vmatpush.bf16.msra.mxu0 %v1869
  %2488 = vmatpush.bf16.msra.mxu0 %v1868
  %2489 = vmatpush.bf16.msra.mxu0 %v1867
  %2490 = vmatpush.bf16.msra.mxu0 %v1866
  %2491 = vmatmul.bf16.gmra.mxu0 %v147
  %v2492 = vpop.f32.mrf.mxu0
  %v2493 = vadd.f32 %v2480, %v2492
  %v2494 = vpop.f32.mrf.mxu0
  %2495 = vdwg.mxu0
  %2496 = vmatpush.bf16.msra.mxu0 %v1881
  %2497 = vmatpush.bf16.msra.mxu0 %v1880
  %2498 = vmatpush.bf16.msra.mxu0 %v1879
  %2499 = vmatpush.bf16.msra.mxu0 %v1878
  %2500 = vmatpush.bf16.msra.mxu0 %v1877
  %2501 = vmatpush.bf16.msra.mxu0 %v1876
  %2502 = vmatpush.bf16.msra.mxu0 %v1875
  %2503 = vmatpush.bf16.msra.mxu0 %v1874
  %2504 = vmatmul.bf16.gmra.mxu0 %v148
  %v2505 = vpop.f32.mrf.mxu0
  %v2506 = vadd.f32 %v2493, %v2505
  %v2507 = vpop.f32.mrf.mxu0
  %2508 = vdwg.mxu0
  %2509 = vmatpush.bf16.msra.mxu0 %v1889
  %2510 = vmatpush.bf16.msra.mxu0 %v1888
  %2511 = vmatpush.bf16.msra.mxu0 %v1887
  %2512 = vmatpush.bf16.msra.mxu0 %v1886
  %2513 = vmatpush.bf16.msra.mxu0 %v1885
  %2514 = vmatpush.bf16.msra.mxu0 %v1884
  %2515 = vmatpush.bf16.msra.mxu0 %v1883
  %2516 = vmatpush.bf16.msra.mxu0 %v1882
  %2517 = vmatmul.bf16.gmra.mxu0 %v149
  %v2518 = vpop.f32.mrf.mxu0
  %v2519 = vadd.f32 %v2506, %v2518
  %v2520 = vpop.f32.mrf.mxu0
  %2521 = vdwg.mxu0
  %2522 = vmatpush.bf16.msra.mxu0 %v1897
  %2523 = vmatpush.bf16.msra.mxu0 %v1896
  %2524 = vmatpush.bf16.msra.mxu0 %v1895
  %2525 = vmatpush.bf16.msra.mxu0 %v1894
  %2526 = vmatpush.bf16.msra.mxu0 %v1893
  %2527 = vmatpush.bf16.msra.mxu0 %v1892
  %2528 = vmatpush.bf16.msra.mxu0 %v1891
  %2529 = vmatpush.bf16.msra.mxu0 %v1890
  %2530 = vmatmul.bf16.gmra.mxu0 %v150
  %v2531 = vpop.f32.mrf.mxu0
  %v2532 = vadd.f32 %v2519, %v2531
  %v2533 = vpop.f32.mrf.mxu0
  %2534 = vdwg.mxu0
  %2535 = vmatpush.bf16.msra.mxu0 %v1905
  %2536 = vmatpush.bf16.msra.mxu0 %v1904
  %2537 = vmatpush.bf16.msra.mxu0 %v1903
  %2538 = vmatpush.bf16.msra.mxu0 %v1902
  %2539 = vmatpush.bf16.msra.mxu0 %v1901
  %2540 = vmatpush.bf16.msra.mxu0 %v1900
  %2541 = vmatpush.bf16.msra.mxu0 %v1899
  %2542 = vmatpush.bf16.msra.mxu0 %v1898
  %2543 = vmatmul.bf16.gmra.mxu0 %v151
  %v2544 = vpop.f32.mrf.mxu0
  %v2545 = vadd.f32 %v2532, %v2544
  %v2546 = vpop.f32.mrf.mxu0
  %2547 = vdwg.mxu0
  %2548 = vmatpush.bf16.msra.mxu0 %v1913
  %2549 = vmatpush.bf16.msra.mxu0 %v1912
  %2550 = vmatpush.bf16.msra.mxu0 %v1911
  %2551 = vmatpush.bf16.msra.mxu0 %v1910
  %2552 = vmatpush.bf16.msra.mxu0 %v1909
  %2553 = vmatpush.bf16.msra.mxu0 %v1908
  %2554 = vmatpush.bf16.msra.mxu0 %v1907
  %2555 = vmatpush.bf16.msra.mxu0 %v1906
  %2556 = vmatmul.bf16.gmra.mxu0 %v152
  %v2557 = vpop.f32.mrf.mxu0
  %v2558 = vadd.f32 %v2545, %v2557
  %v2559 = vpop.f32.mrf.mxu0
  %2560 = vdwg.mxu0
  %2561 = vmatpush.bf16.msra.mxu0 %v1921
  %2562 = vmatpush.bf16.msra.mxu0 %v1920
  %2563 = vmatpush.bf16.msra.mxu0 %v1919
  %2564 = vmatpush.bf16.msra.mxu0 %v1918
  %2565 = vmatpush.bf16.msra.mxu0 %v1917
  %2566 = vmatpush.bf16.msra.mxu0 %v1916
  %2567 = vmatpush.bf16.msra.mxu0 %v1915
  %2568 = vmatpush.bf16.msra.mxu0 %v1914
  %2569 = vmatmul.bf16.gmra.mxu0 %v153
  %v2570 = vpop.f32.mrf.mxu0
  %v2571 = vadd.f32 %v2558, %v2570
  %v2572 = vpop.f32.mrf.mxu0
  %2573 = vdwg.mxu0
  %2574 = vmatpush.bf16.msra.mxu0 %v1929
  %2575 = vmatpush.bf16.msra.mxu0 %v1928
  %2576 = vmatpush.bf16.msra.mxu0 %v1927
  %2577 = vmatpush.bf16.msra.mxu0 %v1926
  %2578 = vmatpush.bf16.msra.mxu0 %v1925
  %2579 = vmatpush.bf16.msra.mxu0 %v1924
  %2580 = vmatpush.bf16.msra.mxu0 %v1923
  %2581 = vmatpush.bf16.msra.mxu0 %v1922
  %2582 = vmatmul.bf16.gmra.mxu0 %v154
  %v2583 = vpop.f32.mrf.mxu0
  %v2584 = vadd.f32 %v2571, %v2583
  %v2585 = vpop.f32.mrf.mxu0
  %2586 = vdwg.mxu0
  %2587 = vmatpush.bf16.msra.mxu0 %v1937
  %2588 = vmatpush.bf16.msra.mxu0 %v1936
  %2589 = vmatpush.bf16.msra.mxu0 %v1935
  %2590 = vmatpush.bf16.msra.mxu0 %v1934
  %2591 = vmatpush.bf16.msra.mxu0 %v1933
  %2592 = vmatpush.bf16.msra.mxu0 %v1932
  %2593 = vmatpush.bf16.msra.mxu0 %v1931
  %2594 = vmatpush.bf16.msra.mxu0 %v1930
  %2595 = vmatmul.bf16.gmra.mxu0 %v155
  %v2596 = vpop.f32.mrf.mxu0
  %v2597 = vadd.f32 %v2584, %v2596
  %v2598 = vpop.f32.mrf.mxu0
  %2599 = vdwg.mxu0
  %2600 = vmatpush.bf16.msra.mxu0 %v1945
  %2601 = vmatpush.bf16.msra.mxu0 %v1944
  %2602 = vmatpush.bf16.msra.mxu0 %v1943
  %2603 = vmatpush.bf16.msra.mxu0 %v1942
  %2604 = vmatpush.bf16.msra.mxu0 %v1941
  %2605 = vmatpush.bf16.msra.mxu0 %v1940
  %2606 = vmatpush.bf16.msra.mxu0 %v1939
  %2607 = vmatpush.bf16.msra.mxu0 %v1938
  %2608 = vmatmul.bf16.gmra.mxu0 %v156
  %v2609 = vpop.f32.mrf.mxu0
  %v2610 = vadd.f32 %v2597, %v2609
  %v2611 = vpop.f32.mrf.mxu0
  %2612 = vdwg.mxu0
  %2613 = vmatpush.bf16.msra.mxu0 %v1953
  %2614 = vmatpush.bf16.msra.mxu0 %v1952
  %2615 = vmatpush.bf16.msra.mxu0 %v1951
  %2616 = vmatpush.bf16.msra.mxu0 %v1950
  %2617 = vmatpush.bf16.msra.mxu0 %v1949
  %2618 = vmatpush.bf16.msra.mxu0 %v1948
  %2619 = vmatpush.bf16.msra.mxu0 %v1947
  %2620 = vmatpush.bf16.msra.mxu0 %v1946
  %2621 = vmatmul.bf16.gmra.mxu0 %v157
  %v2622 = vpop.f32.mrf.mxu0
  %v2623 = vadd.f32 %v2610, %v2622
  %v2624 = vpop.f32.mrf.mxu0
  %2625 = vdwg.mxu0
  %2626 = vst [vmem:[%s4] sm:$0x3] %v2623
  // Predicated region
  $region18: #{deep_cnn0_forward.9} parent=0 // pred_check
    _
  $region19: #{deep_cnn0_forward.9} parent=0 // pred_check_branch
    %2628 = sbr.rel (0) target = $region21
  $region20: #{deep_cnn0_forward.9} parent=0 // pred_region
    _
  $region21: #{deep_cnn0_forward.9} parent=0 // pred_fallthru
    _
  // Predicated region
  $region22: #{deep_cnn0_forward.9} parent=0 // pred_check
    _
  $region23: #{deep_cnn0_forward.9} parent=0 // pred_check_branch
    %2630 = sbr.rel (0) target = $region25
  $region24: #{deep_cnn0_forward.9} parent=0 // pred_region
    _
  $region25: #{deep_cnn0_forward.9} parent=0 // pred_fallthru
    _

</llo_original>
